<compile_context>
chip_gen: v6e
topology: v6e:2x2x1
jax: 0.10.0
libtpu: 0.0.40
codegen_flags: <defaults>
</compile_context>

<pallas_src>
import math
import functools

import jax
import jax.numpy as jnp
from jax import lax
from jax.experimental import pallas as pl
from jax.experimental.pallas import tpu as pltpu

# Make the pure-JAX reference and the in-kernel f32 dots numerically comparable
# (self-test only; production would run bf16 operands with f32 accumulation).
jax.config.update("jax_default_matmul_precision", "highest")

VMEM_LIMIT = 32 * 1024 * 1024   # explicit scoped-VMEM budget: > v5e's 16 MiB default,
                                # == v6e/v7x scoped default, headroom on v7x's 64 MiB.
STAT_LANES = 128                # lane-replicated running-stat width (full-vreg stores)


# ----------------------------- tile sizing -----------------------------------
def _fit_tile(dim, pref):
    """Largest legal tile <= pref: full dim if small, else a 128-multiple divisor."""
    if dim <= pref:
        return dim
    for t in (pref, 1024, 512, 256, 128):
        if t <= pref and dim % t == 0:
            return t
    return dim  # fallback: single full block (always layout-legal)


def _attn_tile_for_backend():
    """256 tiles better fill v6e's 2x256^2 MXU; keep 128 on v5e (128^2 MXU) and on
    v7x (64 MiB VMEM) unless the VMEM budget is explicitly re-derived."""
    try:
        kind = jax.devices()[0].device_kind.lower()
    except Exception:
        return 128
    return 256 if "v6" in kind else 128


# ----------------------------- tiled projection GEMM -------------------------
def _matmul_kernel(x_ref, w_ref, o_ref, acc_ref):
    @pl.when(pl.program_id(2) == 0)
    def _init():
        acc_ref[...] = jnp.zeros_like(acc_ref)

    acc_ref[...] += jnp.dot(x_ref[...], w_ref[...],
                            preferred_element_type=jnp.float32)

    @pl.when(pl.program_id(2) == pl.num_programs(2) - 1)
    def _store():
        o_ref[...] = acc_ref[...].astype(o_ref.dtype)


def matmul_pallas(x, w, *, tm=512, tn=256, tk=512):
    M, K = x.shape
    K2, N = w.shape
    assert K == K2
    tm, tn, tk = _fit_tile(M, tm), _fit_tile(N, tn), _fit_tile(K, tk)
    return pl.pallas_call(
        _matmul_kernel,
        out_shape=jax.ShapeDtypeStruct((M, N), x.dtype),
        grid=(M // tm, N // tn, K // tk),
        in_specs=[
            pl.BlockSpec((tm, tk), lambda i, j, k: (i, k)),
            pl.BlockSpec((tk, tn), lambda i, j, k: (k, j)),
        ],
        out_specs=pl.BlockSpec((tm, tn), lambda i, j, k: (i, j)),
        scratch_shapes=[pltpu.VMEM((tm, tn), jnp.float32)],
        compiler_params=pltpu.CompilerParams(
            dimension_semantics=("parallel", "parallel", "arbitrary"),
            vmem_limit_bytes=VMEM_LIMIT),
    )(x, w)


# ----------------------------- RoPE (hoisted, elementwise) --------------------
@functools.lru_cache(maxsize=None)
def _roll_plus_one_is_prev():
    """One-time probe of pltpu.roll's direction so the pair swap is convention-proof."""
    def probe(o_ref):
        o_ref[...] = pltpu.roll(lax.broadcasted_iota(jnp.int32, (8, 128), 1), 1, 1)

    r = pl.pallas_call(
        probe, out_shape=jax.ShapeDtypeStruct((8, 128), jnp.int32))()
    # jnp.roll semantics: out[i] = x[i - 1]  ->  out[:, 1] == 0
    return bool(jax.device_get(r[0, 1]) == 0)


def _rope_kernel(x_ref, c_ref, s_ref, o_ref, *, shift_next, shift_prev):
    x = x_ref[0].astype(jnp.float32)                         # (ts, W)
    lane = lax.broadcasted_iota(jnp.int32, x.shape, 1)
    # partner[2i] = x[2i+1], partner[2i+1] = x[2i]  (adjacent-lane pair swap on the XLU)
    partner = jnp.where(lane % 2 == 0,
                        pltpu.roll(x, shift_next, 1),
                        pltpu.roll(x, shift_prev, 1))
    o_ref[0] = (x * c_ref[...] + partner * s_ref[...]).astype(o_ref.dtype)


def rope_pallas(x, cos_t, sin_t):
    """Interleaved RoPE over the lane dim: out = x*cos + pair_swap(x)*sin.
    cos/sin carry per-column sign/scale; columns with (cos=1, sin=0) pass through."""
    B, S, W = x.shape
    ts = _fit_tile(S, 512)
    if _roll_plus_one_is_prev():
        shift_prev, shift_next = 1, W - 1
    else:
        shift_prev, shift_next = W - 1, 1
    kern = functools.partial(_rope_kernel,
                             shift_next=shift_next, shift_prev=shift_prev)
    return pl.pallas_call(
        kern,
        out_shape=jax.ShapeDtypeStruct(x.shape, x.dtype),
        grid=(B, S // ts),
        in_specs=[
            pl.BlockSpec((1, ts, W), lambda b, i: (b, i, 0)),
            pl.BlockSpec((ts, W), lambda b, i: (i, 0)),
            pl.BlockSpec((ts, W), lambda b, i: (i, 0)),
        ],
        out_specs=pl.BlockSpec((1, ts, W), lambda b, i: (b, i, 0)),
        compiler_params=pltpu.CompilerParams(
            dimension_semantics=("parallel", "parallel"),
            vmem_limit_bytes=VMEM_LIMIT),
    )(x, cos_t, sin_t)


# ----------------------------- flash attention (causal, GQA) ------------------
def _flash_attn_kernel(q_ref, k_ref, v_ref, o_ref, m_sc, l_sc, acc_sc,
                       *, n_heads, n_kv_heads, head_dim, tq, tk):
    qi = pl.program_id(1)
    ki = pl.program_id(2)
    nk = pl.num_programs(2)
    n_rep = n_heads // n_kv_heads
    NEG = jnp.float32(-1e30)
    q_start = qi * tq
    k_start = ki * tk
    dn_qkT = (((1,), (1,)), ((), ()))        # contract last dims: q @ k^T

    @pl.when(ki == 0)
    def _init():
        m_sc[...] = jnp.full(m_sc.shape, NEG, m_sc.dtype)
        l_sc[...] = jnp.zeros_like(l_sc)
        acc_sc[...] = jnp.zeros_like(acc_sc)

    def _tile_update(masked):
        if masked:
            row = q_start + lax.broadcasted_iota(jnp.int32, (tq, tk), 0)
            col = k_start + lax.broadcasted_iota(jnp.int32, (tq, tk), 1)
            causal = col <= row
        # Heads unrolled statically (fine for small/medium H; for very large head
        # counts move kv-heads onto the grid so k/v blocks become (1, tk, Dh)).
        for hk in range(n_kv_heads):
            kh = k_ref[0, :, hk * head_dim:(hk + 1) * head_dim]     # (tk, Dh)
            vh = v_ref[0, :, hk * head_dim:(hk + 1) * head_dim]     # (tk, Dh)
            for r in range(n_rep):
                h = hk * n_rep + r                                  # query head h -> kv head h // n_rep
                a0, a1 = h * head_dim, (h + 1) * head_dim
                qh = q_ref[0, :, a0:a1]                             # (tq, Dh) pre-roped, pre-scaled
                s = lax.dot_general(qh, kh, dn_qkT,
                                    preferred_element_type=jnp.float32)   # (tq, tk)
                if masked:
                    s = jnp.where(causal, s, NEG)
                m_prev = m_sc[h]                                    # (tq, STAT_LANES), lane-replicated
                m_new = jnp.maximum(m_prev, jnp.max(s, axis=-1, keepdims=True))
                alpha = jnp.exp(m_prev - m_new)
                p = jnp.exp(s - m_new[:, :1])
                l_sc[h] = alpha * l_sc[h] + jnp.sum(p, axis=-1, keepdims=True)
                acc_sc[:, a0:a1] = (alpha[:, :1] * acc_sc[:, a0:a1]
                                    + jnp.dot(p.astype(vh.dtype), vh,
                                              preferred_element_type=jnp.float32))
                m_sc[h] = m_new

    # tile fully in the causal past -> no mask needed
    @pl.when(k_start + tk - 1 <= q_start)
    def _past():
        _tile_update(masked=False)

    # diagonal tile -> build & apply the causal mask
    @pl.when(jnp.logical_and(k_start <= q_start + tq - 1,
                             k_start + tk - 1 > q_start))
    def _diag():
        _tile_update(masked=True)

    @pl.when(ki == nk - 1)
    def _finalize():
        # exact reciprocal keeps the strict f32 self-test tolerance;
        # flip approx=True (EUP) for bf16 production.
        for h in range(n_heads):
            a0, a1 = h * head_dim, (h + 1) * head_dim
            inv_l = pl.reciprocal(l_sc[h][:, :1], approx=False)     # (tq, 1)
            acc_sc[:, a0:a1] = acc_sc[:, a0:a1] * inv_l
        o_ref[0] = acc_sc[...].astype(o_ref.dtype)


def flash_attention_pallas(qkv, n_heads, n_kv_heads, head_dim, *, tile=128):
    """qkv: (B, S, Wq + 2*Wkv) fused slab; q|k columns already RoPE'd, q pre-scaled."""
    B, S, Wt = qkv.shape
    Wq = n_heads * head_dim
    Wkv = n_kv_heads * head_dim
    n_rep = n_heads // n_kv_heads
    assert Wt == Wq + 2 * Wkv
    tq = _fit_tile(S, tile)
    tk = _fit_tile(S, tile)

    def q_map(b, qi, ki):
        return (b, qi, 0)

    def make_kv_map(col_block):
        # Clamp to the last causally-needed kv block: skipped steps revisit the
        # same block index -> Pallas issues no new DMA for dead tiles.
        def kv_map(b, qi, ki):
            last_needed = (qi * tq + tq - 1) // tk
            return (b, jnp.minimum(ki, last_needed), col_block)
        return kv_map

    kern = functools.partial(
        _flash_attn_kernel, n_heads=n_heads, n_kv_heads=n_kv_heads,
        head_dim=head_dim, tq=tq, tk=tk)
    return pl.pallas_call(
        kern,
        out_shape=jax.ShapeDtypeStruct((B, S, Wq), qkv.dtype),
        grid=(B, S // tq, S // tk),
        in_specs=[
            pl.BlockSpec((1, tq, Wq), q_map),                      # q columns
            pl.BlockSpec((1, tk, Wkv), make_kv_map(n_rep)),        # k columns
            pl.BlockSpec((1, tk, Wkv), make_kv_map(n_rep + 1)),    # v columns
        ],
        out_specs=pl.BlockSpec((1, tq, Wq), lambda b, qi, ki: (b, qi, 0)),
        scratch_shapes=[
            pltpu.VMEM((n_heads, tq, STAT_LANES), jnp.float32),    # running max (lane-replicated)
            pltpu.VMEM((n_heads, tq, STAT_LANES), jnp.float32),    # running denom (lane-replicated)
            pltpu.VMEM((tq, Wq), jnp.float32),                     # running numerator
        ],
        compiler_params=pltpu.CompilerParams(
            dimension_semantics=("parallel", "parallel", "arbitrary"),
            vmem_limit_bytes=VMEM_LIMIT),
    )(qkv, qkv, qkv)


# ----------------------------- RoPE tables (parameter-setup time) -------------
def precompute_cos_sin(seq_len, head_dim, theta=1e6):
    freqs = 1.0 / (theta ** (jnp.arange(0, head_dim, 2, dtype=jnp.float32) / head_dim))
    t = jnp.arange(seq_len, dtype=jnp.float32)
    ang = jnp.outer(t, freqs)                     # (S, head_dim // 2)
    return jnp.cos(ang), jnp.sin(ang)


def build_rope_lane_tables(cos, sin, n_heads, n_kv_heads, head_dim):
    """(S, Dh/2) cos/sin -> (S, Wq+2Wkv) lane tables for the fused qkv slab.
    q columns carry the 1/sqrt(Dh) score scale; v columns are identity (cos=1, sin=0)."""
    S = cos.shape[0]
    cos_e = jnp.repeat(cos, 2, axis=-1)                              # [c0, c0, c1, c1, ...]
    sin_s = jnp.stack([-sin, sin], axis=-1).reshape(S, head_dim)     # [-s0, s0, -s1, s1, ...]
    scale = 1.0 / math.sqrt(head_dim)
    cos_t = jnp.concatenate([jnp.tile(cos_e * scale, (1, n_heads)),
                             jnp.tile(cos_e, (1, n_kv_heads)),
                             jnp.ones((S, n_kv_heads * head_dim), jnp.float32)], axis=1)
    sin_t = jnp.concatenate([jnp.tile(sin_s * scale, (1, n_heads)),
                             jnp.tile(sin_s, (1, n_kv_heads)),
                             jnp.zeros((S, n_kv_heads * head_dim), jnp.float32)], axis=1)
    return cos_t, sin_t


# ----------------------------- full forward ----------------------------------
def attention_forward(x, w_qkv, wo, cos_t, sin_t, n_heads, n_kv_heads):
    """Eval / no-cache forward of the Attention module. Returns (output, past_kv=None)."""
    B, S, dim = x.shape
    head_dim = dim // n_heads

    # 1) fused, tiled QKV projection (x read from HBM once; w_qkv packed at setup time)
    qkv = matmul_pallas(x.reshape(B * S, dim), w_qkv).reshape(B, S, -1)

    # 2) one elementwise RoPE pass over the fused slab (v columns pass through)
    qkv = rope_pallas(qkv, cos_t, sin_t)

    # 3) causal flash attention with GQA; q/k/v read straight from the fused slab
    attn = flash_attention_pallas(qkv, n_heads, n_kv_heads, head_dim,
                                  tile=_attn_tile_for_backend())

    # 4) tiled output projection; dropout p=0 (eval) -> identity
    out = matmul_pallas(attn.reshape(B * S, n_heads * head_dim), wo).reshape(B, S, dim)
    return out, None  # TODO(synk): use_cache / past_key_value path not implemented


# ----------------------------- pure-JAX reference ----------------------------
def reference_forward(x, wq, wk, wv, wo, cos, sin, n_heads, n_kv_heads):
    B, S, dim = x.shape
    head_dim = dim // n_heads
    n_rep = n_heads // n_kv_heads
    q = (x.reshape(B * S, dim) @ wq).reshape(B, S, n_heads, head_dim)
    k = (x.reshape(B * S, dim) @ wk).reshape(B, S, n_kv_heads, head_dim)
    v = (x.reshape(B * S, dim) @ wv).reshape(B, S, n_kv_heads, head_dim)

    def rope(t):
        te, to = t[..., 0::2], t[..., 1::2]
        c = cos[None, :, None, :]
        s = sin[None, :, None, :]
        re = te * c - to * s
        im = te * s + to * c
        return jnp.stack([re, im], axis=-1).reshape(t.shape)

    q, k = rope(q), rope(k)
    q = q.transpose(0, 2, 1, 3)
    k = jnp.repeat(k.transpose(0, 2, 1, 3), n_rep, axis=1)
    v = jnp.repeat(v.transpose(0, 2, 1, 3), n_rep, axis=1)
    scores = jnp.einsum("bhqd,bhkd->bhqk", q, k) / math.sqrt(head_dim)
    mask = jnp.triu(jnp.full((S, S), -jnp.inf, jnp.float32), k=1)
    scores = scores + mask[None, None]
    probs = jax.nn.softmax(scores, axis=-1)
    out = jnp.einsum("bhqk,bhkd->bhqd", probs, v)
    out = out.transpose(0, 2, 1, 3).reshape(B * S, n_heads * head_dim)
    return (out @ wo).reshape(B, S, dim)


if __name__ == "__main__":
    # Small but production-representative shapes: head_dim=64 keeps all lane widths
    # at 128-multiples (exercises real (8,128) tiling), S=256 exercises multi-tile
    # online softmax + causal tile skipping, B=2 exercises the batch grid axis.
    B, S, dim, n_heads, n_kv_heads = 2, 256, 256, 4, 2
    head_dim = dim // n_heads

    key = jax.random.PRNGKey(0)
    kx, kq, kk, kv, ko = jax.random.split(key, 5)
    std = 0.02
    x = jax.random.normal(kx, (B, S, dim), dtype=jnp.float32)
    wq = jax.random.normal(kq, (dim, n_heads * head_dim), jnp.float32) * std
    wk = jax.random.normal(kk, (dim, n_kv_heads * head_dim), jnp.float32) * std
    wv = jax.random.normal(kv, (dim, n_kv_heads * head_dim), jnp.float32) * std
    wo = jax.random.normal(ko, (n_heads * head_dim, dim), jnp.float32) * std

    cos, sin = precompute_cos_sin(S, head_dim)
    # parameter-setup-time packing (NOT per forward call)
    w_qkv = jnp.concatenate([wq, wk, wv], axis=1)
    cos_t, sin_t = build_rope_lane_tables(cos, sin, n_heads, n_kv_heads, head_dim)

    out, _ = attention_forward(x, w_qkv, wo, cos_t, sin_t, n_heads, n_kv_heads)
    out = jax.block_until_ready(out)

    ref = reference_forward(x, wq, wk, wv, wo, cos, sin, n_heads, n_kv_heads)
    assert out.shape == (B, S, dim)
    max_err = float(jnp.max(jnp.abs(out - ref)))
    assert jnp.allclose(out, ref, atol=2e-4, rtol=2e-4), \
        f"mismatch vs reference (max abs err {max_err})"
    print("KERNEL_OK")
</pallas_src>

<mosaic_0001>
module attributes {stable_mosaic.version = 11 : i64} {
  func.func @_matmul_kernel(%arg0: i32, %arg1: i32, %arg2: i32, %arg3: memref<512x256xf32, #tpu.memory_space<vmem>>, %arg4: memref<256x256xf32, #tpu.memory_space<vmem>>, %arg5: memref<512x256xf32, #tpu.memory_space<vmem>>, %arg6: memref<512x256xf32, #tpu.memory_space<vmem>>) attributes {dimension_semantics = [#tpu.dimension_semantics<parallel>, #tpu.dimension_semantics<parallel>, #tpu.dimension_semantics<arbitrary>], iteration_bounds = array<i64: 1, 2, 1>, scalar_prefetch = 0 : i64, scratch_operands = 1 : i64, tpu.core_type = #tpu.core_type<tc>, window_params = [{transform_indices = @transform_0, window_bounds = array<i64: 512, 256>}, {transform_indices = @transform_1, window_bounds = array<i64: 256, 256>}, {transform_indices = @transform_2, window_bounds = array<i64: 512, 256>}]} {
    %c0_i32 = arith.constant 0 : i32
    %0 = arith.cmpi eq, %arg2, %c0_i32 : i32
    %1 = arith.extui %0 : i1 to i32
    %c0_i32_0 = arith.constant 0 : i32
    %2 = arith.cmpi ne, %1, %c0_i32_0 : i32
    scf.if %2 {
      %cst_10 = arith.constant 0.000000e+00 : f32
      %12 = vector.broadcast %cst_10 : f32 to vector<512x256xf32>
      %c0_11 = arith.constant 0 : index
      %c0_12 = arith.constant 0 : index
      %13 = vector.load %arg6[%c0_11, %c0_12] : memref<512x256xf32, #tpu.memory_space<vmem>>, vector<512x256xf32>
      tpu.vector_store %arg6[%c0_11, %c0_12], %12 {strides = array<i32>} : memref<512x256xf32, #tpu.memory_space<vmem>>, vector<512x256xf32>,
    } else {
    }
    %c0 = arith.constant 0 : index
    %c0_1 = arith.constant 0 : index
    %3 = vector.load %arg6[%c0, %c0_1] : memref<512x256xf32, #tpu.memory_space<vmem>>, vector<512x256xf32>
    %c0_2 = arith.constant 0 : index
    %c0_3 = arith.constant 0 : index
    %4 = vector.load %arg3[%c0_2, %c0_3] : memref<512x256xf32, #tpu.memory_space<vmem>>, vector<512x256xf32>
    %c0_4 = arith.constant 0 : index
    %c0_5 = arith.constant 0 : index
    %5 = vector.load %arg4[%c0_4, %c0_5] : memref<256x256xf32, #tpu.memory_space<vmem>>, vector<256x256xf32>
    %cst = arith.constant dense<0.000000e+00> : vector<512x256xf32>
    %6 = tpu.matmul %4, %5, %cst {dimension_numbers = #tpu.dot_dimension_numbers<[1], [0], [0], [1], [0, 0, 1, 1], [], []>, precision = #tpu.contract_precision<fp32>} : vector<512x256xf32>, vector<256x256xf32>, vector<512x256xf32> -> vector<512x256xf32>
    %7 = arith.addf %3, %6 : vector<512x256xf32>
    %c0_6 = arith.constant 0 : index
    %c0_7 = arith.constant 0 : index
    %8 = vector.load %arg6[%c0_6, %c0_7] : memref<512x256xf32, #tpu.memory_space<vmem>>, vector<512x256xf32>
    tpu.vector_store %arg6[%c0_6, %c0_7], %7 {strides = array<i32>} : memref<512x256xf32, #tpu.memory_space<vmem>>, vector<512x256xf32>,
    %c0_i32_8 = arith.constant 0 : i32
    %9 = arith.cmpi eq, %arg2, %c0_i32_8 : i32
    %10 = arith.extui %9 : i1 to i32
    %c0_i32_9 = arith.constant 0 : i32
    %11 = arith.cmpi ne, %10, %c0_i32_9 : i32
    scf.if %11 {
      %c0_10 = arith.constant 0 : index
      %c0_11 = arith.constant 0 : index
      %12 = vector.load %arg6[%c0_10, %c0_11] : memref<512x256xf32, #tpu.memory_space<vmem>>, vector<512x256xf32>
      %c0_12 = arith.constant 0 : index
      %c0_13 = arith.constant 0 : index
      %13 = vector.load %arg5[%c0_12, %c0_13] : memref<512x256xf32, #tpu.memory_space<vmem>>, vector<512x256xf32>
      tpu.vector_store %arg5[%c0_12, %c0_13], %12 {strides = array<i32>} : memref<512x256xf32, #tpu.memory_space<vmem>>, vector<512x256xf32>,
    } else {
    }
    return
  }
  func.func @transform_0(%arg0: i32, %arg1: i32, %arg2: i32) -> (i32, i32) {
    %c0_i32 = arith.constant 0 : i32
    return %arg0, %arg2 : i32, i32
  }
  func.func @transform_1(%arg0: i32, %arg1: i32, %arg2: i32) -> (i32, i32) {
    %c0_i32 = arith.constant 0 : i32
    return %arg2, %arg1 : i32, i32
  }
  func.func @transform_2(%arg0: i32, %arg1: i32, %arg2: i32) -> (i32, i32) {
    %c0_i32 = arith.constant 0 : i32
    return %arg0, %arg1 : i32, i32
  }
}

</mosaic_0001>

<llo_original>
// kernel: tpu_custom_call.1
$region0: #{tpu_custom_call.1}
  #allocation0 [shape = 'u32[]', space=smem, size = 0x4, offset = 0x4, fixed_abs, tag = 'smem constant byte address 0x4 - core index']
  #allocation1 [shape = 'u32[144,128]{1,0:T(1,128)}', space=vmem, size = 0x12000, scoped, tag = 'internal scratch']
  #allocation2 [shape = 'f32[512,256]{1,0:T(8,128)}', space=vmem, size = 0x80000, scoped, tag = 'scratch operand']
  %s0 = inlined_call_operand.hbm [shape: f32[512,256], index: 0, kind: input, shape index: {}]
  %s1 = inlined_call_operand.hbm [shape: f32[256,512], index: 1, kind: input, shape index: {}]
  %s2 = inlined_call_operand.hbm [shape: f32[512,512], index: 2, kind: output, shape index: {}]
  %s3 = sld [smem:[#allocation0]]
  $region57: #{tpu_custom_call.1} parent=0
    _
  %s5 = ssub.s32 1, %s3
  %s6 = scalar_select 0, %s5, %s3
  $region1: #{tpu_custom_call.1} parent=0
    #allocation3 [shape = 'u8[524288]{0}', space=vmem, size = 0x80000, scoped, tag = 'input window, operand 0, single buffered']
    #allocation4 [shape = 's32[2]{0}', space=sflag, size = 0x8, scoped, tag = 'scoped memory for tpu_custom_call.1']
    #allocation5 [shape = 's32[2]{0}', space=sflag, size = 0x8, scoped, tag = 'scoped memory for tpu_custom_call.1']
    #allocation6 [shape = 'u8[524288]{0}', space=vmem, size = 0x80000, scoped, tag = 'input window, operand 1']
    #allocation7 [shape = 's32[2]{0}', space=sflag, size = 0x8, scoped, tag = 'scoped memory for tpu_custom_call.1']
    #allocation8 [shape = 'u8[1048576]{0}', space=vmem, size = 0x100000, scoped, tag = 'output window, operand 0']
    %7 = vsyncpa [#allocation4], 0
    %8 = vsyncpa [#allocation7], 0
    %s9 = scalar_lea.sflag [#allocation7], 1
    %10 = vsyncpa %s9, 0
    %11 = vsyncpa [#allocation5], 0
    %s12 = scalar_lea.sflag [#allocation5], 1
    %13 = vsyncpa %s12, 0
    loop: start=0, step=1, limit=4
    $region2: #{tpu_custom_call.1} parent=1 // loop_pre_header
      _
    $region3: #{tpu_custom_call.1} parent=1 // loop_header
      %s15 = sphi 0, %s19
      %p16 = scmp.ge.s32.totalorder %s15, 4
      %s22 = sphi 0, %s41
      %s23 = sphi 0, %s37
      %s24 = sphi 0, %s33
      %s25 = sphi 0, %s22
      %s26 = sphi 0, %s23
      %s27 = sphi 0, %s24
      %s28 = sphi 0, %s25
      %s29 = sphi 0, %s26
      %s30 = sphi 0, %s27
      %s46 = sphi 0, %s48
      %s49 = sphi 0, %s46
      %s50 = sphi 0, %s49
      %s66 = sphi 0, %s50
      %s74 = sphi 0, %s76
      %s77 = sphi 0, %s74
      %s78 = sphi 0, %s77
      %s94 = sphi 0, %s78
      %s102 = sphi 0, %s104
      %s105 = sphi 0, %s102
      %s106 = sphi 0, %s105
      %s122 = sphi 0, %s106
    $region4: #{tpu_custom_call.1} parent=1 // loop_header_branch
      %18 = sbr.rel (%p16) target = $region8
    $region5: #{tpu_custom_call.1} parent=1 // loop_body
      %s20 = ssub.s32 %s15, 1
      %s21 = ssub.s32 %s15, 2
      %s31 = sadd.s32 1, %s24
      %p32 = scmp.ge.s32.totalorder %s31, 1
      %s33 = scalar_select %p32, 0, %s31
      %s34 = sadd.s32 1, %s23
      %s35 = scalar_select %p32, %s34, %s23
      %p36 = scmp.ge.s32.totalorder %s35, 2
      %s37 = scalar_select %p36, 0, %s35
      %s38 = sadd.s32 1, %s22
      %s39 = scalar_select %p36, %s38, %s22
      %p40 = scmp.ge.s32.totalorder %s39, 1
      %s41 = scalar_select %p40, 0, %s39
      %s42 = ssub.s32 %s22, %s41
      %s43 = ssub.s32 %s24, %s33
      %s44 = sor.u32 %s42, %s43
      %p45 = scmp.eq.s32.totalorder %s44, 0
      %s47 = sadd.s32 %s46, 1
      %s48 = scalar_select %p45, %s46, %s47
      %p51 = pneg %p45
      %p52 = scmp.eq.s32.totalorder %s15, 1
      %p53 = por %p51, %p52
      %p54 = scmp.ne.s32.totalorder %s46, %s49
      %p55 = scmp.eq.s32.totalorder %s15, 0
      %p56 = por %p54, %p55
      %p57 = scmp.ne.s32.totalorder %s46, %s49
      %p58 = scmp.eq.s32.totalorder %s20, 1
      %p59 = por %p57, %p58
      %p60 = scmp.ne.s32.totalorder %s49, %s50
      %p61 = scmp.eq.s32.totalorder %s20, 0
      %p62 = por %p60, %p61
      %p63 = scmp.ne.s32.totalorder %s49, %s50
      %p64 = scmp.eq.s32.totalorder %s21, 1
      %p65 = por %p63, %p64
      %p67 = scmp.ne.s32.totalorder %s50, %s66
      %p68 = scmp.eq.s32.totalorder %s21, 0
      %p69 = por %p67, %p68
      %s70 = ssub.s32 %s24, %s33
      %s71 = ssub.s32 %s23, %s37
      %s72 = sor.u32 %s70, %s71
      %p73 = scmp.eq.s32.totalorder %s72, 0
      %s75 = sadd.s32 %s74, 1
      %s76 = scalar_select %p73, %s74, %s75
      %p79 = pneg %p73
      %p80 = scmp.eq.s32.totalorder %s15, 1
      %p81 = por %p79, %p80
      %p82 = scmp.ne.s32.totalorder %s74, %s77
      %p83 = scmp.eq.s32.totalorder %s15, 0
      %p84 = por %p82, %p83
      %p85 = scmp.ne.s32.totalorder %s74, %s77
      %p86 = scmp.eq.s32.totalorder %s20, 1
      %p87 = por %p85, %p86
      %p88 = scmp.ne.s32.totalorder %s77, %s78
      %p89 = scmp.eq.s32.totalorder %s20, 0
      %p90 = por %p88, %p89
      %p91 = scmp.ne.s32.totalorder %s77, %s78
      %p92 = scmp.eq.s32.totalorder %s21, 1
      %p93 = por %p91, %p92
      %p95 = scmp.ne.s32.totalorder %s78, %s94
      %p96 = scmp.eq.s32.totalorder %s21, 0
      %p97 = por %p95, %p96
      %s98 = ssub.s32 %s22, %s41
      %s99 = ssub.s32 %s23, %s37
      %s100 = sor.u32 %s98, %s99
      %p101 = scmp.eq.s32.totalorder %s100, 0
      %s103 = sadd.s32 %s102, 1
      %s104 = scalar_select %p101, %s102, %s103
      %p107 = pneg %p101
      %p108 = scmp.eq.s32.totalorder %s15, 1
      %p109 = por %p107, %p108
      %p110 = scmp.ne.s32.totalorder %s102, %s105
      %p111 = scmp.eq.s32.totalorder %s15, 0
      %p112 = por %p110, %p111
      %p113 = scmp.ne.s32.totalorder %s102, %s105
      %p114 = scmp.eq.s32.totalorder %s20, 1
      %p115 = por %p113, %p114
      %p116 = scmp.ne.s32.totalorder %s105, %s106
      %p117 = scmp.eq.s32.totalorder %s20, 0
      %p118 = por %p116, %p117
      %p119 = scmp.ne.s32.totalorder %s105, %s106
      %p120 = scmp.eq.s32.totalorder %s21, 1
      %p121 = por %p119, %p120
      %p123 = scmp.ne.s32.totalorder %s106, %s122
      %p124 = scmp.eq.s32.totalorder %s21, 0
      %p125 = por %p123, %p124
      %p126 = scmp.le.s32.totalorder 1, %s15
      %p127 = scmp.lt.s32.totalorder %s15, 3
      %p128 = pnand %p126, %p127
      %p129 = pneg %p128
      // Predicated region
      $region9: #{tpu_custom_call.1} parent=5 // pred_check
        _
      $region10: #{tpu_custom_call.1} parent=5 // pred_check_branch
        %131 = sbr.rel (%p128) target = $region12
      $region11: #{tpu_custom_call.1} parent=5 // pred_region
        %s132 = ssub.s32 %s15, 1
        // Predicated region
        $region13: #{tpu_custom_call.1} parent=11 // pred_check
          %p133 = pneg %p62
        $region14: #{tpu_custom_call.1} parent=11 // pred_check_branch
          %135 = sbr.rel (%p133) target = $region16
        $region15: #{tpu_custom_call.1} parent=11 // pred_region
          %s136 = smul.u32 64, %s25
          %s137 = smul.u32 2, %s27
          %s139 = ssub.s32 16384, 16384
          %140 = vsyncadd [#allocation4], %s139
          %s141 = smul.addr %s136, 2
          %s142 = sadd.s32 %s137, %s141
          %s143 = smul.addr %s142, 128
          %s144 = scalar_lea.hbm %s0, %s143
          %s145 = sshll.u32 [#allocation3], 4
          %s146 = int_to_ptr.vmem [resolvable:$true] %s145
          %151 = dma.hbm_to_vmem [thread:$0]  %s144, 16384, %s146, [#allocation4], 256, 256, 16
        $region16: #{tpu_custom_call.1} parent=11 // pred_fallthru
          _
      $region12: #{tpu_custom_call.1} parent=5 // pred_fallthru
        _
      %p152 = scmp.lt.s32.totalorder %s15, 2
      // Predicated region
      $region17: #{tpu_custom_call.1} parent=5 // pred_check
        %p153 = pneg %p152
      $region18: #{tpu_custom_call.1} parent=5 // pred_check_branch
        %155 = sbr.rel (%p153) target = $region20
      $region19: #{tpu_custom_call.1} parent=5 // pred_region
        // Predicated region
        $region21: #{tpu_custom_call.1} parent=19 // pred_check
          %p156 = pneg %p84
        $region22: #{tpu_custom_call.1} parent=19 // pred_check_branch
          %158 = sbr.rel (%p156) target = $region24
        $region23: #{tpu_custom_call.1} parent=19 // pred_region
          %s159 = sand.u32 %s74, 1
          %s160 = scalar_lea.sflag [#allocation7], %s159
          %s161 = sand.u32 %s74, 1
          %s162 = smul.addr %s161, 512
          %s163 = scalar_lea.vmem [#allocation6], %s162
          %s164 = smul.u32 32, %s24
          %s165 = smul.u32 2, %s23
          %s167 = ssub.s32 8192, 8192
          %168 = vsyncadd %s160, %s167
          %s169 = smul.addr %s164, 4
          %s170 = sadd.s32 %s165, %s169
          %s171 = smul.addr %s170, 128
          %s172 = scalar_lea.hbm %s1, %s171
          %s173 = sshll.u32 %s163, 4
          %s174 = int_to_ptr.vmem [resolvable:$true] %s173
          %179 = dma.hbm_to_vmem [thread:$0]  %s172, 8192, %s174, %s160, 512, 256, 16
        $region24: #{tpu_custom_call.1} parent=19 // pred_fallthru
          _
      $region20: #{tpu_custom_call.1} parent=5 // pred_fallthru
        _
      %p180 = scmp.le.s32.totalorder 1, %s15
      %p181 = scmp.lt.s32.totalorder %s15, 3
      %p182 = pnand %p180, %p181
      %p183 = pneg %p182
      // Predicated region
      $region25: #{tpu_custom_call.1} parent=5 // pred_check
        _
      $region26: #{tpu_custom_call.1} parent=5 // pred_check_branch
        %185 = sbr.rel (%p182) target = $region28
      $region27: #{tpu_custom_call.1} parent=5 // pred_region
        %s186 = ssub.s32 %s15, 1
        // Predicated region
        $region29: #{tpu_custom_call.1} parent=27 // pred_check
          %p187 = pneg %p62
        $region30: #{tpu_custom_call.1} parent=27 // pred_check_branch
          %189 = sbr.rel (%p187) target = $region32
        $region31: #{tpu_custom_call.1} parent=27 // pred_region
          %190 = dma.done [#allocation4], 16384
        $region32: #{tpu_custom_call.1} parent=27 // pred_fallthru
          _
        %s191 = sand.u32 %s77, 1
        %s192 = scalar_lea.sflag [#allocation7], %s191
        %s193 = sand.u32 %s77, 1
        %s194 = smul.addr %s193, 512
        %s195 = scalar_lea.vmem [#allocation6], %s194
        // Predicated region
        $region33: #{tpu_custom_call.1} parent=27 // pred_check
          %p196 = pneg %p90
        $region34: #{tpu_custom_call.1} parent=27 // pred_check_branch
          %198 = sbr.rel (%p196) target = $region36
        $region35: #{tpu_custom_call.1} parent=27 // pred_region
          %199 = dma.done %s192, 8192
        $region36: #{tpu_custom_call.1} parent=27 // pred_fallthru
          _
        %p200 = pneg %p62
        %p201 = pneg %p59
        %s202 = sand.u32 %s77, 1
        %s203 = scalar_lea.sflag [#allocation7], %s202
        %s204 = sand.u32 %s77, 1
        %s205 = smul.addr %s204, 512
        %s206 = scalar_lea.vmem [#allocation6], %s205
        %p207 = pneg %p90
        %p208 = pneg %p87
        %p209 = pneg %p118
        %p210 = pneg %p115
        %s211 = sand.u32 %s105, 1
        %s212 = scalar_lea.sflag [#allocation5], %s211
        %s213 = sand.u32 %s105, 1
        %s214 = smul.addr %s213, 1024
        %s215 = scalar_lea.vmem [#allocation8], %s214
        %s216 = smul.u32 64, %s25
        %s217 = smul.u32 2, %s27
        %s218 = smul.u32 32, %s27
        %s219 = smul.u32 2, %s26
        %s220 = smul.u32 64, %s25
        %s221 = smul.u32 2, %s26
        %p222 = scmp.eq.s32.totalorder %s27, 0
        // Predicated region
        $region37: #{tpu_custom_call.1} parent=27 // pred_check
          %p223 = pneg %p222
        $region38: #{tpu_custom_call.1} parent=27 // pred_check_branch
          %225 = sbr.rel (%p223) target = $region40
        $region39: #{tpu_custom_call.1} parent=27 // pred_region
          %226 = vst [vmem:[#allocation2] sm:$0xff] 0.0
          %227 = vst [vmem:[#allocation2 + $0x8] sm:$0xff] 0.0
          %228 = vst [vmem:[#allocation2 + $0x10] sm:$0xff] 0.0
          %229 = vst [vmem:[#allocation2 + $0x18] sm:$0xff] 0.0
          %230 = vst [vmem:[#allocation2 + $0x20] sm:$0xff] 0.0
          %231 = vst [vmem:[#allocation2 + $0x28] sm:$0xff] 0.0
          %232 = vst [vmem:[#allocation2 + $0x30] sm:$0xff] 0.0
          %233 = vst [vmem:[#allocation2 + $0x38] sm:$0xff] 0.0
          %234 = vst [vmem:[#allocation2 + $0x40] sm:$0xff] 0.0
          %235 = vst [vmem:[#allocation2 + $0x48] sm:$0xff] 0.0
          %236 = vst [vmem:[#allocation2 + $0x50] sm:$0xff] 0.0
          %237 = vst [vmem:[#allocation2 + $0x58] sm:$0xff] 0.0
          %238 = vst [vmem:[#allocation2 + $0x60] sm:$0xff] 0.0
          %239 = vst [vmem:[#allocation2 + $0x68] sm:$0xff] 0.0
          %240 = vst [vmem:[#allocation2 + $0x70] sm:$0xff] 0.0
          %241 = vst [vmem:[#allocation2 + $0x78] sm:$0xff] 0.0
          %242 = vst [vmem:[#allocation2 + $0x80] sm:$0xff] 0.0
          %243 = vst [vmem:[#allocation2 + $0x88] sm:$0xff] 0.0
          %244 = vst [vmem:[#allocation2 + $0x90] sm:$0xff] 0.0
          %245 = vst [vmem:[#allocation2 + $0x98] sm:$0xff] 0.0
          %246 = vst [vmem:[#allocation2 + $0xa0] sm:$0xff] 0.0
          %247 = vst [vmem:[#allocation2 + $0xa8] sm:$0xff] 0.0
          %248 = vst [vmem:[#allocation2 + $0xb0] sm:$0xff] 0.0
          %249 = vst [vmem:[#allocation2 + $0xb8] sm:$0xff] 0.0
          %250 = vst [vmem:[#allocation2 + $0xc0] sm:$0xff] 0.0
          %251 = vst [vmem:[#allocation2 + $0xc8] sm:$0xff] 0.0
          %252 = vst [vmem:[#allocation2 + $0xd0] sm:$0xff] 0.0
          %253 = vst [vmem:[#allocation2 + $0xd8] sm:$0xff] 0.0
          %254 = vst [vmem:[#allocation2 + $0xe0] sm:$0xff] 0.0
          %255 = vst [vmem:[#allocation2 + $0xe8] sm:$0xff] 0.0
          %256 = vst [vmem:[#allocation2 + $0xf0] sm:$0xff] 0.0
          %257 = vst [vmem:[#allocation2 + $0xf8] sm:$0xff] 0.0
          %258 = vst [vmem:[#allocation2 + $0x100] sm:$0xff] 0.0
          %259 = vst [vmem:[#allocation2 + $0x108] sm:$0xff] 0.0
          %260 = vst [vmem:[#allocation2 + $0x110] sm:$0xff] 0.0
          %261 = vst [vmem:[#allocation2 + $0x118] sm:$0xff] 0.0
          %262 = vst [vmem:[#allocation2 + $0x120] sm:$0xff] 0.0
          %263 = vst [vmem:[#allocation2 + $0x128] sm:$0xff] 0.0
          %264 = vst [vmem:[#allocation2 + $0x130] sm:$0xff] 0.0
          %265 = vst [vmem:[#allocation2 + $0x138] sm:$0xff] 0.0
          %266 = vst [vmem:[#allocation2 + $0x140] sm:$0xff] 0.0
          %267 = vst [vmem:[#allocation2 + $0x148] sm:$0xff] 0.0
          %268 = vst [vmem:[#allocation2 + $0x150] sm:$0xff] 0.0
          %269 = vst [vmem:[#allocation2 + $0x158] sm:$0xff] 0.0
          %270 = vst [vmem:[#allocation2 + $0x160] sm:$0xff] 0.0
          %271 = vst [vmem:[#allocation2 + $0x168] sm:$0xff] 0.0
          %272 = vst [vmem:[#allocation2 + $0x170] sm:$0xff] 0.0
          %273 = vst [vmem:[#allocation2 + $0x178] sm:$0xff] 0.0
          %274 = vst [vmem:[#allocation2 + $0x180] sm:$0xff] 0.0
          %275 = vst [vmem:[#allocation2 + $0x188] sm:$0xff] 0.0
          %276 = vst [vmem:[#allocation2 + $0x190] sm:$0xff] 0.0
          %277 = vst [vmem:[#allocation2 + $0x198] sm:$0xff] 0.0
          %278 = vst [vmem:[#allocation2 + $0x1a0] sm:$0xff] 0.0
          %279 = vst [vmem:[#allocation2 + $0x1a8] sm:$0xff] 0.0
          %280 = vst [vmem:[#allocation2 + $0x1b0] sm:$0xff] 0.0
          %281 = vst [vmem:[#allocation2 + $0x1b8] sm:$0xff] 0.0
          %282 = vst [vmem:[#allocation2 + $0x1c0] sm:$0xff] 0.0
          %283 = vst [vmem:[#allocation2 + $0x1c8] sm:$0xff] 0.0
          %284 = vst [vmem:[#allocation2 + $0x1d0] sm:$0xff] 0.0
          %285 = vst [vmem:[#allocation2 + $0x1d8] sm:$0xff] 0.0
          %286 = vst [vmem:[#allocation2 + $0x1e0] sm:$0xff] 0.0
          %287 = vst [vmem:[#allocation2 + $0x1e8] sm:$0xff] 0.0
          %288 = vst [vmem:[#allocation2 + $0x1f0] sm:$0xff] 0.0
          %289 = vst [vmem:[#allocation2 + $0x1f8] sm:$0xff] 0.0
          %290 = vst [vmem:[#allocation2 + $0x200] sm:$0xff] 0.0
          %291 = vst [vmem:[#allocation2 + $0x208] sm:$0xff] 0.0
          %292 = vst [vmem:[#allocation2 + $0x210] sm:$0xff] 0.0
          %293 = vst [vmem:[#allocation2 + $0x218] sm:$0xff] 0.0
          %294 = vst [vmem:[#allocation2 + $0x220] sm:$0xff] 0.0
          %295 = vst [vmem:[#allocation2 + $0x228] sm:$0xff] 0.0
          %296 = vst [vmem:[#allocation2 + $0x230] sm:$0xff] 0.0
          %297 = vst [vmem:[#allocation2 + $0x238] sm:$0xff] 0.0
          %298 = vst [vmem:[#allocation2 + $0x240] sm:$0xff] 0.0
          %299 = vst [vmem:[#allocation2 + $0x248] sm:$0xff] 0.0
          %300 = vst [vmem:[#allocation2 + $0x250] sm:$0xff] 0.0
          %301 = vst [vmem:[#allocation2 + $0x258] sm:$0xff] 0.0
          %302 = vst [vmem:[#allocation2 + $0x260] sm:$0xff] 0.0
          %303 = vst [vmem:[#allocation2 + $0x268] sm:$0xff] 0.0
          %304 = vst [vmem:[#allocation2 + $0x270] sm:$0xff] 0.0
          %305 = vst [vmem:[#allocation2 + $0x278] sm:$0xff] 0.0
          %306 = vst [vmem:[#allocation2 + $0x280] sm:$0xff] 0.0
          %307 = vst [vmem:[#allocation2 + $0x288] sm:$0xff] 0.0
          %308 = vst [vmem:[#allocation2 + $0x290] sm:$0xff] 0.0
          %309 = vst [vmem:[#allocation2 + $0x298] sm:$0xff] 0.0
          %310 = vst [vmem:[#allocation2 + $0x2a0] sm:$0xff] 0.0
          %311 = vst [vmem:[#allocation2 + $0x2a8] sm:$0xff] 0.0
          %312 = vst [vmem:[#allocation2 + $0x2b0] sm:$0xff] 0.0
          %313 = vst [vmem:[#allocation2 + $0x2b8] sm:$0xff] 0.0
          %314 = vst [vmem:[#allocation2 + $0x2c0] sm:$0xff] 0.0
          %315 = vst [vmem:[#allocation2 + $0x2c8] sm:$0xff] 0.0
          %316 = vst [vmem:[#allocation2 + $0x2d0] sm:$0xff] 0.0
          %317 = vst [vmem:[#allocation2 + $0x2d8] sm:$0xff] 0.0
          %318 = vst [vmem:[#allocation2 + $0x2e0] sm:$0xff] 0.0
          %319 = vst [vmem:[#allocation2 + $0x2e8] sm:$0xff] 0.0
          %320 = vst [vmem:[#allocation2 + $0x2f0] sm:$0xff] 0.0
          %321 = vst [vmem:[#allocation2 + $0x2f8] sm:$0xff] 0.0
          %322 = vst [vmem:[#allocation2 + $0x300] sm:$0xff] 0.0
          %323 = vst [vmem:[#allocation2 + $0x308] sm:$0xff] 0.0
          %324 = vst [vmem:[#allocation2 + $0x310] sm:$0xff] 0.0
          %325 = vst [vmem:[#allocation2 + $0x318] sm:$0xff] 0.0
          %326 = vst [vmem:[#allocation2 + $0x320] sm:$0xff] 0.0
          %327 = vst [vmem:[#allocation2 + $0x328] sm:$0xff] 0.0
          %328 = vst [vmem:[#allocation2 + $0x330] sm:$0xff] 0.0
          %329 = vst [vmem:[#allocation2 + $0x338] sm:$0xff] 0.0
          %330 = vst [vmem:[#allocation2 + $0x340] sm:$0xff] 0.0
          %331 = vst [vmem:[#allocation2 + $0x348] sm:$0xff] 0.0
          %332 = vst [vmem:[#allocation2 + $0x350] sm:$0xff] 0.0
          %333 = vst [vmem:[#allocation2 + $0x358] sm:$0xff] 0.0
          %334 = vst [vmem:[#allocation2 + $0x360] sm:$0xff] 0.0
          %335 = vst [vmem:[#allocation2 + $0x368] sm:$0xff] 0.0
          %336 = vst [vmem:[#allocation2 + $0x370] sm:$0xff] 0.0
          %337 = vst [vmem:[#allocation2 + $0x378] sm:$0xff] 0.0
          %338 = vst [vmem:[#allocation2 + $0x380] sm:$0xff] 0.0
          %339 = vst [vmem:[#allocation2 + $0x388] sm:$0xff] 0.0
          %340 = vst [vmem:[#allocation2 + $0x390] sm:$0xff] 0.0
          %341 = vst [vmem:[#allocation2 + $0x398] sm:$0xff] 0.0
          %342 = vst [vmem:[#allocation2 + $0x3a0] sm:$0xff] 0.0
          %343 = vst [vmem:[#allocation2 + $0x3a8] sm:$0xff] 0.0
          %344 = vst [vmem:[#allocation2 + $0x3b0] sm:$0xff] 0.0
          %345 = vst [vmem:[#allocation2 + $0x3b8] sm:$0xff] 0.0
          %346 = vst [vmem:[#allocation2 + $0x3c0] sm:$0xff] 0.0
          %347 = vst [vmem:[#allocation2 + $0x3c8] sm:$0xff] 0.0
          %348 = vst [vmem:[#allocation2 + $0x3d0] sm:$0xff] 0.0
          %349 = vst [vmem:[#allocation2 + $0x3d8] sm:$0xff] 0.0
          %350 = vst [vmem:[#allocation2 + $0x3e0] sm:$0xff] 0.0
          %351 = vst [vmem:[#allocation2 + $0x3e8] sm:$0xff] 0.0
          %352 = vst [vmem:[#allocation2 + $0x3f0] sm:$0xff] 0.0
          %353 = vst [vmem:[#allocation2 + $0x3f8] sm:$0xff] 0.0
        $region40: #{tpu_custom_call.1} parent=27 // pred_fallthru
          _
        %v354 = vld [vmem:[#allocation2] sm:$0xff]
        %v355 = vld [vmem:[#allocation2 + $0x8] sm:$0xff]
        %v356 = vld [vmem:[#allocation2 + $0x10] sm:$0xff]
        %v357 = vld [vmem:[#allocation2 + $0x18] sm:$0xff]
        %v358 = vld [vmem:[#allocation2 + $0x20] sm:$0xff]
        %v359 = vld [vmem:[#allocation2 + $0x28] sm:$0xff]
        %v360 = vld [vmem:[#allocation2 + $0x30] sm:$0xff]
        %v361 = vld [vmem:[#allocation2 + $0x38] sm:$0xff]
        %v362 = vld [vmem:[#allocation2 + $0x40] sm:$0xff]
        %v363 = vld [vmem:[#allocation2 + $0x48] sm:$0xff]
        %v364 = vld [vmem:[#allocation2 + $0x50] sm:$0xff]
        %v365 = vld [vmem:[#allocation2 + $0x58] sm:$0xff]
        %v366 = vld [vmem:[#allocation2 + $0x60] sm:$0xff]
        %v367 = vld [vmem:[#allocation2 + $0x68] sm:$0xff]
        %v368 = vld [vmem:[#allocation2 + $0x70] sm:$0xff]
        %v369 = vld [vmem:[#allocation2 + $0x78] sm:$0xff]
        %v370 = vld [vmem:[#allocation2 + $0x80] sm:$0xff]
        %v371 = vld [vmem:[#allocation2 + $0x88] sm:$0xff]
        %v372 = vld [vmem:[#allocation2 + $0x90] sm:$0xff]
        %v373 = vld [vmem:[#allocation2 + $0x98] sm:$0xff]
        %v374 = vld [vmem:[#allocation2 + $0xa0] sm:$0xff]
        %v375 = vld [vmem:[#allocation2 + $0xa8] sm:$0xff]
        %v376 = vld [vmem:[#allocation2 + $0xb0] sm:$0xff]
        %v377 = vld [vmem:[#allocation2 + $0xb8] sm:$0xff]
        %v378 = vld [vmem:[#allocation2 + $0xc0] sm:$0xff]
        %v379 = vld [vmem:[#allocation2 + $0xc8] sm:$0xff]
        %v380 = vld [vmem:[#allocation2 + $0xd0] sm:$0xff]
        %v381 = vld [vmem:[#allocation2 + $0xd8] sm:$0xff]
        %v382 = vld [vmem:[#allocation2 + $0xe0] sm:$0xff]
        %v383 = vld [vmem:[#allocation2 + $0xe8] sm:$0xff]
        %v384 = vld [vmem:[#allocation2 + $0xf0] sm:$0xff]
        %v385 = vld [vmem:[#allocation2 + $0xf8] sm:$0xff]
        %v386 = vld [vmem:[#allocation2 + $0x100] sm:$0xff]
        %v387 = vld [vmem:[#allocation2 + $0x108] sm:$0xff]
        %v388 = vld [vmem:[#allocation2 + $0x110] sm:$0xff]
        %v389 = vld [vmem:[#allocation2 + $0x118] sm:$0xff]
        %v390 = vld [vmem:[#allocation2 + $0x120] sm:$0xff]
        %v391 = vld [vmem:[#allocation2 + $0x128] sm:$0xff]
        %v392 = vld [vmem:[#allocation2 + $0x130] sm:$0xff]
        %v393 = vld [vmem:[#allocation2 + $0x138] sm:$0xff]
        %v394 = vld [vmem:[#allocation2 + $0x140] sm:$0xff]
        %v395 = vld [vmem:[#allocation2 + $0x148] sm:$0xff]
        %v396 = vld [vmem:[#allocation2 + $0x150] sm:$0xff]
        %v397 = vld [vmem:[#allocation2 + $0x158] sm:$0xff]
        %v398 = vld [vmem:[#allocation2 + $0x160] sm:$0xff]
        %v399 = vld [vmem:[#allocation2 + $0x168] sm:$0xff]
        %v400 = vld [vmem:[#allocation2 + $0x170] sm:$0xff]
        %v401 = vld [vmem:[#allocation2 + $0x178] sm:$0xff]
        %v402 = vld [vmem:[#allocation2 + $0x180] sm:$0xff]
        %v403 = vld [vmem:[#allocation2 + $0x188] sm:$0xff]
        %v404 = vld [vmem:[#allocation2 + $0x190] sm:$0xff]
        %v405 = vld [vmem:[#allocation2 + $0x198] sm:$0xff]
        %v406 = vld [vmem:[#allocation2 + $0x1a0] sm:$0xff]
        %v407 = vld [vmem:[#allocation2 + $0x1a8] sm:$0xff]
        %v408 = vld [vmem:[#allocation2 + $0x1b0] sm:$0xff]
        %v409 = vld [vmem:[#allocation2 + $0x1b8] sm:$0xff]
        %v410 = vld [vmem:[#allocation2 + $0x1c0] sm:$0xff]
        %v411 = vld [vmem:[#allocation2 + $0x1c8] sm:$0xff]
        %v412 = vld [vmem:[#allocation2 + $0x1d0] sm:$0xff]
        %v413 = vld [vmem:[#allocation2 + $0x1d8] sm:$0xff]
        %v414 = vld [vmem:[#allocation2 + $0x1e0] sm:$0xff]
        %v415 = vld [vmem:[#allocation2 + $0x1e8] sm:$0xff]
        %v416 = vld [vmem:[#allocation2 + $0x1f0] sm:$0xff]
        %v417 = vld [vmem:[#allocation2 + $0x1f8] sm:$0xff]
        %v418 = vld [vmem:[#allocation2 + $0x200] sm:$0xff]
        %v419 = vld [vmem:[#allocation2 + $0x208] sm:$0xff]
        %v420 = vld [vmem:[#allocation2 + $0x210] sm:$0xff]
        %v421 = vld [vmem:[#allocation2 + $0x218] sm:$0xff]
        %v422 = vld [vmem:[#allocation2 + $0x220] sm:$0xff]
        %v423 = vld [vmem:[#allocation2 + $0x228] sm:$0xff]
        %v424 = vld [vmem:[#allocation2 + $0x230] sm:$0xff]
        %v425 = vld [vmem:[#allocation2 + $0x238] sm:$0xff]
        %v426 = vld [vmem:[#allocation2 + $0x240] sm:$0xff]
        %v427 = vld [vmem:[#allocation2 + $0x248] sm:$0xff]
        %v428 = vld [vmem:[#allocation2 + $0x250] sm:$0xff]
        %v429 = vld [vmem:[#allocation2 + $0x258] sm:$0xff]
        %v430 = vld [vmem:[#allocation2 + $0x260] sm:$0xff]
        %v431 = vld [vmem:[#allocation2 + $0x268] sm:$0xff]
        %v432 = vld [vmem:[#allocation2 + $0x270] sm:$0xff]
        %v433 = vld [vmem:[#allocation2 + $0x278] sm:$0xff]
        %v434 = vld [vmem:[#allocation2 + $0x280] sm:$0xff]
        %v435 = vld [vmem:[#allocation2 + $0x288] sm:$0xff]
        %v436 = vld [vmem:[#allocation2 + $0x290] sm:$0xff]
        %v437 = vld [vmem:[#allocation2 + $0x298] sm:$0xff]
        %v438 = vld [vmem:[#allocation2 + $0x2a0] sm:$0xff]
        %v439 = vld [vmem:[#allocation2 + $0x2a8] sm:$0xff]
        %v440 = vld [vmem:[#allocation2 + $0x2b0] sm:$0xff]
        %v441 = vld [vmem:[#allocation2 + $0x2b8] sm:$0xff]
        %v442 = vld [vmem:[#allocation2 + $0x2c0] sm:$0xff]
        %v443 = vld [vmem:[#allocation2 + $0x2c8] sm:$0xff]
        %v444 = vld [vmem:[#allocation2 + $0x2d0] sm:$0xff]
        %v445 = vld [vmem:[#allocation2 + $0x2d8] sm:$0xff]
        %v446 = vld [vmem:[#allocation2 + $0x2e0] sm:$0xff]
        %v447 = vld [vmem:[#allocation2 + $0x2e8] sm:$0xff]
        %v448 = vld [vmem:[#allocation2 + $0x2f0] sm:$0xff]
        %v449 = vld [vmem:[#allocation2 + $0x2f8] sm:$0xff]
        %v450 = vld [vmem:[#allocation2 + $0x300] sm:$0xff]
        %v451 = vld [vmem:[#allocation2 + $0x308] sm:$0xff]
        %v452 = vld [vmem:[#allocation2 + $0x310] sm:$0xff]
        %v453 = vld [vmem:[#allocation2 + $0x318] sm:$0xff]
        %v454 = vld [vmem:[#allocation2 + $0x320] sm:$0xff]
        %v455 = vld [vmem:[#allocation2 + $0x328] sm:$0xff]
        %v456 = vld [vmem:[#allocation2 + $0x330] sm:$0xff]
        %v457 = vld [vmem:[#allocation2 + $0x338] sm:$0xff]
        %v458 = vld [vmem:[#allocation2 + $0x340] sm:$0xff]
        %v459 = vld [vmem:[#allocation2 + $0x348] sm:$0xff]
        %v460 = vld [vmem:[#allocation2 + $0x350] sm:$0xff]
        %v461 = vld [vmem:[#allocation2 + $0x358] sm:$0xff]
        %v462 = vld [vmem:[#allocation2 + $0x360] sm:$0xff]
        %v463 = vld [vmem:[#allocation2 + $0x368] sm:$0xff]
        %v464 = vld [vmem:[#allocation2 + $0x370] sm:$0xff]
        %v465 = vld [vmem:[#allocation2 + $0x378] sm:$0xff]
        %v466 = vld [vmem:[#allocation2 + $0x380] sm:$0xff]
        %v467 = vld [vmem:[#allocation2 + $0x388] sm:$0xff]
        %v468 = vld [vmem:[#allocation2 + $0x390] sm:$0xff]
        %v469 = vld [vmem:[#allocation2 + $0x398] sm:$0xff]
        %v470 = vld [vmem:[#allocation2 + $0x3a0] sm:$0xff]
        %v471 = vld [vmem:[#allocation2 + $0x3a8] sm:$0xff]
        %v472 = vld [vmem:[#allocation2 + $0x3b0] sm:$0xff]
        %v473 = vld [vmem:[#allocation2 + $0x3b8] sm:$0xff]
        %v474 = vld [vmem:[#allocation2 + $0x3c0] sm:$0xff]
        %v475 = vld [vmem:[#allocation2 + $0x3c8] sm:$0xff]
        %v476 = vld [vmem:[#allocation2 + $0x3d0] sm:$0xff]
        %v477 = vld [vmem:[#allocation2 + $0x3d8] sm:$0xff]
        %v478 = vld [vmem:[#allocation2 + $0x3e0] sm:$0xff]
        %v479 = vld [vmem:[#allocation2 + $0x3e8] sm:$0xff]
        %v480 = vld [vmem:[#allocation2 + $0x3f0] sm:$0xff]
        %v481 = vld [vmem:[#allocation2 + $0x3f8] sm:$0xff]
        %v482 = vld [vmem:[#allocation3] sm:$0xff]
        %v483 = vld [vmem:[#allocation3 + $0x8] sm:$0xff]
        %v484 = vld [vmem:[#allocation3 + $0x10] sm:$0xff]
        %v485 = vld [vmem:[#allocation3 + $0x18] sm:$0xff]
        %v486 = vld [vmem:[#allocation3 + $0x20] sm:$0xff]
        %v487 = vld [vmem:[#allocation3 + $0x28] sm:$0xff]
        %v488 = vld [vmem:[#allocation3 + $0x30] sm:$0xff]
        %v489 = vld [vmem:[#allocation3 + $0x38] sm:$0xff]
        %v490 = vld [vmem:[#allocation3 + $0x40] sm:$0xff]
        %v491 = vld [vmem:[#allocation3 + $0x48] sm:$0xff]
        %v492 = vld [vmem:[#allocation3 + $0x50] sm:$0xff]
        %v493 = vld [vmem:[#allocation3 + $0x58] sm:$0xff]
        %v494 = vld [vmem:[#allocation3 + $0x60] sm:$0xff]
        %v495 = vld [vmem:[#allocation3 + $0x68] sm:$0xff]
        %v496 = vld [vmem:[#allocation3 + $0x70] sm:$0xff]
        %v497 = vld [vmem:[#allocation3 + $0x78] sm:$0xff]
        %v498 = vld [vmem:[#allocation3 + $0x80] sm:$0xff]
        %v499 = vld [vmem:[#allocation3 + $0x88] sm:$0xff]
        %v500 = vld [vmem:[#allocation3 + $0x90] sm:$0xff]
        %v501 = vld [vmem:[#allocation3 + $0x98] sm:$0xff]
        %v502 = vld [vmem:[#allocation3 + $0xa0] sm:$0xff]
        %v503 = vld [vmem:[#allocation3 + $0xa8] sm:$0xff]
        %v504 = vld [vmem:[#allocation3 + $0xb0] sm:$0xff]
        %v505 = vld [vmem:[#allocation3 + $0xb8] sm:$0xff]
        %v506 = vld [vmem:[#allocation3 + $0xc0] sm:$0xff]
        %v507 = vld [vmem:[#allocation3 + $0xc8] sm:$0xff]
        %v508 = vld [vmem:[#allocation3 + $0xd0] sm:$0xff]
        %v509 = vld [vmem:[#allocation3 + $0xd8] sm:$0xff]
        %v510 = vld [vmem:[#allocation3 + $0xe0] sm:$0xff]
        %v511 = vld [vmem:[#allocation3 + $0xe8] sm:$0xff]
        %v512 = vld [vmem:[#allocation3 + $0xf0] sm:$0xff]
        %v513 = vld [vmem:[#allocation3 + $0xf8] sm:$0xff]
        %v514 = vld [vmem:[#allocation3 + $0x100] sm:$0xff]
        %v515 = vld [vmem:[#allocation3 + $0x108] sm:$0xff]
        %v516 = vld [vmem:[#allocation3 + $0x110] sm:$0xff]
        %v517 = vld [vmem:[#allocation3 + $0x118] sm:$0xff]
        %v518 = vld [vmem:[#allocation3 + $0x120] sm:$0xff]
        %v519 = vld [vmem:[#allocation3 + $0x128] sm:$0xff]
        %v520 = vld [vmem:[#allocation3 + $0x130] sm:$0xff]
        %v521 = vld [vmem:[#allocation3 + $0x138] sm:$0xff]
        %v522 = vld [vmem:[#allocation3 + $0x140] sm:$0xff]
        %v523 = vld [vmem:[#allocation3 + $0x148] sm:$0xff]
        %v524 = vld [vmem:[#allocation3 + $0x150] sm:$0xff]
        %v525 = vld [vmem:[#allocation3 + $0x158] sm:$0xff]
        %v526 = vld [vmem:[#allocation3 + $0x160] sm:$0xff]
        %v527 = vld [vmem:[#allocation3 + $0x168] sm:$0xff]
        %v528 = vld [vmem:[#allocation3 + $0x170] sm:$0xff]
        %v529 = vld [vmem:[#allocation3 + $0x178] sm:$0xff]
        %v530 = vld [vmem:[#allocation3 + $0x180] sm:$0xff]
        %v531 = vld [vmem:[#allocation3 + $0x188] sm:$0xff]
        %v532 = vld [vmem:[#allocation3 + $0x190] sm:$0xff]
        %v533 = vld [vmem:[#allocation3 + $0x198] sm:$0xff]
        %v534 = vld [vmem:[#allocation3 + $0x1a0] sm:$0xff]
        %v535 = vld [vmem:[#allocation3 + $0x1a8] sm:$0xff]
        %v536 = vld [vmem:[#allocation3 + $0x1b0] sm:$0xff]
        %v537 = vld [vmem:[#allocation3 + $0x1b8] sm:$0xff]
        %v538 = vld [vmem:[#allocation3 + $0x1c0] sm:$0xff]
        %v539 = vld [vmem:[#allocation3 + $0x1c8] sm:$0xff]
        %v540 = vld [vmem:[#allocation3 + $0x1d0] sm:$0xff]
        %v541 = vld [vmem:[#allocation3 + $0x1d8] sm:$0xff]
        %v542 = vld [vmem:[#allocation3 + $0x1e0] sm:$0xff]
        %v543 = vld [vmem:[#allocation3 + $0x1e8] sm:$0xff]
        %v544 = vld [vmem:[#allocation3 + $0x1f0] sm:$0xff]
        %v545 = vld [vmem:[#allocation3 + $0x1f8] sm:$0xff]
        %v546 = vld [vmem:[#allocation3 + $0x200] sm:$0xff]
        %v547 = vld [vmem:[#allocation3 + $0x208] sm:$0xff]
        %v548 = vld [vmem:[#allocation3 + $0x210] sm:$0xff]
        %v549 = vld [vmem:[#allocation3 + $0x218] sm:$0xff]
        %v550 = vld [vmem:[#allocation3 + $0x220] sm:$0xff]
        %v551 = vld [vmem:[#allocation3 + $0x228] sm:$0xff]
        %v552 = vld [vmem:[#allocation3 + $0x230] sm:$0xff]
        %v553 = vld [vmem:[#allocation3 + $0x238] sm:$0xff]
        %v554 = vld [vmem:[#allocation3 + $0x240] sm:$0xff]
        %v555 = vld [vmem:[#allocation3 + $0x248] sm:$0xff]
        %v556 = vld [vmem:[#allocation3 + $0x250] sm:$0xff]
        %v557 = vld [vmem:[#allocation3 + $0x258] sm:$0xff]
        %v558 = vld [vmem:[#allocation3 + $0x260] sm:$0xff]
        %v559 = vld [vmem:[#allocation3 + $0x268] sm:$0xff]
        %v560 = vld [vmem:[#allocation3 + $0x270] sm:$0xff]
        %v561 = vld [vmem:[#allocation3 + $0x278] sm:$0xff]
        %v562 = vld [vmem:[#allocation3 + $0x280] sm:$0xff]
        %v563 = vld [vmem:[#allocation3 + $0x288] sm:$0xff]
        %v564 = vld [vmem:[#allocation3 + $0x290] sm:$0xff]
        %v565 = vld [vmem:[#allocation3 + $0x298] sm:$0xff]
        %v566 = vld [vmem:[#allocation3 + $0x2a0] sm:$0xff]
        %v567 = vld [vmem:[#allocation3 + $0x2a8] sm:$0xff]
        %v568 = vld [vmem:[#allocation3 + $0x2b0] sm:$0xff]
        %v569 = vld [vmem:[#allocation3 + $0x2b8] sm:$0xff]
        %v570 = vld [vmem:[#allocation3 + $0x2c0] sm:$0xff]
        %v571 = vld [vmem:[#allocation3 + $0x2c8] sm:$0xff]
        %v572 = vld [vmem:[#allocation3 + $0x2d0] sm:$0xff]
        %v573 = vld [vmem:[#allocation3 + $0x2d8] sm:$0xff]
        %v574 = vld [vmem:[#allocation3 + $0x2e0] sm:$0xff]
        %v575 = vld [vmem:[#allocation3 + $0x2e8] sm:$0xff]
        %v576 = vld [vmem:[#allocation3 + $0x2f0] sm:$0xff]
        %v577 = vld [vmem:[#allocation3 + $0x2f8] sm:$0xff]
        %v578 = vld [vmem:[#allocation3 + $0x300] sm:$0xff]
        %v579 = vld [vmem:[#allocation3 + $0x308] sm:$0xff]
        %v580 = vld [vmem:[#allocation3 + $0x310] sm:$0xff]
        %v581 = vld [vmem:[#allocation3 + $0x318] sm:$0xff]
        %v582 = vld [vmem:[#allocation3 + $0x320] sm:$0xff]
        %v583 = vld [vmem:[#allocation3 + $0x328] sm:$0xff]
        %v584 = vld [vmem:[#allocation3 + $0x330] sm:$0xff]
        %v585 = vld [vmem:[#allocation3 + $0x338] sm:$0xff]
        %v586 = vld [vmem:[#allocation3 + $0x340] sm:$0xff]
        %v587 = vld [vmem:[#allocation3 + $0x348] sm:$0xff]
        %v588 = vld [vmem:[#allocation3 + $0x350] sm:$0xff]
        %v589 = vld [vmem:[#allocation3 + $0x358] sm:$0xff]
        %v590 = vld [vmem:[#allocation3 + $0x360] sm:$0xff]
        %v591 = vld [vmem:[#allocation3 + $0x368] sm:$0xff]
        %v592 = vld [vmem:[#allocation3 + $0x370] sm:$0xff]
        %v593 = vld [vmem:[#allocation3 + $0x378] sm:$0xff]
        %v594 = vld [vmem:[#allocation3 + $0x380] sm:$0xff]
        %v595 = vld [vmem:[#allocation3 + $0x388] sm:$0xff]
        %v596 = vld [vmem:[#allocation3 + $0x390] sm:$0xff]
        %v597 = vld [vmem:[#allocation3 + $0x398] sm:$0xff]
        %v598 = vld [vmem:[#allocation3 + $0x3a0] sm:$0xff]
        %v599 = vld [vmem:[#allocation3 + $0x3a8] sm:$0xff]
        %v600 = vld [vmem:[#allocation3 + $0x3b0] sm:$0xff]
        %v601 = vld [vmem:[#allocation3 + $0x3b8] sm:$0xff]
        %v602 = vld [vmem:[#allocation3 + $0x3c0] sm:$0xff]
        %v603 = vld [vmem:[#allocation3 + $0x3c8] sm:$0xff]
        %v604 = vld [vmem:[#allocation3 + $0x3d0] sm:$0xff]
        %v605 = vld [vmem:[#allocation3 + $0x3d8] sm:$0xff]
        %v606 = vld [vmem:[#allocation3 + $0x3e0] sm:$0xff]
        %v607 = vld [vmem:[#allocation3 + $0x3e8] sm:$0xff]
        %v608 = vld [vmem:[#allocation3 + $0x3f0] sm:$0xff]
        %v609 = vld [vmem:[#allocation3 + $0x3f8] sm:$0xff]
        %v610 = vld [vmem:[%s195] sm:$0xff]
        %v611 = vld [vmem:[%s195 + $0x8] sm:$0xff]
        %v612 = vld [vmem:[%s195 + $0x10] sm:$0xff]
        %v613 = vld [vmem:[%s195 + $0x18] sm:$0xff]
        %v614 = vld [vmem:[%s195 + $0x20] sm:$0xff]
        %v615 = vld [vmem:[%s195 + $0x28] sm:$0xff]
        %v616 = vld [vmem:[%s195 + $0x30] sm:$0xff]
        %v617 = vld [vmem:[%s195 + $0x38] sm:$0xff]
        %v618 = vld [vmem:[%s195 + $0x40] sm:$0xff]
        %v619 = vld [vmem:[%s195 + $0x48] sm:$0xff]
        %v620 = vld [vmem:[%s195 + $0x50] sm:$0xff]
        %v621 = vld [vmem:[%s195 + $0x58] sm:$0xff]
        %v622 = vld [vmem:[%s195 + $0x60] sm:$0xff]
        %v623 = vld [vmem:[%s195 + $0x68] sm:$0xff]
        %v624 = vld [vmem:[%s195 + $0x70] sm:$0xff]
        %v625 = vld [vmem:[%s195 + $0x78] sm:$0xff]
        %v626 = vld [vmem:[%s195 + $0x80] sm:$0xff]
        %v627 = vld [vmem:[%s195 + $0x88] sm:$0xff]
        %v628 = vld [vmem:[%s195 + $0x90] sm:$0xff]
        %v629 = vld [vmem:[%s195 + $0x98] sm:$0xff]
        %v630 = vld [vmem:[%s195 + $0xa0] sm:$0xff]
        %v631 = vld [vmem:[%s195 + $0xa8] sm:$0xff]
        %v632 = vld [vmem:[%s195 + $0xb0] sm:$0xff]
        %v633 = vld [vmem:[%s195 + $0xb8] sm:$0xff]
        %v634 = vld [vmem:[%s195 + $0xc0] sm:$0xff]
        %v635 = vld [vmem:[%s195 + $0xc8] sm:$0xff]
        %v636 = vld [vmem:[%s195 + $0xd0] sm:$0xff]
        %v637 = vld [vmem:[%s195 + $0xd8] sm:$0xff]
        %v638 = vld [vmem:[%s195 + $0xe0] sm:$0xff]
        %v639 = vld [vmem:[%s195 + $0xe8] sm:$0xff]
        %v640 = vld [vmem:[%s195 + $0xf0] sm:$0xff]
        %v641 = vld [vmem:[%s195 + $0xf8] sm:$0xff]
        %v642 = vld [vmem:[%s195 + $0x100] sm:$0xff]
        %v643 = vld [vmem:[%s195 + $0x108] sm:$0xff]
        %v644 = vld [vmem:[%s195 + $0x110] sm:$0xff]
        %v645 = vld [vmem:[%s195 + $0x118] sm:$0xff]
        %v646 = vld [vmem:[%s195 + $0x120] sm:$0xff]
        %v647 = vld [vmem:[%s195 + $0x128] sm:$0xff]
        %v648 = vld [vmem:[%s195 + $0x130] sm:$0xff]
        %v649 = vld [vmem:[%s195 + $0x138] sm:$0xff]
        %v650 = vld [vmem:[%s195 + $0x140] sm:$0xff]
        %v651 = vld [vmem:[%s195 + $0x148] sm:$0xff]
        %v652 = vld [vmem:[%s195 + $0x150] sm:$0xff]
        %v653 = vld [vmem:[%s195 + $0x158] sm:$0xff]
        %v654 = vld [vmem:[%s195 + $0x160] sm:$0xff]
        %v655 = vld [vmem:[%s195 + $0x168] sm:$0xff]
        %v656 = vld [vmem:[%s195 + $0x170] sm:$0xff]
        %v657 = vld [vmem:[%s195 + $0x178] sm:$0xff]
        %v658 = vld [vmem:[%s195 + $0x180] sm:$0xff]
        %v659 = vld [vmem:[%s195 + $0x188] sm:$0xff]
        %v660 = vld [vmem:[%s195 + $0x190] sm:$0xff]
        %v661 = vld [vmem:[%s195 + $0x198] sm:$0xff]
        %v662 = vld [vmem:[%s195 + $0x1a0] sm:$0xff]
        %v663 = vld [vmem:[%s195 + $0x1a8] sm:$0xff]
        %v664 = vld [vmem:[%s195 + $0x1b0] sm:$0xff]
        %v665 = vld [vmem:[%s195 + $0x1b8] sm:$0xff]
        %v666 = vld [vmem:[%s195 + $0x1c0] sm:$0xff]
        %v667 = vld [vmem:[%s195 + $0x1c8] sm:$0xff]
        %v668 = vld [vmem:[%s195 + $0x1d0] sm:$0xff]
        %v669 = vld [vmem:[%s195 + $0x1d8] sm:$0xff]
        %v670 = vld [vmem:[%s195 + $0x1e0] sm:$0xff]
        %v671 = vld [vmem:[%s195 + $0x1e8] sm:$0xff]
        %v672 = vld [vmem:[%s195 + $0x1f0] sm:$0xff]
        %v673 = vld [vmem:[%s195 + $0x1f8] sm:$0xff]
        %v674 = vand.u32 %v641, 4294901760
        %675 = vmatprep.subr.mxu0 %v674
        %v676 = vand.u32 %v640, 4294901760
        %677 = vmatpush1.msra.mxu0 %v676
        %v678 = vand.u32 %v639, 4294901760
        %679 = vmatprep.subr.mxu0 %v678
        %v680 = vand.u32 %v638, 4294901760
        %681 = vmatpush1.msra.mxu0 %v680
        %v682 = vand.u32 %v637, 4294901760
        %683 = vmatprep.subr.mxu0 %v682
        %v684 = vand.u32 %v636, 4294901760
        %685 = vmatpush1.msra.mxu0 %v684
        %v686 = vand.u32 %v635, 4294901760
        %687 = vmatprep.subr.mxu0 %v686
        %v688 = vand.u32 %v634, 4294901760
        %689 = vmatpush1.msra.mxu0 %v688
        %v690 = vand.u32 %v633, 4294901760
        %691 = vmatprep.subr.mxu0 %v690
        %v692 = vand.u32 %v632, 4294901760
        %693 = vmatpush1.msra.mxu0 %v692
        %v694 = vand.u32 %v631, 4294901760
        %695 = vmatprep.subr.mxu0 %v694
        %v696 = vand.u32 %v630, 4294901760
        %697 = vmatpush1.msra.mxu0 %v696
        %v698 = vand.u32 %v629, 4294901760
        %699 = vmatprep.subr.mxu0 %v698
        %v700 = vand.u32 %v628, 4294901760
        %701 = vmatpush1.msra.mxu0 %v700
        %v702 = vand.u32 %v627, 4294901760
        %703 = vmatprep.subr.mxu0 %v702
        %v704 = vand.u32 %v626, 4294901760
        %705 = vmatpush1.msra.mxu0 %v704
        %v706 = vand.u32 %v625, 4294901760
        %707 = vmatprep.subr.mxu0 %v706
        %v708 = vand.u32 %v624, 4294901760
        %709 = vmatpush1.msra.mxu0 %v708
        %v710 = vand.u32 %v623, 4294901760
        %711 = vmatprep.subr.mxu0 %v710
        %v712 = vand.u32 %v622, 4294901760
        %713 = vmatpush1.msra.mxu0 %v712
        %v714 = vand.u32 %v621, 4294901760
        %715 = vmatprep.subr.mxu0 %v714
        %v716 = vand.u32 %v620, 4294901760
        %717 = vmatpush1.msra.mxu0 %v716
        %v718 = vand.u32 %v619, 4294901760
        %719 = vmatprep.subr.mxu0 %v718
        %v720 = vand.u32 %v618, 4294901760
        %721 = vmatpush1.msra.mxu0 %v720
        %v722 = vand.u32 %v617, 4294901760
        %723 = vmatprep.subr.mxu0 %v722
        %v724 = vand.u32 %v616, 4294901760
        %725 = vmatpush1.msra.mxu0 %v724
        %v726 = vand.u32 %v615, 4294901760
        %727 = vmatprep.subr.mxu0 %v726
        %v728 = vand.u32 %v614, 4294901760
        %729 = vmatpush1.msra.mxu0 %v728
        %v730 = vand.u32 %v613, 4294901760
        %731 = vmatprep.subr.mxu0 %v730
        %v732 = vand.u32 %v612, 4294901760
        %733 = vmatpush1.msra.mxu0 %v732
        %v734 = vand.u32 %v611, 4294901760
        %735 = vmatprep.subr.mxu0 %v734
        %v736 = vand.u32 %v610, 4294901760
        %737 = vmatpush1.msra.mxu0 %v736
        %v738 = vand.u32 %v673, 4294901760
        %739 = vmatprep.subr.mxu0 %v738
        %v740 = vand.u32 %v672, 4294901760
        %741 = vmatpush2.msra.mxu0 %v740
        %v742 = vand.u32 %v671, 4294901760
        %743 = vmatprep.subr.mxu0 %v742
        %v744 = vand.u32 %v670, 4294901760
        %745 = vmatpush2.msra.mxu0 %v744
        %v746 = vand.u32 %v669, 4294901760
        %747 = vmatprep.subr.mxu0 %v746
        %v748 = vand.u32 %v668, 4294901760
        %749 = vmatpush2.msra.mxu0 %v748
        %v750 = vand.u32 %v667, 4294901760
        %751 = vmatprep.subr.mxu0 %v750
        %v752 = vand.u32 %v666, 4294901760
        %753 = vmatpush2.msra.mxu0 %v752
        %v754 = vand.u32 %v665, 4294901760
        %755 = vmatprep.subr.mxu0 %v754
        %v756 = vand.u32 %v664, 4294901760
        %757 = vmatpush2.msra.mxu0 %v756
        %v758 = vand.u32 %v663, 4294901760
        %759 = vmatprep.subr.mxu0 %v758
        %v760 = vand.u32 %v662, 4294901760
        %761 = vmatpush2.msra.mxu0 %v760
        %v762 = vand.u32 %v661, 4294901760
        %763 = vmatprep.subr.mxu0 %v762
        %v764 = vand.u32 %v660, 4294901760
        %765 = vmatpush2.msra.mxu0 %v764
        %v766 = vand.u32 %v659, 4294901760
        %767 = vmatprep.subr.mxu0 %v766
        %v768 = vand.u32 %v658, 4294901760
        %769 = vmatpush2.msra.mxu0 %v768
        %v770 = vand.u32 %v657, 4294901760
        %771 = vmatprep.subr.mxu0 %v770
        %v772 = vand.u32 %v656, 4294901760
        %773 = vmatpush2.msra.mxu0 %v772
        %v774 = vand.u32 %v655, 4294901760
        %775 = vmatprep.subr.mxu0 %v774
        %v776 = vand.u32 %v654, 4294901760
        %777 = vmatpush2.msra.mxu0 %v776
        %v778 = vand.u32 %v653, 4294901760
        %779 = vmatprep.subr.mxu0 %v778
        %v780 = vand.u32 %v652, 4294901760
        %781 = vmatpush2.msra.mxu0 %v780
        %v782 = vand.u32 %v651, 4294901760
        %783 = vmatprep.subr.mxu0 %v782
        %v784 = vand.u32 %v650, 4294901760
        %785 = vmatpush2.msra.mxu0 %v784
        %v786 = vand.u32 %v649, 4294901760
        %787 = vmatprep.subr.mxu0 %v786
        %v788 = vand.u32 %v648, 4294901760
        %789 = vmatpush2.msra.mxu0 %v788
        %v790 = vand.u32 %v647, 4294901760
        %791 = vmatprep.subr.mxu0 %v790
        %v792 = vand.u32 %v646, 4294901760
        %793 = vmatpush2.msra.mxu0 %v792
        %v794 = vand.u32 %v645, 4294901760
        %795 = vmatprep.subr.mxu0 %v794
        %v796 = vand.u32 %v644, 4294901760
        %797 = vmatpush2.msra.mxu0 %v796
        %v798 = vand.u32 %v643, 4294901760
        %799 = vmatprep.subr.mxu0 %v798
        %v800 = vand.u32 %v642, 4294901760
        %801 = vmatpush2.msra.mxu0 %v800
        %v802 = vand.u32 %v483, 4294901760
        %v803 = vsub.f32 %v483, %v802
        %v804 = vand.u32 %v803, 4294901760
        %v805 = vsub.f32 %v803, %v804
        %v806 = vand.u32 %v805, 4294901760
        %807 = vmatprep.mubr.f32.mxu0 %v806
        %v808 = vand.u32 %v482, 4294901760
        %v809 = vsub.f32 %v482, %v808
        %v810 = vand.u32 %v809, 4294901760
        %v811 = vsub.f32 %v809, %v810
        %v812 = vand.u32 %v811, 4294901760
        %813 = vmatmul.mubr.f32.gmra.mxu0 %v812
        %v814 = vpop.f32.mrf.mxu0
        %v815 = vadd.f32 0.0, %v814
        %v816 = vpop.f32.mrf.mxu0
        %v817 = vadd.f32 0.0, %v816
        %v818 = vand.u32 %v485, 4294901760
        %v819 = vsub.f32 %v485, %v818
        %v820 = vand.u32 %v819, 4294901760
        %v821 = vsub.f32 %v819, %v820
        %v822 = vand.u32 %v821, 4294901760
        %823 = vmatprep.mubr.f32.mxu0 %v822
        %v824 = vand.u32 %v484, 4294901760
        %v825 = vsub.f32 %v484, %v824
        %v826 = vand.u32 %v825, 4294901760
        %v827 = vsub.f32 %v825, %v826
        %v828 = vand.u32 %v827, 4294901760
        %829 = vmatmul.mubr.f32.gmra.mxu0 %v828
        %v830 = vpop.f32.mrf.mxu0
        %v831 = vadd.f32 0.0, %v830
        %v832 = vpop.f32.mrf.mxu0
        %v833 = vadd.f32 0.0, %v832
        %v834 = vand.u32 %v487, 4294901760
        %v835 = vsub.f32 %v487, %v834
        %v836 = vand.u32 %v835, 4294901760
        %v837 = vsub.f32 %v835, %v836
        %v838 = vand.u32 %v837, 4294901760
        %839 = vmatprep.mubr.f32.mxu0 %v838
        %v840 = vand.u32 %v486, 4294901760
        %v841 = vsub.f32 %v486, %v840
        %v842 = vand.u32 %v841, 4294901760
        %v843 = vsub.f32 %v841, %v842
        %v844 = vand.u32 %v843, 4294901760
        %845 = vmatmul.mubr.f32.gmra.mxu0 %v844
        %v846 = vpop.f32.mrf.mxu0
        %v847 = vadd.f32 0.0, %v846
        %v848 = vpop.f32.mrf.mxu0
        %v849 = vadd.f32 0.0, %v848
        %v850 = vand.u32 %v489, 4294901760
        %v851 = vsub.f32 %v489, %v850
        %v852 = vand.u32 %v851, 4294901760
        %v853 = vsub.f32 %v851, %v852
        %v854 = vand.u32 %v853, 4294901760
        %855 = vmatprep.mubr.f32.mxu0 %v854
        %v856 = vand.u32 %v488, 4294901760
        %v857 = vsub.f32 %v488, %v856
        %v858 = vand.u32 %v857, 4294901760
        %v859 = vsub.f32 %v857, %v858
        %v860 = vand.u32 %v859, 4294901760
        %861 = vmatmul.mubr.f32.gmra.mxu0 %v860
        %v862 = vpop.f32.mrf.mxu0
        %v863 = vadd.f32 0.0, %v862
        %v864 = vpop.f32.mrf.mxu0
        %v865 = vadd.f32 0.0, %v864
        %v866 = vand.u32 %v491, 4294901760
        %v867 = vsub.f32 %v491, %v866
        %v868 = vand.u32 %v867, 4294901760
        %v869 = vsub.f32 %v867, %v868
        %v870 = vand.u32 %v869, 4294901760
        %871 = vmatprep.mubr.f32.mxu0 %v870
        %v872 = vand.u32 %v490, 4294901760
        %v873 = vsub.f32 %v490, %v872
        %v874 = vand.u32 %v873, 4294901760
        %v875 = vsub.f32 %v873, %v874
        %v876 = vand.u32 %v875, 4294901760
        %877 = vmatmul.mubr.f32.gmra.mxu0 %v876
        %v878 = vpop.f32.mrf.mxu0
        %v879 = vadd.f32 0.0, %v878
        %v880 = vpop.f32.mrf.mxu0
        %v881 = vadd.f32 0.0, %v880
        %v882 = vand.u32 %v493, 4294901760
        %v883 = vsub.f32 %v493, %v882
        %v884 = vand.u32 %v883, 4294901760
        %v885 = vsub.f32 %v883, %v884
        %v886 = vand.u32 %v885, 4294901760
        %887 = vmatprep.mubr.f32.mxu0 %v886
        %v888 = vand.u32 %v492, 4294901760
        %v889 = vsub.f32 %v492, %v888
        %v890 = vand.u32 %v889, 4294901760
        %v891 = vsub.f32 %v889, %v890
        %v892 = vand.u32 %v891, 4294901760
        %893 = vmatmul.mubr.f32.gmra.mxu0 %v892
        %v894 = vpop.f32.mrf.mxu0
        %v895 = vadd.f32 0.0, %v894
        %v896 = vpop.f32.mrf.mxu0
        %v897 = vadd.f32 0.0, %v896
        %v898 = vand.u32 %v495, 4294901760
        %v899 = vsub.f32 %v495, %v898
        %v900 = vand.u32 %v899, 4294901760
        %v901 = vsub.f32 %v899, %v900
        %v902 = vand.u32 %v901, 4294901760
        %903 = vmatprep.mubr.f32.mxu0 %v902
        %v904 = vand.u32 %v494, 4294901760
        %v905 = vsub.f32 %v494, %v904
        %v906 = vand.u32 %v905, 4294901760
        %v907 = vsub.f32 %v905, %v906
        %v908 = vand.u32 %v907, 4294901760
        %909 = vmatmul.mubr.f32.gmra.mxu0 %v908
        %v910 = vpop.f32.mrf.mxu0
        %v911 = vadd.f32 0.0, %v910
        %v912 = vpop.f32.mrf.mxu0
        %v913 = vadd.f32 0.0, %v912
        %v914 = vand.u32 %v497, 4294901760
        %v915 = vsub.f32 %v497, %v914
        %v916 = vand.u32 %v915, 4294901760
        %v917 = vsub.f32 %v915, %v916
        %v918 = vand.u32 %v917, 4294901760
        %919 = vmatprep.mubr.f32.mxu0 %v918
        %v920 = vand.u32 %v496, 4294901760
        %v921 = vsub.f32 %v496, %v920
        %v922 = vand.u32 %v921, 4294901760
        %v923 = vsub.f32 %v921, %v922
        %v924 = vand.u32 %v923, 4294901760
        %925 = vmatmul.mubr.f32.gmra.mxu0 %v924
        %v926 = vpop.f32.mrf.mxu0
        %v927 = vadd.f32 0.0, %v926
        %v928 = vpop.f32.mrf.mxu0
        %v929 = vadd.f32 0.0, %v928
        %v930 = vand.u32 %v499, 4294901760
        %v931 = vsub.f32 %v499, %v930
        %v932 = vand.u32 %v931, 4294901760
        %v933 = vsub.f32 %v931, %v932
        %v934 = vand.u32 %v933, 4294901760
        %935 = vmatprep.mubr.f32.mxu0 %v934
        %v936 = vand.u32 %v498, 4294901760
        %v937 = vsub.f32 %v498, %v936
        %v938 = vand.u32 %v937, 4294901760
        %v939 = vsub.f32 %v937, %v938
        %v940 = vand.u32 %v939, 4294901760
        %941 = vmatmul.mubr.f32.gmra.mxu0 %v940
        %v942 = vpop.f32.mrf.mxu0
        %v943 = vadd.f32 0.0, %v942
        %v944 = vpop.f32.mrf.mxu0
        %v945 = vadd.f32 0.0, %v944
        %v946 = vand.u32 %v501, 4294901760
        %v947 = vsub.f32 %v501, %v946
        %v948 = vand.u32 %v947, 4294901760
        %v949 = vsub.f32 %v947, %v948
        %v950 = vand.u32 %v949, 4294901760
        %951 = vmatprep.mubr.f32.mxu0 %v950
        %v952 = vand.u32 %v500, 4294901760
        %v953 = vsub.f32 %v500, %v952
        %v954 = vand.u32 %v953, 4294901760
        %v955 = vsub.f32 %v953, %v954
        %v956 = vand.u32 %v955, 4294901760
        %957 = vmatmul.mubr.f32.gmra.mxu0 %v956
        %v958 = vpop.f32.mrf.mxu0
        %v959 = vadd.f32 0.0, %v958
        %v960 = vpop.f32.mrf.mxu0
        %v961 = vadd.f32 0.0, %v960
        %v962 = vand.u32 %v503, 4294901760
        %v963 = vsub.f32 %v503, %v962
        %v964 = vand.u32 %v963, 4294901760
        %v965 = vsub.f32 %v963, %v964
        %v966 = vand.u32 %v965, 4294901760
        %967 = vmatprep.mubr.f32.mxu0 %v966
        %v968 = vand.u32 %v502, 4294901760
        %v969 = vsub.f32 %v502, %v968
        %v970 = vand.u32 %v969, 4294901760
        %v971 = vsub.f32 %v969, %v970
        %v972 = vand.u32 %v971, 4294901760
        %973 = vmatmul.mubr.f32.gmra.mxu0 %v972
        %v974 = vpop.f32.mrf.mxu0
        %v975 = vadd.f32 0.0, %v974
        %v976 = vpop.f32.mrf.mxu0
        %v977 = vadd.f32 0.0, %v976
        %v978 = vand.u32 %v505, 4294901760
        %v979 = vsub.f32 %v505, %v978
        %v980 = vand.u32 %v979, 4294901760
        %v981 = vsub.f32 %v979, %v980
        %v982 = vand.u32 %v981, 4294901760
        %983 = vmatprep.mubr.f32.mxu0 %v982
        %v984 = vand.u32 %v504, 4294901760
        %v985 = vsub.f32 %v504, %v984
        %v986 = vand.u32 %v985, 4294901760
        %v987 = vsub.f32 %v985, %v986
        %v988 = vand.u32 %v987, 4294901760
        %989 = vmatmul.mubr.f32.gmra.mxu0 %v988
        %v990 = vpop.f32.mrf.mxu0
        %v991 = vadd.f32 0.0, %v990
        %v992 = vpop.f32.mrf.mxu0
        %v993 = vadd.f32 0.0, %v992
        %v994 = vand.u32 %v507, 4294901760
        %v995 = vsub.f32 %v507, %v994
        %v996 = vand.u32 %v995, 4294901760
        %v997 = vsub.f32 %v995, %v996
        %v998 = vand.u32 %v997, 4294901760
        %999 = vmatprep.mubr.f32.mxu0 %v998
        %v1000 = vand.u32 %v506, 4294901760
        %v1001 = vsub.f32 %v506, %v1000
        %v1002 = vand.u32 %v1001, 4294901760
        %v1003 = vsub.f32 %v1001, %v1002
        %v1004 = vand.u32 %v1003, 4294901760
        %1005 = vmatmul.mubr.f32.gmra.mxu0 %v1004
        %v1006 = vpop.f32.mrf.mxu0
        %v1007 = vadd.f32 0.0, %v1006
        %v1008 = vpop.f32.mrf.mxu0
        %v1009 = vadd.f32 0.0, %v1008
        %v1010 = vand.u32 %v509, 4294901760
        %v1011 = vsub.f32 %v509, %v1010
        %v1012 = vand.u32 %v1011, 4294901760
        %v1013 = vsub.f32 %v1011, %v1012
        %v1014 = vand.u32 %v1013, 4294901760
        %1015 = vmatprep.mubr.f32.mxu0 %v1014
        %v1016 = vand.u32 %v508, 4294901760
        %v1017 = vsub.f32 %v508, %v1016
        %v1018 = vand.u32 %v1017, 4294901760
        %v1019 = vsub.f32 %v1017, %v1018
        %v1020 = vand.u32 %v1019, 4294901760
        %1021 = vmatmul.mubr.f32.gmra.mxu0 %v1020
        %v1022 = vpop.f32.mrf.mxu0
        %v1023 = vadd.f32 0.0, %v1022
        %v1024 = vpop.f32.mrf.mxu0
        %v1025 = vadd.f32 0.0, %v1024
        %v1026 = vand.u32 %v511, 4294901760
        %v1027 = vsub.f32 %v511, %v1026
        %v1028 = vand.u32 %v1027, 4294901760
        %v1029 = vsub.f32 %v1027, %v1028
        %v1030 = vand.u32 %v1029, 4294901760
        %1031 = vmatprep.mubr.f32.mxu0 %v1030
        %v1032 = vand.u32 %v510, 4294901760
        %v1033 = vsub.f32 %v510, %v1032
        %v1034 = vand.u32 %v1033, 4294901760
        %v1035 = vsub.f32 %v1033, %v1034
        %v1036 = vand.u32 %v1035, 4294901760
        %1037 = vmatmul.mubr.f32.gmra.mxu0 %v1036
        %v1038 = vpop.f32.mrf.mxu0
        %v1039 = vadd.f32 0.0, %v1038
        %v1040 = vpop.f32.mrf.mxu0
        %v1041 = vadd.f32 0.0, %v1040
        %v1042 = vand.u32 %v513, 4294901760
        %v1043 = vsub.f32 %v513, %v1042
        %v1044 = vand.u32 %v1043, 4294901760
        %v1045 = vsub.f32 %v1043, %v1044
        %v1046 = vand.u32 %v1045, 4294901760
        %1047 = vmatprep.mubr.f32.mxu0 %v1046
        %v1048 = vand.u32 %v512, 4294901760
        %v1049 = vsub.f32 %v512, %v1048
        %v1050 = vand.u32 %v1049, 4294901760
        %v1051 = vsub.f32 %v1049, %v1050
        %v1052 = vand.u32 %v1051, 4294901760
        %1053 = vmatmul.mubr.f32.gmra.mxu0 %v1052
        %v1054 = vpop.f32.mrf.mxu0
        %v1055 = vadd.f32 0.0, %v1054
        %v1056 = vpop.f32.mrf.mxu0
        %v1057 = vadd.f32 0.0, %v1056
        %v1058 = vand.u32 %v515, 4294901760
        %v1059 = vsub.f32 %v515, %v1058
        %v1060 = vand.u32 %v1059, 4294901760
        %v1061 = vsub.f32 %v1059, %v1060
        %v1062 = vand.u32 %v1061, 4294901760
        %1063 = vmatprep.mubr.f32.mxu0 %v1062
        %v1064 = vand.u32 %v514, 4294901760
        %v1065 = vsub.f32 %v514, %v1064
        %v1066 = vand.u32 %v1065, 4294901760
        %v1067 = vsub.f32 %v1065, %v1066
        %v1068 = vand.u32 %v1067, 4294901760
        %1069 = vmatmul.mubr.f32.gmra.mxu0 %v1068
        %v1070 = vpop.f32.mrf.mxu0
        %v1071 = vadd.f32 0.0, %v1070
        %v1072 = vpop.f32.mrf.mxu0
        %v1073 = vadd.f32 0.0, %v1072
        %v1074 = vand.u32 %v517, 4294901760
        %v1075 = vsub.f32 %v517, %v1074
        %v1076 = vand.u32 %v1075, 4294901760
        %v1077 = vsub.f32 %v1075, %v1076
        %v1078 = vand.u32 %v1077, 4294901760
        %1079 = vmatprep.mubr.f32.mxu0 %v1078
        %v1080 = vand.u32 %v516, 4294901760
        %v1081 = vsub.f32 %v516, %v1080
        %v1082 = vand.u32 %v1081, 4294901760
        %v1083 = vsub.f32 %v1081, %v1082
        %v1084 = vand.u32 %v1083, 4294901760
        %1085 = vmatmul.mubr.f32.gmra.mxu0 %v1084
        %v1086 = vpop.f32.mrf.mxu0
        %v1087 = vadd.f32 0.0, %v1086
        %v1088 = vpop.f32.mrf.mxu0
        %v1089 = vadd.f32 0.0, %v1088
        %v1090 = vand.u32 %v519, 4294901760
        %v1091 = vsub.f32 %v519, %v1090
        %v1092 = vand.u32 %v1091, 4294901760
        %v1093 = vsub.f32 %v1091, %v1092
        %v1094 = vand.u32 %v1093, 4294901760
        %1095 = vmatprep.mubr.f32.mxu0 %v1094
        %v1096 = vand.u32 %v518, 4294901760
        %v1097 = vsub.f32 %v518, %v1096
        %v1098 = vand.u32 %v1097, 4294901760
        %v1099 = vsub.f32 %v1097, %v1098
        %v1100 = vand.u32 %v1099, 4294901760
        %1101 = vmatmul.mubr.f32.gmra.mxu0 %v1100
        %v1102 = vpop.f32.mrf.mxu0
        %v1103 = vadd.f32 0.0, %v1102
        %v1104 = vpop.f32.mrf.mxu0
        %v1105 = vadd.f32 0.0, %v1104
        %v1106 = vand.u32 %v521, 4294901760
        %v1107 = vsub.f32 %v521, %v1106
        %v1108 = vand.u32 %v1107, 4294901760
        %v1109 = vsub.f32 %v1107, %v1108
        %v1110 = vand.u32 %v1109, 4294901760
        %1111 = vmatprep.mubr.f32.mxu0 %v1110
        %v1112 = vand.u32 %v520, 4294901760
        %v1113 = vsub.f32 %v520, %v1112
        %v1114 = vand.u32 %v1113, 4294901760
        %v1115 = vsub.f32 %v1113, %v1114
        %v1116 = vand.u32 %v1115, 4294901760
        %1117 = vmatmul.mubr.f32.gmra.mxu0 %v1116
        %v1118 = vpop.f32.mrf.mxu0
        %v1119 = vadd.f32 0.0, %v1118
        %v1120 = vpop.f32.mrf.mxu0
        %v1121 = vadd.f32 0.0, %v1120
        %v1122 = vand.u32 %v523, 4294901760
        %v1123 = vsub.f32 %v523, %v1122
        %v1124 = vand.u32 %v1123, 4294901760
        %v1125 = vsub.f32 %v1123, %v1124
        %v1126 = vand.u32 %v1125, 4294901760
        %1127 = vmatprep.mubr.f32.mxu0 %v1126
        %v1128 = vand.u32 %v522, 4294901760
        %v1129 = vsub.f32 %v522, %v1128
        %v1130 = vand.u32 %v1129, 4294901760
        %v1131 = vsub.f32 %v1129, %v1130
        %v1132 = vand.u32 %v1131, 4294901760
        %1133 = vmatmul.mubr.f32.gmra.mxu0 %v1132
        %v1134 = vpop.f32.mrf.mxu0
        %v1135 = vadd.f32 0.0, %v1134
        %v1136 = vpop.f32.mrf.mxu0
        %v1137 = vadd.f32 0.0, %v1136
        %v1138 = vand.u32 %v525, 4294901760
        %v1139 = vsub.f32 %v525, %v1138
        %v1140 = vand.u32 %v1139, 4294901760
        %v1141 = vsub.f32 %v1139, %v1140
        %v1142 = vand.u32 %v1141, 4294901760
        %1143 = vmatprep.mubr.f32.mxu0 %v1142
        %v1144 = vand.u32 %v524, 4294901760
        %v1145 = vsub.f32 %v524, %v1144
        %v1146 = vand.u32 %v1145, 4294901760
        %v1147 = vsub.f32 %v1145, %v1146
        %v1148 = vand.u32 %v1147, 4294901760
        %1149 = vmatmul.mubr.f32.gmra.mxu0 %v1148
        %v1150 = vpop.f32.mrf.mxu0
        %v1151 = vadd.f32 0.0, %v1150
        %v1152 = vpop.f32.mrf.mxu0
        %v1153 = vadd.f32 0.0, %v1152
        %v1154 = vand.u32 %v527, 4294901760
        %v1155 = vsub.f32 %v527, %v1154
        %v1156 = vand.u32 %v1155, 4294901760
        %v1157 = vsub.f32 %v1155, %v1156
        %v1158 = vand.u32 %v1157, 4294901760
        %1159 = vmatprep.mubr.f32.mxu0 %v1158
        %v1160 = vand.u32 %v526, 4294901760
        %v1161 = vsub.f32 %v526, %v1160
        %v1162 = vand.u32 %v1161, 4294901760
        %v1163 = vsub.f32 %v1161, %v1162
        %v1164 = vand.u32 %v1163, 4294901760
        %1165 = vmatmul.mubr.f32.gmra.mxu0 %v1164
        %v1166 = vpop.f32.mrf.mxu0
        %v1167 = vadd.f32 0.0, %v1166
        %v1168 = vpop.f32.mrf.mxu0
        %v1169 = vadd.f32 0.0, %v1168
        %v1170 = vand.u32 %v529, 4294901760
        %v1171 = vsub.f32 %v529, %v1170
        %v1172 = vand.u32 %v1171, 4294901760
        %v1173 = vsub.f32 %v1171, %v1172
        %v1174 = vand.u32 %v1173, 4294901760
        %1175 = vmatprep.mubr.f32.mxu0 %v1174
        %v1176 = vand.u32 %v528, 4294901760
        %v1177 = vsub.f32 %v528, %v1176
        %v1178 = vand.u32 %v1177, 4294901760
        %v1179 = vsub.f32 %v1177, %v1178
        %v1180 = vand.u32 %v1179, 4294901760
        %1181 = vmatmul.mubr.f32.gmra.mxu0 %v1180
        %v1182 = vpop.f32.mrf.mxu0
        %v1183 = vadd.f32 0.0, %v1182
        %v1184 = vpop.f32.mrf.mxu0
        %v1185 = vadd.f32 0.0, %v1184
        %v1186 = vand.u32 %v531, 4294901760
        %v1187 = vsub.f32 %v531, %v1186
        %v1188 = vand.u32 %v1187, 4294901760
        %v1189 = vsub.f32 %v1187, %v1188
        %v1190 = vand.u32 %v1189, 4294901760
        %1191 = vmatprep.mubr.f32.mxu0 %v1190
        %v1192 = vand.u32 %v530, 4294901760
        %v1193 = vsub.f32 %v530, %v1192
        %v1194 = vand.u32 %v1193, 4294901760
        %v1195 = vsub.f32 %v1193, %v1194
        %v1196 = vand.u32 %v1195, 4294901760
        %1197 = vmatmul.mubr.f32.gmra.mxu0 %v1196
        %v1198 = vpop.f32.mrf.mxu0
        %v1199 = vadd.f32 0.0, %v1198
        %v1200 = vpop.f32.mrf.mxu0
        %v1201 = vadd.f32 0.0, %v1200
        %v1202 = vand.u32 %v533, 4294901760
        %v1203 = vsub.f32 %v533, %v1202
        %v1204 = vand.u32 %v1203, 4294901760
        %v1205 = vsub.f32 %v1203, %v1204
        %v1206 = vand.u32 %v1205, 4294901760
        %1207 = vmatprep.mubr.f32.mxu0 %v1206
        %v1208 = vand.u32 %v532, 4294901760
        %v1209 = vsub.f32 %v532, %v1208
        %v1210 = vand.u32 %v1209, 4294901760
        %v1211 = vsub.f32 %v1209, %v1210
        %v1212 = vand.u32 %v1211, 4294901760
        %1213 = vmatmul.mubr.f32.gmra.mxu0 %v1212
        %v1214 = vpop.f32.mrf.mxu0
        %v1215 = vadd.f32 0.0, %v1214
        %v1216 = vpop.f32.mrf.mxu0
        %v1217 = vadd.f32 0.0, %v1216
        %v1218 = vand.u32 %v535, 4294901760
        %v1219 = vsub.f32 %v535, %v1218
        %v1220 = vand.u32 %v1219, 4294901760
        %v1221 = vsub.f32 %v1219, %v1220
        %v1222 = vand.u32 %v1221, 4294901760
        %1223 = vmatprep.mubr.f32.mxu0 %v1222
        %v1224 = vand.u32 %v534, 4294901760
        %v1225 = vsub.f32 %v534, %v1224
        %v1226 = vand.u32 %v1225, 4294901760
        %v1227 = vsub.f32 %v1225, %v1226
        %v1228 = vand.u32 %v1227, 4294901760
        %1229 = vmatmul.mubr.f32.gmra.mxu0 %v1228
        %v1230 = vpop.f32.mrf.mxu0
        %v1231 = vadd.f32 0.0, %v1230
        %v1232 = vpop.f32.mrf.mxu0
        %v1233 = vadd.f32 0.0, %v1232
        %v1234 = vand.u32 %v537, 4294901760
        %v1235 = vsub.f32 %v537, %v1234
        %v1236 = vand.u32 %v1235, 4294901760
        %v1237 = vsub.f32 %v1235, %v1236
        %v1238 = vand.u32 %v1237, 4294901760
        %1239 = vmatprep.mubr.f32.mxu0 %v1238
        %v1240 = vand.u32 %v536, 4294901760
        %v1241 = vsub.f32 %v536, %v1240
        %v1242 = vand.u32 %v1241, 4294901760
        %v1243 = vsub.f32 %v1241, %v1242
        %v1244 = vand.u32 %v1243, 4294901760
        %1245 = vmatmul.mubr.f32.gmra.mxu0 %v1244
        %v1246 = vpop.f32.mrf.mxu0
        %v1247 = vadd.f32 0.0, %v1246
        %v1248 = vpop.f32.mrf.mxu0
        %v1249 = vadd.f32 0.0, %v1248
        %v1250 = vand.u32 %v539, 4294901760
        %v1251 = vsub.f32 %v539, %v1250
        %v1252 = vand.u32 %v1251, 4294901760
        %v1253 = vsub.f32 %v1251, %v1252
        %v1254 = vand.u32 %v1253, 4294901760
        %1255 = vmatprep.mubr.f32.mxu0 %v1254
        %v1256 = vand.u32 %v538, 4294901760
        %v1257 = vsub.f32 %v538, %v1256
        %v1258 = vand.u32 %v1257, 4294901760
        %v1259 = vsub.f32 %v1257, %v1258
        %v1260 = vand.u32 %v1259, 4294901760
        %1261 = vmatmul.mubr.f32.gmra.mxu0 %v1260
        %v1262 = vpop.f32.mrf.mxu0
        %v1263 = vadd.f32 0.0, %v1262
        %v1264 = vpop.f32.mrf.mxu0
        %v1265 = vadd.f32 0.0, %v1264
        %v1266 = vand.u32 %v541, 4294901760
        %v1267 = vsub.f32 %v541, %v1266
        %v1268 = vand.u32 %v1267, 4294901760
        %v1269 = vsub.f32 %v1267, %v1268
        %v1270 = vand.u32 %v1269, 4294901760
        %1271 = vmatprep.mubr.f32.mxu0 %v1270
        %v1272 = vand.u32 %v540, 4294901760
        %v1273 = vsub.f32 %v540, %v1272
        %v1274 = vand.u32 %v1273, 4294901760
        %v1275 = vsub.f32 %v1273, %v1274
        %v1276 = vand.u32 %v1275, 4294901760
        %1277 = vmatmul.mubr.f32.gmra.mxu0 %v1276
        %v1278 = vpop.f32.mrf.mxu0
        %v1279 = vadd.f32 0.0, %v1278
        %v1280 = vpop.f32.mrf.mxu0
        %v1281 = vadd.f32 0.0, %v1280
        %v1282 = vand.u32 %v543, 4294901760
        %v1283 = vsub.f32 %v543, %v1282
        %v1284 = vand.u32 %v1283, 4294901760
        %v1285 = vsub.f32 %v1283, %v1284
        %v1286 = vand.u32 %v1285, 4294901760
        %1287 = vmatprep.mubr.f32.mxu0 %v1286
        %v1288 = vand.u32 %v542, 4294901760
        %v1289 = vsub.f32 %v542, %v1288
        %v1290 = vand.u32 %v1289, 4294901760
        %v1291 = vsub.f32 %v1289, %v1290
        %v1292 = vand.u32 %v1291, 4294901760
        %1293 = vmatmul.mubr.f32.gmra.mxu0 %v1292
        %v1294 = vpop.f32.mrf.mxu0
        %v1295 = vadd.f32 0.0, %v1294
        %v1296 = vpop.f32.mrf.mxu0
        %v1297 = vadd.f32 0.0, %v1296
        %v1298 = vand.u32 %v545, 4294901760
        %v1299 = vsub.f32 %v545, %v1298
        %v1300 = vand.u32 %v1299, 4294901760
        %v1301 = vsub.f32 %v1299, %v1300
        %v1302 = vand.u32 %v1301, 4294901760
        %1303 = vmatprep.mubr.f32.mxu0 %v1302
        %v1304 = vand.u32 %v544, 4294901760
        %v1305 = vsub.f32 %v544, %v1304
        %v1306 = vand.u32 %v1305, 4294901760
        %v1307 = vsub.f32 %v1305, %v1306
        %v1308 = vand.u32 %v1307, 4294901760
        %1309 = vmatmul.mubr.f32.gmra.mxu0 %v1308
        %v1310 = vpop.f32.mrf.mxu0
        %v1311 = vadd.f32 0.0, %v1310
        %v1312 = vpop.f32.mrf.mxu0
        %v1313 = vadd.f32 0.0, %v1312
        %v1314 = vand.u32 %v547, 4294901760
        %v1315 = vsub.f32 %v547, %v1314
        %v1316 = vand.u32 %v1315, 4294901760
        %v1317 = vsub.f32 %v1315, %v1316
        %v1318 = vand.u32 %v1317, 4294901760
        %1319 = vmatprep.mubr.f32.mxu0 %v1318
        %v1320 = vand.u32 %v546, 4294901760
        %v1321 = vsub.f32 %v546, %v1320
        %v1322 = vand.u32 %v1321, 4294901760
        %v1323 = vsub.f32 %v1321, %v1322
        %v1324 = vand.u32 %v1323, 4294901760
        %1325 = vmatmul.mubr.f32.gmra.mxu0 %v1324
        %v1326 = vpop.f32.mrf.mxu0
        %v1327 = vadd.f32 0.0, %v1326
        %v1328 = vpop.f32.mrf.mxu0
        %v1329 = vadd.f32 0.0, %v1328
        %v1330 = vand.u32 %v549, 4294901760
        %v1331 = vsub.f32 %v549, %v1330
        %v1332 = vand.u32 %v1331, 4294901760
        %v1333 = vsub.f32 %v1331, %v1332
        %v1334 = vand.u32 %v1333, 4294901760
        %1335 = vmatprep.mubr.f32.mxu0 %v1334
        %v1336 = vand.u32 %v548, 4294901760
        %v1337 = vsub.f32 %v548, %v1336
        %v1338 = vand.u32 %v1337, 4294901760
        %v1339 = vsub.f32 %v1337, %v1338
        %v1340 = vand.u32 %v1339, 4294901760
        %1341 = vmatmul.mubr.f32.gmra.mxu0 %v1340
        %v1342 = vpop.f32.mrf.mxu0
        %v1343 = vadd.f32 0.0, %v1342
        %v1344 = vpop.f32.mrf.mxu0
        %v1345 = vadd.f32 0.0, %v1344
        %v1346 = vand.u32 %v551, 4294901760
        %v1347 = vsub.f32 %v551, %v1346
        %v1348 = vand.u32 %v1347, 4294901760
        %v1349 = vsub.f32 %v1347, %v1348
        %v1350 = vand.u32 %v1349, 4294901760
        %1351 = vmatprep.mubr.f32.mxu0 %v1350
        %v1352 = vand.u32 %v550, 4294901760
        %v1353 = vsub.f32 %v550, %v1352
        %v1354 = vand.u32 %v1353, 4294901760
        %v1355 = vsub.f32 %v1353, %v1354
        %v1356 = vand.u32 %v1355, 4294901760
        %1357 = vmatmul.mubr.f32.gmra.mxu0 %v1356
        %v1358 = vpop.f32.mrf.mxu0
        %v1359 = vadd.f32 0.0, %v1358
        %v1360 = vpop.f32.mrf.mxu0
        %v1361 = vadd.f32 0.0, %v1360
        %v1362 = vand.u32 %v553, 4294901760
        %v1363 = vsub.f32 %v553, %v1362
        %v1364 = vand.u32 %v1363, 4294901760
        %v1365 = vsub.f32 %v1363, %v1364
        %v1366 = vand.u32 %v1365, 4294901760
        %1367 = vmatprep.mubr.f32.mxu0 %v1366
        %v1368 = vand.u32 %v552, 4294901760
        %v1369 = vsub.f32 %v552, %v1368
        %v1370 = vand.u32 %v1369, 4294901760
        %v1371 = vsub.f32 %v1369, %v1370
        %v1372 = vand.u32 %v1371, 4294901760
        %1373 = vmatmul.mubr.f32.gmra.mxu0 %v1372
        %v1374 = vpop.f32.mrf.mxu0
        %v1375 = vadd.f32 0.0, %v1374
        %v1376 = vpop.f32.mrf.mxu0
        %v1377 = vadd.f32 0.0, %v1376
        %v1378 = vand.u32 %v555, 4294901760
        %v1379 = vsub.f32 %v555, %v1378
        %v1380 = vand.u32 %v1379, 4294901760
        %v1381 = vsub.f32 %v1379, %v1380
        %v1382 = vand.u32 %v1381, 4294901760
        %1383 = vmatprep.mubr.f32.mxu0 %v1382
        %v1384 = vand.u32 %v554, 4294901760
        %v1385 = vsub.f32 %v554, %v1384
        %v1386 = vand.u32 %v1385, 4294901760
        %v1387 = vsub.f32 %v1385, %v1386
        %v1388 = vand.u32 %v1387, 4294901760
        %1389 = vmatmul.mubr.f32.gmra.mxu0 %v1388
        %v1390 = vpop.f32.mrf.mxu0
        %v1391 = vadd.f32 0.0, %v1390
        %v1392 = vpop.f32.mrf.mxu0
        %v1393 = vadd.f32 0.0, %v1392
        %v1394 = vand.u32 %v557, 4294901760
        %v1395 = vsub.f32 %v557, %v1394
        %v1396 = vand.u32 %v1395, 4294901760
        %v1397 = vsub.f32 %v1395, %v1396
        %v1398 = vand.u32 %v1397, 4294901760
        %1399 = vmatprep.mubr.f32.mxu0 %v1398
        %v1400 = vand.u32 %v556, 4294901760
        %v1401 = vsub.f32 %v556, %v1400
        %v1402 = vand.u32 %v1401, 4294901760
        %v1403 = vsub.f32 %v1401, %v1402
        %v1404 = vand.u32 %v1403, 4294901760
        %1405 = vmatmul.mubr.f32.gmra.mxu0 %v1404
        %v1406 = vpop.f32.mrf.mxu0
        %v1407 = vadd.f32 0.0, %v1406
        %v1408 = vpop.f32.mrf.mxu0
        %v1409 = vadd.f32 0.0, %v1408
        %v1410 = vand.u32 %v559, 4294901760
        %v1411 = vsub.f32 %v559, %v1410
        %v1412 = vand.u32 %v1411, 4294901760
        %v1413 = vsub.f32 %v1411, %v1412
        %v1414 = vand.u32 %v1413, 4294901760
        %1415 = vmatprep.mubr.f32.mxu0 %v1414
        %v1416 = vand.u32 %v558, 4294901760
        %v1417 = vsub.f32 %v558, %v1416
        %v1418 = vand.u32 %v1417, 4294901760
        %v1419 = vsub.f32 %v1417, %v1418
        %v1420 = vand.u32 %v1419, 4294901760
        %1421 = vmatmul.mubr.f32.gmra.mxu0 %v1420
        %v1422 = vpop.f32.mrf.mxu0
        %v1423 = vadd.f32 0.0, %v1422
        %v1424 = vpop.f32.mrf.mxu0
        %v1425 = vadd.f32 0.0, %v1424
        %v1426 = vand.u32 %v561, 4294901760
        %v1427 = vsub.f32 %v561, %v1426
        %v1428 = vand.u32 %v1427, 4294901760
        %v1429 = vsub.f32 %v1427, %v1428
        %v1430 = vand.u32 %v1429, 4294901760
        %1431 = vmatprep.mubr.f32.mxu0 %v1430
        %v1432 = vand.u32 %v560, 4294901760
        %v1433 = vsub.f32 %v560, %v1432
        %v1434 = vand.u32 %v1433, 4294901760
        %v1435 = vsub.f32 %v1433, %v1434
        %v1436 = vand.u32 %v1435, 4294901760
        %1437 = vmatmul.mubr.f32.gmra.mxu0 %v1436
        %v1438 = vpop.f32.mrf.mxu0
        %v1439 = vadd.f32 0.0, %v1438
        %v1440 = vpop.f32.mrf.mxu0
        %v1441 = vadd.f32 0.0, %v1440
        %v1442 = vand.u32 %v563, 4294901760
        %v1443 = vsub.f32 %v563, %v1442
        %v1444 = vand.u32 %v1443, 4294901760
        %v1445 = vsub.f32 %v1443, %v1444
        %v1446 = vand.u32 %v1445, 4294901760
        %1447 = vmatprep.mubr.f32.mxu0 %v1446
        %v1448 = vand.u32 %v562, 4294901760
        %v1449 = vsub.f32 %v562, %v1448
        %v1450 = vand.u32 %v1449, 4294901760
        %v1451 = vsub.f32 %v1449, %v1450
        %v1452 = vand.u32 %v1451, 4294901760
        %1453 = vmatmul.mubr.f32.gmra.mxu0 %v1452
        %v1454 = vpop.f32.mrf.mxu0
        %v1455 = vadd.f32 0.0, %v1454
        %v1456 = vpop.f32.mrf.mxu0
        %v1457 = vadd.f32 0.0, %v1456
        %v1458 = vand.u32 %v565, 4294901760
        %v1459 = vsub.f32 %v565, %v1458
        %v1460 = vand.u32 %v1459, 4294901760
        %v1461 = vsub.f32 %v1459, %v1460
        %v1462 = vand.u32 %v1461, 4294901760
        %1463 = vmatprep.mubr.f32.mxu0 %v1462
        %v1464 = vand.u32 %v564, 4294901760
        %v1465 = vsub.f32 %v564, %v1464
        %v1466 = vand.u32 %v1465, 4294901760
        %v1467 = vsub.f32 %v1465, %v1466
        %v1468 = vand.u32 %v1467, 4294901760
        %1469 = vmatmul.mubr.f32.gmra.mxu0 %v1468
        %v1470 = vpop.f32.mrf.mxu0
        %v1471 = vadd.f32 0.0, %v1470
        %v1472 = vpop.f32.mrf.mxu0
        %v1473 = vadd.f32 0.0, %v1472
        %v1474 = vand.u32 %v567, 4294901760
        %v1475 = vsub.f32 %v567, %v1474
        %v1476 = vand.u32 %v1475, 4294901760
        %v1477 = vsub.f32 %v1475, %v1476
        %v1478 = vand.u32 %v1477, 4294901760
        %1479 = vmatprep.mubr.f32.mxu0 %v1478
        %v1480 = vand.u32 %v566, 4294901760
        %v1481 = vsub.f32 %v566, %v1480
        %v1482 = vand.u32 %v1481, 4294901760
        %v1483 = vsub.f32 %v1481, %v1482
        %v1484 = vand.u32 %v1483, 4294901760
        %1485 = vmatmul.mubr.f32.gmra.mxu0 %v1484
        %v1486 = vpop.f32.mrf.mxu0
        %v1487 = vadd.f32 0.0, %v1486
        %v1488 = vpop.f32.mrf.mxu0
        %v1489 = vadd.f32 0.0, %v1488
        %v1490 = vand.u32 %v569, 4294901760
        %v1491 = vsub.f32 %v569, %v1490
        %v1492 = vand.u32 %v1491, 4294901760
        %v1493 = vsub.f32 %v1491, %v1492
        %v1494 = vand.u32 %v1493, 4294901760
        %1495 = vmatprep.mubr.f32.mxu0 %v1494
        %v1496 = vand.u32 %v568, 4294901760
        %v1497 = vsub.f32 %v568, %v1496
        %v1498 = vand.u32 %v1497, 4294901760
        %v1499 = vsub.f32 %v1497, %v1498
        %v1500 = vand.u32 %v1499, 4294901760
        %1501 = vmatmul.mubr.f32.gmra.mxu0 %v1500
        %v1502 = vpop.f32.mrf.mxu0
        %v1503 = vadd.f32 0.0, %v1502
        %v1504 = vpop.f32.mrf.mxu0
        %v1505 = vadd.f32 0.0, %v1504
        %v1506 = vand.u32 %v571, 4294901760
        %v1507 = vsub.f32 %v571, %v1506
        %v1508 = vand.u32 %v1507, 4294901760
        %v1509 = vsub.f32 %v1507, %v1508
        %v1510 = vand.u32 %v1509, 4294901760
        %1511 = vmatprep.mubr.f32.mxu0 %v1510
        %v1512 = vand.u32 %v570, 4294901760
        %v1513 = vsub.f32 %v570, %v1512
        %v1514 = vand.u32 %v1513, 4294901760
        %v1515 = vsub.f32 %v1513, %v1514
        %v1516 = vand.u32 %v1515, 4294901760
        %1517 = vmatmul.mubr.f32.gmra.mxu0 %v1516
        %v1518 = vpop.f32.mrf.mxu0
        %v1519 = vadd.f32 0.0, %v1518
        %v1520 = vpop.f32.mrf.mxu0
        %v1521 = vadd.f32 0.0, %v1520
        %v1522 = vand.u32 %v573, 4294901760
        %v1523 = vsub.f32 %v573, %v1522
        %v1524 = vand.u32 %v1523, 4294901760
        %v1525 = vsub.f32 %v1523, %v1524
        %v1526 = vand.u32 %v1525, 4294901760
        %1527 = vmatprep.mubr.f32.mxu0 %v1526
        %v1528 = vand.u32 %v572, 4294901760
        %v1529 = vsub.f32 %v572, %v1528
        %v1530 = vand.u32 %v1529, 4294901760
        %v1531 = vsub.f32 %v1529, %v1530
        %v1532 = vand.u32 %v1531, 4294901760
        %1533 = vmatmul.mubr.f32.gmra.mxu0 %v1532
        %v1534 = vpop.f32.mrf.mxu0
        %v1535 = vadd.f32 0.0, %v1534
        %v1536 = vpop.f32.mrf.mxu0
        %v1537 = vadd.f32 0.0, %v1536
        %v1538 = vand.u32 %v575, 4294901760
        %v1539 = vsub.f32 %v575, %v1538
        %v1540 = vand.u32 %v1539, 4294901760
        %v1541 = vsub.f32 %v1539, %v1540
        %v1542 = vand.u32 %v1541, 4294901760
        %1543 = vmatprep.mubr.f32.mxu0 %v1542
        %v1544 = vand.u32 %v574, 4294901760
        %v1545 = vsub.f32 %v574, %v1544
        %v1546 = vand.u32 %v1545, 4294901760
        %v1547 = vsub.f32 %v1545, %v1546
        %v1548 = vand.u32 %v1547, 4294901760
        %1549 = vmatmul.mubr.f32.gmra.mxu0 %v1548
        %v1550 = vpop.f32.mrf.mxu0
        %v1551 = vadd.f32 0.0, %v1550
        %v1552 = vpop.f32.mrf.mxu0
        %v1553 = vadd.f32 0.0, %v1552
        %v1554 = vand.u32 %v577, 4294901760
        %v1555 = vsub.f32 %v577, %v1554
        %v1556 = vand.u32 %v1555, 4294901760
        %v1557 = vsub.f32 %v1555, %v1556
        %v1558 = vand.u32 %v1557, 4294901760
        %1559 = vmatprep.mubr.f32.mxu0 %v1558
        %v1560 = vand.u32 %v576, 4294901760
        %v1561 = vsub.f32 %v576, %v1560
        %v1562 = vand.u32 %v1561, 4294901760
        %v1563 = vsub.f32 %v1561, %v1562
        %v1564 = vand.u32 %v1563, 4294901760
        %1565 = vmatmul.mubr.f32.gmra.mxu0 %v1564
        %v1566 = vpop.f32.mrf.mxu0
        %v1567 = vadd.f32 0.0, %v1566
        %v1568 = vpop.f32.mrf.mxu0
        %v1569 = vadd.f32 0.0, %v1568
        %v1570 = vand.u32 %v579, 4294901760
        %v1571 = vsub.f32 %v579, %v1570
        %v1572 = vand.u32 %v1571, 4294901760
        %v1573 = vsub.f32 %v1571, %v1572
        %v1574 = vand.u32 %v1573, 4294901760
        %1575 = vmatprep.mubr.f32.mxu0 %v1574
        %v1576 = vand.u32 %v578, 4294901760
        %v1577 = vsub.f32 %v578, %v1576
        %v1578 = vand.u32 %v1577, 4294901760
        %v1579 = vsub.f32 %v1577, %v1578
        %v1580 = vand.u32 %v1579, 4294901760
        %1581 = vmatmul.mubr.f32.gmra.mxu0 %v1580
        %v1582 = vpop.f32.mrf.mxu0
        %v1583 = vadd.f32 0.0, %v1582
        %v1584 = vpop.f32.mrf.mxu0
        %v1585 = vadd.f32 0.0, %v1584
        %v1586 = vand.u32 %v581, 4294901760
        %v1587 = vsub.f32 %v581, %v1586
        %v1588 = vand.u32 %v1587, 4294901760
        %v1589 = vsub.f32 %v1587, %v1588
        %v1590 = vand.u32 %v1589, 4294901760
        %1591 = vmatprep.mubr.f32.mxu0 %v1590
        %v1592 = vand.u32 %v580, 4294901760
        %v1593 = vsub.f32 %v580, %v1592
        %v1594 = vand.u32 %v1593, 4294901760
        %v1595 = vsub.f32 %v1593, %v1594
        %v1596 = vand.u32 %v1595, 4294901760
        %1597 = vmatmul.mubr.f32.gmra.mxu0 %v1596
        %v1598 = vpop.f32.mrf.mxu0
        %v1599 = vadd.f32 0.0, %v1598
        %v1600 = vpop.f32.mrf.mxu0
        %v1601 = vadd.f32 0.0, %v1600
        %v1602 = vand.u32 %v583, 4294901760
        %v1603 = vsub.f32 %v583, %v1602
        %v1604 = vand.u32 %v1603, 4294901760
        %v1605 = vsub.f32 %v1603, %v1604
        %v1606 = vand.u32 %v1605, 4294901760
        %1607 = vmatprep.mubr.f32.mxu0 %v1606
        %v1608 = vand.u32 %v582, 4294901760
        %v1609 = vsub.f32 %v582, %v1608
        %v1610 = vand.u32 %v1609, 4294901760
        %v1611 = vsub.f32 %v1609, %v1610
        %v1612 = vand.u32 %v1611, 4294901760
        %1613 = vmatmul.mubr.f32.gmra.mxu0 %v1612
        %v1614 = vpop.f32.mrf.mxu0
        %v1615 = vadd.f32 0.0, %v1614
        %v1616 = vpop.f32.mrf.mxu0
        %v1617 = vadd.f32 0.0, %v1616
        %v1618 = vand.u32 %v585, 4294901760
        %v1619 = vsub.f32 %v585, %v1618
        %v1620 = vand.u32 %v1619, 4294901760
        %v1621 = vsub.f32 %v1619, %v1620
        %v1622 = vand.u32 %v1621, 4294901760
        %1623 = vmatprep.mubr.f32.mxu0 %v1622
        %v1624 = vand.u32 %v584, 4294901760
        %v1625 = vsub.f32 %v584, %v1624
        %v1626 = vand.u32 %v1625, 4294901760
        %v1627 = vsub.f32 %v1625, %v1626
        %v1628 = vand.u32 %v1627, 4294901760
        %1629 = vmatmul.mubr.f32.gmra.mxu0 %v1628
        %v1630 = vpop.f32.mrf.mxu0
        %v1631 = vadd.f32 0.0, %v1630
        %v1632 = vpop.f32.mrf.mxu0
        %v1633 = vadd.f32 0.0, %v1632
        %v1634 = vand.u32 %v587, 4294901760
        %v1635 = vsub.f32 %v587, %v1634
        %v1636 = vand.u32 %v1635, 4294901760
        %v1637 = vsub.f32 %v1635, %v1636
        %v1638 = vand.u32 %v1637, 4294901760
        %1639 = vmatprep.mubr.f32.mxu0 %v1638
        %v1640 = vand.u32 %v586, 4294901760
        %v1641 = vsub.f32 %v586, %v1640
        %v1642 = vand.u32 %v1641, 4294901760
        %v1643 = vsub.f32 %v1641, %v1642
        %v1644 = vand.u32 %v1643, 4294901760
        %1645 = vmatmul.mubr.f32.gmra.mxu0 %v1644
        %v1646 = vpop.f32.mrf.mxu0
        %v1647 = vadd.f32 0.0, %v1646
        %v1648 = vpop.f32.mrf.mxu0
        %v1649 = vadd.f32 0.0, %v1648
        %v1650 = vand.u32 %v589, 4294901760
        %v1651 = vsub.f32 %v589, %v1650
        %v1652 = vand.u32 %v1651, 4294901760
        %v1653 = vsub.f32 %v1651, %v1652
        %v1654 = vand.u32 %v1653, 4294901760
        %1655 = vmatprep.mubr.f32.mxu0 %v1654
        %v1656 = vand.u32 %v588, 4294901760
        %v1657 = vsub.f32 %v588, %v1656
        %v1658 = vand.u32 %v1657, 4294901760
        %v1659 = vsub.f32 %v1657, %v1658
        %v1660 = vand.u32 %v1659, 4294901760
        %1661 = vmatmul.mubr.f32.gmra.mxu0 %v1660
        %v1662 = vpop.f32.mrf.mxu0
        %v1663 = vadd.f32 0.0, %v1662
        %v1664 = vpop.f32.mrf.mxu0
        %v1665 = vadd.f32 0.0, %v1664
        %v1666 = vand.u32 %v591, 4294901760
        %v1667 = vsub.f32 %v591, %v1666
        %v1668 = vand.u32 %v1667, 4294901760
        %v1669 = vsub.f32 %v1667, %v1668
        %v1670 = vand.u32 %v1669, 4294901760
        %1671 = vmatprep.mubr.f32.mxu0 %v1670
        %v1672 = vand.u32 %v590, 4294901760
        %v1673 = vsub.f32 %v590, %v1672
        %v1674 = vand.u32 %v1673, 4294901760
        %v1675 = vsub.f32 %v1673, %v1674
        %v1676 = vand.u32 %v1675, 4294901760
        %1677 = vmatmul.mubr.f32.gmra.mxu0 %v1676
        %v1678 = vpop.f32.mrf.mxu0
        %v1679 = vadd.f32 0.0, %v1678
        %v1680 = vpop.f32.mrf.mxu0
        %v1681 = vadd.f32 0.0, %v1680
        %v1682 = vand.u32 %v593, 4294901760
        %v1683 = vsub.f32 %v593, %v1682
        %v1684 = vand.u32 %v1683, 4294901760
        %v1685 = vsub.f32 %v1683, %v1684
        %v1686 = vand.u32 %v1685, 4294901760
        %1687 = vmatprep.mubr.f32.mxu0 %v1686
        %v1688 = vand.u32 %v592, 4294901760
        %v1689 = vsub.f32 %v592, %v1688
        %v1690 = vand.u32 %v1689, 4294901760
        %v1691 = vsub.f32 %v1689, %v1690
        %v1692 = vand.u32 %v1691, 4294901760
        %1693 = vmatmul.mubr.f32.gmra.mxu0 %v1692
        %v1694 = vpop.f32.mrf.mxu0
        %v1695 = vadd.f32 0.0, %v1694
        %v1696 = vpop.f32.mrf.mxu0
        %v1697 = vadd.f32 0.0, %v1696
        %v1698 = vand.u32 %v595, 4294901760
        %v1699 = vsub.f32 %v595, %v1698
        %v1700 = vand.u32 %v1699, 4294901760
        %v1701 = vsub.f32 %v1699, %v1700
        %v1702 = vand.u32 %v1701, 4294901760
        %1703 = vmatprep.mubr.f32.mxu0 %v1702
        %v1704 = vand.u32 %v594, 4294901760
        %v1705 = vsub.f32 %v594, %v1704
        %v1706 = vand.u32 %v1705, 4294901760
        %v1707 = vsub.f32 %v1705, %v1706
        %v1708 = vand.u32 %v1707, 4294901760
        %1709 = vmatmul.mubr.f32.gmra.mxu0 %v1708
        %v1710 = vpop.f32.mrf.mxu0
        %v1711 = vadd.f32 0.0, %v1710
        %v1712 = vpop.f32.mrf.mxu0
        %v1713 = vadd.f32 0.0, %v1712
        %v1714 = vand.u32 %v597, 4294901760
        %v1715 = vsub.f32 %v597, %v1714
        %v1716 = vand.u32 %v1715, 4294901760
        %v1717 = vsub.f32 %v1715, %v1716
        %v1718 = vand.u32 %v1717, 4294901760
        %1719 = vmatprep.mubr.f32.mxu0 %v1718
        %v1720 = vand.u32 %v596, 4294901760
        %v1721 = vsub.f32 %v596, %v1720
        %v1722 = vand.u32 %v1721, 4294901760
        %v1723 = vsub.f32 %v1721, %v1722
        %v1724 = vand.u32 %v1723, 4294901760
        %1725 = vmatmul.mubr.f32.gmra.mxu0 %v1724
        %v1726 = vpop.f32.mrf.mxu0
        %v1727 = vadd.f32 0.0, %v1726
        %v1728 = vpop.f32.mrf.mxu0
        %v1729 = vadd.f32 0.0, %v1728
        %v1730 = vand.u32 %v599, 4294901760
        %v1731 = vsub.f32 %v599, %v1730
        %v1732 = vand.u32 %v1731, 4294901760
        %v1733 = vsub.f32 %v1731, %v1732
        %v1734 = vand.u32 %v1733, 4294901760
        %1735 = vmatprep.mubr.f32.mxu0 %v1734
        %v1736 = vand.u32 %v598, 4294901760
        %v1737 = vsub.f32 %v598, %v1736
        %v1738 = vand.u32 %v1737, 4294901760
        %v1739 = vsub.f32 %v1737, %v1738
        %v1740 = vand.u32 %v1739, 4294901760
        %1741 = vmatmul.mubr.f32.gmra.mxu0 %v1740
        %v1742 = vpop.f32.mrf.mxu0
        %v1743 = vadd.f32 0.0, %v1742
        %v1744 = vpop.f32.mrf.mxu0
        %v1745 = vadd.f32 0.0, %v1744
        %v1746 = vand.u32 %v601, 4294901760
        %v1747 = vsub.f32 %v601, %v1746
        %v1748 = vand.u32 %v1747, 4294901760
        %v1749 = vsub.f32 %v1747, %v1748
        %v1750 = vand.u32 %v1749, 4294901760
        %1751 = vmatprep.mubr.f32.mxu0 %v1750
        %v1752 = vand.u32 %v600, 4294901760
        %v1753 = vsub.f32 %v600, %v1752
        %v1754 = vand.u32 %v1753, 4294901760
        %v1755 = vsub.f32 %v1753, %v1754
        %v1756 = vand.u32 %v1755, 4294901760
        %1757 = vmatmul.mubr.f32.gmra.mxu0 %v1756
        %v1758 = vpop.f32.mrf.mxu0
        %v1759 = vadd.f32 0.0, %v1758
        %v1760 = vpop.f32.mrf.mxu0
        %v1761 = vadd.f32 0.0, %v1760
        %v1762 = vand.u32 %v603, 4294901760
        %v1763 = vsub.f32 %v603, %v1762
        %v1764 = vand.u32 %v1763, 4294901760
        %v1765 = vsub.f32 %v1763, %v1764
        %v1766 = vand.u32 %v1765, 4294901760
        %1767 = vmatprep.mubr.f32.mxu0 %v1766
        %v1768 = vand.u32 %v602, 4294901760
        %v1769 = vsub.f32 %v602, %v1768
        %v1770 = vand.u32 %v1769, 4294901760
        %v1771 = vsub.f32 %v1769, %v1770
        %v1772 = vand.u32 %v1771, 4294901760
        %1773 = vmatmul.mubr.f32.gmra.mxu0 %v1772
        %v1774 = vpop.f32.mrf.mxu0
        %v1775 = vadd.f32 0.0, %v1774
        %v1776 = vpop.f32.mrf.mxu0
        %v1777 = vadd.f32 0.0, %v1776
        %v1778 = vand.u32 %v605, 4294901760
        %v1779 = vsub.f32 %v605, %v1778
        %v1780 = vand.u32 %v1779, 4294901760
        %v1781 = vsub.f32 %v1779, %v1780
        %v1782 = vand.u32 %v1781, 4294901760
        %1783 = vmatprep.mubr.f32.mxu0 %v1782
        %v1784 = vand.u32 %v604, 4294901760
        %v1785 = vsub.f32 %v604, %v1784
        %v1786 = vand.u32 %v1785, 4294901760
        %v1787 = vsub.f32 %v1785, %v1786
        %v1788 = vand.u32 %v1787, 4294901760
        %1789 = vmatmul.mubr.f32.gmra.mxu0 %v1788
        %v1790 = vpop.f32.mrf.mxu0
        %v1791 = vadd.f32 0.0, %v1790
        %v1792 = vpop.f32.mrf.mxu0
        %v1793 = vadd.f32 0.0, %v1792
        %v1794 = vand.u32 %v607, 4294901760
        %v1795 = vsub.f32 %v607, %v1794
        %v1796 = vand.u32 %v1795, 4294901760
        %v1797 = vsub.f32 %v1795, %v1796
        %v1798 = vand.u32 %v1797, 4294901760
        %1799 = vmatprep.mubr.f32.mxu0 %v1798
        %v1800 = vand.u32 %v606, 4294901760
        %v1801 = vsub.f32 %v606, %v1800
        %v1802 = vand.u32 %v1801, 4294901760
        %v1803 = vsub.f32 %v1801, %v1802
        %v1804 = vand.u32 %v1803, 4294901760
        %1805 = vmatmul.mubr.f32.gmra.mxu0 %v1804
        %v1806 = vpop.f32.mrf.mxu0
        %v1807 = vadd.f32 0.0, %v1806
        %v1808 = vpop.f32.mrf.mxu0
        %v1809 = vadd.f32 0.0, %v1808
        %v1810 = vand.u32 %v609, 4294901760
        %v1811 = vsub.f32 %v609, %v1810
        %v1812 = vand.u32 %v1811, 4294901760
        %v1813 = vsub.f32 %v1811, %v1812
        %v1814 = vand.u32 %v1813, 4294901760
        %1815 = vmatprep.mubr.f32.mxu0 %v1814
        %v1816 = vand.u32 %v608, 4294901760
        %v1817 = vsub.f32 %v608, %v1816
        %v1818 = vand.u32 %v1817, 4294901760
        %v1819 = vsub.f32 %v1817, %v1818
        %v1820 = vand.u32 %v1819, 4294901760
        %1821 = vmatmul.mubr.f32.gmra.mxu0 %v1820
        %v1822 = vpop.f32.mrf.mxu0
        %v1823 = vadd.f32 0.0, %v1822
        %v1824 = vpop.f32.mrf.mxu0
        %v1825 = vadd.f32 0.0, %v1824
        %1826 = vdwg.mxu0
        %v1827 = vand.u32 %v641, 4294901760
        %v1828 = vsub.f32 %v641, %v1827
        %v1829 = vand.u32 %v1828, 4294901760
        %v1830 = vsub.f32 %v1828, %v1829
        %v1831 = vand.u32 %v1830, 4294901760
        %1832 = vmatprep.subr.mxu0 %v1831
        %v1833 = vand.u32 %v640, 4294901760
        %v1834 = vsub.f32 %v640, %v1833
        %v1835 = vand.u32 %v1834, 4294901760
        %v1836 = vsub.f32 %v1834, %v1835
        %v1837 = vand.u32 %v1836, 4294901760
        %1838 = vmatpush1.msra.mxu0 %v1837
        %v1839 = vand.u32 %v639, 4294901760
        %v1840 = vsub.f32 %v639, %v1839
        %v1841 = vand.u32 %v1840, 4294901760
        %v1842 = vsub.f32 %v1840, %v1841
        %v1843 = vand.u32 %v1842, 4294901760
        %1844 = vmatprep.subr.mxu0 %v1843
        %v1845 = vand.u32 %v638, 4294901760
        %v1846 = vsub.f32 %v638, %v1845
        %v1847 = vand.u32 %v1846, 4294901760
        %v1848 = vsub.f32 %v1846, %v1847
        %v1849 = vand.u32 %v1848, 4294901760
        %1850 = vmatpush1.msra.mxu0 %v1849
        %v1851 = vand.u32 %v637, 4294901760
        %v1852 = vsub.f32 %v637, %v1851
        %v1853 = vand.u32 %v1852, 4294901760
        %v1854 = vsub.f32 %v1852, %v1853
        %v1855 = vand.u32 %v1854, 4294901760
        %1856 = vmatprep.subr.mxu0 %v1855
        %v1857 = vand.u32 %v636, 4294901760
        %v1858 = vsub.f32 %v636, %v1857
        %v1859 = vand.u32 %v1858, 4294901760
        %v1860 = vsub.f32 %v1858, %v1859
        %v1861 = vand.u32 %v1860, 4294901760
        %1862 = vmatpush1.msra.mxu0 %v1861
        %v1863 = vand.u32 %v635, 4294901760
        %v1864 = vsub.f32 %v635, %v1863
        %v1865 = vand.u32 %v1864, 4294901760
        %v1866 = vsub.f32 %v1864, %v1865
        %v1867 = vand.u32 %v1866, 4294901760
        %1868 = vmatprep.subr.mxu0 %v1867
        %v1869 = vand.u32 %v634, 4294901760
        %v1870 = vsub.f32 %v634, %v1869
        %v1871 = vand.u32 %v1870, 4294901760
        %v1872 = vsub.f32 %v1870, %v1871
        %v1873 = vand.u32 %v1872, 4294901760
        %1874 = vmatpush1.msra.mxu0 %v1873
        %v1875 = vand.u32 %v633, 4294901760
        %v1876 = vsub.f32 %v633, %v1875
        %v1877 = vand.u32 %v1876, 4294901760
        %v1878 = vsub.f32 %v1876, %v1877
        %v1879 = vand.u32 %v1878, 4294901760
        %1880 = vmatprep.subr.mxu0 %v1879
        %v1881 = vand.u32 %v632, 4294901760
        %v1882 = vsub.f32 %v632, %v1881
        %v1883 = vand.u32 %v1882, 4294901760
        %v1884 = vsub.f32 %v1882, %v1883
        %v1885 = vand.u32 %v1884, 4294901760
        %1886 = vmatpush1.msra.mxu0 %v1885
        %v1887 = vand.u32 %v631, 4294901760
        %v1888 = vsub.f32 %v631, %v1887
        %v1889 = vand.u32 %v1888, 4294901760
        %v1890 = vsub.f32 %v1888, %v1889
        %v1891 = vand.u32 %v1890, 4294901760
        %1892 = vmatprep.subr.mxu0 %v1891
        %v1893 = vand.u32 %v630, 4294901760
        %v1894 = vsub.f32 %v630, %v1893
        %v1895 = vand.u32 %v1894, 4294901760
        %v1896 = vsub.f32 %v1894, %v1895
        %v1897 = vand.u32 %v1896, 4294901760
        %1898 = vmatpush1.msra.mxu0 %v1897
        %v1899 = vand.u32 %v629, 4294901760
        %v1900 = vsub.f32 %v629, %v1899
        %v1901 = vand.u32 %v1900, 4294901760
        %v1902 = vsub.f32 %v1900, %v1901
        %v1903 = vand.u32 %v1902, 4294901760
        %1904 = vmatprep.subr.mxu0 %v1903
        %v1905 = vand.u32 %v628, 4294901760
        %v1906 = vsub.f32 %v628, %v1905
        %v1907 = vand.u32 %v1906, 4294901760
        %v1908 = vsub.f32 %v1906, %v1907
        %v1909 = vand.u32 %v1908, 4294901760
        %1910 = vmatpush1.msra.mxu0 %v1909
        %v1911 = vand.u32 %v627, 4294901760
        %v1912 = vsub.f32 %v627, %v1911
        %v1913 = vand.u32 %v1912, 4294901760
        %v1914 = vsub.f32 %v1912, %v1913
        %v1915 = vand.u32 %v1914, 4294901760
        %1916 = vmatprep.subr.mxu0 %v1915
        %v1917 = vand.u32 %v626, 4294901760
        %v1918 = vsub.f32 %v626, %v1917
        %v1919 = vand.u32 %v1918, 4294901760
        %v1920 = vsub.f32 %v1918, %v1919
        %v1921 = vand.u32 %v1920, 4294901760
        %1922 = vmatpush1.msra.mxu0 %v1921
        %v1923 = vand.u32 %v625, 4294901760
        %v1924 = vsub.f32 %v625, %v1923
        %v1925 = vand.u32 %v1924, 4294901760
        %v1926 = vsub.f32 %v1924, %v1925
        %v1927 = vand.u32 %v1926, 4294901760
        %1928 = vmatprep.subr.mxu0 %v1927
        %v1929 = vand.u32 %v624, 4294901760
        %v1930 = vsub.f32 %v624, %v1929
        %v1931 = vand.u32 %v1930, 4294901760
        %v1932 = vsub.f32 %v1930, %v1931
        %v1933 = vand.u32 %v1932, 4294901760
        %1934 = vmatpush1.msra.mxu0 %v1933
        %v1935 = vand.u32 %v623, 4294901760
        %v1936 = vsub.f32 %v623, %v1935
        %v1937 = vand.u32 %v1936, 4294901760
        %v1938 = vsub.f32 %v1936, %v1937
        %v1939 = vand.u32 %v1938, 4294901760
        %1940 = vmatprep.subr.mxu0 %v1939
        %v1941 = vand.u32 %v622, 4294901760
        %v1942 = vsub.f32 %v622, %v1941
        %v1943 = vand.u32 %v1942, 4294901760
        %v1944 = vsub.f32 %v1942, %v1943
        %v1945 = vand.u32 %v1944, 4294901760
        %1946 = vmatpush1.msra.mxu0 %v1945
        %v1947 = vand.u32 %v621, 4294901760
        %v1948 = vsub.f32 %v621, %v1947
        %v1949 = vand.u32 %v1948, 4294901760
        %v1950 = vsub.f32 %v1948, %v1949
        %v1951 = vand.u32 %v1950, 4294901760
        %1952 = vmatprep.subr.mxu0 %v1951
        %v1953 = vand.u32 %v620, 4294901760
        %v1954 = vsub.f32 %v620, %v1953
        %v1955 = vand.u32 %v1954, 4294901760
        %v1956 = vsub.f32 %v1954, %v1955
        %v1957 = vand.u32 %v1956, 4294901760
        %1958 = vmatpush1.msra.mxu0 %v1957
        %v1959 = vand.u32 %v619, 4294901760
        %v1960 = vsub.f32 %v619, %v1959
        %v1961 = vand.u32 %v1960, 4294901760
        %v1962 = vsub.f32 %v1960, %v1961
        %v1963 = vand.u32 %v1962, 4294901760
        %1964 = vmatprep.subr.mxu0 %v1963
        %v1965 = vand.u32 %v618, 4294901760
        %v1966 = vsub.f32 %v618, %v1965
        %v1967 = vand.u32 %v1966, 4294901760
        %v1968 = vsub.f32 %v1966, %v1967
        %v1969 = vand.u32 %v1968, 4294901760
        %1970 = vmatpush1.msra.mxu0 %v1969
        %v1971 = vand.u32 %v617, 4294901760
        %v1972 = vsub.f32 %v617, %v1971
        %v1973 = vand.u32 %v1972, 4294901760
        %v1974 = vsub.f32 %v1972, %v1973
        %v1975 = vand.u32 %v1974, 4294901760
        %1976 = vmatprep.subr.mxu0 %v1975
        %v1977 = vand.u32 %v616, 4294901760
        %v1978 = vsub.f32 %v616, %v1977
        %v1979 = vand.u32 %v1978, 4294901760
        %v1980 = vsub.f32 %v1978, %v1979
        %v1981 = vand.u32 %v1980, 4294901760
        %1982 = vmatpush1.msra.mxu0 %v1981
        %v1983 = vand.u32 %v615, 4294901760
        %v1984 = vsub.f32 %v615, %v1983
        %v1985 = vand.u32 %v1984, 4294901760
        %v1986 = vsub.f32 %v1984, %v1985
        %v1987 = vand.u32 %v1986, 4294901760
        %1988 = vmatprep.subr.mxu0 %v1987
        %v1989 = vand.u32 %v614, 4294901760
        %v1990 = vsub.f32 %v614, %v1989
        %v1991 = vand.u32 %v1990, 4294901760
        %v1992 = vsub.f32 %v1990, %v1991
        %v1993 = vand.u32 %v1992, 4294901760
        %1994 = vmatpush1.msra.mxu0 %v1993
        %v1995 = vand.u32 %v613, 4294901760
        %v1996 = vsub.f32 %v613, %v1995
        %v1997 = vand.u32 %v1996, 4294901760
        %v1998 = vsub.f32 %v1996, %v1997
        %v1999 = vand.u32 %v1998, 4294901760
        %2000 = vmatprep.subr.mxu0 %v1999
        %v2001 = vand.u32 %v612, 4294901760
        %v2002 = vsub.f32 %v612, %v2001
        %v2003 = vand.u32 %v2002, 4294901760
        %v2004 = vsub.f32 %v2002, %v2003
        %v2005 = vand.u32 %v2004, 4294901760
        %2006 = vmatpush1.msra.mxu0 %v2005
        %v2007 = vand.u32 %v611, 4294901760
        %v2008 = vsub.f32 %v611, %v2007
        %v2009 = vand.u32 %v2008, 4294901760
        %v2010 = vsub.f32 %v2008, %v2009
        %v2011 = vand.u32 %v2010, 4294901760
        %2012 = vmatprep.subr.mxu0 %v2011
        %v2013 = vand.u32 %v610, 4294901760
        %v2014 = vsub.f32 %v610, %v2013
        %v2015 = vand.u32 %v2014, 4294901760
        %v2016 = vsub.f32 %v2014, %v2015
        %v2017 = vand.u32 %v2016, 4294901760
        %2018 = vmatpush1.msra.mxu0 %v2017
        %v2019 = vand.u32 %v673, 4294901760
        %v2020 = vsub.f32 %v673, %v2019
        %v2021 = vand.u32 %v2020, 4294901760
        %v2022 = vsub.f32 %v2020, %v2021
        %v2023 = vand.u32 %v2022, 4294901760
        %2024 = vmatprep.subr.mxu0 %v2023
        %v2025 = vand.u32 %v672, 4294901760
        %v2026 = vsub.f32 %v672, %v2025
        %v2027 = vand.u32 %v2026, 4294901760
        %v2028 = vsub.f32 %v2026, %v2027
        %v2029 = vand.u32 %v2028, 4294901760
        %2030 = vmatpush2.msra.mxu0 %v2029
        %v2031 = vand.u32 %v671, 4294901760
        %v2032 = vsub.f32 %v671, %v2031
        %v2033 = vand.u32 %v2032, 4294901760
        %v2034 = vsub.f32 %v2032, %v2033
        %v2035 = vand.u32 %v2034, 4294901760
        %2036 = vmatprep.subr.mxu0 %v2035
        %v2037 = vand.u32 %v670, 4294901760
        %v2038 = vsub.f32 %v670, %v2037
        %v2039 = vand.u32 %v2038, 4294901760
        %v2040 = vsub.f32 %v2038, %v2039
        %v2041 = vand.u32 %v2040, 4294901760
        %2042 = vmatpush2.msra.mxu0 %v2041
        %v2043 = vand.u32 %v669, 4294901760
        %v2044 = vsub.f32 %v669, %v2043
        %v2045 = vand.u32 %v2044, 4294901760
        %v2046 = vsub.f32 %v2044, %v2045
        %v2047 = vand.u32 %v2046, 4294901760
        %2048 = vmatprep.subr.mxu0 %v2047
        %v2049 = vand.u32 %v668, 4294901760
        %v2050 = vsub.f32 %v668, %v2049
        %v2051 = vand.u32 %v2050, 4294901760
        %v2052 = vsub.f32 %v2050, %v2051
        %v2053 = vand.u32 %v2052, 4294901760
        %2054 = vmatpush2.msra.mxu0 %v2053
        %v2055 = vand.u32 %v667, 4294901760
        %v2056 = vsub.f32 %v667, %v2055
        %v2057 = vand.u32 %v2056, 4294901760
        %v2058 = vsub.f32 %v2056, %v2057
        %v2059 = vand.u32 %v2058, 4294901760
        %2060 = vmatprep.subr.mxu0 %v2059
        %v2061 = vand.u32 %v666, 4294901760
        %v2062 = vsub.f32 %v666, %v2061
        %v2063 = vand.u32 %v2062, 4294901760
        %v2064 = vsub.f32 %v2062, %v2063
        %v2065 = vand.u32 %v2064, 4294901760
        %2066 = vmatpush2.msra.mxu0 %v2065
        %v2067 = vand.u32 %v665, 4294901760
        %v2068 = vsub.f32 %v665, %v2067
        %v2069 = vand.u32 %v2068, 4294901760
        %v2070 = vsub.f32 %v2068, %v2069
        %v2071 = vand.u32 %v2070, 4294901760
        %2072 = vmatprep.subr.mxu0 %v2071
        %v2073 = vand.u32 %v664, 4294901760
        %v2074 = vsub.f32 %v664, %v2073
        %v2075 = vand.u32 %v2074, 4294901760
        %v2076 = vsub.f32 %v2074, %v2075
        %v2077 = vand.u32 %v2076, 4294901760
        %2078 = vmatpush2.msra.mxu0 %v2077
        %v2079 = vand.u32 %v663, 4294901760
        %v2080 = vsub.f32 %v663, %v2079
        %v2081 = vand.u32 %v2080, 4294901760
        %v2082 = vsub.f32 %v2080, %v2081
        %v2083 = vand.u32 %v2082, 4294901760
        %2084 = vmatprep.subr.mxu0 %v2083
        %v2085 = vand.u32 %v662, 4294901760
        %v2086 = vsub.f32 %v662, %v2085
        %v2087 = vand.u32 %v2086, 4294901760
        %v2088 = vsub.f32 %v2086, %v2087
        %v2089 = vand.u32 %v2088, 4294901760
        %2090 = vmatpush2.msra.mxu0 %v2089
        %v2091 = vand.u32 %v661, 4294901760
        %v2092 = vsub.f32 %v661, %v2091
        %v2093 = vand.u32 %v2092, 4294901760
        %v2094 = vsub.f32 %v2092, %v2093
        %v2095 = vand.u32 %v2094, 4294901760
        %2096 = vmatprep.subr.mxu0 %v2095
        %v2097 = vand.u32 %v660, 4294901760
        %v2098 = vsub.f32 %v660, %v2097
        %v2099 = vand.u32 %v2098, 4294901760
        %v2100 = vsub.f32 %v2098, %v2099
        %v2101 = vand.u32 %v2100, 4294901760
        %2102 = vmatpush2.msra.mxu0 %v2101
        %v2103 = vand.u32 %v659, 4294901760
        %v2104 = vsub.f32 %v659, %v2103
        %v2105 = vand.u32 %v2104, 4294901760
        %v2106 = vsub.f32 %v2104, %v2105
        %v2107 = vand.u32 %v2106, 4294901760
        %2108 = vmatprep.subr.mxu0 %v2107
        %v2109 = vand.u32 %v658, 4294901760
        %v2110 = vsub.f32 %v658, %v2109
        %v2111 = vand.u32 %v2110, 4294901760
        %v2112 = vsub.f32 %v2110, %v2111
        %v2113 = vand.u32 %v2112, 4294901760
        %2114 = vmatpush2.msra.mxu0 %v2113
        %v2115 = vand.u32 %v657, 4294901760
        %v2116 = vsub.f32 %v657, %v2115
        %v2117 = vand.u32 %v2116, 4294901760
        %v2118 = vsub.f32 %v2116, %v2117
        %v2119 = vand.u32 %v2118, 4294901760
        %2120 = vmatprep.subr.mxu0 %v2119
        %v2121 = vand.u32 %v656, 4294901760
        %v2122 = vsub.f32 %v656, %v2121
        %v2123 = vand.u32 %v2122, 4294901760
        %v2124 = vsub.f32 %v2122, %v2123
        %v2125 = vand.u32 %v2124, 4294901760
        %2126 = vmatpush2.msra.mxu0 %v2125
        %v2127 = vand.u32 %v655, 4294901760
        %v2128 = vsub.f32 %v655, %v2127
        %v2129 = vand.u32 %v2128, 4294901760
        %v2130 = vsub.f32 %v2128, %v2129
        %v2131 = vand.u32 %v2130, 4294901760
        %2132 = vmatprep.subr.mxu0 %v2131
        %v2133 = vand.u32 %v654, 4294901760
        %v2134 = vsub.f32 %v654, %v2133
        %v2135 = vand.u32 %v2134, 4294901760
        %v2136 = vsub.f32 %v2134, %v2135
        %v2137 = vand.u32 %v2136, 4294901760
        %2138 = vmatpush2.msra.mxu0 %v2137
        %v2139 = vand.u32 %v653, 4294901760
        %v2140 = vsub.f32 %v653, %v2139
        %v2141 = vand.u32 %v2140, 4294901760
        %v2142 = vsub.f32 %v2140, %v2141
        %v2143 = vand.u32 %v2142, 4294901760
        %2144 = vmatprep.subr.mxu0 %v2143
        %v2145 = vand.u32 %v652, 4294901760
        %v2146 = vsub.f32 %v652, %v2145
        %v2147 = vand.u32 %v2146, 4294901760
        %v2148 = vsub.f32 %v2146, %v2147
        %v2149 = vand.u32 %v2148, 4294901760
        %2150 = vmatpush2.msra.mxu0 %v2149
        %v2151 = vand.u32 %v651, 4294901760
        %v2152 = vsub.f32 %v651, %v2151
        %v2153 = vand.u32 %v2152, 4294901760
        %v2154 = vsub.f32 %v2152, %v2153
        %v2155 = vand.u32 %v2154, 4294901760
        %2156 = vmatprep.subr.mxu0 %v2155
        %v2157 = vand.u32 %v650, 4294901760
        %v2158 = vsub.f32 %v650, %v2157
        %v2159 = vand.u32 %v2158, 4294901760
        %v2160 = vsub.f32 %v2158, %v2159
        %v2161 = vand.u32 %v2160, 4294901760
        %2162 = vmatpush2.msra.mxu0 %v2161
        %v2163 = vand.u32 %v649, 4294901760
        %v2164 = vsub.f32 %v649, %v2163
        %v2165 = vand.u32 %v2164, 4294901760
        %v2166 = vsub.f32 %v2164, %v2165
        %v2167 = vand.u32 %v2166, 4294901760
        %2168 = vmatprep.subr.mxu0 %v2167
        %v2169 = vand.u32 %v648, 4294901760
        %v2170 = vsub.f32 %v648, %v2169
        %v2171 = vand.u32 %v2170, 4294901760
        %v2172 = vsub.f32 %v2170, %v2171
        %v2173 = vand.u32 %v2172, 4294901760
        %2174 = vmatpush2.msra.mxu0 %v2173
        %v2175 = vand.u32 %v647, 4294901760
        %v2176 = vsub.f32 %v647, %v2175
        %v2177 = vand.u32 %v2176, 4294901760
        %v2178 = vsub.f32 %v2176, %v2177
        %v2179 = vand.u32 %v2178, 4294901760
        %2180 = vmatprep.subr.mxu0 %v2179
        %v2181 = vand.u32 %v646, 4294901760
        %v2182 = vsub.f32 %v646, %v2181
        %v2183 = vand.u32 %v2182, 4294901760
        %v2184 = vsub.f32 %v2182, %v2183
        %v2185 = vand.u32 %v2184, 4294901760
        %2186 = vmatpush2.msra.mxu0 %v2185
        %v2187 = vand.u32 %v645, 4294901760
        %v2188 = vsub.f32 %v645, %v2187
        %v2189 = vand.u32 %v2188, 4294901760
        %v2190 = vsub.f32 %v2188, %v2189
        %v2191 = vand.u32 %v2190, 4294901760
        %2192 = vmatprep.subr.mxu0 %v2191
        %v2193 = vand.u32 %v644, 4294901760
        %v2194 = vsub.f32 %v644, %v2193
        %v2195 = vand.u32 %v2194, 4294901760
        %v2196 = vsub.f32 %v2194, %v2195
        %v2197 = vand.u32 %v2196, 4294901760
        %2198 = vmatpush2.msra.mxu0 %v2197
        %v2199 = vand.u32 %v643, 4294901760
        %v2200 = vsub.f32 %v643, %v2199
        %v2201 = vand.u32 %v2200, 4294901760
        %v2202 = vsub.f32 %v2200, %v2201
        %v2203 = vand.u32 %v2202, 4294901760
        %2204 = vmatprep.subr.mxu0 %v2203
        %v2205 = vand.u32 %v642, 4294901760
        %v2206 = vsub.f32 %v642, %v2205
        %v2207 = vand.u32 %v2206, 4294901760
        %v2208 = vsub.f32 %v2206, %v2207
        %v2209 = vand.u32 %v2208, 4294901760
        %2210 = vmatpush2.msra.mxu0 %v2209
        %v2211 = vand.u32 %v483, 4294901760
        %2212 = vmatprep.mubr.f32.mxu0 %v2211
        %v2213 = vand.u32 %v482, 4294901760
        %2214 = vmatmul.mubr.f32.gmra.mxu0 %v2213
        %v2215 = vpop.f32.mrf.mxu0
        %v2216 = vadd.f32 %v815, %v2215
        %v2217 = vpop.f32.mrf.mxu0
        %v2218 = vadd.f32 %v817, %v2217
        %v2219 = vand.u32 %v485, 4294901760
        %2220 = vmatprep.mubr.f32.mxu0 %v2219
        %v2221 = vand.u32 %v484, 4294901760
        %2222 = vmatmul.mubr.f32.gmra.mxu0 %v2221
        %v2223 = vpop.f32.mrf.mxu0
        %v2224 = vadd.f32 %v831, %v2223
        %v2225 = vpop.f32.mrf.mxu0
        %v2226 = vadd.f32 %v833, %v2225
        %v2227 = vand.u32 %v487, 4294901760
        %2228 = vmatprep.mubr.f32.mxu0 %v2227
        %v2229 = vand.u32 %v486, 4294901760
        %2230 = vmatmul.mubr.f32.gmra.mxu0 %v2229
        %v2231 = vpop.f32.mrf.mxu0
        %v2232 = vadd.f32 %v847, %v2231
        %v2233 = vpop.f32.mrf.mxu0
        %v2234 = vadd.f32 %v849, %v2233
        %v2235 = vand.u32 %v489, 4294901760
        %2236 = vmatprep.mubr.f32.mxu0 %v2235
        %v2237 = vand.u32 %v488, 4294901760
        %2238 = vmatmul.mubr.f32.gmra.mxu0 %v2237
        %v2239 = vpop.f32.mrf.mxu0
        %v2240 = vadd.f32 %v863, %v2239
        %v2241 = vpop.f32.mrf.mxu0
        %v2242 = vadd.f32 %v865, %v2241
        %v2243 = vand.u32 %v491, 4294901760
        %2244 = vmatprep.mubr.f32.mxu0 %v2243
        %v2245 = vand.u32 %v490, 4294901760
        %2246 = vmatmul.mubr.f32.gmra.mxu0 %v2245
        %v2247 = vpop.f32.mrf.mxu0
        %v2248 = vadd.f32 %v879, %v2247
        %v2249 = vpop.f32.mrf.mxu0
        %v2250 = vadd.f32 %v881, %v2249
        %v2251 = vand.u32 %v493, 4294901760
        %2252 = vmatprep.mubr.f32.mxu0 %v2251
        %v2253 = vand.u32 %v492, 4294901760
        %2254 = vmatmul.mubr.f32.gmra.mxu0 %v2253
        %v2255 = vpop.f32.mrf.mxu0
        %v2256 = vadd.f32 %v895, %v2255
        %v2257 = vpop.f32.mrf.mxu0
        %v2258 = vadd.f32 %v897, %v2257
        %v2259 = vand.u32 %v495, 4294901760
        %2260 = vmatprep.mubr.f32.mxu0 %v2259
        %v2261 = vand.u32 %v494, 4294901760
        %2262 = vmatmul.mubr.f32.gmra.mxu0 %v2261
        %v2263 = vpop.f32.mrf.mxu0
        %v2264 = vadd.f32 %v911, %v2263
        %v2265 = vpop.f32.mrf.mxu0
        %v2266 = vadd.f32 %v913, %v2265
        %v2267 = vand.u32 %v497, 4294901760
        %2268 = vmatprep.mubr.f32.mxu0 %v2267
        %v2269 = vand.u32 %v496, 4294901760
        %2270 = vmatmul.mubr.f32.gmra.mxu0 %v2269
        %v2271 = vpop.f32.mrf.mxu0
        %v2272 = vadd.f32 %v927, %v2271
        %v2273 = vpop.f32.mrf.mxu0
        %v2274 = vadd.f32 %v929, %v2273
        %v2275 = vand.u32 %v499, 4294901760
        %2276 = vmatprep.mubr.f32.mxu0 %v2275
        %v2277 = vand.u32 %v498, 4294901760
        %2278 = vmatmul.mubr.f32.gmra.mxu0 %v2277
        %v2279 = vpop.f32.mrf.mxu0
        %v2280 = vadd.f32 %v943, %v2279
        %v2281 = vpop.f32.mrf.mxu0
        %v2282 = vadd.f32 %v945, %v2281
        %v2283 = vand.u32 %v501, 4294901760
        %2284 = vmatprep.mubr.f32.mxu0 %v2283
        %v2285 = vand.u32 %v500, 4294901760
        %2286 = vmatmul.mubr.f32.gmra.mxu0 %v2285
        %v2287 = vpop.f32.mrf.mxu0
        %v2288 = vadd.f32 %v959, %v2287
        %v2289 = vpop.f32.mrf.mxu0
        %v2290 = vadd.f32 %v961, %v2289
        %v2291 = vand.u32 %v503, 4294901760
        %2292 = vmatprep.mubr.f32.mxu0 %v2291
        %v2293 = vand.u32 %v502, 4294901760
        %2294 = vmatmul.mubr.f32.gmra.mxu0 %v2293
        %v2295 = vpop.f32.mrf.mxu0
        %v2296 = vadd.f32 %v975, %v2295
        %v2297 = vpop.f32.mrf.mxu0
        %v2298 = vadd.f32 %v977, %v2297
        %v2299 = vand.u32 %v505, 4294901760
        %2300 = vmatprep.mubr.f32.mxu0 %v2299
        %v2301 = vand.u32 %v504, 4294901760
        %2302 = vmatmul.mubr.f32.gmra.mxu0 %v2301
        %v2303 = vpop.f32.mrf.mxu0
        %v2304 = vadd.f32 %v991, %v2303
        %v2305 = vpop.f32.mrf.mxu0
        %v2306 = vadd.f32 %v993, %v2305
        %v2307 = vand.u32 %v507, 4294901760
        %2308 = vmatprep.mubr.f32.mxu0 %v2307
        %v2309 = vand.u32 %v506, 4294901760
        %2310 = vmatmul.mubr.f32.gmra.mxu0 %v2309
        %v2311 = vpop.f32.mrf.mxu0
        %v2312 = vadd.f32 %v1007, %v2311
        %v2313 = vpop.f32.mrf.mxu0
        %v2314 = vadd.f32 %v1009, %v2313
        %v2315 = vand.u32 %v509, 4294901760
        %2316 = vmatprep.mubr.f32.mxu0 %v2315
        %v2317 = vand.u32 %v508, 4294901760
        %2318 = vmatmul.mubr.f32.gmra.mxu0 %v2317
        %v2319 = vpop.f32.mrf.mxu0
        %v2320 = vadd.f32 %v1023, %v2319
        %v2321 = vpop.f32.mrf.mxu0
        %v2322 = vadd.f32 %v1025, %v2321
        %v2323 = vand.u32 %v511, 4294901760
        %2324 = vmatprep.mubr.f32.mxu0 %v2323
        %v2325 = vand.u32 %v510, 4294901760
        %2326 = vmatmul.mubr.f32.gmra.mxu0 %v2325
        %v2327 = vpop.f32.mrf.mxu0
        %v2328 = vadd.f32 %v1039, %v2327
        %v2329 = vpop.f32.mrf.mxu0
        %v2330 = vadd.f32 %v1041, %v2329
        %v2331 = vand.u32 %v513, 4294901760
        %2332 = vmatprep.mubr.f32.mxu0 %v2331
        %v2333 = vand.u32 %v512, 4294901760
        %2334 = vmatmul.mubr.f32.gmra.mxu0 %v2333
        %v2335 = vpop.f32.mrf.mxu0
        %v2336 = vadd.f32 %v1055, %v2335
        %v2337 = vpop.f32.mrf.mxu0
        %v2338 = vadd.f32 %v1057, %v2337
        %v2339 = vand.u32 %v515, 4294901760
        %2340 = vmatprep.mubr.f32.mxu0 %v2339
        %v2341 = vand.u32 %v514, 4294901760
        %2342 = vmatmul.mubr.f32.gmra.mxu0 %v2341
        %v2343 = vpop.f32.mrf.mxu0
        %v2344 = vadd.f32 %v1071, %v2343
        %v2345 = vpop.f32.mrf.mxu0
        %v2346 = vadd.f32 %v1073, %v2345
        %v2347 = vand.u32 %v517, 4294901760
        %2348 = vmatprep.mubr.f32.mxu0 %v2347
        %v2349 = vand.u32 %v516, 4294901760
        %2350 = vmatmul.mubr.f32.gmra.mxu0 %v2349
        %v2351 = vpop.f32.mrf.mxu0
        %v2352 = vadd.f32 %v1087, %v2351
        %v2353 = vpop.f32.mrf.mxu0
        %v2354 = vadd.f32 %v1089, %v2353
        %v2355 = vand.u32 %v519, 4294901760
        %2356 = vmatprep.mubr.f32.mxu0 %v2355
        %v2357 = vand.u32 %v518, 4294901760
        %2358 = vmatmul.mubr.f32.gmra.mxu0 %v2357
        %v2359 = vpop.f32.mrf.mxu0
        %v2360 = vadd.f32 %v1103, %v2359
        %v2361 = vpop.f32.mrf.mxu0
        %v2362 = vadd.f32 %v1105, %v2361
        %v2363 = vand.u32 %v521, 4294901760
        %2364 = vmatprep.mubr.f32.mxu0 %v2363
        %v2365 = vand.u32 %v520, 4294901760
        %2366 = vmatmul.mubr.f32.gmra.mxu0 %v2365
        %v2367 = vpop.f32.mrf.mxu0
        %v2368 = vadd.f32 %v1119, %v2367
        %v2369 = vpop.f32.mrf.mxu0
        %v2370 = vadd.f32 %v1121, %v2369
        %v2371 = vand.u32 %v523, 4294901760
        %2372 = vmatprep.mubr.f32.mxu0 %v2371
        %v2373 = vand.u32 %v522, 4294901760
        %2374 = vmatmul.mubr.f32.gmra.mxu0 %v2373
        %v2375 = vpop.f32.mrf.mxu0
        %v2376 = vadd.f32 %v1135, %v2375
        %v2377 = vpop.f32.mrf.mxu0
        %v2378 = vadd.f32 %v1137, %v2377
        %v2379 = vand.u32 %v525, 4294901760
        %2380 = vmatprep.mubr.f32.mxu0 %v2379
        %v2381 = vand.u32 %v524, 4294901760
        %2382 = vmatmul.mubr.f32.gmra.mxu0 %v2381
        %v2383 = vpop.f32.mrf.mxu0
        %v2384 = vadd.f32 %v1151, %v2383
        %v2385 = vpop.f32.mrf.mxu0
        %v2386 = vadd.f32 %v1153, %v2385
        %v2387 = vand.u32 %v527, 4294901760
        %2388 = vmatprep.mubr.f32.mxu0 %v2387
        %v2389 = vand.u32 %v526, 4294901760
        %2390 = vmatmul.mubr.f32.gmra.mxu0 %v2389
        %v2391 = vpop.f32.mrf.mxu0
        %v2392 = vadd.f32 %v1167, %v2391
        %v2393 = vpop.f32.mrf.mxu0
        %v2394 = vadd.f32 %v1169, %v2393
        %v2395 = vand.u32 %v529, 4294901760
        %2396 = vmatprep.mubr.f32.mxu0 %v2395
        %v2397 = vand.u32 %v528, 4294901760
        %2398 = vmatmul.mubr.f32.gmra.mxu0 %v2397
        %v2399 = vpop.f32.mrf.mxu0
        %v2400 = vadd.f32 %v1183, %v2399
        %v2401 = vpop.f32.mrf.mxu0
        %v2402 = vadd.f32 %v1185, %v2401
        %v2403 = vand.u32 %v531, 4294901760
        %2404 = vmatprep.mubr.f32.mxu0 %v2403
        %v2405 = vand.u32 %v530, 4294901760
        %2406 = vmatmul.mubr.f32.gmra.mxu0 %v2405
        %v2407 = vpop.f32.mrf.mxu0
        %v2408 = vadd.f32 %v1199, %v2407
        %v2409 = vpop.f32.mrf.mxu0
        %v2410 = vadd.f32 %v1201, %v2409
        %v2411 = vand.u32 %v533, 4294901760
        %2412 = vmatprep.mubr.f32.mxu0 %v2411
        %v2413 = vand.u32 %v532, 4294901760
        %2414 = vmatmul.mubr.f32.gmra.mxu0 %v2413
        %v2415 = vpop.f32.mrf.mxu0
        %v2416 = vadd.f32 %v1215, %v2415
        %v2417 = vpop.f32.mrf.mxu0
        %v2418 = vadd.f32 %v1217, %v2417
        %v2419 = vand.u32 %v535, 4294901760
        %2420 = vmatprep.mubr.f32.mxu0 %v2419
        %v2421 = vand.u32 %v534, 4294901760
        %2422 = vmatmul.mubr.f32.gmra.mxu0 %v2421
        %v2423 = vpop.f32.mrf.mxu0
        %v2424 = vadd.f32 %v1231, %v2423
        %v2425 = vpop.f32.mrf.mxu0
        %v2426 = vadd.f32 %v1233, %v2425
        %v2427 = vand.u32 %v537, 4294901760
        %2428 = vmatprep.mubr.f32.mxu0 %v2427
        %v2429 = vand.u32 %v536, 4294901760
        %2430 = vmatmul.mubr.f32.gmra.mxu0 %v2429
        %v2431 = vpop.f32.mrf.mxu0
        %v2432 = vadd.f32 %v1247, %v2431
        %v2433 = vpop.f32.mrf.mxu0
        %v2434 = vadd.f32 %v1249, %v2433
        %v2435 = vand.u32 %v539, 4294901760
        %2436 = vmatprep.mubr.f32.mxu0 %v2435
        %v2437 = vand.u32 %v538, 4294901760
        %2438 = vmatmul.mubr.f32.gmra.mxu0 %v2437
        %v2439 = vpop.f32.mrf.mxu0
        %v2440 = vadd.f32 %v1263, %v2439
        %v2441 = vpop.f32.mrf.mxu0
        %v2442 = vadd.f32 %v1265, %v2441
        %v2443 = vand.u32 %v541, 4294901760
        %2444 = vmatprep.mubr.f32.mxu0 %v2443
        %v2445 = vand.u32 %v540, 4294901760
        %2446 = vmatmul.mubr.f32.gmra.mxu0 %v2445
        %v2447 = vpop.f32.mrf.mxu0
        %v2448 = vadd.f32 %v1279, %v2447
        %v2449 = vpop.f32.mrf.mxu0
        %v2450 = vadd.f32 %v1281, %v2449
        %v2451 = vand.u32 %v543, 4294901760
        %2452 = vmatprep.mubr.f32.mxu0 %v2451
        %v2453 = vand.u32 %v542, 4294901760
        %2454 = vmatmul.mubr.f32.gmra.mxu0 %v2453
        %v2455 = vpop.f32.mrf.mxu0
        %v2456 = vadd.f32 %v1295, %v2455
        %v2457 = vpop.f32.mrf.mxu0
        %v2458 = vadd.f32 %v1297, %v2457
        %v2459 = vand.u32 %v545, 4294901760
        %2460 = vmatprep.mubr.f32.mxu0 %v2459
        %v2461 = vand.u32 %v544, 4294901760
        %2462 = vmatmul.mubr.f32.gmra.mxu0 %v2461
        %v2463 = vpop.f32.mrf.mxu0
        %v2464 = vadd.f32 %v1311, %v2463
        %v2465 = vpop.f32.mrf.mxu0
        %v2466 = vadd.f32 %v1313, %v2465
        %v2467 = vand.u32 %v547, 4294901760
        %2468 = vmatprep.mubr.f32.mxu0 %v2467
        %v2469 = vand.u32 %v546, 4294901760
        %2470 = vmatmul.mubr.f32.gmra.mxu0 %v2469
        %v2471 = vpop.f32.mrf.mxu0
        %v2472 = vadd.f32 %v1327, %v2471
        %v2473 = vpop.f32.mrf.mxu0
        %v2474 = vadd.f32 %v1329, %v2473
        %v2475 = vand.u32 %v549, 4294901760
        %2476 = vmatprep.mubr.f32.mxu0 %v2475
        %v2477 = vand.u32 %v548, 4294901760
        %2478 = vmatmul.mubr.f32.gmra.mxu0 %v2477
        %v2479 = vpop.f32.mrf.mxu0
        %v2480 = vadd.f32 %v1343, %v2479
        %v2481 = vpop.f32.mrf.mxu0
        %v2482 = vadd.f32 %v1345, %v2481
        %v2483 = vand.u32 %v551, 4294901760
        %2484 = vmatprep.mubr.f32.mxu0 %v2483
        %v2485 = vand.u32 %v550, 4294901760
        %2486 = vmatmul.mubr.f32.gmra.mxu0 %v2485
        %v2487 = vpop.f32.mrf.mxu0
        %v2488 = vadd.f32 %v1359, %v2487
        %v2489 = vpop.f32.mrf.mxu0
        %v2490 = vadd.f32 %v1361, %v2489
        %v2491 = vand.u32 %v553, 4294901760
        %2492 = vmatprep.mubr.f32.mxu0 %v2491
        %v2493 = vand.u32 %v552, 4294901760
        %2494 = vmatmul.mubr.f32.gmra.mxu0 %v2493
        %v2495 = vpop.f32.mrf.mxu0
        %v2496 = vadd.f32 %v1375, %v2495
        %v2497 = vpop.f32.mrf.mxu0
        %v2498 = vadd.f32 %v1377, %v2497
        %v2499 = vand.u32 %v555, 4294901760
        %2500 = vmatprep.mubr.f32.mxu0 %v2499
        %v2501 = vand.u32 %v554, 4294901760
        %2502 = vmatmul.mubr.f32.gmra.mxu0 %v2501
        %v2503 = vpop.f32.mrf.mxu0
        %v2504 = vadd.f32 %v1391, %v2503
        %v2505 = vpop.f32.mrf.mxu0
        %v2506 = vadd.f32 %v1393, %v2505
        %v2507 = vand.u32 %v557, 4294901760
        %2508 = vmatprep.mubr.f32.mxu0 %v2507
        %v2509 = vand.u32 %v556, 4294901760
        %2510 = vmatmul.mubr.f32.gmra.mxu0 %v2509
        %v2511 = vpop.f32.mrf.mxu0
        %v2512 = vadd.f32 %v1407, %v2511
        %v2513 = vpop.f32.mrf.mxu0
        %v2514 = vadd.f32 %v1409, %v2513
        %v2515 = vand.u32 %v559, 4294901760
        %2516 = vmatprep.mubr.f32.mxu0 %v2515
        %v2517 = vand.u32 %v558, 4294901760
        %2518 = vmatmul.mubr.f32.gmra.mxu0 %v2517
        %v2519 = vpop.f32.mrf.mxu0
        %v2520 = vadd.f32 %v1423, %v2519
        %v2521 = vpop.f32.mrf.mxu0
        %v2522 = vadd.f32 %v1425, %v2521
        %v2523 = vand.u32 %v561, 4294901760
        %2524 = vmatprep.mubr.f32.mxu0 %v2523
        %v2525 = vand.u32 %v560, 4294901760
        %2526 = vmatmul.mubr.f32.gmra.mxu0 %v2525
        %v2527 = vpop.f32.mrf.mxu0
        %v2528 = vadd.f32 %v1439, %v2527
        %v2529 = vpop.f32.mrf.mxu0
        %v2530 = vadd.f32 %v1441, %v2529
        %v2531 = vand.u32 %v563, 4294901760
        %2532 = vmatprep.mubr.f32.mxu0 %v2531
        %v2533 = vand.u32 %v562, 4294901760
        %2534 = vmatmul.mubr.f32.gmra.mxu0 %v2533
        %v2535 = vpop.f32.mrf.mxu0
        %v2536 = vadd.f32 %v1455, %v2535
        %v2537 = vpop.f32.mrf.mxu0
        %v2538 = vadd.f32 %v1457, %v2537
        %v2539 = vand.u32 %v565, 4294901760
        %2540 = vmatprep.mubr.f32.mxu0 %v2539
        %v2541 = vand.u32 %v564, 4294901760
        %2542 = vmatmul.mubr.f32.gmra.mxu0 %v2541
        %v2543 = vpop.f32.mrf.mxu0
        %v2544 = vadd.f32 %v1471, %v2543
        %v2545 = vpop.f32.mrf.mxu0
        %v2546 = vadd.f32 %v1473, %v2545
        %v2547 = vand.u32 %v567, 4294901760
        %2548 = vmatprep.mubr.f32.mxu0 %v2547
        %v2549 = vand.u32 %v566, 4294901760
        %2550 = vmatmul.mubr.f32.gmra.mxu0 %v2549
        %v2551 = vpop.f32.mrf.mxu0
        %v2552 = vadd.f32 %v1487, %v2551
        %v2553 = vpop.f32.mrf.mxu0
        %v2554 = vadd.f32 %v1489, %v2553
        %v2555 = vand.u32 %v569, 4294901760
        %2556 = vmatprep.mubr.f32.mxu0 %v2555
        %v2557 = vand.u32 %v568, 4294901760
        %2558 = vmatmul.mubr.f32.gmra.mxu0 %v2557
        %v2559 = vpop.f32.mrf.mxu0
        %v2560 = vadd.f32 %v1503, %v2559
        %v2561 = vpop.f32.mrf.mxu0
        %v2562 = vadd.f32 %v1505, %v2561
        %v2563 = vand.u32 %v571, 4294901760
        %2564 = vmatprep.mubr.f32.mxu0 %v2563
        %v2565 = vand.u32 %v570, 4294901760
        %2566 = vmatmul.mubr.f32.gmra.mxu0 %v2565
        %v2567 = vpop.f32.mrf.mxu0
        %v2568 = vadd.f32 %v1519, %v2567
        %v2569 = vpop.f32.mrf.mxu0
        %v2570 = vadd.f32 %v1521, %v2569
        %v2571 = vand.u32 %v573, 4294901760
        %2572 = vmatprep.mubr.f32.mxu0 %v2571
        %v2573 = vand.u32 %v572, 4294901760
        %2574 = vmatmul.mubr.f32.gmra.mxu0 %v2573
        %v2575 = vpop.f32.mrf.mxu0
        %v2576 = vadd.f32 %v1535, %v2575
        %v2577 = vpop.f32.mrf.mxu0
        %v2578 = vadd.f32 %v1537, %v2577
        %v2579 = vand.u32 %v575, 4294901760
        %2580 = vmatprep.mubr.f32.mxu0 %v2579
        %v2581 = vand.u32 %v574, 4294901760
        %2582 = vmatmul.mubr.f32.gmra.mxu0 %v2581
        %v2583 = vpop.f32.mrf.mxu0
        %v2584 = vadd.f32 %v1551, %v2583
        %v2585 = vpop.f32.mrf.mxu0
        %v2586 = vadd.f32 %v1553, %v2585
        %v2587 = vand.u32 %v577, 4294901760
        %2588 = vmatprep.mubr.f32.mxu0 %v2587
        %v2589 = vand.u32 %v576, 4294901760
        %2590 = vmatmul.mubr.f32.gmra.mxu0 %v2589
        %v2591 = vpop.f32.mrf.mxu0
        %v2592 = vadd.f32 %v1567, %v2591
        %v2593 = vpop.f32.mrf.mxu0
        %v2594 = vadd.f32 %v1569, %v2593
        %v2595 = vand.u32 %v579, 4294901760
        %2596 = vmatprep.mubr.f32.mxu0 %v2595
        %v2597 = vand.u32 %v578, 4294901760
        %2598 = vmatmul.mubr.f32.gmra.mxu0 %v2597
        %v2599 = vpop.f32.mrf.mxu0
        %v2600 = vadd.f32 %v1583, %v2599
        %v2601 = vpop.f32.mrf.mxu0
        %v2602 = vadd.f32 %v1585, %v2601
        %v2603 = vand.u32 %v581, 4294901760
        %2604 = vmatprep.mubr.f32.mxu0 %v2603
        %v2605 = vand.u32 %v580, 4294901760
        %2606 = vmatmul.mubr.f32.gmra.mxu0 %v2605
        %v2607 = vpop.f32.mrf.mxu0
        %v2608 = vadd.f32 %v1599, %v2607
        %v2609 = vpop.f32.mrf.mxu0
        %v2610 = vadd.f32 %v1601, %v2609
        %v2611 = vand.u32 %v583, 4294901760
        %2612 = vmatprep.mubr.f32.mxu0 %v2611
        %v2613 = vand.u32 %v582, 4294901760
        %2614 = vmatmul.mubr.f32.gmra.mxu0 %v2613
        %v2615 = vpop.f32.mrf.mxu0
        %v2616 = vadd.f32 %v1615, %v2615
        %v2617 = vpop.f32.mrf.mxu0
        %v2618 = vadd.f32 %v1617, %v2617
        %v2619 = vand.u32 %v585, 4294901760
        %2620 = vmatprep.mubr.f32.mxu0 %v2619
        %v2621 = vand.u32 %v584, 4294901760
        %2622 = vmatmul.mubr.f32.gmra.mxu0 %v2621
        %v2623 = vpop.f32.mrf.mxu0
        %v2624 = vadd.f32 %v1631, %v2623
        %v2625 = vpop.f32.mrf.mxu0
        %v2626 = vadd.f32 %v1633, %v2625
        %v2627 = vand.u32 %v587, 4294901760
        %2628 = vmatprep.mubr.f32.mxu0 %v2627
        %v2629 = vand.u32 %v586, 4294901760
        %2630 = vmatmul.mubr.f32.gmra.mxu0 %v2629
        %v2631 = vpop.f32.mrf.mxu0
        %v2632 = vadd.f32 %v1647, %v2631
        %v2633 = vpop.f32.mrf.mxu0
        %v2634 = vadd.f32 %v1649, %v2633
        %v2635 = vand.u32 %v589, 4294901760
        %2636 = vmatprep.mubr.f32.mxu0 %v2635
        %v2637 = vand.u32 %v588, 4294901760
        %2638 = vmatmul.mubr.f32.gmra.mxu0 %v2637
        %v2639 = vpop.f32.mrf.mxu0
        %v2640 = vadd.f32 %v1663, %v2639
        %v2641 = vpop.f32.mrf.mxu0
        %v2642 = vadd.f32 %v1665, %v2641
        %v2643 = vand.u32 %v591, 4294901760
        %2644 = vmatprep.mubr.f32.mxu0 %v2643
        %v2645 = vand.u32 %v590, 4294901760
        %2646 = vmatmul.mubr.f32.gmra.mxu0 %v2645
        %v2647 = vpop.f32.mrf.mxu0
        %v2648 = vadd.f32 %v1679, %v2647
        %v2649 = vpop.f32.mrf.mxu0
        %v2650 = vadd.f32 %v1681, %v2649
        %v2651 = vand.u32 %v593, 4294901760
        %2652 = vmatprep.mubr.f32.mxu0 %v2651
        %v2653 = vand.u32 %v592, 4294901760
        %2654 = vmatmul.mubr.f32.gmra.mxu0 %v2653
        %v2655 = vpop.f32.mrf.mxu0
        %v2656 = vadd.f32 %v1695, %v2655
        %v2657 = vpop.f32.mrf.mxu0
        %v2658 = vadd.f32 %v1697, %v2657
        %v2659 = vand.u32 %v595, 4294901760
        %2660 = vmatprep.mubr.f32.mxu0 %v2659
        %v2661 = vand.u32 %v594, 4294901760
        %2662 = vmatmul.mubr.f32.gmra.mxu0 %v2661
        %v2663 = vpop.f32.mrf.mxu0
        %v2664 = vadd.f32 %v1711, %v2663
        %v2665 = vpop.f32.mrf.mxu0
        %v2666 = vadd.f32 %v1713, %v2665
        %v2667 = vand.u32 %v597, 4294901760
        %2668 = vmatprep.mubr.f32.mxu0 %v2667
        %v2669 = vand.u32 %v596, 4294901760
        %2670 = vmatmul.mubr.f32.gmra.mxu0 %v2669
        %v2671 = vpop.f32.mrf.mxu0
        %v2672 = vadd.f32 %v1727, %v2671
        %v2673 = vpop.f32.mrf.mxu0
        %v2674 = vadd.f32 %v1729, %v2673
        %v2675 = vand.u32 %v599, 4294901760
        %2676 = vmatprep.mubr.f32.mxu0 %v2675
        %v2677 = vand.u32 %v598, 4294901760
        %2678 = vmatmul.mubr.f32.gmra.mxu0 %v2677
        %v2679 = vpop.f32.mrf.mxu0
        %v2680 = vadd.f32 %v1743, %v2679
        %v2681 = vpop.f32.mrf.mxu0
        %v2682 = vadd.f32 %v1745, %v2681
        %v2683 = vand.u32 %v601, 4294901760
        %2684 = vmatprep.mubr.f32.mxu0 %v2683
        %v2685 = vand.u32 %v600, 4294901760
        %2686 = vmatmul.mubr.f32.gmra.mxu0 %v2685
        %v2687 = vpop.f32.mrf.mxu0
        %v2688 = vadd.f32 %v1759, %v2687
        %v2689 = vpop.f32.mrf.mxu0
        %v2690 = vadd.f32 %v1761, %v2689
        %v2691 = vand.u32 %v603, 4294901760
        %2692 = vmatprep.mubr.f32.mxu0 %v2691
        %v2693 = vand.u32 %v602, 4294901760
        %2694 = vmatmul.mubr.f32.gmra.mxu0 %v2693
        %v2695 = vpop.f32.mrf.mxu0
        %v2696 = vadd.f32 %v1775, %v2695
        %v2697 = vpop.f32.mrf.mxu0
        %v2698 = vadd.f32 %v1777, %v2697
        %v2699 = vand.u32 %v605, 4294901760
        %2700 = vmatprep.mubr.f32.mxu0 %v2699
        %v2701 = vand.u32 %v604, 4294901760
        %2702 = vmatmul.mubr.f32.gmra.mxu0 %v2701
        %v2703 = vpop.f32.mrf.mxu0
        %v2704 = vadd.f32 %v1791, %v2703
        %v2705 = vpop.f32.mrf.mxu0
        %v2706 = vadd.f32 %v1793, %v2705
        %v2707 = vand.u32 %v607, 4294901760
        %2708 = vmatprep.mubr.f32.mxu0 %v2707
        %v2709 = vand.u32 %v606, 4294901760
        %2710 = vmatmul.mubr.f32.gmra.mxu0 %v2709
        %v2711 = vpop.f32.mrf.mxu0
        %v2712 = vadd.f32 %v1807, %v2711
        %v2713 = vpop.f32.mrf.mxu0
        %v2714 = vadd.f32 %v1809, %v2713
        %v2715 = vand.u32 %v609, 4294901760
        %2716 = vmatprep.mubr.f32.mxu0 %v2715
        %v2717 = vand.u32 %v608, 4294901760
        %2718 = vmatmul.mubr.f32.gmra.mxu0 %v2717
        %v2719 = vpop.f32.mrf.mxu0
        %v2720 = vadd.f32 %v1823, %v2719
        %v2721 = vpop.f32.mrf.mxu0
        %v2722 = vadd.f32 %v1825, %v2721
        %2723 = vdwg.mxu0
        %v2724 = vand.u32 %v641, 4294901760
        %v2725 = vsub.f32 %v641, %v2724
        %2726 = vmatprep.subr.mxu0 %v2725
        %v2727 = vand.u32 %v640, 4294901760
        %v2728 = vsub.f32 %v640, %v2727
        %2729 = vmatpush1.msra.mxu0 %v2728
        %v2730 = vand.u32 %v639, 4294901760
        %v2731 = vsub.f32 %v639, %v2730
        %2732 = vmatprep.subr.mxu0 %v2731
        %v2733 = vand.u32 %v638, 4294901760
        %v2734 = vsub.f32 %v638, %v2733
        %2735 = vmatpush1.msra.mxu0 %v2734
        %v2736 = vand.u32 %v637, 4294901760
        %v2737 = vsub.f32 %v637, %v2736
        %2738 = vmatprep.subr.mxu0 %v2737
        %v2739 = vand.u32 %v636, 4294901760
        %v2740 = vsub.f32 %v636, %v2739
        %2741 = vmatpush1.msra.mxu0 %v2740
        %v2742 = vand.u32 %v635, 4294901760
        %v2743 = vsub.f32 %v635, %v2742
        %2744 = vmatprep.subr.mxu0 %v2743
        %v2745 = vand.u32 %v634, 4294901760
        %v2746 = vsub.f32 %v634, %v2745
        %2747 = vmatpush1.msra.mxu0 %v2746
        %v2748 = vand.u32 %v633, 4294901760
        %v2749 = vsub.f32 %v633, %v2748
        %2750 = vmatprep.subr.mxu0 %v2749
        %v2751 = vand.u32 %v632, 4294901760
        %v2752 = vsub.f32 %v632, %v2751
        %2753 = vmatpush1.msra.mxu0 %v2752
        %v2754 = vand.u32 %v631, 4294901760
        %v2755 = vsub.f32 %v631, %v2754
        %2756 = vmatprep.subr.mxu0 %v2755
        %v2757 = vand.u32 %v630, 4294901760
        %v2758 = vsub.f32 %v630, %v2757
        %2759 = vmatpush1.msra.mxu0 %v2758
        %v2760 = vand.u32 %v629, 4294901760
        %v2761 = vsub.f32 %v629, %v2760
        %2762 = vmatprep.subr.mxu0 %v2761
        %v2763 = vand.u32 %v628, 4294901760
        %v2764 = vsub.f32 %v628, %v2763
        %2765 = vmatpush1.msra.mxu0 %v2764
        %v2766 = vand.u32 %v627, 4294901760
        %v2767 = vsub.f32 %v627, %v2766
        %2768 = vmatprep.subr.mxu0 %v2767
        %v2769 = vand.u32 %v626, 4294901760
        %v2770 = vsub.f32 %v626, %v2769
        %2771 = vmatpush1.msra.mxu0 %v2770
        %v2772 = vand.u32 %v625, 4294901760
        %v2773 = vsub.f32 %v625, %v2772
        %2774 = vmatprep.subr.mxu0 %v2773
        %v2775 = vand.u32 %v624, 4294901760
        %v2776 = vsub.f32 %v624, %v2775
        %2777 = vmatpush1.msra.mxu0 %v2776
        %v2778 = vand.u32 %v623, 4294901760
        %v2779 = vsub.f32 %v623, %v2778
        %2780 = vmatprep.subr.mxu0 %v2779
        %v2781 = vand.u32 %v622, 4294901760
        %v2782 = vsub.f32 %v622, %v2781
        %2783 = vmatpush1.msra.mxu0 %v2782
        %v2784 = vand.u32 %v621, 4294901760
        %v2785 = vsub.f32 %v621, %v2784
        %2786 = vmatprep.subr.mxu0 %v2785
        %v2787 = vand.u32 %v620, 4294901760
        %v2788 = vsub.f32 %v620, %v2787
        %2789 = vmatpush1.msra.mxu0 %v2788
        %v2790 = vand.u32 %v619, 4294901760
        %v2791 = vsub.f32 %v619, %v2790
        %2792 = vmatprep.subr.mxu0 %v2791
        %v2793 = vand.u32 %v618, 4294901760
        %v2794 = vsub.f32 %v618, %v2793
        %2795 = vmatpush1.msra.mxu0 %v2794
        %v2796 = vand.u32 %v617, 4294901760
        %v2797 = vsub.f32 %v617, %v2796
        %2798 = vmatprep.subr.mxu0 %v2797
        %v2799 = vand.u32 %v616, 4294901760
        %v2800 = vsub.f32 %v616, %v2799
        %2801 = vmatpush1.msra.mxu0 %v2800
        %v2802 = vand.u32 %v615, 4294901760
        %v2803 = vsub.f32 %v615, %v2802
        %2804 = vmatprep.subr.mxu0 %v2803
        %v2805 = vand.u32 %v614, 4294901760
        %v2806 = vsub.f32 %v614, %v2805
        %2807 = vmatpush1.msra.mxu0 %v2806
        %v2808 = vand.u32 %v613, 4294901760
        %v2809 = vsub.f32 %v613, %v2808
        %2810 = vmatprep.subr.mxu0 %v2809
        %v2811 = vand.u32 %v612, 4294901760
        %v2812 = vsub.f32 %v612, %v2811
        %2813 = vmatpush1.msra.mxu0 %v2812
        %v2814 = vand.u32 %v611, 4294901760
        %v2815 = vsub.f32 %v611, %v2814
        %2816 = vmatprep.subr.mxu0 %v2815
        %v2817 = vand.u32 %v610, 4294901760
        %v2818 = vsub.f32 %v610, %v2817
        %2819 = vmatpush1.msra.mxu0 %v2818
        %v2820 = vand.u32 %v673, 4294901760
        %v2821 = vsub.f32 %v673, %v2820
        %2822 = vmatprep.subr.mxu0 %v2821
        %v2823 = vand.u32 %v672, 4294901760
        %v2824 = vsub.f32 %v672, %v2823
        %2825 = vmatpush2.msra.mxu0 %v2824
        %v2826 = vand.u32 %v671, 4294901760
        %v2827 = vsub.f32 %v671, %v2826
        %2828 = vmatprep.subr.mxu0 %v2827
        %v2829 = vand.u32 %v670, 4294901760
        %v2830 = vsub.f32 %v670, %v2829
        %2831 = vmatpush2.msra.mxu0 %v2830
        %v2832 = vand.u32 %v669, 4294901760
        %v2833 = vsub.f32 %v669, %v2832
        %2834 = vmatprep.subr.mxu0 %v2833
        %v2835 = vand.u32 %v668, 4294901760
        %v2836 = vsub.f32 %v668, %v2835
        %2837 = vmatpush2.msra.mxu0 %v2836
        %v2838 = vand.u32 %v667, 4294901760
        %v2839 = vsub.f32 %v667, %v2838
        %2840 = vmatprep.subr.mxu0 %v2839
        %v2841 = vand.u32 %v666, 4294901760
        %v2842 = vsub.f32 %v666, %v2841
        %2843 = vmatpush2.msra.mxu0 %v2842
        %v2844 = vand.u32 %v665, 4294901760
        %v2845 = vsub.f32 %v665, %v2844
        %2846 = vmatprep.subr.mxu0 %v2845
        %v2847 = vand.u32 %v664, 4294901760
        %v2848 = vsub.f32 %v664, %v2847
        %2849 = vmatpush2.msra.mxu0 %v2848
        %v2850 = vand.u32 %v663, 4294901760
        %v2851 = vsub.f32 %v663, %v2850
        %2852 = vmatprep.subr.mxu0 %v2851
        %v2853 = vand.u32 %v662, 4294901760
        %v2854 = vsub.f32 %v662, %v2853
        %2855 = vmatpush2.msra.mxu0 %v2854
        %v2856 = vand.u32 %v661, 4294901760
        %v2857 = vsub.f32 %v661, %v2856
        %2858 = vmatprep.subr.mxu0 %v2857
        %v2859 = vand.u32 %v660, 4294901760
        %v2860 = vsub.f32 %v660, %v2859
        %2861 = vmatpush2.msra.mxu0 %v2860
        %v2862 = vand.u32 %v659, 4294901760
        %v2863 = vsub.f32 %v659, %v2862
        %2864 = vmatprep.subr.mxu0 %v2863
        %v2865 = vand.u32 %v658, 4294901760
        %v2866 = vsub.f32 %v658, %v2865
        %2867 = vmatpush2.msra.mxu0 %v2866
        %v2868 = vand.u32 %v657, 4294901760
        %v2869 = vsub.f32 %v657, %v2868
        %2870 = vmatprep.subr.mxu0 %v2869
        %v2871 = vand.u32 %v656, 4294901760
        %v2872 = vsub.f32 %v656, %v2871
        %2873 = vmatpush2.msra.mxu0 %v2872
        %v2874 = vand.u32 %v655, 4294901760
        %v2875 = vsub.f32 %v655, %v2874
        %2876 = vmatprep.subr.mxu0 %v2875
        %v2877 = vand.u32 %v654, 4294901760
        %v2878 = vsub.f32 %v654, %v2877
        %2879 = vmatpush2.msra.mxu0 %v2878
        %v2880 = vand.u32 %v653, 4294901760
        %v2881 = vsub.f32 %v653, %v2880
        %2882 = vmatprep.subr.mxu0 %v2881
        %v2883 = vand.u32 %v652, 4294901760
        %v2884 = vsub.f32 %v652, %v2883
        %2885 = vmatpush2.msra.mxu0 %v2884
        %v2886 = vand.u32 %v651, 4294901760
        %v2887 = vsub.f32 %v651, %v2886
        %2888 = vmatprep.subr.mxu0 %v2887
        %v2889 = vand.u32 %v650, 4294901760
        %v2890 = vsub.f32 %v650, %v2889
        %2891 = vmatpush2.msra.mxu0 %v2890
        %v2892 = vand.u32 %v649, 4294901760
        %v2893 = vsub.f32 %v649, %v2892
        %2894 = vmatprep.subr.mxu0 %v2893
        %v2895 = vand.u32 %v648, 4294901760
        %v2896 = vsub.f32 %v648, %v2895
        %2897 = vmatpush2.msra.mxu0 %v2896
        %v2898 = vand.u32 %v647, 4294901760
        %v2899 = vsub.f32 %v647, %v2898
        %2900 = vmatprep.subr.mxu0 %v2899
        %v2901 = vand.u32 %v646, 4294901760
        %v2902 = vsub.f32 %v646, %v2901
        %2903 = vmatpush2.msra.mxu0 %v2902
        %v2904 = vand.u32 %v645, 4294901760
        %v2905 = vsub.f32 %v645, %v2904
        %2906 = vmatprep.subr.mxu0 %v2905
        %v2907 = vand.u32 %v644, 4294901760
        %v2908 = vsub.f32 %v644, %v2907
        %2909 = vmatpush2.msra.mxu0 %v2908
        %v2910 = vand.u32 %v643, 4294901760
        %v2911 = vsub.f32 %v643, %v2910
        %2912 = vmatprep.subr.mxu0 %v2911
        %v2913 = vand.u32 %v642, 4294901760
        %v2914 = vsub.f32 %v642, %v2913
        %2915 = vmatpush2.msra.mxu0 %v2914
        %v2916 = vand.u32 %v483, 4294901760
        %v2917 = vsub.f32 %v483, %v2916
        %2918 = vmatprep.mubr.f32.mxu0 %v2917
        %v2919 = vand.u32 %v482, 4294901760
        %v2920 = vsub.f32 %v482, %v2919
        %2921 = vmatmul.mubr.f32.gmra.mxu0 %v2920
        %v2922 = vpop.f32.mrf.mxu0
        %v2923 = vadd.f32 %v2216, %v2922
        %v2924 = vpop.f32.mrf.mxu0
        %v2925 = vadd.f32 %v2218, %v2924
        %v2926 = vand.u32 %v485, 4294901760
        %v2927 = vsub.f32 %v485, %v2926
        %2928 = vmatprep.mubr.f32.mxu0 %v2927
        %v2929 = vand.u32 %v484, 4294901760
        %v2930 = vsub.f32 %v484, %v2929
        %2931 = vmatmul.mubr.f32.gmra.mxu0 %v2930
        %v2932 = vpop.f32.mrf.mxu0
        %v2933 = vadd.f32 %v2224, %v2932
        %v2934 = vpop.f32.mrf.mxu0
        %v2935 = vadd.f32 %v2226, %v2934
        %v2936 = vand.u32 %v487, 4294901760
        %v2937 = vsub.f32 %v487, %v2936
        %2938 = vmatprep.mubr.f32.mxu0 %v2937
        %v2939 = vand.u32 %v486, 4294901760
        %v2940 = vsub.f32 %v486, %v2939
        %2941 = vmatmul.mubr.f32.gmra.mxu0 %v2940
        %v2942 = vpop.f32.mrf.mxu0
        %v2943 = vadd.f32 %v2232, %v2942
        %v2944 = vpop.f32.mrf.mxu0
        %v2945 = vadd.f32 %v2234, %v2944
        %v2946 = vand.u32 %v489, 4294901760
        %v2947 = vsub.f32 %v489, %v2946
        %2948 = vmatprep.mubr.f32.mxu0 %v2947
        %v2949 = vand.u32 %v488, 4294901760
        %v2950 = vsub.f32 %v488, %v2949
        %2951 = vmatmul.mubr.f32.gmra.mxu0 %v2950
        %v2952 = vpop.f32.mrf.mxu0
        %v2953 = vadd.f32 %v2240, %v2952
        %v2954 = vpop.f32.mrf.mxu0
        %v2955 = vadd.f32 %v2242, %v2954
        %v2956 = vand.u32 %v491, 4294901760
        %v2957 = vsub.f32 %v491, %v2956
        %2958 = vmatprep.mubr.f32.mxu0 %v2957
        %v2959 = vand.u32 %v490, 4294901760
        %v2960 = vsub.f32 %v490, %v2959
        %2961 = vmatmul.mubr.f32.gmra.mxu0 %v2960
        %v2962 = vpop.f32.mrf.mxu0
        %v2963 = vadd.f32 %v2248, %v2962
        %v2964 = vpop.f32.mrf.mxu0
        %v2965 = vadd.f32 %v2250, %v2964
        %v2966 = vand.u32 %v493, 4294901760
        %v2967 = vsub.f32 %v493, %v2966
        %2968 = vmatprep.mubr.f32.mxu0 %v2967
        %v2969 = vand.u32 %v492, 4294901760
        %v2970 = vsub.f32 %v492, %v2969
        %2971 = vmatmul.mubr.f32.gmra.mxu0 %v2970
        %v2972 = vpop.f32.mrf.mxu0
        %v2973 = vadd.f32 %v2256, %v2972
        %v2974 = vpop.f32.mrf.mxu0
        %v2975 = vadd.f32 %v2258, %v2974
        %v2976 = vand.u32 %v495, 4294901760
        %v2977 = vsub.f32 %v495, %v2976
        %2978 = vmatprep.mubr.f32.mxu0 %v2977
        %v2979 = vand.u32 %v494, 4294901760
        %v2980 = vsub.f32 %v494, %v2979
        %2981 = vmatmul.mubr.f32.gmra.mxu0 %v2980
        %v2982 = vpop.f32.mrf.mxu0
        %v2983 = vadd.f32 %v2264, %v2982
        %v2984 = vpop.f32.mrf.mxu0
        %v2985 = vadd.f32 %v2266, %v2984
        %v2986 = vand.u32 %v497, 4294901760
        %v2987 = vsub.f32 %v497, %v2986
        %2988 = vmatprep.mubr.f32.mxu0 %v2987
        %v2989 = vand.u32 %v496, 4294901760
        %v2990 = vsub.f32 %v496, %v2989
        %2991 = vmatmul.mubr.f32.gmra.mxu0 %v2990
        %v2992 = vpop.f32.mrf.mxu0
        %v2993 = vadd.f32 %v2272, %v2992
        %v2994 = vpop.f32.mrf.mxu0
        %v2995 = vadd.f32 %v2274, %v2994
        %v2996 = vand.u32 %v499, 4294901760
        %v2997 = vsub.f32 %v499, %v2996
        %2998 = vmatprep.mubr.f32.mxu0 %v2997
        %v2999 = vand.u32 %v498, 4294901760
        %v3000 = vsub.f32 %v498, %v2999
        %3001 = vmatmul.mubr.f32.gmra.mxu0 %v3000
        %v3002 = vpop.f32.mrf.mxu0
        %v3003 = vadd.f32 %v2280, %v3002
        %v3004 = vpop.f32.mrf.mxu0
        %v3005 = vadd.f32 %v2282, %v3004
        %v3006 = vand.u32 %v501, 4294901760
        %v3007 = vsub.f32 %v501, %v3006
        %3008 = vmatprep.mubr.f32.mxu0 %v3007
        %v3009 = vand.u32 %v500, 4294901760
        %v3010 = vsub.f32 %v500, %v3009
        %3011 = vmatmul.mubr.f32.gmra.mxu0 %v3010
        %v3012 = vpop.f32.mrf.mxu0
        %v3013 = vadd.f32 %v2288, %v3012
        %v3014 = vpop.f32.mrf.mxu0
        %v3015 = vadd.f32 %v2290, %v3014
        %v3016 = vand.u32 %v503, 4294901760
        %v3017 = vsub.f32 %v503, %v3016
        %3018 = vmatprep.mubr.f32.mxu0 %v3017
        %v3019 = vand.u32 %v502, 4294901760
        %v3020 = vsub.f32 %v502, %v3019
        %3021 = vmatmul.mubr.f32.gmra.mxu0 %v3020
        %v3022 = vpop.f32.mrf.mxu0
        %v3023 = vadd.f32 %v2296, %v3022
        %v3024 = vpop.f32.mrf.mxu0
        %v3025 = vadd.f32 %v2298, %v3024
        %v3026 = vand.u32 %v505, 4294901760
        %v3027 = vsub.f32 %v505, %v3026
        %3028 = vmatprep.mubr.f32.mxu0 %v3027
        %v3029 = vand.u32 %v504, 4294901760
        %v3030 = vsub.f32 %v504, %v3029
        %3031 = vmatmul.mubr.f32.gmra.mxu0 %v3030
        %v3032 = vpop.f32.mrf.mxu0
        %v3033 = vadd.f32 %v2304, %v3032
        %v3034 = vpop.f32.mrf.mxu0
        %v3035 = vadd.f32 %v2306, %v3034
        %v3036 = vand.u32 %v507, 4294901760
        %v3037 = vsub.f32 %v507, %v3036
        %3038 = vmatprep.mubr.f32.mxu0 %v3037
        %v3039 = vand.u32 %v506, 4294901760
        %v3040 = vsub.f32 %v506, %v3039
        %3041 = vmatmul.mubr.f32.gmra.mxu0 %v3040
        %v3042 = vpop.f32.mrf.mxu0
        %v3043 = vadd.f32 %v2312, %v3042
        %v3044 = vpop.f32.mrf.mxu0
        %v3045 = vadd.f32 %v2314, %v3044
        %v3046 = vand.u32 %v509, 4294901760
        %v3047 = vsub.f32 %v509, %v3046
        %3048 = vmatprep.mubr.f32.mxu0 %v3047
        %v3049 = vand.u32 %v508, 4294901760
        %v3050 = vsub.f32 %v508, %v3049
        %3051 = vmatmul.mubr.f32.gmra.mxu0 %v3050
        %v3052 = vpop.f32.mrf.mxu0
        %v3053 = vadd.f32 %v2320, %v3052
        %v3054 = vpop.f32.mrf.mxu0
        %v3055 = vadd.f32 %v2322, %v3054
        %v3056 = vand.u32 %v511, 4294901760
        %v3057 = vsub.f32 %v511, %v3056
        %3058 = vmatprep.mubr.f32.mxu0 %v3057
        %v3059 = vand.u32 %v510, 4294901760
        %v3060 = vsub.f32 %v510, %v3059
        %3061 = vmatmul.mubr.f32.gmra.mxu0 %v3060
        %v3062 = vpop.f32.mrf.mxu0
        %v3063 = vadd.f32 %v2328, %v3062
        %v3064 = vpop.f32.mrf.mxu0
        %v3065 = vadd.f32 %v2330, %v3064
        %v3066 = vand.u32 %v513, 4294901760
        %v3067 = vsub.f32 %v513, %v3066
        %3068 = vmatprep.mubr.f32.mxu0 %v3067
        %v3069 = vand.u32 %v512, 4294901760
        %v3070 = vsub.f32 %v512, %v3069
        %3071 = vmatmul.mubr.f32.gmra.mxu0 %v3070
        %v3072 = vpop.f32.mrf.mxu0
        %v3073 = vadd.f32 %v2336, %v3072
        %v3074 = vpop.f32.mrf.mxu0
        %v3075 = vadd.f32 %v2338, %v3074
        %v3076 = vand.u32 %v515, 4294901760
        %v3077 = vsub.f32 %v515, %v3076
        %3078 = vmatprep.mubr.f32.mxu0 %v3077
        %v3079 = vand.u32 %v514, 4294901760
        %v3080 = vsub.f32 %v514, %v3079
        %3081 = vmatmul.mubr.f32.gmra.mxu0 %v3080
        %v3082 = vpop.f32.mrf.mxu0
        %v3083 = vadd.f32 %v2344, %v3082
        %v3084 = vpop.f32.mrf.mxu0
        %v3085 = vadd.f32 %v2346, %v3084
        %v3086 = vand.u32 %v517, 4294901760
        %v3087 = vsub.f32 %v517, %v3086
        %3088 = vmatprep.mubr.f32.mxu0 %v3087
        %v3089 = vand.u32 %v516, 4294901760
        %v3090 = vsub.f32 %v516, %v3089
        %3091 = vmatmul.mubr.f32.gmra.mxu0 %v3090
        %v3092 = vpop.f32.mrf.mxu0
        %v3093 = vadd.f32 %v2352, %v3092
        %v3094 = vpop.f32.mrf.mxu0
        %v3095 = vadd.f32 %v2354, %v3094
        %v3096 = vand.u32 %v519, 4294901760
        %v3097 = vsub.f32 %v519, %v3096
        %3098 = vmatprep.mubr.f32.mxu0 %v3097
        %v3099 = vand.u32 %v518, 4294901760
        %v3100 = vsub.f32 %v518, %v3099
        %3101 = vmatmul.mubr.f32.gmra.mxu0 %v3100
        %v3102 = vpop.f32.mrf.mxu0
        %v3103 = vadd.f32 %v2360, %v3102
        %v3104 = vpop.f32.mrf.mxu0
        %v3105 = vadd.f32 %v2362, %v3104
        %v3106 = vand.u32 %v521, 4294901760
        %v3107 = vsub.f32 %v521, %v3106
        %3108 = vmatprep.mubr.f32.mxu0 %v3107
        %v3109 = vand.u32 %v520, 4294901760
        %v3110 = vsub.f32 %v520, %v3109
        %3111 = vmatmul.mubr.f32.gmra.mxu0 %v3110
        %v3112 = vpop.f32.mrf.mxu0
        %v3113 = vadd.f32 %v2368, %v3112
        %v3114 = vpop.f32.mrf.mxu0
        %v3115 = vadd.f32 %v2370, %v3114
        %v3116 = vand.u32 %v523, 4294901760
        %v3117 = vsub.f32 %v523, %v3116
        %3118 = vmatprep.mubr.f32.mxu0 %v3117
        %v3119 = vand.u32 %v522, 4294901760
        %v3120 = vsub.f32 %v522, %v3119
        %3121 = vmatmul.mubr.f32.gmra.mxu0 %v3120
        %v3122 = vpop.f32.mrf.mxu0
        %v3123 = vadd.f32 %v2376, %v3122
        %v3124 = vpop.f32.mrf.mxu0
        %v3125 = vadd.f32 %v2378, %v3124
        %v3126 = vand.u32 %v525, 4294901760
        %v3127 = vsub.f32 %v525, %v3126
        %3128 = vmatprep.mubr.f32.mxu0 %v3127
        %v3129 = vand.u32 %v524, 4294901760
        %v3130 = vsub.f32 %v524, %v3129
        %3131 = vmatmul.mubr.f32.gmra.mxu0 %v3130
        %v3132 = vpop.f32.mrf.mxu0
        %v3133 = vadd.f32 %v2384, %v3132
        %v3134 = vpop.f32.mrf.mxu0
        %v3135 = vadd.f32 %v2386, %v3134
        %v3136 = vand.u32 %v527, 4294901760
        %v3137 = vsub.f32 %v527, %v3136
        %3138 = vmatprep.mubr.f32.mxu0 %v3137
        %v3139 = vand.u32 %v526, 4294901760
        %v3140 = vsub.f32 %v526, %v3139
        %3141 = vmatmul.mubr.f32.gmra.mxu0 %v3140
        %v3142 = vpop.f32.mrf.mxu0
        %v3143 = vadd.f32 %v2392, %v3142
        %v3144 = vpop.f32.mrf.mxu0
        %v3145 = vadd.f32 %v2394, %v3144
        %v3146 = vand.u32 %v529, 4294901760
        %v3147 = vsub.f32 %v529, %v3146
        %3148 = vmatprep.mubr.f32.mxu0 %v3147
        %v3149 = vand.u32 %v528, 4294901760
        %v3150 = vsub.f32 %v528, %v3149
        %3151 = vmatmul.mubr.f32.gmra.mxu0 %v3150
        %v3152 = vpop.f32.mrf.mxu0
        %v3153 = vadd.f32 %v2400, %v3152
        %v3154 = vpop.f32.mrf.mxu0
        %v3155 = vadd.f32 %v2402, %v3154
        %v3156 = vand.u32 %v531, 4294901760
        %v3157 = vsub.f32 %v531, %v3156
        %3158 = vmatprep.mubr.f32.mxu0 %v3157
        %v3159 = vand.u32 %v530, 4294901760
        %v3160 = vsub.f32 %v530, %v3159
        %3161 = vmatmul.mubr.f32.gmra.mxu0 %v3160
        %v3162 = vpop.f32.mrf.mxu0
        %v3163 = vadd.f32 %v2408, %v3162
        %v3164 = vpop.f32.mrf.mxu0
        %v3165 = vadd.f32 %v2410, %v3164
        %v3166 = vand.u32 %v533, 4294901760
        %v3167 = vsub.f32 %v533, %v3166
        %3168 = vmatprep.mubr.f32.mxu0 %v3167
        %v3169 = vand.u32 %v532, 4294901760
        %v3170 = vsub.f32 %v532, %v3169
        %3171 = vmatmul.mubr.f32.gmra.mxu0 %v3170
        %v3172 = vpop.f32.mrf.mxu0
        %v3173 = vadd.f32 %v2416, %v3172
        %v3174 = vpop.f32.mrf.mxu0
        %v3175 = vadd.f32 %v2418, %v3174
        %v3176 = vand.u32 %v535, 4294901760
        %v3177 = vsub.f32 %v535, %v3176
        %3178 = vmatprep.mubr.f32.mxu0 %v3177
        %v3179 = vand.u32 %v534, 4294901760
        %v3180 = vsub.f32 %v534, %v3179
        %3181 = vmatmul.mubr.f32.gmra.mxu0 %v3180
        %v3182 = vpop.f32.mrf.mxu0
        %v3183 = vadd.f32 %v2424, %v3182
        %v3184 = vpop.f32.mrf.mxu0
        %v3185 = vadd.f32 %v2426, %v3184
        %v3186 = vand.u32 %v537, 4294901760
        %v3187 = vsub.f32 %v537, %v3186
        %3188 = vmatprep.mubr.f32.mxu0 %v3187
        %v3189 = vand.u32 %v536, 4294901760
        %v3190 = vsub.f32 %v536, %v3189
        %3191 = vmatmul.mubr.f32.gmra.mxu0 %v3190
        %v3192 = vpop.f32.mrf.mxu0
        %v3193 = vadd.f32 %v2432, %v3192
        %v3194 = vpop.f32.mrf.mxu0
        %v3195 = vadd.f32 %v2434, %v3194
        %v3196 = vand.u32 %v539, 4294901760
        %v3197 = vsub.f32 %v539, %v3196
        %3198 = vmatprep.mubr.f32.mxu0 %v3197
        %v3199 = vand.u32 %v538, 4294901760
        %v3200 = vsub.f32 %v538, %v3199
        %3201 = vmatmul.mubr.f32.gmra.mxu0 %v3200
        %v3202 = vpop.f32.mrf.mxu0
        %v3203 = vadd.f32 %v2440, %v3202
        %v3204 = vpop.f32.mrf.mxu0
        %v3205 = vadd.f32 %v2442, %v3204
        %v3206 = vand.u32 %v541, 4294901760
        %v3207 = vsub.f32 %v541, %v3206
        %3208 = vmatprep.mubr.f32.mxu0 %v3207
        %v3209 = vand.u32 %v540, 4294901760
        %v3210 = vsub.f32 %v540, %v3209
        %3211 = vmatmul.mubr.f32.gmra.mxu0 %v3210
        %v3212 = vpop.f32.mrf.mxu0
        %v3213 = vadd.f32 %v2448, %v3212
        %v3214 = vpop.f32.mrf.mxu0
        %v3215 = vadd.f32 %v2450, %v3214
        %v3216 = vand.u32 %v543, 4294901760
        %v3217 = vsub.f32 %v543, %v3216
        %3218 = vmatprep.mubr.f32.mxu0 %v3217
        %v3219 = vand.u32 %v542, 4294901760
        %v3220 = vsub.f32 %v542, %v3219
        %3221 = vmatmul.mubr.f32.gmra.mxu0 %v3220
        %v3222 = vpop.f32.mrf.mxu0
        %v3223 = vadd.f32 %v2456, %v3222
        %v3224 = vpop.f32.mrf.mxu0
        %v3225 = vadd.f32 %v2458, %v3224
        %v3226 = vand.u32 %v545, 4294901760
        %v3227 = vsub.f32 %v545, %v3226
        %3228 = vmatprep.mubr.f32.mxu0 %v3227
        %v3229 = vand.u32 %v544, 4294901760
        %v3230 = vsub.f32 %v544, %v3229
        %3231 = vmatmul.mubr.f32.gmra.mxu0 %v3230
        %v3232 = vpop.f32.mrf.mxu0
        %v3233 = vadd.f32 %v2464, %v3232
        %v3234 = vpop.f32.mrf.mxu0
        %v3235 = vadd.f32 %v2466, %v3234
        %v3236 = vand.u32 %v547, 4294901760
        %v3237 = vsub.f32 %v547, %v3236
        %3238 = vmatprep.mubr.f32.mxu0 %v3237
        %v3239 = vand.u32 %v546, 4294901760
        %v3240 = vsub.f32 %v546, %v3239
        %3241 = vmatmul.mubr.f32.gmra.mxu0 %v3240
        %v3242 = vpop.f32.mrf.mxu0
        %v3243 = vadd.f32 %v2472, %v3242
        %v3244 = vpop.f32.mrf.mxu0
        %v3245 = vadd.f32 %v2474, %v3244
        %v3246 = vand.u32 %v549, 4294901760
        %v3247 = vsub.f32 %v549, %v3246
        %3248 = vmatprep.mubr.f32.mxu0 %v3247
        %v3249 = vand.u32 %v548, 4294901760
        %v3250 = vsub.f32 %v548, %v3249
        %3251 = vmatmul.mubr.f32.gmra.mxu0 %v3250
        %v3252 = vpop.f32.mrf.mxu0
        %v3253 = vadd.f32 %v2480, %v3252
        %v3254 = vpop.f32.mrf.mxu0
        %v3255 = vadd.f32 %v2482, %v3254
        %v3256 = vand.u32 %v551, 4294901760
        %v3257 = vsub.f32 %v551, %v3256
        %3258 = vmatprep.mubr.f32.mxu0 %v3257
        %v3259 = vand.u32 %v550, 4294901760
        %v3260 = vsub.f32 %v550, %v3259
        %3261 = vmatmul.mubr.f32.gmra.mxu0 %v3260
        %v3262 = vpop.f32.mrf.mxu0
        %v3263 = vadd.f32 %v2488, %v3262
        %v3264 = vpop.f32.mrf.mxu0
        %v3265 = vadd.f32 %v2490, %v3264
        %v3266 = vand.u32 %v553, 4294901760
        %v3267 = vsub.f32 %v553, %v3266
        %3268 = vmatprep.mubr.f32.mxu0 %v3267
        %v3269 = vand.u32 %v552, 4294901760
        %v3270 = vsub.f32 %v552, %v3269
        %3271 = vmatmul.mubr.f32.gmra.mxu0 %v3270
        %v3272 = vpop.f32.mrf.mxu0
        %v3273 = vadd.f32 %v2496, %v3272
        %v3274 = vpop.f32.mrf.mxu0
        %v3275 = vadd.f32 %v2498, %v3274
        %v3276 = vand.u32 %v555, 4294901760
        %v3277 = vsub.f32 %v555, %v3276
        %3278 = vmatprep.mubr.f32.mxu0 %v3277
        %v3279 = vand.u32 %v554, 4294901760
        %v3280 = vsub.f32 %v554, %v3279
        %3281 = vmatmul.mubr.f32.gmra.mxu0 %v3280
        %v3282 = vpop.f32.mrf.mxu0
        %v3283 = vadd.f32 %v2504, %v3282
        %v3284 = vpop.f32.mrf.mxu0
        %v3285 = vadd.f32 %v2506, %v3284
        %v3286 = vand.u32 %v557, 4294901760
        %v3287 = vsub.f32 %v557, %v3286
        %3288 = vmatprep.mubr.f32.mxu0 %v3287
        %v3289 = vand.u32 %v556, 4294901760
        %v3290 = vsub.f32 %v556, %v3289
        %3291 = vmatmul.mubr.f32.gmra.mxu0 %v3290
        %v3292 = vpop.f32.mrf.mxu0
        %v3293 = vadd.f32 %v2512, %v3292
        %v3294 = vpop.f32.mrf.mxu0
        %v3295 = vadd.f32 %v2514, %v3294
        %v3296 = vand.u32 %v559, 4294901760
        %v3297 = vsub.f32 %v559, %v3296
        %3298 = vmatprep.mubr.f32.mxu0 %v3297
        %v3299 = vand.u32 %v558, 4294901760
        %v3300 = vsub.f32 %v558, %v3299
        %3301 = vmatmul.mubr.f32.gmra.mxu0 %v3300
        %v3302 = vpop.f32.mrf.mxu0
        %v3303 = vadd.f32 %v2520, %v3302
        %v3304 = vpop.f32.mrf.mxu0
        %v3305 = vadd.f32 %v2522, %v3304
        %v3306 = vand.u32 %v561, 4294901760
        %v3307 = vsub.f32 %v561, %v3306
        %3308 = vmatprep.mubr.f32.mxu0 %v3307
        %v3309 = vand.u32 %v560, 4294901760
        %v3310 = vsub.f32 %v560, %v3309
        %3311 = vmatmul.mubr.f32.gmra.mxu0 %v3310
        %v3312 = vpop.f32.mrf.mxu0
        %v3313 = vadd.f32 %v2528, %v3312
        %v3314 = vpop.f32.mrf.mxu0
        %v3315 = vadd.f32 %v2530, %v3314
        %v3316 = vand.u32 %v563, 4294901760
        %v3317 = vsub.f32 %v563, %v3316
        %3318 = vmatprep.mubr.f32.mxu0 %v3317
        %v3319 = vand.u32 %v562, 4294901760
        %v3320 = vsub.f32 %v562, %v3319
        %3321 = vmatmul.mubr.f32.gmra.mxu0 %v3320
        %v3322 = vpop.f32.mrf.mxu0
        %v3323 = vadd.f32 %v2536, %v3322
        %v3324 = vpop.f32.mrf.mxu0
        %v3325 = vadd.f32 %v2538, %v3324
        %v3326 = vand.u32 %v565, 4294901760
        %v3327 = vsub.f32 %v565, %v3326
        %3328 = vmatprep.mubr.f32.mxu0 %v3327
        %v3329 = vand.u32 %v564, 4294901760
        %v3330 = vsub.f32 %v564, %v3329
        %3331 = vmatmul.mubr.f32.gmra.mxu0 %v3330
        %v3332 = vpop.f32.mrf.mxu0
        %v3333 = vadd.f32 %v2544, %v3332
        %v3334 = vpop.f32.mrf.mxu0
        %v3335 = vadd.f32 %v2546, %v3334
        %v3336 = vand.u32 %v567, 4294901760
        %v3337 = vsub.f32 %v567, %v3336
        %3338 = vmatprep.mubr.f32.mxu0 %v3337
        %v3339 = vand.u32 %v566, 4294901760
        %v3340 = vsub.f32 %v566, %v3339
        %3341 = vmatmul.mubr.f32.gmra.mxu0 %v3340
        %v3342 = vpop.f32.mrf.mxu0
        %v3343 = vadd.f32 %v2552, %v3342
        %v3344 = vpop.f32.mrf.mxu0
        %v3345 = vadd.f32 %v2554, %v3344
        %v3346 = vand.u32 %v569, 4294901760
        %v3347 = vsub.f32 %v569, %v3346
        %3348 = vmatprep.mubr.f32.mxu0 %v3347
        %v3349 = vand.u32 %v568, 4294901760
        %v3350 = vsub.f32 %v568, %v3349
        %3351 = vmatmul.mubr.f32.gmra.mxu0 %v3350
        %v3352 = vpop.f32.mrf.mxu0
        %v3353 = vadd.f32 %v2560, %v3352
        %v3354 = vpop.f32.mrf.mxu0
        %v3355 = vadd.f32 %v2562, %v3354
        %v3356 = vand.u32 %v571, 4294901760
        %v3357 = vsub.f32 %v571, %v3356
        %3358 = vmatprep.mubr.f32.mxu0 %v3357
        %v3359 = vand.u32 %v570, 4294901760
        %v3360 = vsub.f32 %v570, %v3359
        %3361 = vmatmul.mubr.f32.gmra.mxu0 %v3360
        %v3362 = vpop.f32.mrf.mxu0
        %v3363 = vadd.f32 %v2568, %v3362
        %v3364 = vpop.f32.mrf.mxu0
        %v3365 = vadd.f32 %v2570, %v3364
        %v3366 = vand.u32 %v573, 4294901760
        %v3367 = vsub.f32 %v573, %v3366
        %3368 = vmatprep.mubr.f32.mxu0 %v3367
        %v3369 = vand.u32 %v572, 4294901760
        %v3370 = vsub.f32 %v572, %v3369
        %3371 = vmatmul.mubr.f32.gmra.mxu0 %v3370
        %v3372 = vpop.f32.mrf.mxu0
        %v3373 = vadd.f32 %v2576, %v3372
        %v3374 = vpop.f32.mrf.mxu0
        %v3375 = vadd.f32 %v2578, %v3374
        %v3376 = vand.u32 %v575, 4294901760
        %v3377 = vsub.f32 %v575, %v3376
        %3378 = vmatprep.mubr.f32.mxu0 %v3377
        %v3379 = vand.u32 %v574, 4294901760
        %v3380 = vsub.f32 %v574, %v3379
        %3381 = vmatmul.mubr.f32.gmra.mxu0 %v3380
        %v3382 = vpop.f32.mrf.mxu0
        %v3383 = vadd.f32 %v2584, %v3382
        %v3384 = vpop.f32.mrf.mxu0
        %v3385 = vadd.f32 %v2586, %v3384
        %v3386 = vand.u32 %v577, 4294901760
        %v3387 = vsub.f32 %v577, %v3386
        %3388 = vmatprep.mubr.f32.mxu0 %v3387
        %v3389 = vand.u32 %v576, 4294901760
        %v3390 = vsub.f32 %v576, %v3389
        %3391 = vmatmul.mubr.f32.gmra.mxu0 %v3390
        %v3392 = vpop.f32.mrf.mxu0
        %v3393 = vadd.f32 %v2592, %v3392
        %v3394 = vpop.f32.mrf.mxu0
        %v3395 = vadd.f32 %v2594, %v3394
        %v3396 = vand.u32 %v579, 4294901760
        %v3397 = vsub.f32 %v579, %v3396
        %3398 = vmatprep.mubr.f32.mxu0 %v3397
        %v3399 = vand.u32 %v578, 4294901760
        %v3400 = vsub.f32 %v578, %v3399
        %3401 = vmatmul.mubr.f32.gmra.mxu0 %v3400
        %v3402 = vpop.f32.mrf.mxu0
        %v3403 = vadd.f32 %v2600, %v3402
        %v3404 = vpop.f32.mrf.mxu0
        %v3405 = vadd.f32 %v2602, %v3404
        %v3406 = vand.u32 %v581, 4294901760
        %v3407 = vsub.f32 %v581, %v3406
        %3408 = vmatprep.mubr.f32.mxu0 %v3407
        %v3409 = vand.u32 %v580, 4294901760
        %v3410 = vsub.f32 %v580, %v3409
        %3411 = vmatmul.mubr.f32.gmra.mxu0 %v3410
        %v3412 = vpop.f32.mrf.mxu0
        %v3413 = vadd.f32 %v2608, %v3412
        %v3414 = vpop.f32.mrf.mxu0
        %v3415 = vadd.f32 %v2610, %v3414
        %v3416 = vand.u32 %v583, 4294901760
        %v3417 = vsub.f32 %v583, %v3416
        %3418 = vmatprep.mubr.f32.mxu0 %v3417
        %v3419 = vand.u32 %v582, 4294901760
        %v3420 = vsub.f32 %v582, %v3419
        %3421 = vmatmul.mubr.f32.gmra.mxu0 %v3420
        %v3422 = vpop.f32.mrf.mxu0
        %v3423 = vadd.f32 %v2616, %v3422
        %v3424 = vpop.f32.mrf.mxu0
        %v3425 = vadd.f32 %v2618, %v3424
        %v3426 = vand.u32 %v585, 4294901760
        %v3427 = vsub.f32 %v585, %v3426
        %3428 = vmatprep.mubr.f32.mxu0 %v3427
        %v3429 = vand.u32 %v584, 4294901760
        %v3430 = vsub.f32 %v584, %v3429
        %3431 = vmatmul.mubr.f32.gmra.mxu0 %v3430
        %v3432 = vpop.f32.mrf.mxu0
        %v3433 = vadd.f32 %v2624, %v3432
        %v3434 = vpop.f32.mrf.mxu0
        %v3435 = vadd.f32 %v2626, %v3434
        %v3436 = vand.u32 %v587, 4294901760
        %v3437 = vsub.f32 %v587, %v3436
        %3438 = vmatprep.mubr.f32.mxu0 %v3437
        %v3439 = vand.u32 %v586, 4294901760
        %v3440 = vsub.f32 %v586, %v3439
        %3441 = vmatmul.mubr.f32.gmra.mxu0 %v3440
        %v3442 = vpop.f32.mrf.mxu0
        %v3443 = vadd.f32 %v2632, %v3442
        %v3444 = vpop.f32.mrf.mxu0
        %v3445 = vadd.f32 %v2634, %v3444
        %v3446 = vand.u32 %v589, 4294901760
        %v3447 = vsub.f32 %v589, %v3446
        %3448 = vmatprep.mubr.f32.mxu0 %v3447
        %v3449 = vand.u32 %v588, 4294901760
        %v3450 = vsub.f32 %v588, %v3449
        %3451 = vmatmul.mubr.f32.gmra.mxu0 %v3450
        %v3452 = vpop.f32.mrf.mxu0
        %v3453 = vadd.f32 %v2640, %v3452
        %v3454 = vpop.f32.mrf.mxu0
        %v3455 = vadd.f32 %v2642, %v3454
        %v3456 = vand.u32 %v591, 4294901760
        %v3457 = vsub.f32 %v591, %v3456
        %3458 = vmatprep.mubr.f32.mxu0 %v3457
        %v3459 = vand.u32 %v590, 4294901760
        %v3460 = vsub.f32 %v590, %v3459
        %3461 = vmatmul.mubr.f32.gmra.mxu0 %v3460
        %v3462 = vpop.f32.mrf.mxu0
        %v3463 = vadd.f32 %v2648, %v3462
        %v3464 = vpop.f32.mrf.mxu0
        %v3465 = vadd.f32 %v2650, %v3464
        %v3466 = vand.u32 %v593, 4294901760
        %v3467 = vsub.f32 %v593, %v3466
        %3468 = vmatprep.mubr.f32.mxu0 %v3467
        %v3469 = vand.u32 %v592, 4294901760
        %v3470 = vsub.f32 %v592, %v3469
        %3471 = vmatmul.mubr.f32.gmra.mxu0 %v3470
        %v3472 = vpop.f32.mrf.mxu0
        %v3473 = vadd.f32 %v2656, %v3472
        %v3474 = vpop.f32.mrf.mxu0
        %v3475 = vadd.f32 %v2658, %v3474
        %v3476 = vand.u32 %v595, 4294901760
        %v3477 = vsub.f32 %v595, %v3476
        %3478 = vmatprep.mubr.f32.mxu0 %v3477
        %v3479 = vand.u32 %v594, 4294901760
        %v3480 = vsub.f32 %v594, %v3479
        %3481 = vmatmul.mubr.f32.gmra.mxu0 %v3480
        %v3482 = vpop.f32.mrf.mxu0
        %v3483 = vadd.f32 %v2664, %v3482
        %v3484 = vpop.f32.mrf.mxu0
        %v3485 = vadd.f32 %v2666, %v3484
        %v3486 = vand.u32 %v597, 4294901760
        %v3487 = vsub.f32 %v597, %v3486
        %3488 = vmatprep.mubr.f32.mxu0 %v3487
        %v3489 = vand.u32 %v596, 4294901760
        %v3490 = vsub.f32 %v596, %v3489
        %3491 = vmatmul.mubr.f32.gmra.mxu0 %v3490
        %v3492 = vpop.f32.mrf.mxu0
        %v3493 = vadd.f32 %v2672, %v3492
        %v3494 = vpop.f32.mrf.mxu0
        %v3495 = vadd.f32 %v2674, %v3494
        %v3496 = vand.u32 %v599, 4294901760
        %v3497 = vsub.f32 %v599, %v3496
        %3498 = vmatprep.mubr.f32.mxu0 %v3497
        %v3499 = vand.u32 %v598, 4294901760
        %v3500 = vsub.f32 %v598, %v3499
        %3501 = vmatmul.mubr.f32.gmra.mxu0 %v3500
        %v3502 = vpop.f32.mrf.mxu0
        %v3503 = vadd.f32 %v2680, %v3502
        %v3504 = vpop.f32.mrf.mxu0
        %v3505 = vadd.f32 %v2682, %v3504
        %v3506 = vand.u32 %v601, 4294901760
        %v3507 = vsub.f32 %v601, %v3506
        %3508 = vmatprep.mubr.f32.mxu0 %v3507
        %v3509 = vand.u32 %v600, 4294901760
        %v3510 = vsub.f32 %v600, %v3509
        %3511 = vmatmul.mubr.f32.gmra.mxu0 %v3510
        %v3512 = vpop.f32.mrf.mxu0
        %v3513 = vadd.f32 %v2688, %v3512
        %v3514 = vpop.f32.mrf.mxu0
        %v3515 = vadd.f32 %v2690, %v3514
        %v3516 = vand.u32 %v603, 4294901760
        %v3517 = vsub.f32 %v603, %v3516
        %3518 = vmatprep.mubr.f32.mxu0 %v3517
        %v3519 = vand.u32 %v602, 4294901760
        %v3520 = vsub.f32 %v602, %v3519
        %3521 = vmatmul.mubr.f32.gmra.mxu0 %v3520
        %v3522 = vpop.f32.mrf.mxu0
        %v3523 = vadd.f32 %v2696, %v3522
        %v3524 = vpop.f32.mrf.mxu0
        %v3525 = vadd.f32 %v2698, %v3524
        %v3526 = vand.u32 %v605, 4294901760
        %v3527 = vsub.f32 %v605, %v3526
        %3528 = vmatprep.mubr.f32.mxu0 %v3527
        %v3529 = vand.u32 %v604, 4294901760
        %v3530 = vsub.f32 %v604, %v3529
        %3531 = vmatmul.mubr.f32.gmra.mxu0 %v3530
        %v3532 = vpop.f32.mrf.mxu0
        %v3533 = vadd.f32 %v2704, %v3532
        %v3534 = vpop.f32.mrf.mxu0
        %v3535 = vadd.f32 %v2706, %v3534
        %v3536 = vand.u32 %v607, 4294901760
        %v3537 = vsub.f32 %v607, %v3536
        %3538 = vmatprep.mubr.f32.mxu0 %v3537
        %v3539 = vand.u32 %v606, 4294901760
        %v3540 = vsub.f32 %v606, %v3539
        %3541 = vmatmul.mubr.f32.gmra.mxu0 %v3540
        %v3542 = vpop.f32.mrf.mxu0
        %v3543 = vadd.f32 %v2712, %v3542
        %v3544 = vpop.f32.mrf.mxu0
        %v3545 = vadd.f32 %v2714, %v3544
        %v3546 = vand.u32 %v609, 4294901760
        %v3547 = vsub.f32 %v609, %v3546
        %3548 = vmatprep.mubr.f32.mxu0 %v3547
        %v3549 = vand.u32 %v608, 4294901760
        %v3550 = vsub.f32 %v608, %v3549
        %3551 = vmatmul.mubr.f32.gmra.mxu0 %v3550
        %v3552 = vpop.f32.mrf.mxu0
        %v3553 = vadd.f32 %v2720, %v3552
        %v3554 = vpop.f32.mrf.mxu0
        %v3555 = vadd.f32 %v2722, %v3554
        %3556 = vdwg.mxu0
        %v3557 = vand.u32 %v641, 4294901760
        %3558 = vmatprep.subr.mxu0 %v3557
        %v3559 = vand.u32 %v640, 4294901760
        %3560 = vmatpush1.msra.mxu0 %v3559
        %v3561 = vand.u32 %v639, 4294901760
        %3562 = vmatprep.subr.mxu0 %v3561
        %v3563 = vand.u32 %v638, 4294901760
        %3564 = vmatpush1.msra.mxu0 %v3563
        %v3565 = vand.u32 %v637, 4294901760
        %3566 = vmatprep.subr.mxu0 %v3565
        %v3567 = vand.u32 %v636, 4294901760
        %3568 = vmatpush1.msra.mxu0 %v3567
        %v3569 = vand.u32 %v635, 4294901760
        %3570 = vmatprep.subr.mxu0 %v3569
        %v3571 = vand.u32 %v634, 4294901760
        %3572 = vmatpush1.msra.mxu0 %v3571
        %v3573 = vand.u32 %v633, 4294901760
        %3574 = vmatprep.subr.mxu0 %v3573
        %v3575 = vand.u32 %v632, 4294901760
        %3576 = vmatpush1.msra.mxu0 %v3575
        %v3577 = vand.u32 %v631, 4294901760
        %3578 = vmatprep.subr.mxu0 %v3577
        %v3579 = vand.u32 %v630, 4294901760
        %3580 = vmatpush1.msra.mxu0 %v3579
        %v3581 = vand.u32 %v629, 4294901760
        %3582 = vmatprep.subr.mxu0 %v3581
        %v3583 = vand.u32 %v628, 4294901760
        %3584 = vmatpush1.msra.mxu0 %v3583
        %v3585 = vand.u32 %v627, 4294901760
        %3586 = vmatprep.subr.mxu0 %v3585
        %v3587 = vand.u32 %v626, 4294901760
        %3588 = vmatpush1.msra.mxu0 %v3587
        %v3589 = vand.u32 %v625, 4294901760
        %3590 = vmatprep.subr.mxu0 %v3589
        %v3591 = vand.u32 %v624, 4294901760
        %3592 = vmatpush1.msra.mxu0 %v3591
        %v3593 = vand.u32 %v623, 4294901760
        %3594 = vmatprep.subr.mxu0 %v3593
        %v3595 = vand.u32 %v622, 4294901760
        %3596 = vmatpush1.msra.mxu0 %v3595
        %v3597 = vand.u32 %v621, 4294901760
        %3598 = vmatprep.subr.mxu0 %v3597
        %v3599 = vand.u32 %v620, 4294901760
        %3600 = vmatpush1.msra.mxu0 %v3599
        %v3601 = vand.u32 %v619, 4294901760
        %3602 = vmatprep.subr.mxu0 %v3601
        %v3603 = vand.u32 %v618, 4294901760
        %3604 = vmatpush1.msra.mxu0 %v3603
        %v3605 = vand.u32 %v617, 4294901760
        %3606 = vmatprep.subr.mxu0 %v3605
        %v3607 = vand.u32 %v616, 4294901760
        %3608 = vmatpush1.msra.mxu0 %v3607
        %v3609 = vand.u32 %v615, 4294901760
        %3610 = vmatprep.subr.mxu0 %v3609
        %v3611 = vand.u32 %v614, 4294901760
        %3612 = vmatpush1.msra.mxu0 %v3611
        %v3613 = vand.u32 %v613, 4294901760
        %3614 = vmatprep.subr.mxu0 %v3613
        %v3615 = vand.u32 %v612, 4294901760
        %3616 = vmatpush1.msra.mxu0 %v3615
        %v3617 = vand.u32 %v611, 4294901760
        %3618 = vmatprep.subr.mxu0 %v3617
        %v3619 = vand.u32 %v610, 4294901760
        %3620 = vmatpush1.msra.mxu0 %v3619
        %v3621 = vand.u32 %v673, 4294901760
        %3622 = vmatprep.subr.mxu0 %v3621
        %v3623 = vand.u32 %v672, 4294901760
        %3624 = vmatpush2.msra.mxu0 %v3623
        %v3625 = vand.u32 %v671, 4294901760
        %3626 = vmatprep.subr.mxu0 %v3625
        %v3627 = vand.u32 %v670, 4294901760
        %3628 = vmatpush2.msra.mxu0 %v3627
        %v3629 = vand.u32 %v669, 4294901760
        %3630 = vmatprep.subr.mxu0 %v3629
        %v3631 = vand.u32 %v668, 4294901760
        %3632 = vmatpush2.msra.mxu0 %v3631
        %v3633 = vand.u32 %v667, 4294901760
        %3634 = vmatprep.subr.mxu0 %v3633
        %v3635 = vand.u32 %v666, 4294901760
        %3636 = vmatpush2.msra.mxu0 %v3635
        %v3637 = vand.u32 %v665, 4294901760
        %3638 = vmatprep.subr.mxu0 %v3637
        %v3639 = vand.u32 %v664, 4294901760
        %3640 = vmatpush2.msra.mxu0 %v3639
        %v3641 = vand.u32 %v663, 4294901760
        %3642 = vmatprep.subr.mxu0 %v3641
        %v3643 = vand.u32 %v662, 4294901760
        %3644 = vmatpush2.msra.mxu0 %v3643
        %v3645 = vand.u32 %v661, 4294901760
        %3646 = vmatprep.subr.mxu0 %v3645
        %v3647 = vand.u32 %v660, 4294901760
        %3648 = vmatpush2.msra.mxu0 %v3647
        %v3649 = vand.u32 %v659, 4294901760
        %3650 = vmatprep.subr.mxu0 %v3649
        %v3651 = vand.u32 %v658, 4294901760
        %3652 = vmatpush2.msra.mxu0 %v3651
        %v3653 = vand.u32 %v657, 4294901760
        %3654 = vmatprep.subr.mxu0 %v3653
        %v3655 = vand.u32 %v656, 4294901760
        %3656 = vmatpush2.msra.mxu0 %v3655
        %v3657 = vand.u32 %v655, 4294901760
        %3658 = vmatprep.subr.mxu0 %v3657
        %v3659 = vand.u32 %v654, 4294901760
        %3660 = vmatpush2.msra.mxu0 %v3659
        %v3661 = vand.u32 %v653, 4294901760
        %3662 = vmatprep.subr.mxu0 %v3661
        %v3663 = vand.u32 %v652, 4294901760
        %3664 = vmatpush2.msra.mxu0 %v3663
        %v3665 = vand.u32 %v651, 4294901760
        %3666 = vmatprep.subr.mxu0 %v3665
        %v3667 = vand.u32 %v650, 4294901760
        %3668 = vmatpush2.msra.mxu0 %v3667
        %v3669 = vand.u32 %v649, 4294901760
        %3670 = vmatprep.subr.mxu0 %v3669
        %v3671 = vand.u32 %v648, 4294901760
        %3672 = vmatpush2.msra.mxu0 %v3671
        %v3673 = vand.u32 %v647, 4294901760
        %3674 = vmatprep.subr.mxu0 %v3673
        %v3675 = vand.u32 %v646, 4294901760
        %3676 = vmatpush2.msra.mxu0 %v3675
        %v3677 = vand.u32 %v645, 4294901760
        %3678 = vmatprep.subr.mxu0 %v3677
        %v3679 = vand.u32 %v644, 4294901760
        %3680 = vmatpush2.msra.mxu0 %v3679
        %v3681 = vand.u32 %v643, 4294901760
        %3682 = vmatprep.subr.mxu0 %v3681
        %v3683 = vand.u32 %v642, 4294901760
        %3684 = vmatpush2.msra.mxu0 %v3683
        %v3685 = vand.u32 %v483, 4294901760
        %v3686 = vsub.f32 %v483, %v3685
        %v3687 = vand.u32 %v3686, 4294901760
        %3688 = vmatprep.mubr.f32.mxu0 %v3687
        %v3689 = vand.u32 %v482, 4294901760
        %v3690 = vsub.f32 %v482, %v3689
        %v3691 = vand.u32 %v3690, 4294901760
        %3692 = vmatmul.mubr.f32.gmra.mxu0 %v3691
        %v3693 = vpop.f32.mrf.mxu0
        %v3694 = vadd.f32 %v2923, %v3693
        %v3695 = vpop.f32.mrf.mxu0
        %v3696 = vadd.f32 %v2925, %v3695
        %v3697 = vand.u32 %v485, 4294901760
        %v3698 = vsub.f32 %v485, %v3697
        %v3699 = vand.u32 %v3698, 4294901760
        %3700 = vmatprep.mubr.f32.mxu0 %v3699
        %v3701 = vand.u32 %v484, 4294901760
        %v3702 = vsub.f32 %v484, %v3701
        %v3703 = vand.u32 %v3702, 4294901760
        %3704 = vmatmul.mubr.f32.gmra.mxu0 %v3703
        %v3705 = vpop.f32.mrf.mxu0
        %v3706 = vadd.f32 %v2933, %v3705
        %v3707 = vpop.f32.mrf.mxu0
        %v3708 = vadd.f32 %v2935, %v3707
        %v3709 = vand.u32 %v487, 4294901760
        %v3710 = vsub.f32 %v487, %v3709
        %v3711 = vand.u32 %v3710, 4294901760
        %3712 = vmatprep.mubr.f32.mxu0 %v3711
        %v3713 = vand.u32 %v486, 4294901760
        %v3714 = vsub.f32 %v486, %v3713
        %v3715 = vand.u32 %v3714, 4294901760
        %3716 = vmatmul.mubr.f32.gmra.mxu0 %v3715
        %v3717 = vpop.f32.mrf.mxu0
        %v3718 = vadd.f32 %v2943, %v3717
        %v3719 = vpop.f32.mrf.mxu0
        %v3720 = vadd.f32 %v2945, %v3719
        %v3721 = vand.u32 %v489, 4294901760
        %v3722 = vsub.f32 %v489, %v3721
        %v3723 = vand.u32 %v3722, 4294901760
        %3724 = vmatprep.mubr.f32.mxu0 %v3723
        %v3725 = vand.u32 %v488, 4294901760
        %v3726 = vsub.f32 %v488, %v3725
        %v3727 = vand.u32 %v3726, 4294901760
        %3728 = vmatmul.mubr.f32.gmra.mxu0 %v3727
        %v3729 = vpop.f32.mrf.mxu0
        %v3730 = vadd.f32 %v2953, %v3729
        %v3731 = vpop.f32.mrf.mxu0
        %v3732 = vadd.f32 %v2955, %v3731
        %v3733 = vand.u32 %v491, 4294901760
        %v3734 = vsub.f32 %v491, %v3733
        %v3735 = vand.u32 %v3734, 4294901760
        %3736 = vmatprep.mubr.f32.mxu0 %v3735
        %v3737 = vand.u32 %v490, 4294901760
        %v3738 = vsub.f32 %v490, %v3737
        %v3739 = vand.u32 %v3738, 4294901760
        %3740 = vmatmul.mubr.f32.gmra.mxu0 %v3739
        %v3741 = vpop.f32.mrf.mxu0
        %v3742 = vadd.f32 %v2963, %v3741
        %v3743 = vpop.f32.mrf.mxu0
        %v3744 = vadd.f32 %v2965, %v3743
        %v3745 = vand.u32 %v493, 4294901760
        %v3746 = vsub.f32 %v493, %v3745
        %v3747 = vand.u32 %v3746, 4294901760
        %3748 = vmatprep.mubr.f32.mxu0 %v3747
        %v3749 = vand.u32 %v492, 4294901760
        %v3750 = vsub.f32 %v492, %v3749
        %v3751 = vand.u32 %v3750, 4294901760
        %3752 = vmatmul.mubr.f32.gmra.mxu0 %v3751
        %v3753 = vpop.f32.mrf.mxu0
        %v3754 = vadd.f32 %v2973, %v3753
        %v3755 = vpop.f32.mrf.mxu0
        %v3756 = vadd.f32 %v2975, %v3755
        %v3757 = vand.u32 %v495, 4294901760
        %v3758 = vsub.f32 %v495, %v3757
        %v3759 = vand.u32 %v3758, 4294901760
        %3760 = vmatprep.mubr.f32.mxu0 %v3759
        %v3761 = vand.u32 %v494, 4294901760
        %v3762 = vsub.f32 %v494, %v3761
        %v3763 = vand.u32 %v3762, 4294901760
        %3764 = vmatmul.mubr.f32.gmra.mxu0 %v3763
        %v3765 = vpop.f32.mrf.mxu0
        %v3766 = vadd.f32 %v2983, %v3765
        %v3767 = vpop.f32.mrf.mxu0
        %v3768 = vadd.f32 %v2985, %v3767
        %v3769 = vand.u32 %v497, 4294901760
        %v3770 = vsub.f32 %v497, %v3769
        %v3771 = vand.u32 %v3770, 4294901760
        %3772 = vmatprep.mubr.f32.mxu0 %v3771
        %v3773 = vand.u32 %v496, 4294901760
        %v3774 = vsub.f32 %v496, %v3773
        %v3775 = vand.u32 %v3774, 4294901760
        %3776 = vmatmul.mubr.f32.gmra.mxu0 %v3775
        %v3777 = vpop.f32.mrf.mxu0
        %v3778 = vadd.f32 %v2993, %v3777
        %v3779 = vpop.f32.mrf.mxu0
        %v3780 = vadd.f32 %v2995, %v3779
        %v3781 = vand.u32 %v499, 4294901760
        %v3782 = vsub.f32 %v499, %v3781
        %v3783 = vand.u32 %v3782, 4294901760
        %3784 = vmatprep.mubr.f32.mxu0 %v3783
        %v3785 = vand.u32 %v498, 4294901760
        %v3786 = vsub.f32 %v498, %v3785
        %v3787 = vand.u32 %v3786, 4294901760
        %3788 = vmatmul.mubr.f32.gmra.mxu0 %v3787
        %v3789 = vpop.f32.mrf.mxu0
        %v3790 = vadd.f32 %v3003, %v3789
        %v3791 = vpop.f32.mrf.mxu0
        %v3792 = vadd.f32 %v3005, %v3791
        %v3793 = vand.u32 %v501, 4294901760
        %v3794 = vsub.f32 %v501, %v3793
        %v3795 = vand.u32 %v3794, 4294901760
        %3796 = vmatprep.mubr.f32.mxu0 %v3795
        %v3797 = vand.u32 %v500, 4294901760
        %v3798 = vsub.f32 %v500, %v3797
        %v3799 = vand.u32 %v3798, 4294901760
        %3800 = vmatmul.mubr.f32.gmra.mxu0 %v3799
        %v3801 = vpop.f32.mrf.mxu0
        %v3802 = vadd.f32 %v3013, %v3801
        %v3803 = vpop.f32.mrf.mxu0
        %v3804 = vadd.f32 %v3015, %v3803
        %v3805 = vand.u32 %v503, 4294901760
        %v3806 = vsub.f32 %v503, %v3805
        %v3807 = vand.u32 %v3806, 4294901760
        %3808 = vmatprep.mubr.f32.mxu0 %v3807
        %v3809 = vand.u32 %v502, 4294901760
        %v3810 = vsub.f32 %v502, %v3809
        %v3811 = vand.u32 %v3810, 4294901760
        %3812 = vmatmul.mubr.f32.gmra.mxu0 %v3811
        %v3813 = vpop.f32.mrf.mxu0
        %v3814 = vadd.f32 %v3023, %v3813
        %v3815 = vpop.f32.mrf.mxu0
        %v3816 = vadd.f32 %v3025, %v3815
        %v3817 = vand.u32 %v505, 4294901760
        %v3818 = vsub.f32 %v505, %v3817
        %v3819 = vand.u32 %v3818, 4294901760
        %3820 = vmatprep.mubr.f32.mxu0 %v3819
        %v3821 = vand.u32 %v504, 4294901760
        %v3822 = vsub.f32 %v504, %v3821
        %v3823 = vand.u32 %v3822, 4294901760
        %3824 = vmatmul.mubr.f32.gmra.mxu0 %v3823
        %v3825 = vpop.f32.mrf.mxu0
        %v3826 = vadd.f32 %v3033, %v3825
        %v3827 = vpop.f32.mrf.mxu0
        %v3828 = vadd.f32 %v3035, %v3827
        %v3829 = vand.u32 %v507, 4294901760
        %v3830 = vsub.f32 %v507, %v3829
        %v3831 = vand.u32 %v3830, 4294901760
        %3832 = vmatprep.mubr.f32.mxu0 %v3831
        %v3833 = vand.u32 %v506, 4294901760
        %v3834 = vsub.f32 %v506, %v3833
        %v3835 = vand.u32 %v3834, 4294901760
        %3836 = vmatmul.mubr.f32.gmra.mxu0 %v3835
        %v3837 = vpop.f32.mrf.mxu0
        %v3838 = vadd.f32 %v3043, %v3837
        %v3839 = vpop.f32.mrf.mxu0
        %v3840 = vadd.f32 %v3045, %v3839
        %v3841 = vand.u32 %v509, 4294901760
        %v3842 = vsub.f32 %v509, %v3841
        %v3843 = vand.u32 %v3842, 4294901760
        %3844 = vmatprep.mubr.f32.mxu0 %v3843
        %v3845 = vand.u32 %v508, 4294901760
        %v3846 = vsub.f32 %v508, %v3845
        %v3847 = vand.u32 %v3846, 4294901760
        %3848 = vmatmul.mubr.f32.gmra.mxu0 %v3847
        %v3849 = vpop.f32.mrf.mxu0
        %v3850 = vadd.f32 %v3053, %v3849
        %v3851 = vpop.f32.mrf.mxu0
        %v3852 = vadd.f32 %v3055, %v3851
        %v3853 = vand.u32 %v511, 4294901760
        %v3854 = vsub.f32 %v511, %v3853
        %v3855 = vand.u32 %v3854, 4294901760
        %3856 = vmatprep.mubr.f32.mxu0 %v3855
        %v3857 = vand.u32 %v510, 4294901760
        %v3858 = vsub.f32 %v510, %v3857
        %v3859 = vand.u32 %v3858, 4294901760
        %3860 = vmatmul.mubr.f32.gmra.mxu0 %v3859
        %v3861 = vpop.f32.mrf.mxu0
        %v3862 = vadd.f32 %v3063, %v3861
        %v3863 = vpop.f32.mrf.mxu0
        %v3864 = vadd.f32 %v3065, %v3863
        %v3865 = vand.u32 %v513, 4294901760
        %v3866 = vsub.f32 %v513, %v3865
        %v3867 = vand.u32 %v3866, 4294901760
        %3868 = vmatprep.mubr.f32.mxu0 %v3867
        %v3869 = vand.u32 %v512, 4294901760
        %v3870 = vsub.f32 %v512, %v3869
        %v3871 = vand.u32 %v3870, 4294901760
        %3872 = vmatmul.mubr.f32.gmra.mxu0 %v3871
        %v3873 = vpop.f32.mrf.mxu0
        %v3874 = vadd.f32 %v3073, %v3873
        %v3875 = vpop.f32.mrf.mxu0
        %v3876 = vadd.f32 %v3075, %v3875
        %v3877 = vand.u32 %v515, 4294901760
        %v3878 = vsub.f32 %v515, %v3877
        %v3879 = vand.u32 %v3878, 4294901760
        %3880 = vmatprep.mubr.f32.mxu0 %v3879
        %v3881 = vand.u32 %v514, 4294901760
        %v3882 = vsub.f32 %v514, %v3881
        %v3883 = vand.u32 %v3882, 4294901760
        %3884 = vmatmul.mubr.f32.gmra.mxu0 %v3883
        %v3885 = vpop.f32.mrf.mxu0
        %v3886 = vadd.f32 %v3083, %v3885
        %v3887 = vpop.f32.mrf.mxu0
        %v3888 = vadd.f32 %v3085, %v3887
        %v3889 = vand.u32 %v517, 4294901760
        %v3890 = vsub.f32 %v517, %v3889
        %v3891 = vand.u32 %v3890, 4294901760
        %3892 = vmatprep.mubr.f32.mxu0 %v3891
        %v3893 = vand.u32 %v516, 4294901760
        %v3894 = vsub.f32 %v516, %v3893
        %v3895 = vand.u32 %v3894, 4294901760
        %3896 = vmatmul.mubr.f32.gmra.mxu0 %v3895
        %v3897 = vpop.f32.mrf.mxu0
        %v3898 = vadd.f32 %v3093, %v3897
        %v3899 = vpop.f32.mrf.mxu0
        %v3900 = vadd.f32 %v3095, %v3899
        %v3901 = vand.u32 %v519, 4294901760
        %v3902 = vsub.f32 %v519, %v3901
        %v3903 = vand.u32 %v3902, 4294901760
        %3904 = vmatprep.mubr.f32.mxu0 %v3903
        %v3905 = vand.u32 %v518, 4294901760
        %v3906 = vsub.f32 %v518, %v3905
        %v3907 = vand.u32 %v3906, 4294901760
        %3908 = vmatmul.mubr.f32.gmra.mxu0 %v3907
        %v3909 = vpop.f32.mrf.mxu0
        %v3910 = vadd.f32 %v3103, %v3909
        %v3911 = vpop.f32.mrf.mxu0
        %v3912 = vadd.f32 %v3105, %v3911
        %v3913 = vand.u32 %v521, 4294901760
        %v3914 = vsub.f32 %v521, %v3913
        %v3915 = vand.u32 %v3914, 4294901760
        %3916 = vmatprep.mubr.f32.mxu0 %v3915
        %v3917 = vand.u32 %v520, 4294901760
        %v3918 = vsub.f32 %v520, %v3917
        %v3919 = vand.u32 %v3918, 4294901760
        %3920 = vmatmul.mubr.f32.gmra.mxu0 %v3919
        %v3921 = vpop.f32.mrf.mxu0
        %v3922 = vadd.f32 %v3113, %v3921
        %v3923 = vpop.f32.mrf.mxu0
        %v3924 = vadd.f32 %v3115, %v3923
        %v3925 = vand.u32 %v523, 4294901760
        %v3926 = vsub.f32 %v523, %v3925
        %v3927 = vand.u32 %v3926, 4294901760
        %3928 = vmatprep.mubr.f32.mxu0 %v3927
        %v3929 = vand.u32 %v522, 4294901760
        %v3930 = vsub.f32 %v522, %v3929
        %v3931 = vand.u32 %v3930, 4294901760
        %3932 = vmatmul.mubr.f32.gmra.mxu0 %v3931
        %v3933 = vpop.f32.mrf.mxu0
        %v3934 = vadd.f32 %v3123, %v3933
        %v3935 = vpop.f32.mrf.mxu0
        %v3936 = vadd.f32 %v3125, %v3935
        %v3937 = vand.u32 %v525, 4294901760
        %v3938 = vsub.f32 %v525, %v3937
        %v3939 = vand.u32 %v3938, 4294901760
        %3940 = vmatprep.mubr.f32.mxu0 %v3939
        %v3941 = vand.u32 %v524, 4294901760
        %v3942 = vsub.f32 %v524, %v3941
        %v3943 = vand.u32 %v3942, 4294901760
        %3944 = vmatmul.mubr.f32.gmra.mxu0 %v3943
        %v3945 = vpop.f32.mrf.mxu0
        %v3946 = vadd.f32 %v3133, %v3945
        %v3947 = vpop.f32.mrf.mxu0
        %v3948 = vadd.f32 %v3135, %v3947
        %v3949 = vand.u32 %v527, 4294901760
        %v3950 = vsub.f32 %v527, %v3949
        %v3951 = vand.u32 %v3950, 4294901760
        %3952 = vmatprep.mubr.f32.mxu0 %v3951
        %v3953 = vand.u32 %v526, 4294901760
        %v3954 = vsub.f32 %v526, %v3953
        %v3955 = vand.u32 %v3954, 4294901760
        %3956 = vmatmul.mubr.f32.gmra.mxu0 %v3955
        %v3957 = vpop.f32.mrf.mxu0
        %v3958 = vadd.f32 %v3143, %v3957
        %v3959 = vpop.f32.mrf.mxu0
        %v3960 = vadd.f32 %v3145, %v3959
        %v3961 = vand.u32 %v529, 4294901760
        %v3962 = vsub.f32 %v529, %v3961
        %v3963 = vand.u32 %v3962, 4294901760
        %3964 = vmatprep.mubr.f32.mxu0 %v3963
        %v3965 = vand.u32 %v528, 4294901760
        %v3966 = vsub.f32 %v528, %v3965
        %v3967 = vand.u32 %v3966, 4294901760
        %3968 = vmatmul.mubr.f32.gmra.mxu0 %v3967
        %v3969 = vpop.f32.mrf.mxu0
        %v3970 = vadd.f32 %v3153, %v3969
        %v3971 = vpop.f32.mrf.mxu0
        %v3972 = vadd.f32 %v3155, %v3971
        %v3973 = vand.u32 %v531, 4294901760
        %v3974 = vsub.f32 %v531, %v3973
        %v3975 = vand.u32 %v3974, 4294901760
        %3976 = vmatprep.mubr.f32.mxu0 %v3975
        %v3977 = vand.u32 %v530, 4294901760
        %v3978 = vsub.f32 %v530, %v3977
        %v3979 = vand.u32 %v3978, 4294901760
        %3980 = vmatmul.mubr.f32.gmra.mxu0 %v3979
        %v3981 = vpop.f32.mrf.mxu0
        %v3982 = vadd.f32 %v3163, %v3981
        %v3983 = vpop.f32.mrf.mxu0
        %v3984 = vadd.f32 %v3165, %v3983
        %v3985 = vand.u32 %v533, 4294901760
        %v3986 = vsub.f32 %v533, %v3985
        %v3987 = vand.u32 %v3986, 4294901760
        %3988 = vmatprep.mubr.f32.mxu0 %v3987
        %v3989 = vand.u32 %v532, 4294901760
        %v3990 = vsub.f32 %v532, %v3989
        %v3991 = vand.u32 %v3990, 4294901760
        %3992 = vmatmul.mubr.f32.gmra.mxu0 %v3991
        %v3993 = vpop.f32.mrf.mxu0
        %v3994 = vadd.f32 %v3173, %v3993
        %v3995 = vpop.f32.mrf.mxu0
        %v3996 = vadd.f32 %v3175, %v3995
        %v3997 = vand.u32 %v535, 4294901760
        %v3998 = vsub.f32 %v535, %v3997
        %v3999 = vand.u32 %v3998, 4294901760
        %4000 = vmatprep.mubr.f32.mxu0 %v3999
        %v4001 = vand.u32 %v534, 4294901760
        %v4002 = vsub.f32 %v534, %v4001
        %v4003 = vand.u32 %v4002, 4294901760
        %4004 = vmatmul.mubr.f32.gmra.mxu0 %v4003
        %v4005 = vpop.f32.mrf.mxu0
        %v4006 = vadd.f32 %v3183, %v4005
        %v4007 = vpop.f32.mrf.mxu0
        %v4008 = vadd.f32 %v3185, %v4007
        %v4009 = vand.u32 %v537, 4294901760
        %v4010 = vsub.f32 %v537, %v4009
        %v4011 = vand.u32 %v4010, 4294901760
        %4012 = vmatprep.mubr.f32.mxu0 %v4011
        %v4013 = vand.u32 %v536, 4294901760
        %v4014 = vsub.f32 %v536, %v4013
        %v4015 = vand.u32 %v4014, 4294901760
        %4016 = vmatmul.mubr.f32.gmra.mxu0 %v4015
        %v4017 = vpop.f32.mrf.mxu0
        %v4018 = vadd.f32 %v3193, %v4017
        %v4019 = vpop.f32.mrf.mxu0
        %v4020 = vadd.f32 %v3195, %v4019
        %v4021 = vand.u32 %v539, 4294901760
        %v4022 = vsub.f32 %v539, %v4021
        %v4023 = vand.u32 %v4022, 4294901760
        %4024 = vmatprep.mubr.f32.mxu0 %v4023
        %v4025 = vand.u32 %v538, 4294901760
        %v4026 = vsub.f32 %v538, %v4025
        %v4027 = vand.u32 %v4026, 4294901760
        %4028 = vmatmul.mubr.f32.gmra.mxu0 %v4027
        %v4029 = vpop.f32.mrf.mxu0
        %v4030 = vadd.f32 %v3203, %v4029
        %v4031 = vpop.f32.mrf.mxu0
        %v4032 = vadd.f32 %v3205, %v4031
        %v4033 = vand.u32 %v541, 4294901760
        %v4034 = vsub.f32 %v541, %v4033
        %v4035 = vand.u32 %v4034, 4294901760
        %4036 = vmatprep.mubr.f32.mxu0 %v4035
        %v4037 = vand.u32 %v540, 4294901760
        %v4038 = vsub.f32 %v540, %v4037
        %v4039 = vand.u32 %v4038, 4294901760
        %4040 = vmatmul.mubr.f32.gmra.mxu0 %v4039
        %v4041 = vpop.f32.mrf.mxu0
        %v4042 = vadd.f32 %v3213, %v4041
        %v4043 = vpop.f32.mrf.mxu0
        %v4044 = vadd.f32 %v3215, %v4043
        %v4045 = vand.u32 %v543, 4294901760
        %v4046 = vsub.f32 %v543, %v4045
        %v4047 = vand.u32 %v4046, 4294901760
        %4048 = vmatprep.mubr.f32.mxu0 %v4047
        %v4049 = vand.u32 %v542, 4294901760
        %v4050 = vsub.f32 %v542, %v4049
        %v4051 = vand.u32 %v4050, 4294901760
        %4052 = vmatmul.mubr.f32.gmra.mxu0 %v4051
        %v4053 = vpop.f32.mrf.mxu0
        %v4054 = vadd.f32 %v3223, %v4053
        %v4055 = vpop.f32.mrf.mxu0
        %v4056 = vadd.f32 %v3225, %v4055
        %v4057 = vand.u32 %v545, 4294901760
        %v4058 = vsub.f32 %v545, %v4057
        %v4059 = vand.u32 %v4058, 4294901760
        %4060 = vmatprep.mubr.f32.mxu0 %v4059
        %v4061 = vand.u32 %v544, 4294901760
        %v4062 = vsub.f32 %v544, %v4061
        %v4063 = vand.u32 %v4062, 4294901760
        %4064 = vmatmul.mubr.f32.gmra.mxu0 %v4063
        %v4065 = vpop.f32.mrf.mxu0
        %v4066 = vadd.f32 %v3233, %v4065
        %v4067 = vpop.f32.mrf.mxu0
        %v4068 = vadd.f32 %v3235, %v4067
        %v4069 = vand.u32 %v547, 4294901760
        %v4070 = vsub.f32 %v547, %v4069
        %v4071 = vand.u32 %v4070, 4294901760
        %4072 = vmatprep.mubr.f32.mxu0 %v4071
        %v4073 = vand.u32 %v546, 4294901760
        %v4074 = vsub.f32 %v546, %v4073
        %v4075 = vand.u32 %v4074, 4294901760
        %4076 = vmatmul.mubr.f32.gmra.mxu0 %v4075
        %v4077 = vpop.f32.mrf.mxu0
        %v4078 = vadd.f32 %v3243, %v4077
        %v4079 = vpop.f32.mrf.mxu0
        %v4080 = vadd.f32 %v3245, %v4079
        %v4081 = vand.u32 %v549, 4294901760
        %v4082 = vsub.f32 %v549, %v4081
        %v4083 = vand.u32 %v4082, 4294901760
        %4084 = vmatprep.mubr.f32.mxu0 %v4083
        %v4085 = vand.u32 %v548, 4294901760
        %v4086 = vsub.f32 %v548, %v4085
        %v4087 = vand.u32 %v4086, 4294901760
        %4088 = vmatmul.mubr.f32.gmra.mxu0 %v4087
        %v4089 = vpop.f32.mrf.mxu0
        %v4090 = vadd.f32 %v3253, %v4089
        %v4091 = vpop.f32.mrf.mxu0
        %v4092 = vadd.f32 %v3255, %v4091
        %v4093 = vand.u32 %v551, 4294901760
        %v4094 = vsub.f32 %v551, %v4093
        %v4095 = vand.u32 %v4094, 4294901760
        %4096 = vmatprep.mubr.f32.mxu0 %v4095
        %v4097 = vand.u32 %v550, 4294901760
        %v4098 = vsub.f32 %v550, %v4097
        %v4099 = vand.u32 %v4098, 4294901760
        %4100 = vmatmul.mubr.f32.gmra.mxu0 %v4099
        %v4101 = vpop.f32.mrf.mxu0
        %v4102 = vadd.f32 %v3263, %v4101
        %v4103 = vpop.f32.mrf.mxu0
        %v4104 = vadd.f32 %v3265, %v4103
        %v4105 = vand.u32 %v553, 4294901760
        %v4106 = vsub.f32 %v553, %v4105
        %v4107 = vand.u32 %v4106, 4294901760
        %4108 = vmatprep.mubr.f32.mxu0 %v4107
        %v4109 = vand.u32 %v552, 4294901760
        %v4110 = vsub.f32 %v552, %v4109
        %v4111 = vand.u32 %v4110, 4294901760
        %4112 = vmatmul.mubr.f32.gmra.mxu0 %v4111
        %v4113 = vpop.f32.mrf.mxu0
        %v4114 = vadd.f32 %v3273, %v4113
        %v4115 = vpop.f32.mrf.mxu0
        %v4116 = vadd.f32 %v3275, %v4115
        %v4117 = vand.u32 %v555, 4294901760
        %v4118 = vsub.f32 %v555, %v4117
        %v4119 = vand.u32 %v4118, 4294901760
        %4120 = vmatprep.mubr.f32.mxu0 %v4119
        %v4121 = vand.u32 %v554, 4294901760
        %v4122 = vsub.f32 %v554, %v4121
        %v4123 = vand.u32 %v4122, 4294901760
        %4124 = vmatmul.mubr.f32.gmra.mxu0 %v4123
        %v4125 = vpop.f32.mrf.mxu0
        %v4126 = vadd.f32 %v3283, %v4125
        %v4127 = vpop.f32.mrf.mxu0
        %v4128 = vadd.f32 %v3285, %v4127
        %v4129 = vand.u32 %v557, 4294901760
        %v4130 = vsub.f32 %v557, %v4129
        %v4131 = vand.u32 %v4130, 4294901760
        %4132 = vmatprep.mubr.f32.mxu0 %v4131
        %v4133 = vand.u32 %v556, 4294901760
        %v4134 = vsub.f32 %v556, %v4133
        %v4135 = vand.u32 %v4134, 4294901760
        %4136 = vmatmul.mubr.f32.gmra.mxu0 %v4135
        %v4137 = vpop.f32.mrf.mxu0
        %v4138 = vadd.f32 %v3293, %v4137
        %v4139 = vpop.f32.mrf.mxu0
        %v4140 = vadd.f32 %v3295, %v4139
        %v4141 = vand.u32 %v559, 4294901760
        %v4142 = vsub.f32 %v559, %v4141
        %v4143 = vand.u32 %v4142, 4294901760
        %4144 = vmatprep.mubr.f32.mxu0 %v4143
        %v4145 = vand.u32 %v558, 4294901760
        %v4146 = vsub.f32 %v558, %v4145
        %v4147 = vand.u32 %v4146, 4294901760
        %4148 = vmatmul.mubr.f32.gmra.mxu0 %v4147
        %v4149 = vpop.f32.mrf.mxu0
        %v4150 = vadd.f32 %v3303, %v4149
        %v4151 = vpop.f32.mrf.mxu0
        %v4152 = vadd.f32 %v3305, %v4151
        %v4153 = vand.u32 %v561, 4294901760
        %v4154 = vsub.f32 %v561, %v4153
        %v4155 = vand.u32 %v4154, 4294901760
        %4156 = vmatprep.mubr.f32.mxu0 %v4155
        %v4157 = vand.u32 %v560, 4294901760
        %v4158 = vsub.f32 %v560, %v4157
        %v4159 = vand.u32 %v4158, 4294901760
        %4160 = vmatmul.mubr.f32.gmra.mxu0 %v4159
        %v4161 = vpop.f32.mrf.mxu0
        %v4162 = vadd.f32 %v3313, %v4161
        %v4163 = vpop.f32.mrf.mxu0
        %v4164 = vadd.f32 %v3315, %v4163
        %v4165 = vand.u32 %v563, 4294901760
        %v4166 = vsub.f32 %v563, %v4165
        %v4167 = vand.u32 %v4166, 4294901760
        %4168 = vmatprep.mubr.f32.mxu0 %v4167
        %v4169 = vand.u32 %v562, 4294901760
        %v4170 = vsub.f32 %v562, %v4169
        %v4171 = vand.u32 %v4170, 4294901760
        %4172 = vmatmul.mubr.f32.gmra.mxu0 %v4171
        %v4173 = vpop.f32.mrf.mxu0
        %v4174 = vadd.f32 %v3323, %v4173
        %v4175 = vpop.f32.mrf.mxu0
        %v4176 = vadd.f32 %v3325, %v4175
        %v4177 = vand.u32 %v565, 4294901760
        %v4178 = vsub.f32 %v565, %v4177
        %v4179 = vand.u32 %v4178, 4294901760
        %4180 = vmatprep.mubr.f32.mxu0 %v4179
        %v4181 = vand.u32 %v564, 4294901760
        %v4182 = vsub.f32 %v564, %v4181
        %v4183 = vand.u32 %v4182, 4294901760
        %4184 = vmatmul.mubr.f32.gmra.mxu0 %v4183
        %v4185 = vpop.f32.mrf.mxu0
        %v4186 = vadd.f32 %v3333, %v4185
        %v4187 = vpop.f32.mrf.mxu0
        %v4188 = vadd.f32 %v3335, %v4187
        %v4189 = vand.u32 %v567, 4294901760
        %v4190 = vsub.f32 %v567, %v4189
        %v4191 = vand.u32 %v4190, 4294901760
        %4192 = vmatprep.mubr.f32.mxu0 %v4191
        %v4193 = vand.u32 %v566, 4294901760
        %v4194 = vsub.f32 %v566, %v4193
        %v4195 = vand.u32 %v4194, 4294901760
        %4196 = vmatmul.mubr.f32.gmra.mxu0 %v4195
        %v4197 = vpop.f32.mrf.mxu0
        %v4198 = vadd.f32 %v3343, %v4197
        %v4199 = vpop.f32.mrf.mxu0
        %v4200 = vadd.f32 %v3345, %v4199
        %v4201 = vand.u32 %v569, 4294901760
        %v4202 = vsub.f32 %v569, %v4201
        %v4203 = vand.u32 %v4202, 4294901760
        %4204 = vmatprep.mubr.f32.mxu0 %v4203
        %v4205 = vand.u32 %v568, 4294901760
        %v4206 = vsub.f32 %v568, %v4205
        %v4207 = vand.u32 %v4206, 4294901760
        %4208 = vmatmul.mubr.f32.gmra.mxu0 %v4207
        %v4209 = vpop.f32.mrf.mxu0
        %v4210 = vadd.f32 %v3353, %v4209
        %v4211 = vpop.f32.mrf.mxu0
        %v4212 = vadd.f32 %v3355, %v4211
        %v4213 = vand.u32 %v571, 4294901760
        %v4214 = vsub.f32 %v571, %v4213
        %v4215 = vand.u32 %v4214, 4294901760
        %4216 = vmatprep.mubr.f32.mxu0 %v4215
        %v4217 = vand.u32 %v570, 4294901760
        %v4218 = vsub.f32 %v570, %v4217
        %v4219 = vand.u32 %v4218, 4294901760
        %4220 = vmatmul.mubr.f32.gmra.mxu0 %v4219
        %v4221 = vpop.f32.mrf.mxu0
        %v4222 = vadd.f32 %v3363, %v4221
        %v4223 = vpop.f32.mrf.mxu0
        %v4224 = vadd.f32 %v3365, %v4223
        %v4225 = vand.u32 %v573, 4294901760
        %v4226 = vsub.f32 %v573, %v4225
        %v4227 = vand.u32 %v4226, 4294901760
        %4228 = vmatprep.mubr.f32.mxu0 %v4227
        %v4229 = vand.u32 %v572, 4294901760
        %v4230 = vsub.f32 %v572, %v4229
        %v4231 = vand.u32 %v4230, 4294901760
        %4232 = vmatmul.mubr.f32.gmra.mxu0 %v4231
        %v4233 = vpop.f32.mrf.mxu0
        %v4234 = vadd.f32 %v3373, %v4233
        %v4235 = vpop.f32.mrf.mxu0
        %v4236 = vadd.f32 %v3375, %v4235
        %v4237 = vand.u32 %v575, 4294901760
        %v4238 = vsub.f32 %v575, %v4237
        %v4239 = vand.u32 %v4238, 4294901760
        %4240 = vmatprep.mubr.f32.mxu0 %v4239
        %v4241 = vand.u32 %v574, 4294901760
        %v4242 = vsub.f32 %v574, %v4241
        %v4243 = vand.u32 %v4242, 4294901760
        %4244 = vmatmul.mubr.f32.gmra.mxu0 %v4243
        %v4245 = vpop.f32.mrf.mxu0
        %v4246 = vadd.f32 %v3383, %v4245
        %v4247 = vpop.f32.mrf.mxu0
        %v4248 = vadd.f32 %v3385, %v4247
        %v4249 = vand.u32 %v577, 4294901760
        %v4250 = vsub.f32 %v577, %v4249
        %v4251 = vand.u32 %v4250, 4294901760
        %4252 = vmatprep.mubr.f32.mxu0 %v4251
        %v4253 = vand.u32 %v576, 4294901760
        %v4254 = vsub.f32 %v576, %v4253
        %v4255 = vand.u32 %v4254, 4294901760
        %4256 = vmatmul.mubr.f32.gmra.mxu0 %v4255
        %v4257 = vpop.f32.mrf.mxu0
        %v4258 = vadd.f32 %v3393, %v4257
        %v4259 = vpop.f32.mrf.mxu0
        %v4260 = vadd.f32 %v3395, %v4259
        %v4261 = vand.u32 %v579, 4294901760
        %v4262 = vsub.f32 %v579, %v4261
        %v4263 = vand.u32 %v4262, 4294901760
        %4264 = vmatprep.mubr.f32.mxu0 %v4263
        %v4265 = vand.u32 %v578, 4294901760
        %v4266 = vsub.f32 %v578, %v4265
        %v4267 = vand.u32 %v4266, 4294901760
        %4268 = vmatmul.mubr.f32.gmra.mxu0 %v4267
        %v4269 = vpop.f32.mrf.mxu0
        %v4270 = vadd.f32 %v3403, %v4269
        %v4271 = vpop.f32.mrf.mxu0
        %v4272 = vadd.f32 %v3405, %v4271
        %v4273 = vand.u32 %v581, 4294901760
        %v4274 = vsub.f32 %v581, %v4273
        %v4275 = vand.u32 %v4274, 4294901760
        %4276 = vmatprep.mubr.f32.mxu0 %v4275
        %v4277 = vand.u32 %v580, 4294901760
        %v4278 = vsub.f32 %v580, %v4277
        %v4279 = vand.u32 %v4278, 4294901760
        %4280 = vmatmul.mubr.f32.gmra.mxu0 %v4279
        %v4281 = vpop.f32.mrf.mxu0
        %v4282 = vadd.f32 %v3413, %v4281
        %v4283 = vpop.f32.mrf.mxu0
        %v4284 = vadd.f32 %v3415, %v4283
        %v4285 = vand.u32 %v583, 4294901760
        %v4286 = vsub.f32 %v583, %v4285
        %v4287 = vand.u32 %v4286, 4294901760
        %4288 = vmatprep.mubr.f32.mxu0 %v4287
        %v4289 = vand.u32 %v582, 4294901760
        %v4290 = vsub.f32 %v582, %v4289
        %v4291 = vand.u32 %v4290, 4294901760
        %4292 = vmatmul.mubr.f32.gmra.mxu0 %v4291
        %v4293 = vpop.f32.mrf.mxu0
        %v4294 = vadd.f32 %v3423, %v4293
        %v4295 = vpop.f32.mrf.mxu0
        %v4296 = vadd.f32 %v3425, %v4295
        %v4297 = vand.u32 %v585, 4294901760
        %v4298 = vsub.f32 %v585, %v4297
        %v4299 = vand.u32 %v4298, 4294901760
        %4300 = vmatprep.mubr.f32.mxu0 %v4299
        %v4301 = vand.u32 %v584, 4294901760
        %v4302 = vsub.f32 %v584, %v4301
        %v4303 = vand.u32 %v4302, 4294901760
        %4304 = vmatmul.mubr.f32.gmra.mxu0 %v4303
        %v4305 = vpop.f32.mrf.mxu0
        %v4306 = vadd.f32 %v3433, %v4305
        %v4307 = vpop.f32.mrf.mxu0
        %v4308 = vadd.f32 %v3435, %v4307
        %v4309 = vand.u32 %v587, 4294901760
        %v4310 = vsub.f32 %v587, %v4309
        %v4311 = vand.u32 %v4310, 4294901760
        %4312 = vmatprep.mubr.f32.mxu0 %v4311
        %v4313 = vand.u32 %v586, 4294901760
        %v4314 = vsub.f32 %v586, %v4313
        %v4315 = vand.u32 %v4314, 4294901760
        %4316 = vmatmul.mubr.f32.gmra.mxu0 %v4315
        %v4317 = vpop.f32.mrf.mxu0
        %v4318 = vadd.f32 %v3443, %v4317
        %v4319 = vpop.f32.mrf.mxu0
        %v4320 = vadd.f32 %v3445, %v4319
        %v4321 = vand.u32 %v589, 4294901760
        %v4322 = vsub.f32 %v589, %v4321
        %v4323 = vand.u32 %v4322, 4294901760
        %4324 = vmatprep.mubr.f32.mxu0 %v4323
        %v4325 = vand.u32 %v588, 4294901760
        %v4326 = vsub.f32 %v588, %v4325
        %v4327 = vand.u32 %v4326, 4294901760
        %4328 = vmatmul.mubr.f32.gmra.mxu0 %v4327
        %v4329 = vpop.f32.mrf.mxu0
        %v4330 = vadd.f32 %v3453, %v4329
        %v4331 = vpop.f32.mrf.mxu0
        %v4332 = vadd.f32 %v3455, %v4331
        %v4333 = vand.u32 %v591, 4294901760
        %v4334 = vsub.f32 %v591, %v4333
        %v4335 = vand.u32 %v4334, 4294901760
        %4336 = vmatprep.mubr.f32.mxu0 %v4335
        %v4337 = vand.u32 %v590, 4294901760
        %v4338 = vsub.f32 %v590, %v4337
        %v4339 = vand.u32 %v4338, 4294901760
        %4340 = vmatmul.mubr.f32.gmra.mxu0 %v4339
        %v4341 = vpop.f32.mrf.mxu0
        %v4342 = vadd.f32 %v3463, %v4341
        %v4343 = vpop.f32.mrf.mxu0
        %v4344 = vadd.f32 %v3465, %v4343
        %v4345 = vand.u32 %v593, 4294901760
        %v4346 = vsub.f32 %v593, %v4345
        %v4347 = vand.u32 %v4346, 4294901760
        %4348 = vmatprep.mubr.f32.mxu0 %v4347
        %v4349 = vand.u32 %v592, 4294901760
        %v4350 = vsub.f32 %v592, %v4349
        %v4351 = vand.u32 %v4350, 4294901760
        %4352 = vmatmul.mubr.f32.gmra.mxu0 %v4351
        %v4353 = vpop.f32.mrf.mxu0
        %v4354 = vadd.f32 %v3473, %v4353
        %v4355 = vpop.f32.mrf.mxu0
        %v4356 = vadd.f32 %v3475, %v4355
        %v4357 = vand.u32 %v595, 4294901760
        %v4358 = vsub.f32 %v595, %v4357
        %v4359 = vand.u32 %v4358, 4294901760
        %4360 = vmatprep.mubr.f32.mxu0 %v4359
        %v4361 = vand.u32 %v594, 4294901760
        %v4362 = vsub.f32 %v594, %v4361
        %v4363 = vand.u32 %v4362, 4294901760
        %4364 = vmatmul.mubr.f32.gmra.mxu0 %v4363
        %v4365 = vpop.f32.mrf.mxu0
        %v4366 = vadd.f32 %v3483, %v4365
        %v4367 = vpop.f32.mrf.mxu0
        %v4368 = vadd.f32 %v3485, %v4367
        %v4369 = vand.u32 %v597, 4294901760
        %v4370 = vsub.f32 %v597, %v4369
        %v4371 = vand.u32 %v4370, 4294901760
        %4372 = vmatprep.mubr.f32.mxu0 %v4371
        %v4373 = vand.u32 %v596, 4294901760
        %v4374 = vsub.f32 %v596, %v4373
        %v4375 = vand.u32 %v4374, 4294901760
        %4376 = vmatmul.mubr.f32.gmra.mxu0 %v4375
        %v4377 = vpop.f32.mrf.mxu0
        %v4378 = vadd.f32 %v3493, %v4377
        %v4379 = vpop.f32.mrf.mxu0
        %v4380 = vadd.f32 %v3495, %v4379
        %v4381 = vand.u32 %v599, 4294901760
        %v4382 = vsub.f32 %v599, %v4381
        %v4383 = vand.u32 %v4382, 4294901760
        %4384 = vmatprep.mubr.f32.mxu0 %v4383
        %v4385 = vand.u32 %v598, 4294901760
        %v4386 = vsub.f32 %v598, %v4385
        %v4387 = vand.u32 %v4386, 4294901760
        %4388 = vmatmul.mubr.f32.gmra.mxu0 %v4387
        %v4389 = vpop.f32.mrf.mxu0
        %v4390 = vadd.f32 %v3503, %v4389
        %v4391 = vpop.f32.mrf.mxu0
        %v4392 = vadd.f32 %v3505, %v4391
        %v4393 = vand.u32 %v601, 4294901760
        %v4394 = vsub.f32 %v601, %v4393
        %v4395 = vand.u32 %v4394, 4294901760
        %4396 = vmatprep.mubr.f32.mxu0 %v4395
        %v4397 = vand.u32 %v600, 4294901760
        %v4398 = vsub.f32 %v600, %v4397
        %v4399 = vand.u32 %v4398, 4294901760
        %4400 = vmatmul.mubr.f32.gmra.mxu0 %v4399
        %v4401 = vpop.f32.mrf.mxu0
        %v4402 = vadd.f32 %v3513, %v4401
        %v4403 = vpop.f32.mrf.mxu0
        %v4404 = vadd.f32 %v3515, %v4403
        %v4405 = vand.u32 %v603, 4294901760
        %v4406 = vsub.f32 %v603, %v4405
        %v4407 = vand.u32 %v4406, 4294901760
        %4408 = vmatprep.mubr.f32.mxu0 %v4407
        %v4409 = vand.u32 %v602, 4294901760
        %v4410 = vsub.f32 %v602, %v4409
        %v4411 = vand.u32 %v4410, 4294901760
        %4412 = vmatmul.mubr.f32.gmra.mxu0 %v4411
        %v4413 = vpop.f32.mrf.mxu0
        %v4414 = vadd.f32 %v3523, %v4413
        %v4415 = vpop.f32.mrf.mxu0
        %v4416 = vadd.f32 %v3525, %v4415
        %v4417 = vand.u32 %v605, 4294901760
        %v4418 = vsub.f32 %v605, %v4417
        %v4419 = vand.u32 %v4418, 4294901760
        %4420 = vmatprep.mubr.f32.mxu0 %v4419
        %v4421 = vand.u32 %v604, 4294901760
        %v4422 = vsub.f32 %v604, %v4421
        %v4423 = vand.u32 %v4422, 4294901760
        %4424 = vmatmul.mubr.f32.gmra.mxu0 %v4423
        %v4425 = vpop.f32.mrf.mxu0
        %v4426 = vadd.f32 %v3533, %v4425
        %v4427 = vpop.f32.mrf.mxu0
        %v4428 = vadd.f32 %v3535, %v4427
        %v4429 = vand.u32 %v607, 4294901760
        %v4430 = vsub.f32 %v607, %v4429
        %v4431 = vand.u32 %v4430, 4294901760
        %4432 = vmatprep.mubr.f32.mxu0 %v4431
        %v4433 = vand.u32 %v606, 4294901760
        %v4434 = vsub.f32 %v606, %v4433
        %v4435 = vand.u32 %v4434, 4294901760
        %4436 = vmatmul.mubr.f32.gmra.mxu0 %v4435
        %v4437 = vpop.f32.mrf.mxu0
        %v4438 = vadd.f32 %v3543, %v4437
        %v4439 = vpop.f32.mrf.mxu0
        %v4440 = vadd.f32 %v3545, %v4439
        %v4441 = vand.u32 %v609, 4294901760
        %v4442 = vsub.f32 %v609, %v4441
        %v4443 = vand.u32 %v4442, 4294901760
        %4444 = vmatprep.mubr.f32.mxu0 %v4443
        %v4445 = vand.u32 %v608, 4294901760
        %v4446 = vsub.f32 %v608, %v4445
        %v4447 = vand.u32 %v4446, 4294901760
        %4448 = vmatmul.mubr.f32.gmra.mxu0 %v4447
        %v4449 = vpop.f32.mrf.mxu0
        %v4450 = vadd.f32 %v3553, %v4449
        %v4451 = vpop.f32.mrf.mxu0
        %v4452 = vadd.f32 %v3555, %v4451
        %4453 = vdwg.mxu0
        %v4454 = vand.u32 %v641, 4294901760
        %v4455 = vsub.f32 %v641, %v4454
        %v4456 = vand.u32 %v4455, 4294901760
        %4457 = vmatprep.subr.mxu0 %v4456
        %v4458 = vand.u32 %v640, 4294901760
        %v4459 = vsub.f32 %v640, %v4458
        %v4460 = vand.u32 %v4459, 4294901760
        %4461 = vmatpush1.msra.mxu0 %v4460
        %v4462 = vand.u32 %v639, 4294901760
        %v4463 = vsub.f32 %v639, %v4462
        %v4464 = vand.u32 %v4463, 4294901760
        %4465 = vmatprep.subr.mxu0 %v4464
        %v4466 = vand.u32 %v638, 4294901760
        %v4467 = vsub.f32 %v638, %v4466
        %v4468 = vand.u32 %v4467, 4294901760
        %4469 = vmatpush1.msra.mxu0 %v4468
        %v4470 = vand.u32 %v637, 4294901760
        %v4471 = vsub.f32 %v637, %v4470
        %v4472 = vand.u32 %v4471, 4294901760
        %4473 = vmatprep.subr.mxu0 %v4472
        %v4474 = vand.u32 %v636, 4294901760
        %v4475 = vsub.f32 %v636, %v4474
        %v4476 = vand.u32 %v4475, 4294901760
        %4477 = vmatpush1.msra.mxu0 %v4476
        %v4478 = vand.u32 %v635, 4294901760
        %v4479 = vsub.f32 %v635, %v4478
        %v4480 = vand.u32 %v4479, 4294901760
        %4481 = vmatprep.subr.mxu0 %v4480
        %v4482 = vand.u32 %v634, 4294901760
        %v4483 = vsub.f32 %v634, %v4482
        %v4484 = vand.u32 %v4483, 4294901760
        %4485 = vmatpush1.msra.mxu0 %v4484
        %v4486 = vand.u32 %v633, 4294901760
        %v4487 = vsub.f32 %v633, %v4486
        %v4488 = vand.u32 %v4487, 4294901760
        %4489 = vmatprep.subr.mxu0 %v4488
        %v4490 = vand.u32 %v632, 4294901760
        %v4491 = vsub.f32 %v632, %v4490
        %v4492 = vand.u32 %v4491, 4294901760
        %4493 = vmatpush1.msra.mxu0 %v4492
        %v4494 = vand.u32 %v631, 4294901760
        %v4495 = vsub.f32 %v631, %v4494
        %v4496 = vand.u32 %v4495, 4294901760
        %4497 = vmatprep.subr.mxu0 %v4496
        %v4498 = vand.u32 %v630, 4294901760
        %v4499 = vsub.f32 %v630, %v4498
        %v4500 = vand.u32 %v4499, 4294901760
        %4501 = vmatpush1.msra.mxu0 %v4500
        %v4502 = vand.u32 %v629, 4294901760
        %v4503 = vsub.f32 %v629, %v4502
        %v4504 = vand.u32 %v4503, 4294901760
        %4505 = vmatprep.subr.mxu0 %v4504
        %v4506 = vand.u32 %v628, 4294901760
        %v4507 = vsub.f32 %v628, %v4506
        %v4508 = vand.u32 %v4507, 4294901760
        %4509 = vmatpush1.msra.mxu0 %v4508
        %v4510 = vand.u32 %v627, 4294901760
        %v4511 = vsub.f32 %v627, %v4510
        %v4512 = vand.u32 %v4511, 4294901760
        %4513 = vmatprep.subr.mxu0 %v4512
        %v4514 = vand.u32 %v626, 4294901760
        %v4515 = vsub.f32 %v626, %v4514
        %v4516 = vand.u32 %v4515, 4294901760
        %4517 = vmatpush1.msra.mxu0 %v4516
        %v4518 = vand.u32 %v625, 4294901760
        %v4519 = vsub.f32 %v625, %v4518
        %v4520 = vand.u32 %v4519, 4294901760
        %4521 = vmatprep.subr.mxu0 %v4520
        %v4522 = vand.u32 %v624, 4294901760
        %v4523 = vsub.f32 %v624, %v4522
        %v4524 = vand.u32 %v4523, 4294901760
        %4525 = vmatpush1.msra.mxu0 %v4524
        %v4526 = vand.u32 %v623, 4294901760
        %v4527 = vsub.f32 %v623, %v4526
        %v4528 = vand.u32 %v4527, 4294901760
        %4529 = vmatprep.subr.mxu0 %v4528
        %v4530 = vand.u32 %v622, 4294901760
        %v4531 = vsub.f32 %v622, %v4530
        %v4532 = vand.u32 %v4531, 4294901760
        %4533 = vmatpush1.msra.mxu0 %v4532
        %v4534 = vand.u32 %v621, 4294901760
        %v4535 = vsub.f32 %v621, %v4534
        %v4536 = vand.u32 %v4535, 4294901760
        %4537 = vmatprep.subr.mxu0 %v4536
        %v4538 = vand.u32 %v620, 4294901760
        %v4539 = vsub.f32 %v620, %v4538
        %v4540 = vand.u32 %v4539, 4294901760
        %4541 = vmatpush1.msra.mxu0 %v4540
        %v4542 = vand.u32 %v619, 4294901760
        %v4543 = vsub.f32 %v619, %v4542
        %v4544 = vand.u32 %v4543, 4294901760
        %4545 = vmatprep.subr.mxu0 %v4544
        %v4546 = vand.u32 %v618, 4294901760
        %v4547 = vsub.f32 %v618, %v4546
        %v4548 = vand.u32 %v4547, 4294901760
        %4549 = vmatpush1.msra.mxu0 %v4548
        %v4550 = vand.u32 %v617, 4294901760
        %v4551 = vsub.f32 %v617, %v4550
        %v4552 = vand.u32 %v4551, 4294901760
        %4553 = vmatprep.subr.mxu0 %v4552
        %v4554 = vand.u32 %v616, 4294901760
        %v4555 = vsub.f32 %v616, %v4554
        %v4556 = vand.u32 %v4555, 4294901760
        %4557 = vmatpush1.msra.mxu0 %v4556
        %v4558 = vand.u32 %v615, 4294901760
        %v4559 = vsub.f32 %v615, %v4558
        %v4560 = vand.u32 %v4559, 4294901760
        %4561 = vmatprep.subr.mxu0 %v4560
        %v4562 = vand.u32 %v614, 4294901760
        %v4563 = vsub.f32 %v614, %v4562
        %v4564 = vand.u32 %v4563, 4294901760
        %4565 = vmatpush1.msra.mxu0 %v4564
        %v4566 = vand.u32 %v613, 4294901760
        %v4567 = vsub.f32 %v613, %v4566
        %v4568 = vand.u32 %v4567, 4294901760
        %4569 = vmatprep.subr.mxu0 %v4568
        %v4570 = vand.u32 %v612, 4294901760
        %v4571 = vsub.f32 %v612, %v4570
        %v4572 = vand.u32 %v4571, 4294901760
        %4573 = vmatpush1.msra.mxu0 %v4572
        %v4574 = vand.u32 %v611, 4294901760
        %v4575 = vsub.f32 %v611, %v4574
        %v4576 = vand.u32 %v4575, 4294901760
        %4577 = vmatprep.subr.mxu0 %v4576
        %v4578 = vand.u32 %v610, 4294901760
        %v4579 = vsub.f32 %v610, %v4578
        %v4580 = vand.u32 %v4579, 4294901760
        %4581 = vmatpush1.msra.mxu0 %v4580
        %v4582 = vand.u32 %v673, 4294901760
        %v4583 = vsub.f32 %v673, %v4582
        %v4584 = vand.u32 %v4583, 4294901760
        %4585 = vmatprep.subr.mxu0 %v4584
        %v4586 = vand.u32 %v672, 4294901760
        %v4587 = vsub.f32 %v672, %v4586
        %v4588 = vand.u32 %v4587, 4294901760
        %4589 = vmatpush2.msra.mxu0 %v4588
        %v4590 = vand.u32 %v671, 4294901760
        %v4591 = vsub.f32 %v671, %v4590
        %v4592 = vand.u32 %v4591, 4294901760
        %4593 = vmatprep.subr.mxu0 %v4592
        %v4594 = vand.u32 %v670, 4294901760
        %v4595 = vsub.f32 %v670, %v4594
        %v4596 = vand.u32 %v4595, 4294901760
        %4597 = vmatpush2.msra.mxu0 %v4596
        %v4598 = vand.u32 %v669, 4294901760
        %v4599 = vsub.f32 %v669, %v4598
        %v4600 = vand.u32 %v4599, 4294901760
        %4601 = vmatprep.subr.mxu0 %v4600
        %v4602 = vand.u32 %v668, 4294901760
        %v4603 = vsub.f32 %v668, %v4602
        %v4604 = vand.u32 %v4603, 4294901760
        %4605 = vmatpush2.msra.mxu0 %v4604
        %v4606 = vand.u32 %v667, 4294901760
        %v4607 = vsub.f32 %v667, %v4606
        %v4608 = vand.u32 %v4607, 4294901760
        %4609 = vmatprep.subr.mxu0 %v4608
        %v4610 = vand.u32 %v666, 4294901760
        %v4611 = vsub.f32 %v666, %v4610
        %v4612 = vand.u32 %v4611, 4294901760
        %4613 = vmatpush2.msra.mxu0 %v4612
        %v4614 = vand.u32 %v665, 4294901760
        %v4615 = vsub.f32 %v665, %v4614
        %v4616 = vand.u32 %v4615, 4294901760
        %4617 = vmatprep.subr.mxu0 %v4616
        %v4618 = vand.u32 %v664, 4294901760
        %v4619 = vsub.f32 %v664, %v4618
        %v4620 = vand.u32 %v4619, 4294901760
        %4621 = vmatpush2.msra.mxu0 %v4620
        %v4622 = vand.u32 %v663, 4294901760
        %v4623 = vsub.f32 %v663, %v4622
        %v4624 = vand.u32 %v4623, 4294901760
        %4625 = vmatprep.subr.mxu0 %v4624
        %v4626 = vand.u32 %v662, 4294901760
        %v4627 = vsub.f32 %v662, %v4626
        %v4628 = vand.u32 %v4627, 4294901760
        %4629 = vmatpush2.msra.mxu0 %v4628
        %v4630 = vand.u32 %v661, 4294901760
        %v4631 = vsub.f32 %v661, %v4630
        %v4632 = vand.u32 %v4631, 4294901760
        %4633 = vmatprep.subr.mxu0 %v4632
        %v4634 = vand.u32 %v660, 4294901760
        %v4635 = vsub.f32 %v660, %v4634
        %v4636 = vand.u32 %v4635, 4294901760
        %4637 = vmatpush2.msra.mxu0 %v4636
        %v4638 = vand.u32 %v659, 4294901760
        %v4639 = vsub.f32 %v659, %v4638
        %v4640 = vand.u32 %v4639, 4294901760
        %4641 = vmatprep.subr.mxu0 %v4640
        %v4642 = vand.u32 %v658, 4294901760
        %v4643 = vsub.f32 %v658, %v4642
        %v4644 = vand.u32 %v4643, 4294901760
        %4645 = vmatpush2.msra.mxu0 %v4644
        %v4646 = vand.u32 %v657, 4294901760
        %v4647 = vsub.f32 %v657, %v4646
        %v4648 = vand.u32 %v4647, 4294901760
        %4649 = vmatprep.subr.mxu0 %v4648
        %v4650 = vand.u32 %v656, 4294901760
        %v4651 = vsub.f32 %v656, %v4650
        %v4652 = vand.u32 %v4651, 4294901760
        %4653 = vmatpush2.msra.mxu0 %v4652
        %v4654 = vand.u32 %v655, 4294901760
        %v4655 = vsub.f32 %v655, %v4654
        %v4656 = vand.u32 %v4655, 4294901760
        %4657 = vmatprep.subr.mxu0 %v4656
        %v4658 = vand.u32 %v654, 4294901760
        %v4659 = vsub.f32 %v654, %v4658
        %v4660 = vand.u32 %v4659, 4294901760
        %4661 = vmatpush2.msra.mxu0 %v4660
        %v4662 = vand.u32 %v653, 4294901760
        %v4663 = vsub.f32 %v653, %v4662
        %v4664 = vand.u32 %v4663, 4294901760
        %4665 = vmatprep.subr.mxu0 %v4664
        %v4666 = vand.u32 %v652, 4294901760
        %v4667 = vsub.f32 %v652, %v4666
        %v4668 = vand.u32 %v4667, 4294901760
        %4669 = vmatpush2.msra.mxu0 %v4668
        %v4670 = vand.u32 %v651, 4294901760
        %v4671 = vsub.f32 %v651, %v4670
        %v4672 = vand.u32 %v4671, 4294901760
        %4673 = vmatprep.subr.mxu0 %v4672
        %v4674 = vand.u32 %v650, 4294901760
        %v4675 = vsub.f32 %v650, %v4674
        %v4676 = vand.u32 %v4675, 4294901760
        %4677 = vmatpush2.msra.mxu0 %v4676
        %v4678 = vand.u32 %v649, 4294901760
        %v4679 = vsub.f32 %v649, %v4678
        %v4680 = vand.u32 %v4679, 4294901760
        %4681 = vmatprep.subr.mxu0 %v4680
        %v4682 = vand.u32 %v648, 4294901760
        %v4683 = vsub.f32 %v648, %v4682
        %v4684 = vand.u32 %v4683, 4294901760
        %4685 = vmatpush2.msra.mxu0 %v4684
        %v4686 = vand.u32 %v647, 4294901760
        %v4687 = vsub.f32 %v647, %v4686
        %v4688 = vand.u32 %v4687, 4294901760
        %4689 = vmatprep.subr.mxu0 %v4688
        %v4690 = vand.u32 %v646, 4294901760
        %v4691 = vsub.f32 %v646, %v4690
        %v4692 = vand.u32 %v4691, 4294901760
        %4693 = vmatpush2.msra.mxu0 %v4692
        %v4694 = vand.u32 %v645, 4294901760
        %v4695 = vsub.f32 %v645, %v4694
        %v4696 = vand.u32 %v4695, 4294901760
        %4697 = vmatprep.subr.mxu0 %v4696
        %v4698 = vand.u32 %v644, 4294901760
        %v4699 = vsub.f32 %v644, %v4698
        %v4700 = vand.u32 %v4699, 4294901760
        %4701 = vmatpush2.msra.mxu0 %v4700
        %v4702 = vand.u32 %v643, 4294901760
        %v4703 = vsub.f32 %v643, %v4702
        %v4704 = vand.u32 %v4703, 4294901760
        %4705 = vmatprep.subr.mxu0 %v4704
        %v4706 = vand.u32 %v642, 4294901760
        %v4707 = vsub.f32 %v642, %v4706
        %v4708 = vand.u32 %v4707, 4294901760
        %4709 = vmatpush2.msra.mxu0 %v4708
        %v4710 = vand.u32 %v483, 4294901760
        %4711 = vmatprep.mubr.f32.mxu0 %v4710
        %v4712 = vand.u32 %v482, 4294901760
        %4713 = vmatmul.mubr.f32.gmra.mxu0 %v4712
        %v4714 = vpop.f32.mrf.mxu0
        %v4715 = vadd.f32 %v3694, %v4714
        %v4716 = vpop.f32.mrf.mxu0
        %v4717 = vadd.f32 %v3696, %v4716
        %v4718 = vand.u32 %v485, 4294901760
        %4719 = vmatprep.mubr.f32.mxu0 %v4718
        %v4720 = vand.u32 %v484, 4294901760
        %4721 = vmatmul.mubr.f32.gmra.mxu0 %v4720
        %v4722 = vpop.f32.mrf.mxu0
        %v4723 = vadd.f32 %v3706, %v4722
        %v4724 = vpop.f32.mrf.mxu0
        %v4725 = vadd.f32 %v3708, %v4724
        %v4726 = vand.u32 %v487, 4294901760
        %4727 = vmatprep.mubr.f32.mxu0 %v4726
        %v4728 = vand.u32 %v486, 4294901760
        %4729 = vmatmul.mubr.f32.gmra.mxu0 %v4728
        %v4730 = vpop.f32.mrf.mxu0
        %v4731 = vadd.f32 %v3718, %v4730
        %v4732 = vpop.f32.mrf.mxu0
        %v4733 = vadd.f32 %v3720, %v4732
        %v4734 = vand.u32 %v489, 4294901760
        %4735 = vmatprep.mubr.f32.mxu0 %v4734
        %v4736 = vand.u32 %v488, 4294901760
        %4737 = vmatmul.mubr.f32.gmra.mxu0 %v4736
        %v4738 = vpop.f32.mrf.mxu0
        %v4739 = vadd.f32 %v3730, %v4738
        %v4740 = vpop.f32.mrf.mxu0
        %v4741 = vadd.f32 %v3732, %v4740
        %v4742 = vand.u32 %v491, 4294901760
        %4743 = vmatprep.mubr.f32.mxu0 %v4742
        %v4744 = vand.u32 %v490, 4294901760
        %4745 = vmatmul.mubr.f32.gmra.mxu0 %v4744
        %v4746 = vpop.f32.mrf.mxu0
        %v4747 = vadd.f32 %v3742, %v4746
        %v4748 = vpop.f32.mrf.mxu0
        %v4749 = vadd.f32 %v3744, %v4748
        %v4750 = vand.u32 %v493, 4294901760
        %4751 = vmatprep.mubr.f32.mxu0 %v4750
        %v4752 = vand.u32 %v492, 4294901760
        %4753 = vmatmul.mubr.f32.gmra.mxu0 %v4752
        %v4754 = vpop.f32.mrf.mxu0
        %v4755 = vadd.f32 %v3754, %v4754
        %v4756 = vpop.f32.mrf.mxu0
        %v4757 = vadd.f32 %v3756, %v4756
        %v4758 = vand.u32 %v495, 4294901760
        %4759 = vmatprep.mubr.f32.mxu0 %v4758
        %v4760 = vand.u32 %v494, 4294901760
        %4761 = vmatmul.mubr.f32.gmra.mxu0 %v4760
        %v4762 = vpop.f32.mrf.mxu0
        %v4763 = vadd.f32 %v3766, %v4762
        %v4764 = vpop.f32.mrf.mxu0
        %v4765 = vadd.f32 %v3768, %v4764
        %v4766 = vand.u32 %v497, 4294901760
        %4767 = vmatprep.mubr.f32.mxu0 %v4766
        %v4768 = vand.u32 %v496, 4294901760
        %4769 = vmatmul.mubr.f32.gmra.mxu0 %v4768
        %v4770 = vpop.f32.mrf.mxu0
        %v4771 = vadd.f32 %v3778, %v4770
        %v4772 = vpop.f32.mrf.mxu0
        %v4773 = vadd.f32 %v3780, %v4772
        %v4774 = vand.u32 %v499, 4294901760
        %4775 = vmatprep.mubr.f32.mxu0 %v4774
        %v4776 = vand.u32 %v498, 4294901760
        %4777 = vmatmul.mubr.f32.gmra.mxu0 %v4776
        %v4778 = vpop.f32.mrf.mxu0
        %v4779 = vadd.f32 %v3790, %v4778
        %v4780 = vpop.f32.mrf.mxu0
        %v4781 = vadd.f32 %v3792, %v4780
        %v4782 = vand.u32 %v501, 4294901760
        %4783 = vmatprep.mubr.f32.mxu0 %v4782
        %v4784 = vand.u32 %v500, 4294901760
        %4785 = vmatmul.mubr.f32.gmra.mxu0 %v4784
        %v4786 = vpop.f32.mrf.mxu0
        %v4787 = vadd.f32 %v3802, %v4786
        %v4788 = vpop.f32.mrf.mxu0
        %v4789 = vadd.f32 %v3804, %v4788
        %v4790 = vand.u32 %v503, 4294901760
        %4791 = vmatprep.mubr.f32.mxu0 %v4790
        %v4792 = vand.u32 %v502, 4294901760
        %4793 = vmatmul.mubr.f32.gmra.mxu0 %v4792
        %v4794 = vpop.f32.mrf.mxu0
        %v4795 = vadd.f32 %v3814, %v4794
        %v4796 = vpop.f32.mrf.mxu0
        %v4797 = vadd.f32 %v3816, %v4796
        %v4798 = vand.u32 %v505, 4294901760
        %4799 = vmatprep.mubr.f32.mxu0 %v4798
        %v4800 = vand.u32 %v504, 4294901760
        %4801 = vmatmul.mubr.f32.gmra.mxu0 %v4800
        %v4802 = vpop.f32.mrf.mxu0
        %v4803 = vadd.f32 %v3826, %v4802
        %v4804 = vpop.f32.mrf.mxu0
        %v4805 = vadd.f32 %v3828, %v4804
        %v4806 = vand.u32 %v507, 4294901760
        %4807 = vmatprep.mubr.f32.mxu0 %v4806
        %v4808 = vand.u32 %v506, 4294901760
        %4809 = vmatmul.mubr.f32.gmra.mxu0 %v4808
        %v4810 = vpop.f32.mrf.mxu0
        %v4811 = vadd.f32 %v3838, %v4810
        %v4812 = vpop.f32.mrf.mxu0
        %v4813 = vadd.f32 %v3840, %v4812
        %v4814 = vand.u32 %v509, 4294901760
        %4815 = vmatprep.mubr.f32.mxu0 %v4814
        %v4816 = vand.u32 %v508, 4294901760
        %4817 = vmatmul.mubr.f32.gmra.mxu0 %v4816
        %v4818 = vpop.f32.mrf.mxu0
        %v4819 = vadd.f32 %v3850, %v4818
        %v4820 = vpop.f32.mrf.mxu0
        %v4821 = vadd.f32 %v3852, %v4820
        %v4822 = vand.u32 %v511, 4294901760
        %4823 = vmatprep.mubr.f32.mxu0 %v4822
        %v4824 = vand.u32 %v510, 4294901760
        %4825 = vmatmul.mubr.f32.gmra.mxu0 %v4824
        %v4826 = vpop.f32.mrf.mxu0
        %v4827 = vadd.f32 %v3862, %v4826
        %v4828 = vpop.f32.mrf.mxu0
        %v4829 = vadd.f32 %v3864, %v4828
        %v4830 = vand.u32 %v513, 4294901760
        %4831 = vmatprep.mubr.f32.mxu0 %v4830
        %v4832 = vand.u32 %v512, 4294901760
        %4833 = vmatmul.mubr.f32.gmra.mxu0 %v4832
        %v4834 = vpop.f32.mrf.mxu0
        %v4835 = vadd.f32 %v3874, %v4834
        %v4836 = vpop.f32.mrf.mxu0
        %v4837 = vadd.f32 %v3876, %v4836
        %v4838 = vand.u32 %v515, 4294901760
        %4839 = vmatprep.mubr.f32.mxu0 %v4838
        %v4840 = vand.u32 %v514, 4294901760
        %4841 = vmatmul.mubr.f32.gmra.mxu0 %v4840
        %v4842 = vpop.f32.mrf.mxu0
        %v4843 = vadd.f32 %v3886, %v4842
        %v4844 = vpop.f32.mrf.mxu0
        %v4845 = vadd.f32 %v3888, %v4844
        %v4846 = vand.u32 %v517, 4294901760
        %4847 = vmatprep.mubr.f32.mxu0 %v4846
        %v4848 = vand.u32 %v516, 4294901760
        %4849 = vmatmul.mubr.f32.gmra.mxu0 %v4848
        %v4850 = vpop.f32.mrf.mxu0
        %v4851 = vadd.f32 %v3898, %v4850
        %v4852 = vpop.f32.mrf.mxu0
        %v4853 = vadd.f32 %v3900, %v4852
        %v4854 = vand.u32 %v519, 4294901760
        %4855 = vmatprep.mubr.f32.mxu0 %v4854
        %v4856 = vand.u32 %v518, 4294901760
        %4857 = vmatmul.mubr.f32.gmra.mxu0 %v4856
        %v4858 = vpop.f32.mrf.mxu0
        %v4859 = vadd.f32 %v3910, %v4858
        %v4860 = vpop.f32.mrf.mxu0
        %v4861 = vadd.f32 %v3912, %v4860
        %v4862 = vand.u32 %v521, 4294901760
        %4863 = vmatprep.mubr.f32.mxu0 %v4862
        %v4864 = vand.u32 %v520, 4294901760
        %4865 = vmatmul.mubr.f32.gmra.mxu0 %v4864
        %v4866 = vpop.f32.mrf.mxu0
        %v4867 = vadd.f32 %v3922, %v4866
        %v4868 = vpop.f32.mrf.mxu0
        %v4869 = vadd.f32 %v3924, %v4868
        %v4870 = vand.u32 %v523, 4294901760
        %4871 = vmatprep.mubr.f32.mxu0 %v4870
        %v4872 = vand.u32 %v522, 4294901760
        %4873 = vmatmul.mubr.f32.gmra.mxu0 %v4872
        %v4874 = vpop.f32.mrf.mxu0
        %v4875 = vadd.f32 %v3934, %v4874
        %v4876 = vpop.f32.mrf.mxu0
        %v4877 = vadd.f32 %v3936, %v4876
        %v4878 = vand.u32 %v525, 4294901760
        %4879 = vmatprep.mubr.f32.mxu0 %v4878
        %v4880 = vand.u32 %v524, 4294901760
        %4881 = vmatmul.mubr.f32.gmra.mxu0 %v4880
        %v4882 = vpop.f32.mrf.mxu0
        %v4883 = vadd.f32 %v3946, %v4882
        %v4884 = vpop.f32.mrf.mxu0
        %v4885 = vadd.f32 %v3948, %v4884
        %v4886 = vand.u32 %v527, 4294901760
        %4887 = vmatprep.mubr.f32.mxu0 %v4886
        %v4888 = vand.u32 %v526, 4294901760
        %4889 = vmatmul.mubr.f32.gmra.mxu0 %v4888
        %v4890 = vpop.f32.mrf.mxu0
        %v4891 = vadd.f32 %v3958, %v4890
        %v4892 = vpop.f32.mrf.mxu0
        %v4893 = vadd.f32 %v3960, %v4892
        %v4894 = vand.u32 %v529, 4294901760
        %4895 = vmatprep.mubr.f32.mxu0 %v4894
        %v4896 = vand.u32 %v528, 4294901760
        %4897 = vmatmul.mubr.f32.gmra.mxu0 %v4896
        %v4898 = vpop.f32.mrf.mxu0
        %v4899 = vadd.f32 %v3970, %v4898
        %v4900 = vpop.f32.mrf.mxu0
        %v4901 = vadd.f32 %v3972, %v4900
        %v4902 = vand.u32 %v531, 4294901760
        %4903 = vmatprep.mubr.f32.mxu0 %v4902
        %v4904 = vand.u32 %v530, 4294901760
        %4905 = vmatmul.mubr.f32.gmra.mxu0 %v4904
        %v4906 = vpop.f32.mrf.mxu0
        %v4907 = vadd.f32 %v3982, %v4906
        %v4908 = vpop.f32.mrf.mxu0
        %v4909 = vadd.f32 %v3984, %v4908
        %v4910 = vand.u32 %v533, 4294901760
        %4911 = vmatprep.mubr.f32.mxu0 %v4910
        %v4912 = vand.u32 %v532, 4294901760
        %4913 = vmatmul.mubr.f32.gmra.mxu0 %v4912
        %v4914 = vpop.f32.mrf.mxu0
        %v4915 = vadd.f32 %v3994, %v4914
        %v4916 = vpop.f32.mrf.mxu0
        %v4917 = vadd.f32 %v3996, %v4916
        %v4918 = vand.u32 %v535, 4294901760
        %4919 = vmatprep.mubr.f32.mxu0 %v4918
        %v4920 = vand.u32 %v534, 4294901760
        %4921 = vmatmul.mubr.f32.gmra.mxu0 %v4920
        %v4922 = vpop.f32.mrf.mxu0
        %v4923 = vadd.f32 %v4006, %v4922
        %v4924 = vpop.f32.mrf.mxu0
        %v4925 = vadd.f32 %v4008, %v4924
        %v4926 = vand.u32 %v537, 4294901760
        %4927 = vmatprep.mubr.f32.mxu0 %v4926
        %v4928 = vand.u32 %v536, 4294901760
        %4929 = vmatmul.mubr.f32.gmra.mxu0 %v4928
        %v4930 = vpop.f32.mrf.mxu0
        %v4931 = vadd.f32 %v4018, %v4930
        %v4932 = vpop.f32.mrf.mxu0
        %v4933 = vadd.f32 %v4020, %v4932
        %v4934 = vand.u32 %v539, 4294901760
        %4935 = vmatprep.mubr.f32.mxu0 %v4934
        %v4936 = vand.u32 %v538, 4294901760
        %4937 = vmatmul.mubr.f32.gmra.mxu0 %v4936
        %v4938 = vpop.f32.mrf.mxu0
        %v4939 = vadd.f32 %v4030, %v4938
        %v4940 = vpop.f32.mrf.mxu0
        %v4941 = vadd.f32 %v4032, %v4940
        %v4942 = vand.u32 %v541, 4294901760
        %4943 = vmatprep.mubr.f32.mxu0 %v4942
        %v4944 = vand.u32 %v540, 4294901760
        %4945 = vmatmul.mubr.f32.gmra.mxu0 %v4944
        %v4946 = vpop.f32.mrf.mxu0
        %v4947 = vadd.f32 %v4042, %v4946
        %v4948 = vpop.f32.mrf.mxu0
        %v4949 = vadd.f32 %v4044, %v4948
        %v4950 = vand.u32 %v543, 4294901760
        %4951 = vmatprep.mubr.f32.mxu0 %v4950
        %v4952 = vand.u32 %v542, 4294901760
        %4953 = vmatmul.mubr.f32.gmra.mxu0 %v4952
        %v4954 = vpop.f32.mrf.mxu0
        %v4955 = vadd.f32 %v4054, %v4954
        %v4956 = vpop.f32.mrf.mxu0
        %v4957 = vadd.f32 %v4056, %v4956
        %v4958 = vand.u32 %v545, 4294901760
        %4959 = vmatprep.mubr.f32.mxu0 %v4958
        %v4960 = vand.u32 %v544, 4294901760
        %4961 = vmatmul.mubr.f32.gmra.mxu0 %v4960
        %v4962 = vpop.f32.mrf.mxu0
        %v4963 = vadd.f32 %v4066, %v4962
        %v4964 = vpop.f32.mrf.mxu0
        %v4965 = vadd.f32 %v4068, %v4964
        %v4966 = vand.u32 %v547, 4294901760
        %4967 = vmatprep.mubr.f32.mxu0 %v4966
        %v4968 = vand.u32 %v546, 4294901760
        %4969 = vmatmul.mubr.f32.gmra.mxu0 %v4968
        %v4970 = vpop.f32.mrf.mxu0
        %v4971 = vadd.f32 %v4078, %v4970
        %v4972 = vpop.f32.mrf.mxu0
        %v4973 = vadd.f32 %v4080, %v4972
        %v4974 = vand.u32 %v549, 4294901760
        %4975 = vmatprep.mubr.f32.mxu0 %v4974
        %v4976 = vand.u32 %v548, 4294901760
        %4977 = vmatmul.mubr.f32.gmra.mxu0 %v4976
        %v4978 = vpop.f32.mrf.mxu0
        %v4979 = vadd.f32 %v4090, %v4978
        %v4980 = vpop.f32.mrf.mxu0
        %v4981 = vadd.f32 %v4092, %v4980
        %v4982 = vand.u32 %v551, 4294901760
        %4983 = vmatprep.mubr.f32.mxu0 %v4982
        %v4984 = vand.u32 %v550, 4294901760
        %4985 = vmatmul.mubr.f32.gmra.mxu0 %v4984
        %v4986 = vpop.f32.mrf.mxu0
        %v4987 = vadd.f32 %v4102, %v4986
        %v4988 = vpop.f32.mrf.mxu0
        %v4989 = vadd.f32 %v4104, %v4988
        %v4990 = vand.u32 %v553, 4294901760
        %4991 = vmatprep.mubr.f32.mxu0 %v4990
        %v4992 = vand.u32 %v552, 4294901760
        %4993 = vmatmul.mubr.f32.gmra.mxu0 %v4992
        %v4994 = vpop.f32.mrf.mxu0
        %v4995 = vadd.f32 %v4114, %v4994
        %v4996 = vpop.f32.mrf.mxu0
        %v4997 = vadd.f32 %v4116, %v4996
        %v4998 = vand.u32 %v555, 4294901760
        %4999 = vmatprep.mubr.f32.mxu0 %v4998
        %v5000 = vand.u32 %v554, 4294901760
        %5001 = vmatmul.mubr.f32.gmra.mxu0 %v5000
        %v5002 = vpop.f32.mrf.mxu0
        %v5003 = vadd.f32 %v4126, %v5002
        %v5004 = vpop.f32.mrf.mxu0
        %v5005 = vadd.f32 %v4128, %v5004
        %v5006 = vand.u32 %v557, 4294901760
        %5007 = vmatprep.mubr.f32.mxu0 %v5006
        %v5008 = vand.u32 %v556, 4294901760
        %5009 = vmatmul.mubr.f32.gmra.mxu0 %v5008
        %v5010 = vpop.f32.mrf.mxu0
        %v5011 = vadd.f32 %v4138, %v5010
        %v5012 = vpop.f32.mrf.mxu0
        %v5013 = vadd.f32 %v4140, %v5012
        %v5014 = vand.u32 %v559, 4294901760
        %5015 = vmatprep.mubr.f32.mxu0 %v5014
        %v5016 = vand.u32 %v558, 4294901760
        %5017 = vmatmul.mubr.f32.gmra.mxu0 %v5016
        %v5018 = vpop.f32.mrf.mxu0
        %v5019 = vadd.f32 %v4150, %v5018
        %v5020 = vpop.f32.mrf.mxu0
        %v5021 = vadd.f32 %v4152, %v5020
        %v5022 = vand.u32 %v561, 4294901760
        %5023 = vmatprep.mubr.f32.mxu0 %v5022
        %v5024 = vand.u32 %v560, 4294901760
        %5025 = vmatmul.mubr.f32.gmra.mxu0 %v5024
        %v5026 = vpop.f32.mrf.mxu0
        %v5027 = vadd.f32 %v4162, %v5026
        %v5028 = vpop.f32.mrf.mxu0
        %v5029 = vadd.f32 %v4164, %v5028
        %v5030 = vand.u32 %v563, 4294901760
        %5031 = vmatprep.mubr.f32.mxu0 %v5030
        %v5032 = vand.u32 %v562, 4294901760
        %5033 = vmatmul.mubr.f32.gmra.mxu0 %v5032
        %v5034 = vpop.f32.mrf.mxu0
        %v5035 = vadd.f32 %v4174, %v5034
        %v5036 = vpop.f32.mrf.mxu0
        %v5037 = vadd.f32 %v4176, %v5036
        %v5038 = vand.u32 %v565, 4294901760
        %5039 = vmatprep.mubr.f32.mxu0 %v5038
        %v5040 = vand.u32 %v564, 4294901760
        %5041 = vmatmul.mubr.f32.gmra.mxu0 %v5040
        %v5042 = vpop.f32.mrf.mxu0
        %v5043 = vadd.f32 %v4186, %v5042
        %v5044 = vpop.f32.mrf.mxu0
        %v5045 = vadd.f32 %v4188, %v5044
        %v5046 = vand.u32 %v567, 4294901760
        %5047 = vmatprep.mubr.f32.mxu0 %v5046
        %v5048 = vand.u32 %v566, 4294901760
        %5049 = vmatmul.mubr.f32.gmra.mxu0 %v5048
        %v5050 = vpop.f32.mrf.mxu0
        %v5051 = vadd.f32 %v4198, %v5050
        %v5052 = vpop.f32.mrf.mxu0
        %v5053 = vadd.f32 %v4200, %v5052
        %v5054 = vand.u32 %v569, 4294901760
        %5055 = vmatprep.mubr.f32.mxu0 %v5054
        %v5056 = vand.u32 %v568, 4294901760
        %5057 = vmatmul.mubr.f32.gmra.mxu0 %v5056
        %v5058 = vpop.f32.mrf.mxu0
        %v5059 = vadd.f32 %v4210, %v5058
        %v5060 = vpop.f32.mrf.mxu0
        %v5061 = vadd.f32 %v4212, %v5060
        %v5062 = vand.u32 %v571, 4294901760
        %5063 = vmatprep.mubr.f32.mxu0 %v5062
        %v5064 = vand.u32 %v570, 4294901760
        %5065 = vmatmul.mubr.f32.gmra.mxu0 %v5064
        %v5066 = vpop.f32.mrf.mxu0
        %v5067 = vadd.f32 %v4222, %v5066
        %v5068 = vpop.f32.mrf.mxu0
        %v5069 = vadd.f32 %v4224, %v5068
        %v5070 = vand.u32 %v573, 4294901760
        %5071 = vmatprep.mubr.f32.mxu0 %v5070
        %v5072 = vand.u32 %v572, 4294901760
        %5073 = vmatmul.mubr.f32.gmra.mxu0 %v5072
        %v5074 = vpop.f32.mrf.mxu0
        %v5075 = vadd.f32 %v4234, %v5074
        %v5076 = vpop.f32.mrf.mxu0
        %v5077 = vadd.f32 %v4236, %v5076
        %v5078 = vand.u32 %v575, 4294901760
        %5079 = vmatprep.mubr.f32.mxu0 %v5078
        %v5080 = vand.u32 %v574, 4294901760
        %5081 = vmatmul.mubr.f32.gmra.mxu0 %v5080
        %v5082 = vpop.f32.mrf.mxu0
        %v5083 = vadd.f32 %v4246, %v5082
        %v5084 = vpop.f32.mrf.mxu0
        %v5085 = vadd.f32 %v4248, %v5084
        %v5086 = vand.u32 %v577, 4294901760
        %5087 = vmatprep.mubr.f32.mxu0 %v5086
        %v5088 = vand.u32 %v576, 4294901760
        %5089 = vmatmul.mubr.f32.gmra.mxu0 %v5088
        %v5090 = vpop.f32.mrf.mxu0
        %v5091 = vadd.f32 %v4258, %v5090
        %v5092 = vpop.f32.mrf.mxu0
        %v5093 = vadd.f32 %v4260, %v5092
        %v5094 = vand.u32 %v579, 4294901760
        %5095 = vmatprep.mubr.f32.mxu0 %v5094
        %v5096 = vand.u32 %v578, 4294901760
        %5097 = vmatmul.mubr.f32.gmra.mxu0 %v5096
        %v5098 = vpop.f32.mrf.mxu0
        %v5099 = vadd.f32 %v4270, %v5098
        %v5100 = vpop.f32.mrf.mxu0
        %v5101 = vadd.f32 %v4272, %v5100
        %v5102 = vand.u32 %v581, 4294901760
        %5103 = vmatprep.mubr.f32.mxu0 %v5102
        %v5104 = vand.u32 %v580, 4294901760
        %5105 = vmatmul.mubr.f32.gmra.mxu0 %v5104
        %v5106 = vpop.f32.mrf.mxu0
        %v5107 = vadd.f32 %v4282, %v5106
        %v5108 = vpop.f32.mrf.mxu0
        %v5109 = vadd.f32 %v4284, %v5108
        %v5110 = vand.u32 %v583, 4294901760
        %5111 = vmatprep.mubr.f32.mxu0 %v5110
        %v5112 = vand.u32 %v582, 4294901760
        %5113 = vmatmul.mubr.f32.gmra.mxu0 %v5112
        %v5114 = vpop.f32.mrf.mxu0
        %v5115 = vadd.f32 %v4294, %v5114
        %v5116 = vpop.f32.mrf.mxu0
        %v5117 = vadd.f32 %v4296, %v5116
        %v5118 = vand.u32 %v585, 4294901760
        %5119 = vmatprep.mubr.f32.mxu0 %v5118
        %v5120 = vand.u32 %v584, 4294901760
        %5121 = vmatmul.mubr.f32.gmra.mxu0 %v5120
        %v5122 = vpop.f32.mrf.mxu0
        %v5123 = vadd.f32 %v4306, %v5122
        %v5124 = vpop.f32.mrf.mxu0
        %v5125 = vadd.f32 %v4308, %v5124
        %v5126 = vand.u32 %v587, 4294901760
        %5127 = vmatprep.mubr.f32.mxu0 %v5126
        %v5128 = vand.u32 %v586, 4294901760
        %5129 = vmatmul.mubr.f32.gmra.mxu0 %v5128
        %v5130 = vpop.f32.mrf.mxu0
        %v5131 = vadd.f32 %v4318, %v5130
        %v5132 = vpop.f32.mrf.mxu0
        %v5133 = vadd.f32 %v4320, %v5132
        %v5134 = vand.u32 %v589, 4294901760
        %5135 = vmatprep.mubr.f32.mxu0 %v5134
        %v5136 = vand.u32 %v588, 4294901760
        %5137 = vmatmul.mubr.f32.gmra.mxu0 %v5136
        %v5138 = vpop.f32.mrf.mxu0
        %v5139 = vadd.f32 %v4330, %v5138
        %v5140 = vpop.f32.mrf.mxu0
        %v5141 = vadd.f32 %v4332, %v5140
        %v5142 = vand.u32 %v591, 4294901760
        %5143 = vmatprep.mubr.f32.mxu0 %v5142
        %v5144 = vand.u32 %v590, 4294901760
        %5145 = vmatmul.mubr.f32.gmra.mxu0 %v5144
        %v5146 = vpop.f32.mrf.mxu0
        %v5147 = vadd.f32 %v4342, %v5146
        %v5148 = vpop.f32.mrf.mxu0
        %v5149 = vadd.f32 %v4344, %v5148
        %v5150 = vand.u32 %v593, 4294901760
        %5151 = vmatprep.mubr.f32.mxu0 %v5150
        %v5152 = vand.u32 %v592, 4294901760
        %5153 = vmatmul.mubr.f32.gmra.mxu0 %v5152
        %v5154 = vpop.f32.mrf.mxu0
        %v5155 = vadd.f32 %v4354, %v5154
        %v5156 = vpop.f32.mrf.mxu0
        %v5157 = vadd.f32 %v4356, %v5156
        %v5158 = vand.u32 %v595, 4294901760
        %5159 = vmatprep.mubr.f32.mxu0 %v5158
        %v5160 = vand.u32 %v594, 4294901760
        %5161 = vmatmul.mubr.f32.gmra.mxu0 %v5160
        %v5162 = vpop.f32.mrf.mxu0
        %v5163 = vadd.f32 %v4366, %v5162
        %v5164 = vpop.f32.mrf.mxu0
        %v5165 = vadd.f32 %v4368, %v5164
        %v5166 = vand.u32 %v597, 4294901760
        %5167 = vmatprep.mubr.f32.mxu0 %v5166
        %v5168 = vand.u32 %v596, 4294901760
        %5169 = vmatmul.mubr.f32.gmra.mxu0 %v5168
        %v5170 = vpop.f32.mrf.mxu0
        %v5171 = vadd.f32 %v4378, %v5170
        %v5172 = vpop.f32.mrf.mxu0
        %v5173 = vadd.f32 %v4380, %v5172
        %v5174 = vand.u32 %v599, 4294901760
        %5175 = vmatprep.mubr.f32.mxu0 %v5174
        %v5176 = vand.u32 %v598, 4294901760
        %5177 = vmatmul.mubr.f32.gmra.mxu0 %v5176
        %v5178 = vpop.f32.mrf.mxu0
        %v5179 = vadd.f32 %v4390, %v5178
        %v5180 = vpop.f32.mrf.mxu0
        %v5181 = vadd.f32 %v4392, %v5180
        %v5182 = vand.u32 %v601, 4294901760
        %5183 = vmatprep.mubr.f32.mxu0 %v5182
        %v5184 = vand.u32 %v600, 4294901760
        %5185 = vmatmul.mubr.f32.gmra.mxu0 %v5184
        %v5186 = vpop.f32.mrf.mxu0
        %v5187 = vadd.f32 %v4402, %v5186
        %v5188 = vpop.f32.mrf.mxu0
        %v5189 = vadd.f32 %v4404, %v5188
        %v5190 = vand.u32 %v603, 4294901760
        %5191 = vmatprep.mubr.f32.mxu0 %v5190
        %v5192 = vand.u32 %v602, 4294901760
        %5193 = vmatmul.mubr.f32.gmra.mxu0 %v5192
        %v5194 = vpop.f32.mrf.mxu0
        %v5195 = vadd.f32 %v4414, %v5194
        %v5196 = vpop.f32.mrf.mxu0
        %v5197 = vadd.f32 %v4416, %v5196
        %v5198 = vand.u32 %v605, 4294901760
        %5199 = vmatprep.mubr.f32.mxu0 %v5198
        %v5200 = vand.u32 %v604, 4294901760
        %5201 = vmatmul.mubr.f32.gmra.mxu0 %v5200
        %v5202 = vpop.f32.mrf.mxu0
        %v5203 = vadd.f32 %v4426, %v5202
        %v5204 = vpop.f32.mrf.mxu0
        %v5205 = vadd.f32 %v4428, %v5204
        %v5206 = vand.u32 %v607, 4294901760
        %5207 = vmatprep.mubr.f32.mxu0 %v5206
        %v5208 = vand.u32 %v606, 4294901760
        %5209 = vmatmul.mubr.f32.gmra.mxu0 %v5208
        %v5210 = vpop.f32.mrf.mxu0
        %v5211 = vadd.f32 %v4438, %v5210
        %v5212 = vpop.f32.mrf.mxu0
        %v5213 = vadd.f32 %v4440, %v5212
        %v5214 = vand.u32 %v609, 4294901760
        %5215 = vmatprep.mubr.f32.mxu0 %v5214
        %v5216 = vand.u32 %v608, 4294901760
        %5217 = vmatmul.mubr.f32.gmra.mxu0 %v5216
        %v5218 = vpop.f32.mrf.mxu0
        %v5219 = vadd.f32 %v4450, %v5218
        %v5220 = vpop.f32.mrf.mxu0
        %v5221 = vadd.f32 %v4452, %v5220
        %5222 = vdwg.mxu0
        %v5223 = vand.u32 %v641, 4294901760
        %5224 = vmatprep.subr.mxu0 %v5223
        %v5225 = vand.u32 %v640, 4294901760
        %5226 = vmatpush1.msra.mxu0 %v5225
        %v5227 = vand.u32 %v639, 4294901760
        %5228 = vmatprep.subr.mxu0 %v5227
        %v5229 = vand.u32 %v638, 4294901760
        %5230 = vmatpush1.msra.mxu0 %v5229
        %v5231 = vand.u32 %v637, 4294901760
        %5232 = vmatprep.subr.mxu0 %v5231
        %v5233 = vand.u32 %v636, 4294901760
        %5234 = vmatpush1.msra.mxu0 %v5233
        %v5235 = vand.u32 %v635, 4294901760
        %5236 = vmatprep.subr.mxu0 %v5235
        %v5237 = vand.u32 %v634, 4294901760
        %5238 = vmatpush1.msra.mxu0 %v5237
        %v5239 = vand.u32 %v633, 4294901760
        %5240 = vmatprep.subr.mxu0 %v5239
        %v5241 = vand.u32 %v632, 4294901760
        %5242 = vmatpush1.msra.mxu0 %v5241
        %v5243 = vand.u32 %v631, 4294901760
        %5244 = vmatprep.subr.mxu0 %v5243
        %v5245 = vand.u32 %v630, 4294901760
        %5246 = vmatpush1.msra.mxu0 %v5245
        %v5247 = vand.u32 %v629, 4294901760
        %5248 = vmatprep.subr.mxu0 %v5247
        %v5249 = vand.u32 %v628, 4294901760
        %5250 = vmatpush1.msra.mxu0 %v5249
        %v5251 = vand.u32 %v627, 4294901760
        %5252 = vmatprep.subr.mxu0 %v5251
        %v5253 = vand.u32 %v626, 4294901760
        %5254 = vmatpush1.msra.mxu0 %v5253
        %v5255 = vand.u32 %v625, 4294901760
        %5256 = vmatprep.subr.mxu0 %v5255
        %v5257 = vand.u32 %v624, 4294901760
        %5258 = vmatpush1.msra.mxu0 %v5257
        %v5259 = vand.u32 %v623, 4294901760
        %5260 = vmatprep.subr.mxu0 %v5259
        %v5261 = vand.u32 %v622, 4294901760
        %5262 = vmatpush1.msra.mxu0 %v5261
        %v5263 = vand.u32 %v621, 4294901760
        %5264 = vmatprep.subr.mxu0 %v5263
        %v5265 = vand.u32 %v620, 4294901760
        %5266 = vmatpush1.msra.mxu0 %v5265
        %v5267 = vand.u32 %v619, 4294901760
        %5268 = vmatprep.subr.mxu0 %v5267
        %v5269 = vand.u32 %v618, 4294901760
        %5270 = vmatpush1.msra.mxu0 %v5269
        %v5271 = vand.u32 %v617, 4294901760
        %5272 = vmatprep.subr.mxu0 %v5271
        %v5273 = vand.u32 %v616, 4294901760
        %5274 = vmatpush1.msra.mxu0 %v5273
        %v5275 = vand.u32 %v615, 4294901760
        %5276 = vmatprep.subr.mxu0 %v5275
        %v5277 = vand.u32 %v614, 4294901760
        %5278 = vmatpush1.msra.mxu0 %v5277
        %v5279 = vand.u32 %v613, 4294901760
        %5280 = vmatprep.subr.mxu0 %v5279
        %v5281 = vand.u32 %v612, 4294901760
        %5282 = vmatpush1.msra.mxu0 %v5281
        %v5283 = vand.u32 %v611, 4294901760
        %5284 = vmatprep.subr.mxu0 %v5283
        %v5285 = vand.u32 %v610, 4294901760
        %5286 = vmatpush1.msra.mxu0 %v5285
        %v5287 = vand.u32 %v673, 4294901760
        %5288 = vmatprep.subr.mxu0 %v5287
        %v5289 = vand.u32 %v672, 4294901760
        %5290 = vmatpush2.msra.mxu0 %v5289
        %v5291 = vand.u32 %v671, 4294901760
        %5292 = vmatprep.subr.mxu0 %v5291
        %v5293 = vand.u32 %v670, 4294901760
        %5294 = vmatpush2.msra.mxu0 %v5293
        %v5295 = vand.u32 %v669, 4294901760
        %5296 = vmatprep.subr.mxu0 %v5295
        %v5297 = vand.u32 %v668, 4294901760
        %5298 = vmatpush2.msra.mxu0 %v5297
        %v5299 = vand.u32 %v667, 4294901760
        %5300 = vmatprep.subr.mxu0 %v5299
        %v5301 = vand.u32 %v666, 4294901760
        %5302 = vmatpush2.msra.mxu0 %v5301
        %v5303 = vand.u32 %v665, 4294901760
        %5304 = vmatprep.subr.mxu0 %v5303
        %v5305 = vand.u32 %v664, 4294901760
        %5306 = vmatpush2.msra.mxu0 %v5305
        %v5307 = vand.u32 %v663, 4294901760
        %5308 = vmatprep.subr.mxu0 %v5307
        %v5309 = vand.u32 %v662, 4294901760
        %5310 = vmatpush2.msra.mxu0 %v5309
        %v5311 = vand.u32 %v661, 4294901760
        %5312 = vmatprep.subr.mxu0 %v5311
        %v5313 = vand.u32 %v660, 4294901760
        %5314 = vmatpush2.msra.mxu0 %v5313
        %v5315 = vand.u32 %v659, 4294901760
        %5316 = vmatprep.subr.mxu0 %v5315
        %v5317 = vand.u32 %v658, 4294901760
        %5318 = vmatpush2.msra.mxu0 %v5317
        %v5319 = vand.u32 %v657, 4294901760
        %5320 = vmatprep.subr.mxu0 %v5319
        %v5321 = vand.u32 %v656, 4294901760
        %5322 = vmatpush2.msra.mxu0 %v5321
        %v5323 = vand.u32 %v655, 4294901760
        %5324 = vmatprep.subr.mxu0 %v5323
        %v5325 = vand.u32 %v654, 4294901760
        %5326 = vmatpush2.msra.mxu0 %v5325
        %v5327 = vand.u32 %v653, 4294901760
        %5328 = vmatprep.subr.mxu0 %v5327
        %v5329 = vand.u32 %v652, 4294901760
        %5330 = vmatpush2.msra.mxu0 %v5329
        %v5331 = vand.u32 %v651, 4294901760
        %5332 = vmatprep.subr.mxu0 %v5331
        %v5333 = vand.u32 %v650, 4294901760
        %5334 = vmatpush2.msra.mxu0 %v5333
        %v5335 = vand.u32 %v649, 4294901760
        %5336 = vmatprep.subr.mxu0 %v5335
        %v5337 = vand.u32 %v648, 4294901760
        %5338 = vmatpush2.msra.mxu0 %v5337
        %v5339 = vand.u32 %v647, 4294901760
        %5340 = vmatprep.subr.mxu0 %v5339
        %v5341 = vand.u32 %v646, 4294901760
        %5342 = vmatpush2.msra.mxu0 %v5341
        %v5343 = vand.u32 %v645, 4294901760
        %5344 = vmatprep.subr.mxu0 %v5343
        %v5345 = vand.u32 %v644, 4294901760
        %5346 = vmatpush2.msra.mxu0 %v5345
        %v5347 = vand.u32 %v643, 4294901760
        %5348 = vmatprep.subr.mxu0 %v5347
        %v5349 = vand.u32 %v642, 4294901760
        %5350 = vmatpush2.msra.mxu0 %v5349
        %v5351 = vand.u32 %v483, 4294901760
        %5352 = vmatprep.mubr.f32.mxu0 %v5351
        %v5353 = vand.u32 %v482, 4294901760
        %5354 = vmatmul.mubr.f32.gmra.mxu0 %v5353
        %v5355 = vpop.f32.mrf.mxu0
        %v5356 = vadd.f32 %v4715, %v5355
        %v5357 = vpop.f32.mrf.mxu0
        %v5358 = vadd.f32 %v4717, %v5357
        %v5359 = vand.u32 %v485, 4294901760
        %5360 = vmatprep.mubr.f32.mxu0 %v5359
        %v5361 = vand.u32 %v484, 4294901760
        %5362 = vmatmul.mubr.f32.gmra.mxu0 %v5361
        %v5363 = vpop.f32.mrf.mxu0
        %v5364 = vadd.f32 %v4723, %v5363
        %v5365 = vpop.f32.mrf.mxu0
        %v5366 = vadd.f32 %v4725, %v5365
        %v5367 = vand.u32 %v487, 4294901760
        %5368 = vmatprep.mubr.f32.mxu0 %v5367
        %v5369 = vand.u32 %v486, 4294901760
        %5370 = vmatmul.mubr.f32.gmra.mxu0 %v5369
        %v5371 = vpop.f32.mrf.mxu0
        %v5372 = vadd.f32 %v4731, %v5371
        %v5373 = vpop.f32.mrf.mxu0
        %v5374 = vadd.f32 %v4733, %v5373
        %v5375 = vand.u32 %v489, 4294901760
        %5376 = vmatprep.mubr.f32.mxu0 %v5375
        %v5377 = vand.u32 %v488, 4294901760
        %5378 = vmatmul.mubr.f32.gmra.mxu0 %v5377
        %v5379 = vpop.f32.mrf.mxu0
        %v5380 = vadd.f32 %v4739, %v5379
        %v5381 = vpop.f32.mrf.mxu0
        %v5382 = vadd.f32 %v4741, %v5381
        %v5383 = vand.u32 %v491, 4294901760
        %5384 = vmatprep.mubr.f32.mxu0 %v5383
        %v5385 = vand.u32 %v490, 4294901760
        %5386 = vmatmul.mubr.f32.gmra.mxu0 %v5385
        %v5387 = vpop.f32.mrf.mxu0
        %v5388 = vadd.f32 %v4747, %v5387
        %v5389 = vpop.f32.mrf.mxu0
        %v5390 = vadd.f32 %v4749, %v5389
        %v5391 = vand.u32 %v493, 4294901760
        %5392 = vmatprep.mubr.f32.mxu0 %v5391
        %v5393 = vand.u32 %v492, 4294901760
        %5394 = vmatmul.mubr.f32.gmra.mxu0 %v5393
        %v5395 = vpop.f32.mrf.mxu0
        %v5396 = vadd.f32 %v4755, %v5395
        %v5397 = vpop.f32.mrf.mxu0
        %v5398 = vadd.f32 %v4757, %v5397
        %v5399 = vand.u32 %v495, 4294901760
        %5400 = vmatprep.mubr.f32.mxu0 %v5399
        %v5401 = vand.u32 %v494, 4294901760
        %5402 = vmatmul.mubr.f32.gmra.mxu0 %v5401
        %v5403 = vpop.f32.mrf.mxu0
        %v5404 = vadd.f32 %v4763, %v5403
        %v5405 = vpop.f32.mrf.mxu0
        %v5406 = vadd.f32 %v4765, %v5405
        %v5407 = vand.u32 %v497, 4294901760
        %5408 = vmatprep.mubr.f32.mxu0 %v5407
        %v5409 = vand.u32 %v496, 4294901760
        %5410 = vmatmul.mubr.f32.gmra.mxu0 %v5409
        %v5411 = vpop.f32.mrf.mxu0
        %v5412 = vadd.f32 %v4771, %v5411
        %v5413 = vpop.f32.mrf.mxu0
        %v5414 = vadd.f32 %v4773, %v5413
        %v5415 = vand.u32 %v499, 4294901760
        %5416 = vmatprep.mubr.f32.mxu0 %v5415
        %v5417 = vand.u32 %v498, 4294901760
        %5418 = vmatmul.mubr.f32.gmra.mxu0 %v5417
        %v5419 = vpop.f32.mrf.mxu0
        %v5420 = vadd.f32 %v4779, %v5419
        %v5421 = vpop.f32.mrf.mxu0
        %v5422 = vadd.f32 %v4781, %v5421
        %v5423 = vand.u32 %v501, 4294901760
        %5424 = vmatprep.mubr.f32.mxu0 %v5423
        %v5425 = vand.u32 %v500, 4294901760
        %5426 = vmatmul.mubr.f32.gmra.mxu0 %v5425
        %v5427 = vpop.f32.mrf.mxu0
        %v5428 = vadd.f32 %v4787, %v5427
        %v5429 = vpop.f32.mrf.mxu0
        %v5430 = vadd.f32 %v4789, %v5429
        %v5431 = vand.u32 %v503, 4294901760
        %5432 = vmatprep.mubr.f32.mxu0 %v5431
        %v5433 = vand.u32 %v502, 4294901760
        %5434 = vmatmul.mubr.f32.gmra.mxu0 %v5433
        %v5435 = vpop.f32.mrf.mxu0
        %v5436 = vadd.f32 %v4795, %v5435
        %v5437 = vpop.f32.mrf.mxu0
        %v5438 = vadd.f32 %v4797, %v5437
        %v5439 = vand.u32 %v505, 4294901760
        %5440 = vmatprep.mubr.f32.mxu0 %v5439
        %v5441 = vand.u32 %v504, 4294901760
        %5442 = vmatmul.mubr.f32.gmra.mxu0 %v5441
        %v5443 = vpop.f32.mrf.mxu0
        %v5444 = vadd.f32 %v4803, %v5443
        %v5445 = vpop.f32.mrf.mxu0
        %v5446 = vadd.f32 %v4805, %v5445
        %v5447 = vand.u32 %v507, 4294901760
        %5448 = vmatprep.mubr.f32.mxu0 %v5447
        %v5449 = vand.u32 %v506, 4294901760
        %5450 = vmatmul.mubr.f32.gmra.mxu0 %v5449
        %v5451 = vpop.f32.mrf.mxu0
        %v5452 = vadd.f32 %v4811, %v5451
        %v5453 = vpop.f32.mrf.mxu0
        %v5454 = vadd.f32 %v4813, %v5453
        %v5455 = vand.u32 %v509, 4294901760
        %5456 = vmatprep.mubr.f32.mxu0 %v5455
        %v5457 = vand.u32 %v508, 4294901760
        %5458 = vmatmul.mubr.f32.gmra.mxu0 %v5457
        %v5459 = vpop.f32.mrf.mxu0
        %v5460 = vadd.f32 %v4819, %v5459
        %v5461 = vpop.f32.mrf.mxu0
        %v5462 = vadd.f32 %v4821, %v5461
        %v5463 = vand.u32 %v511, 4294901760
        %5464 = vmatprep.mubr.f32.mxu0 %v5463
        %v5465 = vand.u32 %v510, 4294901760
        %5466 = vmatmul.mubr.f32.gmra.mxu0 %v5465
        %v5467 = vpop.f32.mrf.mxu0
        %v5468 = vadd.f32 %v4827, %v5467
        %v5469 = vpop.f32.mrf.mxu0
        %v5470 = vadd.f32 %v4829, %v5469
        %v5471 = vand.u32 %v513, 4294901760
        %5472 = vmatprep.mubr.f32.mxu0 %v5471
        %v5473 = vand.u32 %v512, 4294901760
        %5474 = vmatmul.mubr.f32.gmra.mxu0 %v5473
        %v5475 = vpop.f32.mrf.mxu0
        %v5476 = vadd.f32 %v4835, %v5475
        %v5477 = vpop.f32.mrf.mxu0
        %v5478 = vadd.f32 %v4837, %v5477
        %v5479 = vand.u32 %v515, 4294901760
        %5480 = vmatprep.mubr.f32.mxu0 %v5479
        %v5481 = vand.u32 %v514, 4294901760
        %5482 = vmatmul.mubr.f32.gmra.mxu0 %v5481
        %v5483 = vpop.f32.mrf.mxu0
        %v5484 = vadd.f32 %v4843, %v5483
        %v5485 = vpop.f32.mrf.mxu0
        %v5486 = vadd.f32 %v4845, %v5485
        %v5487 = vand.u32 %v517, 4294901760
        %5488 = vmatprep.mubr.f32.mxu0 %v5487
        %v5489 = vand.u32 %v516, 4294901760
        %5490 = vmatmul.mubr.f32.gmra.mxu0 %v5489
        %v5491 = vpop.f32.mrf.mxu0
        %v5492 = vadd.f32 %v4851, %v5491
        %v5493 = vpop.f32.mrf.mxu0
        %v5494 = vadd.f32 %v4853, %v5493
        %v5495 = vand.u32 %v519, 4294901760
        %5496 = vmatprep.mubr.f32.mxu0 %v5495
        %v5497 = vand.u32 %v518, 4294901760
        %5498 = vmatmul.mubr.f32.gmra.mxu0 %v5497
        %v5499 = vpop.f32.mrf.mxu0
        %v5500 = vadd.f32 %v4859, %v5499
        %v5501 = vpop.f32.mrf.mxu0
        %v5502 = vadd.f32 %v4861, %v5501
        %v5503 = vand.u32 %v521, 4294901760
        %5504 = vmatprep.mubr.f32.mxu0 %v5503
        %v5505 = vand.u32 %v520, 4294901760
        %5506 = vmatmul.mubr.f32.gmra.mxu0 %v5505
        %v5507 = vpop.f32.mrf.mxu0
        %v5508 = vadd.f32 %v4867, %v5507
        %v5509 = vpop.f32.mrf.mxu0
        %v5510 = vadd.f32 %v4869, %v5509
        %v5511 = vand.u32 %v523, 4294901760
        %5512 = vmatprep.mubr.f32.mxu0 %v5511
        %v5513 = vand.u32 %v522, 4294901760
        %5514 = vmatmul.mubr.f32.gmra.mxu0 %v5513
        %v5515 = vpop.f32.mrf.mxu0
        %v5516 = vadd.f32 %v4875, %v5515
        %v5517 = vpop.f32.mrf.mxu0
        %v5518 = vadd.f32 %v4877, %v5517
        %v5519 = vand.u32 %v525, 4294901760
        %5520 = vmatprep.mubr.f32.mxu0 %v5519
        %v5521 = vand.u32 %v524, 4294901760
        %5522 = vmatmul.mubr.f32.gmra.mxu0 %v5521
        %v5523 = vpop.f32.mrf.mxu0
        %v5524 = vadd.f32 %v4883, %v5523
        %v5525 = vpop.f32.mrf.mxu0
        %v5526 = vadd.f32 %v4885, %v5525
        %v5527 = vand.u32 %v527, 4294901760
        %5528 = vmatprep.mubr.f32.mxu0 %v5527
        %v5529 = vand.u32 %v526, 4294901760
        %5530 = vmatmul.mubr.f32.gmra.mxu0 %v5529
        %v5531 = vpop.f32.mrf.mxu0
        %v5532 = vadd.f32 %v4891, %v5531
        %v5533 = vpop.f32.mrf.mxu0
        %v5534 = vadd.f32 %v4893, %v5533
        %v5535 = vand.u32 %v529, 4294901760
        %5536 = vmatprep.mubr.f32.mxu0 %v5535
        %v5537 = vand.u32 %v528, 4294901760
        %5538 = vmatmul.mubr.f32.gmra.mxu0 %v5537
        %v5539 = vpop.f32.mrf.mxu0
        %v5540 = vadd.f32 %v4899, %v5539
        %v5541 = vpop.f32.mrf.mxu0
        %v5542 = vadd.f32 %v4901, %v5541
        %v5543 = vand.u32 %v531, 4294901760
        %5544 = vmatprep.mubr.f32.mxu0 %v5543
        %v5545 = vand.u32 %v530, 4294901760
        %5546 = vmatmul.mubr.f32.gmra.mxu0 %v5545
        %v5547 = vpop.f32.mrf.mxu0
        %v5548 = vadd.f32 %v4907, %v5547
        %v5549 = vpop.f32.mrf.mxu0
        %v5550 = vadd.f32 %v4909, %v5549
        %v5551 = vand.u32 %v533, 4294901760
        %5552 = vmatprep.mubr.f32.mxu0 %v5551
        %v5553 = vand.u32 %v532, 4294901760
        %5554 = vmatmul.mubr.f32.gmra.mxu0 %v5553
        %v5555 = vpop.f32.mrf.mxu0
        %v5556 = vadd.f32 %v4915, %v5555
        %v5557 = vpop.f32.mrf.mxu0
        %v5558 = vadd.f32 %v4917, %v5557
        %v5559 = vand.u32 %v535, 4294901760
        %5560 = vmatprep.mubr.f32.mxu0 %v5559
        %v5561 = vand.u32 %v534, 4294901760
        %5562 = vmatmul.mubr.f32.gmra.mxu0 %v5561
        %v5563 = vpop.f32.mrf.mxu0
        %v5564 = vadd.f32 %v4923, %v5563
        %v5565 = vpop.f32.mrf.mxu0
        %v5566 = vadd.f32 %v4925, %v5565
        %v5567 = vand.u32 %v537, 4294901760
        %5568 = vmatprep.mubr.f32.mxu0 %v5567
        %v5569 = vand.u32 %v536, 4294901760
        %5570 = vmatmul.mubr.f32.gmra.mxu0 %v5569
        %v5571 = vpop.f32.mrf.mxu0
        %v5572 = vadd.f32 %v4931, %v5571
        %v5573 = vpop.f32.mrf.mxu0
        %v5574 = vadd.f32 %v4933, %v5573
        %v5575 = vand.u32 %v539, 4294901760
        %5576 = vmatprep.mubr.f32.mxu0 %v5575
        %v5577 = vand.u32 %v538, 4294901760
        %5578 = vmatmul.mubr.f32.gmra.mxu0 %v5577
        %v5579 = vpop.f32.mrf.mxu0
        %v5580 = vadd.f32 %v4939, %v5579
        %v5581 = vpop.f32.mrf.mxu0
        %v5582 = vadd.f32 %v4941, %v5581
        %v5583 = vand.u32 %v541, 4294901760
        %5584 = vmatprep.mubr.f32.mxu0 %v5583
        %v5585 = vand.u32 %v540, 4294901760
        %5586 = vmatmul.mubr.f32.gmra.mxu0 %v5585
        %v5587 = vpop.f32.mrf.mxu0
        %v5588 = vadd.f32 %v4947, %v5587
        %v5589 = vpop.f32.mrf.mxu0
        %v5590 = vadd.f32 %v4949, %v5589
        %v5591 = vand.u32 %v543, 4294901760
        %5592 = vmatprep.mubr.f32.mxu0 %v5591
        %v5593 = vand.u32 %v542, 4294901760
        %5594 = vmatmul.mubr.f32.gmra.mxu0 %v5593
        %v5595 = vpop.f32.mrf.mxu0
        %v5596 = vadd.f32 %v4955, %v5595
        %v5597 = vpop.f32.mrf.mxu0
        %v5598 = vadd.f32 %v4957, %v5597
        %v5599 = vand.u32 %v545, 4294901760
        %5600 = vmatprep.mubr.f32.mxu0 %v5599
        %v5601 = vand.u32 %v544, 4294901760
        %5602 = vmatmul.mubr.f32.gmra.mxu0 %v5601
        %v5603 = vpop.f32.mrf.mxu0
        %v5604 = vadd.f32 %v4963, %v5603
        %v5605 = vpop.f32.mrf.mxu0
        %v5606 = vadd.f32 %v4965, %v5605
        %v5607 = vand.u32 %v547, 4294901760
        %5608 = vmatprep.mubr.f32.mxu0 %v5607
        %v5609 = vand.u32 %v546, 4294901760
        %5610 = vmatmul.mubr.f32.gmra.mxu0 %v5609
        %v5611 = vpop.f32.mrf.mxu0
        %v5612 = vadd.f32 %v4971, %v5611
        %v5613 = vpop.f32.mrf.mxu0
        %v5614 = vadd.f32 %v4973, %v5613
        %v5615 = vand.u32 %v549, 4294901760
        %5616 = vmatprep.mubr.f32.mxu0 %v5615
        %v5617 = vand.u32 %v548, 4294901760
        %5618 = vmatmul.mubr.f32.gmra.mxu0 %v5617
        %v5619 = vpop.f32.mrf.mxu0
        %v5620 = vadd.f32 %v4979, %v5619
        %v5621 = vpop.f32.mrf.mxu0
        %v5622 = vadd.f32 %v4981, %v5621
        %v5623 = vand.u32 %v551, 4294901760
        %5624 = vmatprep.mubr.f32.mxu0 %v5623
        %v5625 = vand.u32 %v550, 4294901760
        %5626 = vmatmul.mubr.f32.gmra.mxu0 %v5625
        %v5627 = vpop.f32.mrf.mxu0
        %v5628 = vadd.f32 %v4987, %v5627
        %v5629 = vpop.f32.mrf.mxu0
        %v5630 = vadd.f32 %v4989, %v5629
        %v5631 = vand.u32 %v553, 4294901760
        %5632 = vmatprep.mubr.f32.mxu0 %v5631
        %v5633 = vand.u32 %v552, 4294901760
        %5634 = vmatmul.mubr.f32.gmra.mxu0 %v5633
        %v5635 = vpop.f32.mrf.mxu0
        %v5636 = vadd.f32 %v4995, %v5635
        %v5637 = vpop.f32.mrf.mxu0
        %v5638 = vadd.f32 %v4997, %v5637
        %v5639 = vand.u32 %v555, 4294901760
        %5640 = vmatprep.mubr.f32.mxu0 %v5639
        %v5641 = vand.u32 %v554, 4294901760
        %5642 = vmatmul.mubr.f32.gmra.mxu0 %v5641
        %v5643 = vpop.f32.mrf.mxu0
        %v5644 = vadd.f32 %v5003, %v5643
        %v5645 = vpop.f32.mrf.mxu0
        %v5646 = vadd.f32 %v5005, %v5645
        %v5647 = vand.u32 %v557, 4294901760
        %5648 = vmatprep.mubr.f32.mxu0 %v5647
        %v5649 = vand.u32 %v556, 4294901760
        %5650 = vmatmul.mubr.f32.gmra.mxu0 %v5649
        %v5651 = vpop.f32.mrf.mxu0
        %v5652 = vadd.f32 %v5011, %v5651
        %v5653 = vpop.f32.mrf.mxu0
        %v5654 = vadd.f32 %v5013, %v5653
        %v5655 = vand.u32 %v559, 4294901760
        %5656 = vmatprep.mubr.f32.mxu0 %v5655
        %v5657 = vand.u32 %v558, 4294901760
        %5658 = vmatmul.mubr.f32.gmra.mxu0 %v5657
        %v5659 = vpop.f32.mrf.mxu0
        %v5660 = vadd.f32 %v5019, %v5659
        %v5661 = vpop.f32.mrf.mxu0
        %v5662 = vadd.f32 %v5021, %v5661
        %v5663 = vand.u32 %v561, 4294901760
        %5664 = vmatprep.mubr.f32.mxu0 %v5663
        %v5665 = vand.u32 %v560, 4294901760
        %5666 = vmatmul.mubr.f32.gmra.mxu0 %v5665
        %v5667 = vpop.f32.mrf.mxu0
        %v5668 = vadd.f32 %v5027, %v5667
        %v5669 = vpop.f32.mrf.mxu0
        %v5670 = vadd.f32 %v5029, %v5669
        %v5671 = vand.u32 %v563, 4294901760
        %5672 = vmatprep.mubr.f32.mxu0 %v5671
        %v5673 = vand.u32 %v562, 4294901760
        %5674 = vmatmul.mubr.f32.gmra.mxu0 %v5673
        %v5675 = vpop.f32.mrf.mxu0
        %v5676 = vadd.f32 %v5035, %v5675
        %v5677 = vpop.f32.mrf.mxu0
        %v5678 = vadd.f32 %v5037, %v5677
        %v5679 = vand.u32 %v565, 4294901760
        %5680 = vmatprep.mubr.f32.mxu0 %v5679
        %v5681 = vand.u32 %v564, 4294901760
        %5682 = vmatmul.mubr.f32.gmra.mxu0 %v5681
        %v5683 = vpop.f32.mrf.mxu0
        %v5684 = vadd.f32 %v5043, %v5683
        %v5685 = vpop.f32.mrf.mxu0
        %v5686 = vadd.f32 %v5045, %v5685
        %v5687 = vand.u32 %v567, 4294901760
        %5688 = vmatprep.mubr.f32.mxu0 %v5687
        %v5689 = vand.u32 %v566, 4294901760
        %5690 = vmatmul.mubr.f32.gmra.mxu0 %v5689
        %v5691 = vpop.f32.mrf.mxu0
        %v5692 = vadd.f32 %v5051, %v5691
        %v5693 = vpop.f32.mrf.mxu0
        %v5694 = vadd.f32 %v5053, %v5693
        %v5695 = vand.u32 %v569, 4294901760
        %5696 = vmatprep.mubr.f32.mxu0 %v5695
        %v5697 = vand.u32 %v568, 4294901760
        %5698 = vmatmul.mubr.f32.gmra.mxu0 %v5697
        %v5699 = vpop.f32.mrf.mxu0
        %v5700 = vadd.f32 %v5059, %v5699
        %v5701 = vpop.f32.mrf.mxu0
        %v5702 = vadd.f32 %v5061, %v5701
        %v5703 = vand.u32 %v571, 4294901760
        %5704 = vmatprep.mubr.f32.mxu0 %v5703
        %v5705 = vand.u32 %v570, 4294901760
        %5706 = vmatmul.mubr.f32.gmra.mxu0 %v5705
        %v5707 = vpop.f32.mrf.mxu0
        %v5708 = vadd.f32 %v5067, %v5707
        %v5709 = vpop.f32.mrf.mxu0
        %v5710 = vadd.f32 %v5069, %v5709
        %v5711 = vand.u32 %v573, 4294901760
        %5712 = vmatprep.mubr.f32.mxu0 %v5711
        %v5713 = vand.u32 %v572, 4294901760
        %5714 = vmatmul.mubr.f32.gmra.mxu0 %v5713
        %v5715 = vpop.f32.mrf.mxu0
        %v5716 = vadd.f32 %v5075, %v5715
        %v5717 = vpop.f32.mrf.mxu0
        %v5718 = vadd.f32 %v5077, %v5717
        %v5719 = vand.u32 %v575, 4294901760
        %5720 = vmatprep.mubr.f32.mxu0 %v5719
        %v5721 = vand.u32 %v574, 4294901760
        %5722 = vmatmul.mubr.f32.gmra.mxu0 %v5721
        %v5723 = vpop.f32.mrf.mxu0
        %v5724 = vadd.f32 %v5083, %v5723
        %v5725 = vpop.f32.mrf.mxu0
        %v5726 = vadd.f32 %v5085, %v5725
        %v5727 = vand.u32 %v577, 4294901760
        %5728 = vmatprep.mubr.f32.mxu0 %v5727
        %v5729 = vand.u32 %v576, 4294901760
        %5730 = vmatmul.mubr.f32.gmra.mxu0 %v5729
        %v5731 = vpop.f32.mrf.mxu0
        %v5732 = vadd.f32 %v5091, %v5731
        %v5733 = vpop.f32.mrf.mxu0
        %v5734 = vadd.f32 %v5093, %v5733
        %v5735 = vand.u32 %v579, 4294901760
        %5736 = vmatprep.mubr.f32.mxu0 %v5735
        %v5737 = vand.u32 %v578, 4294901760
        %5738 = vmatmul.mubr.f32.gmra.mxu0 %v5737
        %v5739 = vpop.f32.mrf.mxu0
        %v5740 = vadd.f32 %v5099, %v5739
        %v5741 = vpop.f32.mrf.mxu0
        %v5742 = vadd.f32 %v5101, %v5741
        %v5743 = vand.u32 %v581, 4294901760
        %5744 = vmatprep.mubr.f32.mxu0 %v5743
        %v5745 = vand.u32 %v580, 4294901760
        %5746 = vmatmul.mubr.f32.gmra.mxu0 %v5745
        %v5747 = vpop.f32.mrf.mxu0
        %v5748 = vadd.f32 %v5107, %v5747
        %v5749 = vpop.f32.mrf.mxu0
        %v5750 = vadd.f32 %v5109, %v5749
        %v5751 = vand.u32 %v583, 4294901760
        %5752 = vmatprep.mubr.f32.mxu0 %v5751
        %v5753 = vand.u32 %v582, 4294901760
        %5754 = vmatmul.mubr.f32.gmra.mxu0 %v5753
        %v5755 = vpop.f32.mrf.mxu0
        %v5756 = vadd.f32 %v5115, %v5755
        %v5757 = vpop.f32.mrf.mxu0
        %v5758 = vadd.f32 %v5117, %v5757
        %v5759 = vand.u32 %v585, 4294901760
        %5760 = vmatprep.mubr.f32.mxu0 %v5759
        %v5761 = vand.u32 %v584, 4294901760
        %5762 = vmatmul.mubr.f32.gmra.mxu0 %v5761
        %v5763 = vpop.f32.mrf.mxu0
        %v5764 = vadd.f32 %v5123, %v5763
        %v5765 = vpop.f32.mrf.mxu0
        %v5766 = vadd.f32 %v5125, %v5765
        %v5767 = vand.u32 %v587, 4294901760
        %5768 = vmatprep.mubr.f32.mxu0 %v5767
        %v5769 = vand.u32 %v586, 4294901760
        %5770 = vmatmul.mubr.f32.gmra.mxu0 %v5769
        %v5771 = vpop.f32.mrf.mxu0
        %v5772 = vadd.f32 %v5131, %v5771
        %v5773 = vpop.f32.mrf.mxu0
        %v5774 = vadd.f32 %v5133, %v5773
        %v5775 = vand.u32 %v589, 4294901760
        %5776 = vmatprep.mubr.f32.mxu0 %v5775
        %v5777 = vand.u32 %v588, 4294901760
        %5778 = vmatmul.mubr.f32.gmra.mxu0 %v5777
        %v5779 = vpop.f32.mrf.mxu0
        %v5780 = vadd.f32 %v5139, %v5779
        %v5781 = vpop.f32.mrf.mxu0
        %v5782 = vadd.f32 %v5141, %v5781
        %v5783 = vand.u32 %v591, 4294901760
        %5784 = vmatprep.mubr.f32.mxu0 %v5783
        %v5785 = vand.u32 %v590, 4294901760
        %5786 = vmatmul.mubr.f32.gmra.mxu0 %v5785
        %v5787 = vpop.f32.mrf.mxu0
        %v5788 = vadd.f32 %v5147, %v5787
        %v5789 = vpop.f32.mrf.mxu0
        %v5790 = vadd.f32 %v5149, %v5789
        %v5791 = vand.u32 %v593, 4294901760
        %5792 = vmatprep.mubr.f32.mxu0 %v5791
        %v5793 = vand.u32 %v592, 4294901760
        %5794 = vmatmul.mubr.f32.gmra.mxu0 %v5793
        %v5795 = vpop.f32.mrf.mxu0
        %v5796 = vadd.f32 %v5155, %v5795
        %v5797 = vpop.f32.mrf.mxu0
        %v5798 = vadd.f32 %v5157, %v5797
        %v5799 = vand.u32 %v595, 4294901760
        %5800 = vmatprep.mubr.f32.mxu0 %v5799
        %v5801 = vand.u32 %v594, 4294901760
        %5802 = vmatmul.mubr.f32.gmra.mxu0 %v5801
        %v5803 = vpop.f32.mrf.mxu0
        %v5804 = vadd.f32 %v5163, %v5803
        %v5805 = vpop.f32.mrf.mxu0
        %v5806 = vadd.f32 %v5165, %v5805
        %v5807 = vand.u32 %v597, 4294901760
        %5808 = vmatprep.mubr.f32.mxu0 %v5807
        %v5809 = vand.u32 %v596, 4294901760
        %5810 = vmatmul.mubr.f32.gmra.mxu0 %v5809
        %v5811 = vpop.f32.mrf.mxu0
        %v5812 = vadd.f32 %v5171, %v5811
        %v5813 = vpop.f32.mrf.mxu0
        %v5814 = vadd.f32 %v5173, %v5813
        %v5815 = vand.u32 %v599, 4294901760
        %5816 = vmatprep.mubr.f32.mxu0 %v5815
        %v5817 = vand.u32 %v598, 4294901760
        %5818 = vmatmul.mubr.f32.gmra.mxu0 %v5817
        %v5819 = vpop.f32.mrf.mxu0
        %v5820 = vadd.f32 %v5179, %v5819
        %v5821 = vpop.f32.mrf.mxu0
        %v5822 = vadd.f32 %v5181, %v5821
        %v5823 = vand.u32 %v601, 4294901760
        %5824 = vmatprep.mubr.f32.mxu0 %v5823
        %v5825 = vand.u32 %v600, 4294901760
        %5826 = vmatmul.mubr.f32.gmra.mxu0 %v5825
        %v5827 = vpop.f32.mrf.mxu0
        %v5828 = vadd.f32 %v5187, %v5827
        %v5829 = vpop.f32.mrf.mxu0
        %v5830 = vadd.f32 %v5189, %v5829
        %v5831 = vand.u32 %v603, 4294901760
        %5832 = vmatprep.mubr.f32.mxu0 %v5831
        %v5833 = vand.u32 %v602, 4294901760
        %5834 = vmatmul.mubr.f32.gmra.mxu0 %v5833
        %v5835 = vpop.f32.mrf.mxu0
        %v5836 = vadd.f32 %v5195, %v5835
        %v5837 = vpop.f32.mrf.mxu0
        %v5838 = vadd.f32 %v5197, %v5837
        %v5839 = vand.u32 %v605, 4294901760
        %5840 = vmatprep.mubr.f32.mxu0 %v5839
        %v5841 = vand.u32 %v604, 4294901760
        %5842 = vmatmul.mubr.f32.gmra.mxu0 %v5841
        %v5843 = vpop.f32.mrf.mxu0
        %v5844 = vadd.f32 %v5203, %v5843
        %v5845 = vpop.f32.mrf.mxu0
        %v5846 = vadd.f32 %v5205, %v5845
        %v5847 = vand.u32 %v607, 4294901760
        %5848 = vmatprep.mubr.f32.mxu0 %v5847
        %v5849 = vand.u32 %v606, 4294901760
        %5850 = vmatmul.mubr.f32.gmra.mxu0 %v5849
        %v5851 = vpop.f32.mrf.mxu0
        %v5852 = vadd.f32 %v5211, %v5851
        %v5853 = vpop.f32.mrf.mxu0
        %v5854 = vadd.f32 %v5213, %v5853
        %v5855 = vand.u32 %v609, 4294901760
        %5856 = vmatprep.mubr.f32.mxu0 %v5855
        %v5857 = vand.u32 %v608, 4294901760
        %5858 = vmatmul.mubr.f32.gmra.mxu0 %v5857
        %v5859 = vpop.f32.mrf.mxu0
        %v5860 = vadd.f32 %v5219, %v5859
        %v5861 = vpop.f32.mrf.mxu0
        %v5862 = vadd.f32 %v5221, %v5861
        %5863 = vdwg.mxu0
        %v5864 = vadd.f32 %v354, %v5356
        %v5865 = vadd.f32 %v355, %v5358
        %v5866 = vadd.f32 %v356, %v5364
        %v5867 = vadd.f32 %v357, %v5366
        %v5868 = vadd.f32 %v358, %v5372
        %v5869 = vadd.f32 %v359, %v5374
        %v5870 = vadd.f32 %v360, %v5380
        %v5871 = vadd.f32 %v361, %v5382
        %v5872 = vadd.f32 %v362, %v5388
        %v5873 = vadd.f32 %v363, %v5390
        %v5874 = vadd.f32 %v364, %v5396
        %v5875 = vadd.f32 %v365, %v5398
        %v5876 = vadd.f32 %v366, %v5404
        %v5877 = vadd.f32 %v367, %v5406
        %v5878 = vadd.f32 %v368, %v5412
        %v5879 = vadd.f32 %v369, %v5414
        %v5880 = vadd.f32 %v370, %v5420
        %v5881 = vadd.f32 %v371, %v5422
        %v5882 = vadd.f32 %v372, %v5428
        %v5883 = vadd.f32 %v373, %v5430
        %v5884 = vadd.f32 %v374, %v5436
        %v5885 = vadd.f32 %v375, %v5438
        %v5886 = vadd.f32 %v376, %v5444
        %v5887 = vadd.f32 %v377, %v5446
        %v5888 = vadd.f32 %v378, %v5452
        %v5889 = vadd.f32 %v379, %v5454
        %v5890 = vadd.f32 %v380, %v5460
        %v5891 = vadd.f32 %v381, %v5462
        %v5892 = vadd.f32 %v382, %v5468
        %v5893 = vadd.f32 %v383, %v5470
        %v5894 = vadd.f32 %v384, %v5476
        %v5895 = vadd.f32 %v385, %v5478
        %v5896 = vadd.f32 %v386, %v5484
        %v5897 = vadd.f32 %v387, %v5486
        %v5898 = vadd.f32 %v388, %v5492
        %v5899 = vadd.f32 %v389, %v5494
        %v5900 = vadd.f32 %v390, %v5500
        %v5901 = vadd.f32 %v391, %v5502
        %v5902 = vadd.f32 %v392, %v5508
        %v5903 = vadd.f32 %v393, %v5510
        %v5904 = vadd.f32 %v394, %v5516
        %v5905 = vadd.f32 %v395, %v5518
        %v5906 = vadd.f32 %v396, %v5524
        %v5907 = vadd.f32 %v397, %v5526
        %v5908 = vadd.f32 %v398, %v5532
        %v5909 = vadd.f32 %v399, %v5534
        %v5910 = vadd.f32 %v400, %v5540
        %v5911 = vadd.f32 %v401, %v5542
        %v5912 = vadd.f32 %v402, %v5548
        %v5913 = vadd.f32 %v403, %v5550
        %v5914 = vadd.f32 %v404, %v5556
        %v5915 = vadd.f32 %v405, %v5558
        %v5916 = vadd.f32 %v406, %v5564
        %v5917 = vadd.f32 %v407, %v5566
        %v5918 = vadd.f32 %v408, %v5572
        %v5919 = vadd.f32 %v409, %v5574
        %v5920 = vadd.f32 %v410, %v5580
        %v5921 = vadd.f32 %v411, %v5582
        %v5922 = vadd.f32 %v412, %v5588
        %v5923 = vadd.f32 %v413, %v5590
        %v5924 = vadd.f32 %v414, %v5596
        %v5925 = vadd.f32 %v415, %v5598
        %v5926 = vadd.f32 %v416, %v5604
        %v5927 = vadd.f32 %v417, %v5606
        %v5928 = vadd.f32 %v418, %v5612
        %v5929 = vadd.f32 %v419, %v5614
        %v5930 = vadd.f32 %v420, %v5620
        %v5931 = vadd.f32 %v421, %v5622
        %v5932 = vadd.f32 %v422, %v5628
        %v5933 = vadd.f32 %v423, %v5630
        %v5934 = vadd.f32 %v424, %v5636
        %v5935 = vadd.f32 %v425, %v5638
        %v5936 = vadd.f32 %v426, %v5644
        %v5937 = vadd.f32 %v427, %v5646
        %v5938 = vadd.f32 %v428, %v5652
        %v5939 = vadd.f32 %v429, %v5654
        %v5940 = vadd.f32 %v430, %v5660
        %v5941 = vadd.f32 %v431, %v5662
        %v5942 = vadd.f32 %v432, %v5668
        %v5943 = vadd.f32 %v433, %v5670
        %v5944 = vadd.f32 %v434, %v5676
        %v5945 = vadd.f32 %v435, %v5678
        %v5946 = vadd.f32 %v436, %v5684
        %v5947 = vadd.f32 %v437, %v5686
        %v5948 = vadd.f32 %v438, %v5692
        %v5949 = vadd.f32 %v439, %v5694
        %v5950 = vadd.f32 %v440, %v5700
        %v5951 = vadd.f32 %v441, %v5702
        %v5952 = vadd.f32 %v442, %v5708
        %v5953 = vadd.f32 %v443, %v5710
        %v5954 = vadd.f32 %v444, %v5716
        %v5955 = vadd.f32 %v445, %v5718
        %v5956 = vadd.f32 %v446, %v5724
        %v5957 = vadd.f32 %v447, %v5726
        %v5958 = vadd.f32 %v448, %v5732
        %v5959 = vadd.f32 %v449, %v5734
        %v5960 = vadd.f32 %v450, %v5740
        %v5961 = vadd.f32 %v451, %v5742
        %v5962 = vadd.f32 %v452, %v5748
        %v5963 = vadd.f32 %v453, %v5750
        %v5964 = vadd.f32 %v454, %v5756
        %v5965 = vadd.f32 %v455, %v5758
        %v5966 = vadd.f32 %v456, %v5764
        %v5967 = vadd.f32 %v457, %v5766
        %v5968 = vadd.f32 %v458, %v5772
        %v5969 = vadd.f32 %v459, %v5774
        %v5970 = vadd.f32 %v460, %v5780
        %v5971 = vadd.f32 %v461, %v5782
        %v5972 = vadd.f32 %v462, %v5788
        %v5973 = vadd.f32 %v463, %v5790
        %v5974 = vadd.f32 %v464, %v5796
        %v5975 = vadd.f32 %v465, %v5798
        %v5976 = vadd.f32 %v466, %v5804
        %v5977 = vadd.f32 %v467, %v5806
        %v5978 = vadd.f32 %v468, %v5812
        %v5979 = vadd.f32 %v469, %v5814
        %v5980 = vadd.f32 %v470, %v5820
        %v5981 = vadd.f32 %v471, %v5822
        %v5982 = vadd.f32 %v472, %v5828
        %v5983 = vadd.f32 %v473, %v5830
        %v5984 = vadd.f32 %v474, %v5836
        %v5985 = vadd.f32 %v475, %v5838
        %v5986 = vadd.f32 %v476, %v5844
        %v5987 = vadd.f32 %v477, %v5846
        %v5988 = vadd.f32 %v478, %v5852
        %v5989 = vadd.f32 %v479, %v5854
        %v5990 = vadd.f32 %v480, %v5860
        %v5991 = vadd.f32 %v481, %v5862
        %5992 = vst [vmem:[#allocation2] sm:$0xff] %v5864
        %5993 = vst [vmem:[#allocation2 + $0x8] sm:$0xff] %v5865
        %5994 = vst [vmem:[#allocation2 + $0x10] sm:$0xff] %v5866
        %5995 = vst [vmem:[#allocation2 + $0x18] sm:$0xff] %v5867
        %5996 = vst [vmem:[#allocation2 + $0x20] sm:$0xff] %v5868
        %5997 = vst [vmem:[#allocation2 + $0x28] sm:$0xff] %v5869
        %5998 = vst [vmem:[#allocation2 + $0x30] sm:$0xff] %v5870
        %5999 = vst [vmem:[#allocation2 + $0x38] sm:$0xff] %v5871
        %6000 = vst [vmem:[#allocation2 + $0x40] sm:$0xff] %v5872
        %6001 = vst [vmem:[#allocation2 + $0x48] sm:$0xff] %v5873
        %6002 = vst [vmem:[#allocation2 + $0x50] sm:$0xff] %v5874
        %6003 = vst [vmem:[#allocation2 + $0x58] sm:$0xff] %v5875
        %6004 = vst [vmem:[#allocation2 + $0x60] sm:$0xff] %v5876
        %6005 = vst [vmem:[#allocation2 + $0x68] sm:$0xff] %v5877
        %6006 = vst [vmem:[#allocation2 + $0x70] sm:$0xff] %v5878
        %6007 = vst [vmem:[#allocation2 + $0x78] sm:$0xff] %v5879
        %6008 = vst [vmem:[#allocation2 + $0x80] sm:$0xff] %v5880
        %6009 = vst [vmem:[#allocation2 + $0x88] sm:$0xff] %v5881
        %6010 = vst [vmem:[#allocation2 + $0x90] sm:$0xff] %v5882
        %6011 = vst [vmem:[#allocation2 + $0x98] sm:$0xff] %v5883
        %6012 = vst [vmem:[#allocation2 + $0xa0] sm:$0xff] %v5884
        %6013 = vst [vmem:[#allocation2 + $0xa8] sm:$0xff] %v5885
        %6014 = vst [vmem:[#allocation2 + $0xb0] sm:$0xff] %v5886
        %6015 = vst [vmem:[#allocation2 + $0xb8] sm:$0xff] %v5887
        %6016 = vst [vmem:[#allocation2 + $0xc0] sm:$0xff] %v5888
        %6017 = vst [vmem:[#allocation2 + $0xc8] sm:$0xff] %v5889
        %6018 = vst [vmem:[#allocation2 + $0xd0] sm:$0xff] %v5890
        %6019 = vst [vmem:[#allocation2 + $0xd8] sm:$0xff] %v5891
        %6020 = vst [vmem:[#allocation2 + $0xe0] sm:$0xff] %v5892
        %6021 = vst [vmem:[#allocation2 + $0xe8] sm:$0xff] %v5893
        %6022 = vst [vmem:[#allocation2 + $0xf0] sm:$0xff] %v5894
        %6023 = vst [vmem:[#allocation2 + $0xf8] sm:$0xff] %v5895
        %6024 = vst [vmem:[#allocation2 + $0x100] sm:$0xff] %v5896
        %6025 = vst [vmem:[#allocation2 + $0x108] sm:$0xff] %v5897
        %6026 = vst [vmem:[#allocation2 + $0x110] sm:$0xff] %v5898
        %6027 = vst [vmem:[#allocation2 + $0x118] sm:$0xff] %v5899
        %6028 = vst [vmem:[#allocation2 + $0x120] sm:$0xff] %v5900
        %6029 = vst [vmem:[#allocation2 + $0x128] sm:$0xff] %v5901
        %6030 = vst [vmem:[#allocation2 + $0x130] sm:$0xff] %v5902
        %6031 = vst [vmem:[#allocation2 + $0x138] sm:$0xff] %v5903
        %6032 = vst [vmem:[#allocation2 + $0x140] sm:$0xff] %v5904
        %6033 = vst [vmem:[#allocation2 + $0x148] sm:$0xff] %v5905
        %6034 = vst [vmem:[#allocation2 + $0x150] sm:$0xff] %v5906
        %6035 = vst [vmem:[#allocation2 + $0x158] sm:$0xff] %v5907
        %6036 = vst [vmem:[#allocation2 + $0x160] sm:$0xff] %v5908
        %6037 = vst [vmem:[#allocation2 + $0x168] sm:$0xff] %v5909
        %6038 = vst [vmem:[#allocation2 + $0x170] sm:$0xff] %v5910
        %6039 = vst [vmem:[#allocation2 + $0x178] sm:$0xff] %v5911
        %6040 = vst [vmem:[#allocation2 + $0x180] sm:$0xff] %v5912
        %6041 = vst [vmem:[#allocation2 + $0x188] sm:$0xff] %v5913
        %6042 = vst [vmem:[#allocation2 + $0x190] sm:$0xff] %v5914
        %6043 = vst [vmem:[#allocation2 + $0x198] sm:$0xff] %v5915
        %6044 = vst [vmem:[#allocation2 + $0x1a0] sm:$0xff] %v5916
        %6045 = vst [vmem:[#allocation2 + $0x1a8] sm:$0xff] %v5917
        %6046 = vst [vmem:[#allocation2 + $0x1b0] sm:$0xff] %v5918
        %6047 = vst [vmem:[#allocation2 + $0x1b8] sm:$0xff] %v5919
        %6048 = vst [vmem:[#allocation2 + $0x1c0] sm:$0xff] %v5920
        %6049 = vst [vmem:[#allocation2 + $0x1c8] sm:$0xff] %v5921
        %6050 = vst [vmem:[#allocation2 + $0x1d0] sm:$0xff] %v5922
        %6051 = vst [vmem:[#allocation2 + $0x1d8] sm:$0xff] %v5923
        %6052 = vst [vmem:[#allocation2 + $0x1e0] sm:$0xff] %v5924
        %6053 = vst [vmem:[#allocation2 + $0x1e8] sm:$0xff] %v5925
        %6054 = vst [vmem:[#allocation2 + $0x1f0] sm:$0xff] %v5926
        %6055 = vst [vmem:[#allocation2 + $0x1f8] sm:$0xff] %v5927
        %6056 = vst [vmem:[#allocation2 + $0x200] sm:$0xff] %v5928
        %6057 = vst [vmem:[#allocation2 + $0x208] sm:$0xff] %v5929
        %6058 = vst [vmem:[#allocation2 + $0x210] sm:$0xff] %v5930
        %6059 = vst [vmem:[#allocation2 + $0x218] sm:$0xff] %v5931
        %6060 = vst [vmem:[#allocation2 + $0x220] sm:$0xff] %v5932
        %6061 = vst [vmem:[#allocation2 + $0x228] sm:$0xff] %v5933
        %6062 = vst [vmem:[#allocation2 + $0x230] sm:$0xff] %v5934
        %6063 = vst [vmem:[#allocation2 + $0x238] sm:$0xff] %v5935
        %6064 = vst [vmem:[#allocation2 + $0x240] sm:$0xff] %v5936
        %6065 = vst [vmem:[#allocation2 + $0x248] sm:$0xff] %v5937
        %6066 = vst [vmem:[#allocation2 + $0x250] sm:$0xff] %v5938
        %6067 = vst [vmem:[#allocation2 + $0x258] sm:$0xff] %v5939
        %6068 = vst [vmem:[#allocation2 + $0x260] sm:$0xff] %v5940
        %6069 = vst [vmem:[#allocation2 + $0x268] sm:$0xff] %v5941
        %6070 = vst [vmem:[#allocation2 + $0x270] sm:$0xff] %v5942
        %6071 = vst [vmem:[#allocation2 + $0x278] sm:$0xff] %v5943
        %6072 = vst [vmem:[#allocation2 + $0x280] sm:$0xff] %v5944
        %6073 = vst [vmem:[#allocation2 + $0x288] sm:$0xff] %v5945
        %6074 = vst [vmem:[#allocation2 + $0x290] sm:$0xff] %v5946
        %6075 = vst [vmem:[#allocation2 + $0x298] sm:$0xff] %v5947
        %6076 = vst [vmem:[#allocation2 + $0x2a0] sm:$0xff] %v5948
        %6077 = vst [vmem:[#allocation2 + $0x2a8] sm:$0xff] %v5949
        %6078 = vst [vmem:[#allocation2 + $0x2b0] sm:$0xff] %v5950
        %6079 = vst [vmem:[#allocation2 + $0x2b8] sm:$0xff] %v5951
        %6080 = vst [vmem:[#allocation2 + $0x2c0] sm:$0xff] %v5952
        %6081 = vst [vmem:[#allocation2 + $0x2c8] sm:$0xff] %v5953
        %6082 = vst [vmem:[#allocation2 + $0x2d0] sm:$0xff] %v5954
        %6083 = vst [vmem:[#allocation2 + $0x2d8] sm:$0xff] %v5955
        %6084 = vst [vmem:[#allocation2 + $0x2e0] sm:$0xff] %v5956
        %6085 = vst [vmem:[#allocation2 + $0x2e8] sm:$0xff] %v5957
        %6086 = vst [vmem:[#allocation2 + $0x2f0] sm:$0xff] %v5958
        %6087 = vst [vmem:[#allocation2 + $0x2f8] sm:$0xff] %v5959
        %6088 = vst [vmem:[#allocation2 + $0x300] sm:$0xff] %v5960
        %6089 = vst [vmem:[#allocation2 + $0x308] sm:$0xff] %v5961
        %6090 = vst [vmem:[#allocation2 + $0x310] sm:$0xff] %v5962
        %6091 = vst [vmem:[#allocation2 + $0x318] sm:$0xff] %v5963
        %6092 = vst [vmem:[#allocation2 + $0x320] sm:$0xff] %v5964
        %6093 = vst [vmem:[#allocation2 + $0x328] sm:$0xff] %v5965
        %6094 = vst [vmem:[#allocation2 + $0x330] sm:$0xff] %v5966
        %6095 = vst [vmem:[#allocation2 + $0x338] sm:$0xff] %v5967
        %6096 = vst [vmem:[#allocation2 + $0x340] sm:$0xff] %v5968
        %6097 = vst [vmem:[#allocation2 + $0x348] sm:$0xff] %v5969
        %6098 = vst [vmem:[#allocation2 + $0x350] sm:$0xff] %v5970
        %6099 = vst [vmem:[#allocation2 + $0x358] sm:$0xff] %v5971
        %6100 = vst [vmem:[#allocation2 + $0x360] sm:$0xff] %v5972
        %6101 = vst [vmem:[#allocation2 + $0x368] sm:$0xff] %v5973
        %6102 = vst [vmem:[#allocation2 + $0x370] sm:$0xff] %v5974
        %6103 = vst [vmem:[#allocation2 + $0x378] sm:$0xff] %v5975
        %6104 = vst [vmem:[#allocation2 + $0x380] sm:$0xff] %v5976
        %6105 = vst [vmem:[#allocation2 + $0x388] sm:$0xff] %v5977
        %6106 = vst [vmem:[#allocation2 + $0x390] sm:$0xff] %v5978
        %6107 = vst [vmem:[#allocation2 + $0x398] sm:$0xff] %v5979
        %6108 = vst [vmem:[#allocation2 + $0x3a0] sm:$0xff] %v5980
        %6109 = vst [vmem:[#allocation2 + $0x3a8] sm:$0xff] %v5981
        %6110 = vst [vmem:[#allocation2 + $0x3b0] sm:$0xff] %v5982
        %6111 = vst [vmem:[#allocation2 + $0x3b8] sm:$0xff] %v5983
        %6112 = vst [vmem:[#allocation2 + $0x3c0] sm:$0xff] %v5984
        %6113 = vst [vmem:[#allocation2 + $0x3c8] sm:$0xff] %v5985
        %6114 = vst [vmem:[#allocation2 + $0x3d0] sm:$0xff] %v5986
        %6115 = vst [vmem:[#allocation2 + $0x3d8] sm:$0xff] %v5987
        %6116 = vst [vmem:[#allocation2 + $0x3e0] sm:$0xff] %v5988
        %6117 = vst [vmem:[#allocation2 + $0x3e8] sm:$0xff] %v5989
        %6118 = vst [vmem:[#allocation2 + $0x3f0] sm:$0xff] %v5990
        %6119 = vst [vmem:[#allocation2 + $0x3f8] sm:$0xff] %v5991
        // Predicated region
        $region41: #{tpu_custom_call.1} parent=27 // pred_check
          %p6120 = pneg %p222
        $region42: #{tpu_custom_call.1} parent=27 // pred_check_branch
          %6122 = sbr.rel (%p6120) target = $region44
        $region43: #{tpu_custom_call.1} parent=27 // pred_region
          %v6123 = vld [vmem:[#allocation2] sm:$0xff]
          %v6124 = vld [vmem:[#allocation2 + $0x8] sm:$0xff]
          %v6125 = vld [vmem:[#allocation2 + $0x10] sm:$0xff]
          %v6126 = vld [vmem:[#allocation2 + $0x18] sm:$0xff]
          %v6127 = vld [vmem:[#allocation2 + $0x20] sm:$0xff]
          %v6128 = vld [vmem:[#allocation2 + $0x28] sm:$0xff]
          %v6129 = vld [vmem:[#allocation2 + $0x30] sm:$0xff]
          %v6130 = vld [vmem:[#allocation2 + $0x38] sm:$0xff]
          %v6131 = vld [vmem:[#allocation2 + $0x40] sm:$0xff]
          %v6132 = vld [vmem:[#allocation2 + $0x48] sm:$0xff]
          %v6133 = vld [vmem:[#allocation2 + $0x50] sm:$0xff]
          %v6134 = vld [vmem:[#allocation2 + $0x58] sm:$0xff]
          %v6135 = vld [vmem:[#allocation2 + $0x60] sm:$0xff]
          %v6136 = vld [vmem:[#allocation2 + $0x68] sm:$0xff]
          %v6137 = vld [vmem:[#allocation2 + $0x70] sm:$0xff]
          %v6138 = vld [vmem:[#allocation2 + $0x78] sm:$0xff]
          %v6139 = vld [vmem:[#allocation2 + $0x80] sm:$0xff]
          %v6140 = vld [vmem:[#allocation2 + $0x88] sm:$0xff]
          %v6141 = vld [vmem:[#allocation2 + $0x90] sm:$0xff]
          %v6142 = vld [vmem:[#allocation2 + $0x98] sm:$0xff]
          %v6143 = vld [vmem:[#allocation2 + $0xa0] sm:$0xff]
          %v6144 = vld [vmem:[#allocation2 + $0xa8] sm:$0xff]
          %v6145 = vld [vmem:[#allocation2 + $0xb0] sm:$0xff]
          %v6146 = vld [vmem:[#allocation2 + $0xb8] sm:$0xff]
          %v6147 = vld [vmem:[#allocation2 + $0xc0] sm:$0xff]
          %v6148 = vld [vmem:[#allocation2 + $0xc8] sm:$0xff]
          %v6149 = vld [vmem:[#allocation2 + $0xd0] sm:$0xff]
          %v6150 = vld [vmem:[#allocation2 + $0xd8] sm:$0xff]
          %v6151 = vld [vmem:[#allocation2 + $0xe0] sm:$0xff]
          %v6152 = vld [vmem:[#allocation2 + $0xe8] sm:$0xff]
          %v6153 = vld [vmem:[#allocation2 + $0xf0] sm:$0xff]
          %v6154 = vld [vmem:[#allocation2 + $0xf8] sm:$0xff]
          %v6155 = vld [vmem:[#allocation2 + $0x100] sm:$0xff]
          %v6156 = vld [vmem:[#allocation2 + $0x108] sm:$0xff]
          %v6157 = vld [vmem:[#allocation2 + $0x110] sm:$0xff]
          %v6158 = vld [vmem:[#allocation2 + $0x118] sm:$0xff]
          %v6159 = vld [vmem:[#allocation2 + $0x120] sm:$0xff]
          %v6160 = vld [vmem:[#allocation2 + $0x128] sm:$0xff]
          %v6161 = vld [vmem:[#allocation2 + $0x130] sm:$0xff]
          %v6162 = vld [vmem:[#allocation2 + $0x138] sm:$0xff]
          %v6163 = vld [vmem:[#allocation2 + $0x140] sm:$0xff]
          %v6164 = vld [vmem:[#allocation2 + $0x148] sm:$0xff]
          %v6165 = vld [vmem:[#allocation2 + $0x150] sm:$0xff]
          %v6166 = vld [vmem:[#allocation2 + $0x158] sm:$0xff]
          %v6167 = vld [vmem:[#allocation2 + $0x160] sm:$0xff]
          %v6168 = vld [vmem:[#allocation2 + $0x168] sm:$0xff]
          %v6169 = vld [vmem:[#allocation2 + $0x170] sm:$0xff]
          %v6170 = vld [vmem:[#allocation2 + $0x178] sm:$0xff]
          %v6171 = vld [vmem:[#allocation2 + $0x180] sm:$0xff]
          %v6172 = vld [vmem:[#allocation2 + $0x188] sm:$0xff]
          %v6173 = vld [vmem:[#allocation2 + $0x190] sm:$0xff]
          %v6174 = vld [vmem:[#allocation2 + $0x198] sm:$0xff]
          %v6175 = vld [vmem:[#allocation2 + $0x1a0] sm:$0xff]
          %v6176 = vld [vmem:[#allocation2 + $0x1a8] sm:$0xff]
          %v6177 = vld [vmem:[#allocation2 + $0x1b0] sm:$0xff]
          %v6178 = vld [vmem:[#allocation2 + $0x1b8] sm:$0xff]
          %v6179 = vld [vmem:[#allocation2 + $0x1c0] sm:$0xff]
          %v6180 = vld [vmem:[#allocation2 + $0x1c8] sm:$0xff]
          %v6181 = vld [vmem:[#allocation2 + $0x1d0] sm:$0xff]
          %v6182 = vld [vmem:[#allocation2 + $0x1d8] sm:$0xff]
          %v6183 = vld [vmem:[#allocation2 + $0x1e0] sm:$0xff]
          %v6184 = vld [vmem:[#allocation2 + $0x1e8] sm:$0xff]
          %v6185 = vld [vmem:[#allocation2 + $0x1f0] sm:$0xff]
          %v6186 = vld [vmem:[#allocation2 + $0x1f8] sm:$0xff]
          %v6187 = vld [vmem:[#allocation2 + $0x200] sm:$0xff]
          %v6188 = vld [vmem:[#allocation2 + $0x208] sm:$0xff]
          %v6189 = vld [vmem:[#allocation2 + $0x210] sm:$0xff]
          %v6190 = vld [vmem:[#allocation2 + $0x218] sm:$0xff]
          %v6191 = vld [vmem:[#allocation2 + $0x220] sm:$0xff]
          %v6192 = vld [vmem:[#allocation2 + $0x228] sm:$0xff]
          %v6193 = vld [vmem:[#allocation2 + $0x230] sm:$0xff]
          %v6194 = vld [vmem:[#allocation2 + $0x238] sm:$0xff]
          %v6195 = vld [vmem:[#allocation2 + $0x240] sm:$0xff]
          %v6196 = vld [vmem:[#allocation2 + $0x248] sm:$0xff]
          %v6197 = vld [vmem:[#allocation2 + $0x250] sm:$0xff]
          %v6198 = vld [vmem:[#allocation2 + $0x258] sm:$0xff]
          %v6199 = vld [vmem:[#allocation2 + $0x260] sm:$0xff]
          %v6200 = vld [vmem:[#allocation2 + $0x268] sm:$0xff]
          %v6201 = vld [vmem:[#allocation2 + $0x270] sm:$0xff]
          %v6202 = vld [vmem:[#allocation2 + $0x278] sm:$0xff]
          %v6203 = vld [vmem:[#allocation2 + $0x280] sm:$0xff]
          %v6204 = vld [vmem:[#allocation2 + $0x288] sm:$0xff]
          %v6205 = vld [vmem:[#allocation2 + $0x290] sm:$0xff]
          %v6206 = vld [vmem:[#allocation2 + $0x298] sm:$0xff]
          %v6207 = vld [vmem:[#allocation2 + $0x2a0] sm:$0xff]
          %v6208 = vld [vmem:[#allocation2 + $0x2a8] sm:$0xff]
          %v6209 = vld [vmem:[#allocation2 + $0x2b0] sm:$0xff]
          %v6210 = vld [vmem:[#allocation2 + $0x2b8] sm:$0xff]
          %v6211 = vld [vmem:[#allocation2 + $0x2c0] sm:$0xff]
          %v6212 = vld [vmem:[#allocation2 + $0x2c8] sm:$0xff]
          %v6213 = vld [vmem:[#allocation2 + $0x2d0] sm:$0xff]
          %v6214 = vld [vmem:[#allocation2 + $0x2d8] sm:$0xff]
          %v6215 = vld [vmem:[#allocation2 + $0x2e0] sm:$0xff]
          %v6216 = vld [vmem:[#allocation2 + $0x2e8] sm:$0xff]
          %v6217 = vld [vmem:[#allocation2 + $0x2f0] sm:$0xff]
          %v6218 = vld [vmem:[#allocation2 + $0x2f8] sm:$0xff]
          %v6219 = vld [vmem:[#allocation2 + $0x300] sm:$0xff]
          %v6220 = vld [vmem:[#allocation2 + $0x308] sm:$0xff]
          %v6221 = vld [vmem:[#allocation2 + $0x310] sm:$0xff]
          %v6222 = vld [vmem:[#allocation2 + $0x318] sm:$0xff]
          %v6223 = vld [vmem:[#allocation2 + $0x320] sm:$0xff]
          %v6224 = vld [vmem:[#allocation2 + $0x328] sm:$0xff]
          %v6225 = vld [vmem:[#allocation2 + $0x330] sm:$0xff]
          %v6226 = vld [vmem:[#allocation2 + $0x338] sm:$0xff]
          %v6227 = vld [vmem:[#allocation2 + $0x340] sm:$0xff]
          %v6228 = vld [vmem:[#allocation2 + $0x348] sm:$0xff]
          %v6229 = vld [vmem:[#allocation2 + $0x350] sm:$0xff]
          %v6230 = vld [vmem:[#allocation2 + $0x358] sm:$0xff]
          %v6231 = vld [vmem:[#allocation2 + $0x360] sm:$0xff]
          %v6232 = vld [vmem:[#allocation2 + $0x368] sm:$0xff]
          %v6233 = vld [vmem:[#allocation2 + $0x370] sm:$0xff]
          %v6234 = vld [vmem:[#allocation2 + $0x378] sm:$0xff]
          %v6235 = vld [vmem:[#allocation2 + $0x380] sm:$0xff]
          %v6236 = vld [vmem:[#allocation2 + $0x388] sm:$0xff]
          %v6237 = vld [vmem:[#allocation2 + $0x390] sm:$0xff]
          %v6238 = vld [vmem:[#allocation2 + $0x398] sm:$0xff]
          %v6239 = vld [vmem:[#allocation2 + $0x3a0] sm:$0xff]
          %v6240 = vld [vmem:[#allocation2 + $0x3a8] sm:$0xff]
          %v6241 = vld [vmem:[#allocation2 + $0x3b0] sm:$0xff]
          %v6242 = vld [vmem:[#allocation2 + $0x3b8] sm:$0xff]
          %v6243 = vld [vmem:[#allocation2 + $0x3c0] sm:$0xff]
          %v6244 = vld [vmem:[#allocation2 + $0x3c8] sm:$0xff]
          %v6245 = vld [vmem:[#allocation2 + $0x3d0] sm:$0xff]
          %v6246 = vld [vmem:[#allocation2 + $0x3d8] sm:$0xff]
          %v6247 = vld [vmem:[#allocation2 + $0x3e0] sm:$0xff]
          %v6248 = vld [vmem:[#allocation2 + $0x3e8] sm:$0xff]
          %v6249 = vld [vmem:[#allocation2 + $0x3f0] sm:$0xff]
          %v6250 = vld [vmem:[#allocation2 + $0x3f8] sm:$0xff]
          %6251 = vst [vmem:[%s215] sm:$0xff] %v6123
          %6252 = vst [vmem:[%s215 + $0x8] sm:$0xff] %v6124
          %6253 = vst [vmem:[%s215 + $0x10] sm:$0xff] %v6125
          %6254 = vst [vmem:[%s215 + $0x18] sm:$0xff] %v6126
          %6255 = vst [vmem:[%s215 + $0x20] sm:$0xff] %v6127
          %6256 = vst [vmem:[%s215 + $0x28] sm:$0xff] %v6128
          %6257 = vst [vmem:[%s215 + $0x30] sm:$0xff] %v6129
          %6258 = vst [vmem:[%s215 + $0x38] sm:$0xff] %v6130
          %6259 = vst [vmem:[%s215 + $0x40] sm:$0xff] %v6131
          %6260 = vst [vmem:[%s215 + $0x48] sm:$0xff] %v6132
          %6261 = vst [vmem:[%s215 + $0x50] sm:$0xff] %v6133
          %6262 = vst [vmem:[%s215 + $0x58] sm:$0xff] %v6134
          %6263 = vst [vmem:[%s215 + $0x60] sm:$0xff] %v6135
          %6264 = vst [vmem:[%s215 + $0x68] sm:$0xff] %v6136
          %6265 = vst [vmem:[%s215 + $0x70] sm:$0xff] %v6137
          %6266 = vst [vmem:[%s215 + $0x78] sm:$0xff] %v6138
          %6267 = vst [vmem:[%s215 + $0x80] sm:$0xff] %v6139
          %6268 = vst [vmem:[%s215 + $0x88] sm:$0xff] %v6140
          %6269 = vst [vmem:[%s215 + $0x90] sm:$0xff] %v6141
          %6270 = vst [vmem:[%s215 + $0x98] sm:$0xff] %v6142
          %6271 = vst [vmem:[%s215 + $0xa0] sm:$0xff] %v6143
          %6272 = vst [vmem:[%s215 + $0xa8] sm:$0xff] %v6144
          %6273 = vst [vmem:[%s215 + $0xb0] sm:$0xff] %v6145
          %6274 = vst [vmem:[%s215 + $0xb8] sm:$0xff] %v6146
          %6275 = vst [vmem:[%s215 + $0xc0] sm:$0xff] %v6147
          %6276 = vst [vmem:[%s215 + $0xc8] sm:$0xff] %v6148
          %6277 = vst [vmem:[%s215 + $0xd0] sm:$0xff] %v6149
          %6278 = vst [vmem:[%s215 + $0xd8] sm:$0xff] %v6150
          %6279 = vst [vmem:[%s215 + $0xe0] sm:$0xff] %v6151
          %6280 = vst [vmem:[%s215 + $0xe8] sm:$0xff] %v6152
          %6281 = vst [vmem:[%s215 + $0xf0] sm:$0xff] %v6153
          %6282 = vst [vmem:[%s215 + $0xf8] sm:$0xff] %v6154
          %6283 = vst [vmem:[%s215 + $0x100] sm:$0xff] %v6155
          %6284 = vst [vmem:[%s215 + $0x108] sm:$0xff] %v6156
          %6285 = vst [vmem:[%s215 + $0x110] sm:$0xff] %v6157
          %6286 = vst [vmem:[%s215 + $0x118] sm:$0xff] %v6158
          %6287 = vst [vmem:[%s215 + $0x120] sm:$0xff] %v6159
          %6288 = vst [vmem:[%s215 + $0x128] sm:$0xff] %v6160
          %6289 = vst [vmem:[%s215 + $0x130] sm:$0xff] %v6161
          %6290 = vst [vmem:[%s215 + $0x138] sm:$0xff] %v6162
          %6291 = vst [vmem:[%s215 + $0x140] sm:$0xff] %v6163
          %6292 = vst [vmem:[%s215 + $0x148] sm:$0xff] %v6164
          %6293 = vst [vmem:[%s215 + $0x150] sm:$0xff] %v6165
          %6294 = vst [vmem:[%s215 + $0x158] sm:$0xff] %v6166
          %6295 = vst [vmem:[%s215 + $0x160] sm:$0xff] %v6167
          %6296 = vst [vmem:[%s215 + $0x168] sm:$0xff] %v6168
          %6297 = vst [vmem:[%s215 + $0x170] sm:$0xff] %v6169
          %6298 = vst [vmem:[%s215 + $0x178] sm:$0xff] %v6170
          %6299 = vst [vmem:[%s215 + $0x180] sm:$0xff] %v6171
          %6300 = vst [vmem:[%s215 + $0x188] sm:$0xff] %v6172
          %6301 = vst [vmem:[%s215 + $0x190] sm:$0xff] %v6173
          %6302 = vst [vmem:[%s215 + $0x198] sm:$0xff] %v6174
          %6303 = vst [vmem:[%s215 + $0x1a0] sm:$0xff] %v6175
          %6304 = vst [vmem:[%s215 + $0x1a8] sm:$0xff] %v6176
          %6305 = vst [vmem:[%s215 + $0x1b0] sm:$0xff] %v6177
          %6306 = vst [vmem:[%s215 + $0x1b8] sm:$0xff] %v6178
          %6307 = vst [vmem:[%s215 + $0x1c0] sm:$0xff] %v6179
          %6308 = vst [vmem:[%s215 + $0x1c8] sm:$0xff] %v6180
          %6309 = vst [vmem:[%s215 + $0x1d0] sm:$0xff] %v6181
          %6310 = vst [vmem:[%s215 + $0x1d8] sm:$0xff] %v6182
          %6311 = vst [vmem:[%s215 + $0x1e0] sm:$0xff] %v6183
          %6312 = vst [vmem:[%s215 + $0x1e8] sm:$0xff] %v6184
          %6313 = vst [vmem:[%s215 + $0x1f0] sm:$0xff] %v6185
          %6314 = vst [vmem:[%s215 + $0x1f8] sm:$0xff] %v6186
          %6315 = vst [vmem:[%s215 + $0x200] sm:$0xff] %v6187
          %6316 = vst [vmem:[%s215 + $0x208] sm:$0xff] %v6188
          %6317 = vst [vmem:[%s215 + $0x210] sm:$0xff] %v6189
          %6318 = vst [vmem:[%s215 + $0x218] sm:$0xff] %v6190
          %6319 = vst [vmem:[%s215 + $0x220] sm:$0xff] %v6191
          %6320 = vst [vmem:[%s215 + $0x228] sm:$0xff] %v6192
          %6321 = vst [vmem:[%s215 + $0x230] sm:$0xff] %v6193
          %6322 = vst [vmem:[%s215 + $0x238] sm:$0xff] %v6194
          %6323 = vst [vmem:[%s215 + $0x240] sm:$0xff] %v6195
          %6324 = vst [vmem:[%s215 + $0x248] sm:$0xff] %v6196
          %6325 = vst [vmem:[%s215 + $0x250] sm:$0xff] %v6197
          %6326 = vst [vmem:[%s215 + $0x258] sm:$0xff] %v6198
          %6327 = vst [vmem:[%s215 + $0x260] sm:$0xff] %v6199
          %6328 = vst [vmem:[%s215 + $0x268] sm:$0xff] %v6200
          %6329 = vst [vmem:[%s215 + $0x270] sm:$0xff] %v6201
          %6330 = vst [vmem:[%s215 + $0x278] sm:$0xff] %v6202
          %6331 = vst [vmem:[%s215 + $0x280] sm:$0xff] %v6203
          %6332 = vst [vmem:[%s215 + $0x288] sm:$0xff] %v6204
          %6333 = vst [vmem:[%s215 + $0x290] sm:$0xff] %v6205
          %6334 = vst [vmem:[%s215 + $0x298] sm:$0xff] %v6206
          %6335 = vst [vmem:[%s215 + $0x2a0] sm:$0xff] %v6207
          %6336 = vst [vmem:[%s215 + $0x2a8] sm:$0xff] %v6208
          %6337 = vst [vmem:[%s215 + $0x2b0] sm:$0xff] %v6209
          %6338 = vst [vmem:[%s215 + $0x2b8] sm:$0xff] %v6210
          %6339 = vst [vmem:[%s215 + $0x2c0] sm:$0xff] %v6211
          %6340 = vst [vmem:[%s215 + $0x2c8] sm:$0xff] %v6212
          %6341 = vst [vmem:[%s215 + $0x2d0] sm:$0xff] %v6213
          %6342 = vst [vmem:[%s215 + $0x2d8] sm:$0xff] %v6214
          %6343 = vst [vmem:[%s215 + $0x2e0] sm:$0xff] %v6215
          %6344 = vst [vmem:[%s215 + $0x2e8] sm:$0xff] %v6216
          %6345 = vst [vmem:[%s215 + $0x2f0] sm:$0xff] %v6217
          %6346 = vst [vmem:[%s215 + $0x2f8] sm:$0xff] %v6218
          %6347 = vst [vmem:[%s215 + $0x300] sm:$0xff] %v6219
          %6348 = vst [vmem:[%s215 + $0x308] sm:$0xff] %v6220
          %6349 = vst [vmem:[%s215 + $0x310] sm:$0xff] %v6221
          %6350 = vst [vmem:[%s215 + $0x318] sm:$0xff] %v6222
          %6351 = vst [vmem:[%s215 + $0x320] sm:$0xff] %v6223
          %6352 = vst [vmem:[%s215 + $0x328] sm:$0xff] %v6224
          %6353 = vst [vmem:[%s215 + $0x330] sm:$0xff] %v6225
          %6354 = vst [vmem:[%s215 + $0x338] sm:$0xff] %v6226
          %6355 = vst [vmem:[%s215 + $0x340] sm:$0xff] %v6227
          %6356 = vst [vmem:[%s215 + $0x348] sm:$0xff] %v6228
          %6357 = vst [vmem:[%s215 + $0x350] sm:$0xff] %v6229
          %6358 = vst [vmem:[%s215 + $0x358] sm:$0xff] %v6230
          %6359 = vst [vmem:[%s215 + $0x360] sm:$0xff] %v6231
          %6360 = vst [vmem:[%s215 + $0x368] sm:$0xff] %v6232
          %6361 = vst [vmem:[%s215 + $0x370] sm:$0xff] %v6233
          %6362 = vst [vmem:[%s215 + $0x378] sm:$0xff] %v6234
          %6363 = vst [vmem:[%s215 + $0x380] sm:$0xff] %v6235
          %6364 = vst [vmem:[%s215 + $0x388] sm:$0xff] %v6236
          %6365 = vst [vmem:[%s215 + $0x390] sm:$0xff] %v6237
          %6366 = vst [vmem:[%s215 + $0x398] sm:$0xff] %v6238
          %6367 = vst [vmem:[%s215 + $0x3a0] sm:$0xff] %v6239
          %6368 = vst [vmem:[%s215 + $0x3a8] sm:$0xff] %v6240
          %6369 = vst [vmem:[%s215 + $0x3b0] sm:$0xff] %v6241
          %6370 = vst [vmem:[%s215 + $0x3b8] sm:$0xff] %v6242
          %6371 = vst [vmem:[%s215 + $0x3c0] sm:$0xff] %v6243
          %6372 = vst [vmem:[%s215 + $0x3c8] sm:$0xff] %v6244
          %6373 = vst [vmem:[%s215 + $0x3d0] sm:$0xff] %v6245
          %6374 = vst [vmem:[%s215 + $0x3d8] sm:$0xff] %v6246
          %6375 = vst [vmem:[%s215 + $0x3e0] sm:$0xff] %v6247
          %6376 = vst [vmem:[%s215 + $0x3e8] sm:$0xff] %v6248
          %6377 = vst [vmem:[%s215 + $0x3f0] sm:$0xff] %v6249
          %6378 = vst [vmem:[%s215 + $0x3f8] sm:$0xff] %v6250
        $region44: #{tpu_custom_call.1} parent=27 // pred_fallthru
          _
        %s6379 = sand.u32 %s105, 1
        %s6380 = scalar_lea.sflag [#allocation5], %s6379
        %s6381 = sand.u32 %s105, 1
        %s6382 = smul.addr %s6381, 1024
        %s6383 = scalar_lea.vmem [#allocation8], %s6382
        // Predicated region
        $region45: #{tpu_custom_call.1} parent=27 // pred_check
          %p6384 = pneg %p115
        $region46: #{tpu_custom_call.1} parent=27 // pred_check_branch
          %6386 = sbr.rel (%p6384) target = $region48
        $region47: #{tpu_custom_call.1} parent=27 // pred_region
          %s6387 = smul.u32 64, %s25
          %s6388 = smul.u32 2, %s26
          %s6390 = ssub.s32 16384, 16384
          %6391 = vsyncadd %s6380, %s6390
          %s6392 = smul.addr %s6387, 4
          %s6393 = sadd.s32 %s6388, %s6392
          %s6394 = smul.addr %s6393, 128
          %s6395 = scalar_lea.hbm %s2, %s6394
          %s6396 = sshll.u32 %s6383, 4
          %s6397 = int_to_ptr.vmem [resolvable:$true] %s6396
          %6402 = dma.vmem_to_hbm [thread:$0]  %s6397, 16384, %s6395, %s6380, 256, 512, 16
        $region48: #{tpu_custom_call.1} parent=27 // pred_fallthru
          _
      $region28: #{tpu_custom_call.1} parent=5 // pred_fallthru
        _
      %p6403 = scmp.le.s32.totalorder 2, %s15
      // Predicated region
      $region49: #{tpu_custom_call.1} parent=5 // pred_check
        %p6404 = pneg %p6403
      $region50: #{tpu_custom_call.1} parent=5 // pred_check_branch
        %6406 = sbr.rel (%p6404) target = $region52
      $region51: #{tpu_custom_call.1} parent=5 // pred_region
        %s6407 = ssub.s32 %s15, 2
        // Predicated region
        $region53: #{tpu_custom_call.1} parent=51 // pred_check
          %p6408 = pneg %p121
        $region54: #{tpu_custom_call.1} parent=51 // pred_check_branch
          %6410 = sbr.rel (%p6408) target = $region56
        $region55: #{tpu_custom_call.1} parent=51 // pred_region
          %s6411 = sand.u32 %s106, 1
          %s6412 = scalar_lea.sflag [#allocation5], %s6411
          %s6413 = sand.u32 %s106, 1
          %s6414 = smul.addr %s6413, 1024
          %s6415 = scalar_lea.vmem [#allocation8], %s6414
          %6416 = dma.done %s6412, 16384
        $region56: #{tpu_custom_call.1} parent=51 // pred_fallthru
          _
      $region52: #{tpu_custom_call.1} parent=5 // pred_fallthru
        _
    $region6: #{tpu_custom_call.1} parent=1 // loop_footer
      %s19 = sadd.s32 1, %s15
    $region7: #{tpu_custom_call.1} parent=1 // loop_footer_branch
      %14 = sbr.rel target = $region3
    $region8: #{tpu_custom_call.1} parent=1 // loop_exit
      _
    %6417 = vsyncpa [#allocation4], 1
    %s6418 = scalar_lea.sflag [#allocation4], 1
    %6419 = vsyncpa %s6418, 1
    %6420 = vsyncpa [#allocation7], 1
    %s6421 = scalar_lea.sflag [#allocation7], 1
    %6422 = vsyncpa %s6421, 1
    %6423 = vsyncpa [#allocation5], 1
    %s6424 = scalar_lea.sflag [#allocation5], 1
    %6425 = vsyncpa %s6424, 1

</llo_original>
